<compile_context>
chip_gen: v7x
topology: tpu7x:2x2x1
jax: 0.10.0
libtpu: 0.0.40
codegen_flags: <defaults>
</compile_context>

<pallas_src>
import functools

import numpy as np
import jax
import jax.numpy as jnp
from jax import lax
from jax.experimental import pallas as pl
from jax.experimental.pallas import tpu as pltpu

LANES = 128  # the channel axis is zero-padded to one full lane register width


def _slab_rows(h, w):
    """Flat padded-grid sizes for one sample at spatial (h, w)."""
    hp, wp = h + 1, w + 1
    r_cmp = hp * wp                             # rows the conv is evaluated on
    r_slab = ((r_cmp + wp + 1 + 7) // 8) * 8    # + tap over-read slack, 8-align
    return hp, wp, r_cmp, r_slab


# -----------------------------------------------------------------------------
# The fused DenseNet kernel (one grid step == one sample)
# -----------------------------------------------------------------------------
def _densenet_kernel(x_ref, w_ref, b_ref, tw_ref, tb_ref, o_ref,
                     slab_a, slab_b, *, metas):
    slabs = (slab_a, slab_b)
    nb = len(metas)

    # ---- build block-0's zero-padded flat slab from the (H, W, 128) tile ----
    h0, w0 = metas[0][0], metas[0][1]
    wp0 = w0 + 1
    slab_a[...] = jnp.zeros_like(slab_a)
    for y in range(h0):
        slab_a[pl.ds(y * wp0, w0), :] = x_ref[0, y]

    for bi, (h, w, hp, wp, r_cmp, layers) in enumerate(metas):
        cur = slabs[bi % 2]

        # Row-validity mask (0 on the ConstantPad2d pad row/col), computed
        # in-kernel from an iota and hoisted out of the layer loop.  Division-
        # free f32 math: y = floor((r + 0.5)/wp), x = r - y*wp are exact here.
        rf = lax.broadcasted_iota(jnp.int32, (r_cmp, LANES), 0).astype(
            jnp.float32)
        yy = jnp.floor((rf + 0.5) * (1.0 / wp))
        xx = rf - yy * wp
        valid = jnp.where((yy < h - 0.5) & (xx < w - 0.5), 1.0, 0.0)

        # ---- dense block: layers x (2x2 conv + bias + ReLU).  The channel
        # ---- concat is an add into this layer's (zero-placed) output lanes.
        taps = (0, 1, wp, wp + 1)        # (dh, dw) -> flat row shift dh*wp+dw
        for l in range(layers):
            cols = jnp.concatenate(      # fused im2col, K = 4 * 128 per dot
                [cur[pl.ds(t, r_cmp), :].astype(jnp.bfloat16) for t in taps],
                axis=-1)
            acc = jnp.dot(cols, w_ref[bi, l],
                          preferred_element_type=jnp.float32)
            new_feat = jnp.maximum(acc + b_ref[bi, l], 0.0) * valid
            cur[pl.ds(0, r_cmp), :] = cur[pl.ds(0, r_cmp), :] + new_feat

        # ---- transition block: 1x1 conv + bias (no ReLU).  Pad rows pick up
        # ---- the bias, which is benign: the 2x2/stride-2 pool below never
        # ---- reads them and the destination slab is re-zeroed before the
        # ---- gather, so the next block's pad rows are exactly zero again.
        trans = jnp.dot(cur[pl.ds(0, r_cmp), :].astype(jnp.bfloat16),
                        tw_ref[bi], preferred_element_type=jnp.float32)
        cur[pl.ds(0, r_cmp), :] = trans + tb_ref[bi]

        # ---- 2x2 / stride-2 max pool, gathered via stride-2 row reads
        # ---- straight into the next block's padded flat layout (or o_ref).
        ho, wo = h // 2, w // 2
        last = bi == nb - 1
        if last:
            o_ref[...] = jnp.zeros_like(o_ref)
        else:
            nxt = slabs[(bi + 1) % 2]
            nxt[...] = jnp.zeros_like(nxt)
        for i in range(ho):
            base = (2 * i) * wp
            pooled = jnp.maximum(
                jnp.maximum(cur[pl.ds(base, wo, stride=2), :],
                            cur[pl.ds(base + 1, wo, stride=2), :]),
                jnp.maximum(cur[pl.ds(base + wp, wo, stride=2), :],
                            cur[pl.ds(base + wp + 1, wo, stride=2), :]))
            if last:
                o_ref[0, pl.ds(i * wo, wo), :] = pooled
            else:
                nxt[pl.ds(i * (wo + 1), wo), :] = pooled


# -----------------------------------------------------------------------------
# Raw parameter construction (mirrors the PyTorch module's shapes / defaults)
# -----------------------------------------------------------------------------
def init_densenet_params(key, in_channels, nb_dense_blocks=3,
                         layers_per_dense_block=3, growth_rate=10,
                         transition_scale_down_ratio=0.5,
                         conv_kernel_size=(2, 2)):
    params = []
    c = in_channels
    kh, kw = conv_kernel_size
    for _ in range(nb_dense_blocks):
        dense_layers = []
        for _ in range(layers_per_dense_block):
            key, k1, k2 = jax.random.split(key, 3)
            fan_in = c * kh * kw
            bound = 1.0 / np.sqrt(float(fan_in))
            w = jax.random.uniform(k1, (kh, kw, c, growth_rate),
                                   minval=-bound, maxval=bound,
                                   dtype=jnp.float32)
            b = jax.random.uniform(k2, (1, growth_rate),
                                   minval=-bound, maxval=bound,
                                   dtype=jnp.float32)
            dense_layers.append((w, b))
            c += growth_rate
        c_out = int(c * transition_scale_down_ratio)
        key, k1, k2 = jax.random.split(key, 3)
        bound = 1.0 / np.sqrt(float(c))
        tw = jax.random.uniform(k1, (c, c_out), minval=-bound, maxval=bound,
                                dtype=jnp.float32)
        tb = jax.random.uniform(k2, (1, c_out), minval=-bound, maxval=bound,
                                dtype=jnp.float32)
        params.append((dense_layers, (tw, tb)))
        c = c_out
    return params, c


# -----------------------------------------------------------------------------
# Pack raw params into zero-placed, lane-dense, tap-stacked kernel tensors
# -----------------------------------------------------------------------------
def pack_params(params, h, w):
    nb = len(params)
    layers = len(params[0][0])
    w_all = np.zeros((nb, layers, 4 * LANES, LANES), np.float32)
    b_all = np.zeros((nb, layers, 1, LANES), np.float32)
    tw_all = np.zeros((nb, LANES, LANES), np.float32)
    tb_all = np.zeros((nb, 1, LANES), np.float32)
    metas = []
    r_slab_a, r_slab_b = 8, 8
    hh, ww = h, w
    c_out = None
    for bi, (dense_layers, (tw, tb)) in enumerate(params):
        assert hh % 2 == 0 and ww % 2 == 0
        assert len(dense_layers) == layers
        hp, wp, r_cmp, r_slab = _slab_rows(hh, ww)
        if bi % 2 == 0:
            r_slab_a = max(r_slab_a, r_slab)
        else:
            r_slab_b = max(r_slab_b, r_slab)
        c = g = 0
        for l, (wl, bl) in enumerate(dense_layers):
            wl = np.asarray(wl, np.float32)
            bl = np.asarray(bl, np.float32).reshape(-1)
            kh, kw, c, g = wl.shape
            # TODO(synk): only the module's default (2,2) conv / (2,2) pool
            #             kernel sizes are specialized in the Pallas kernel.
            assert (kh, kw) == (2, 2) and c + g <= LANES
            for dh in range(2):
                for dw in range(2):
                    t = 2 * dh + dw
                    w_all[bi, l, t * LANES:t * LANES + c, c:c + g] = wl[dh, dw]
            b_all[bi, l, 0, c:c + g] = bl
        c_end = c + g
        tw = np.asarray(tw, np.float32)
        tb = np.asarray(tb, np.float32).reshape(-1)
        assert tw.shape[0] == c_end and tw.shape[1] <= LANES
        c_out = tw.shape[1]
        tw_all[bi, :c_end, :c_out] = tw
        tb_all[bi, 0, :c_out] = tb
        metas.append((hh, ww, hp, wp, r_cmp, layers))
        hh, ww = hh // 2, ww // 2
    out_rows = max(8, ((hh * ww + 7) // 8) * 8)
    return dict(
        w=jnp.asarray(w_all, jnp.bfloat16),    # MXU operands in bf16
        b=jnp.asarray(b_all, jnp.float32),     # VPU work stays in f32
        tw=jnp.asarray(tw_all, jnp.bfloat16),
        tb=jnp.asarray(tb_all, jnp.float32),
        metas=tuple(metas),
        r_slab_a=r_slab_a, r_slab_b=r_slab_b,
        out_rows=out_rows, out_h=hh, out_w=ww, c_out=c_out,
    )


# -----------------------------------------------------------------------------
# Forward pass (single Pallas launch, batch-parallel grid)
# -----------------------------------------------------------------------------
def densenet_forward(x_nchw, packed):
    """x_nchw: (N, C, H, W) float32, matching the PyTorch call convention."""
    n, c0, h, w = x_nchw.shape
    assert (h, w) == (packed["metas"][0][0], packed["metas"][0][1])
    # Host prologue: NCHW -> NHWC + zero-pad channels to a full lane register.
    x = jnp.transpose(x_nchw, (0, 2, 3, 1)).astype(jnp.float32)
    x = jnp.pad(x, ((0, 0), (0, 0), (0, 0), (0, LANES - c0)))

    kernel = functools.partial(_densenet_kernel, metas=packed["metas"])
    out_flat = pl.pallas_call(
        kernel,
        grid=(n,),
        in_specs=[
            pl.BlockSpec((1, h, w, LANES), lambda bt: (bt, 0, 0, 0)),
            pl.BlockSpec(packed["w"].shape, lambda bt: (0, 0, 0, 0)),
            pl.BlockSpec(packed["b"].shape, lambda bt: (0, 0, 0, 0)),
            pl.BlockSpec(packed["tw"].shape, lambda bt: (0, 0, 0)),
            pl.BlockSpec(packed["tb"].shape, lambda bt: (0, 0, 0)),
        ],
        out_specs=pl.BlockSpec((1, packed["out_rows"], LANES),
                               lambda bt: (bt, 0, 0)),
        out_shape=jax.ShapeDtypeStruct((n, packed["out_rows"], LANES),
                                       jnp.float32),
        scratch_shapes=[pltpu.VMEM((packed["r_slab_a"], LANES), jnp.float32),
                        pltpu.VMEM((packed["r_slab_b"], LANES), jnp.float32)],
        compiler_params=pltpu.CompilerParams(
            dimension_semantics=("parallel",)),
    )(x, packed["w"], packed["b"], packed["tw"], packed["tb"])

    ho, wo, c_out = packed["out_h"], packed["out_w"], packed["c_out"]
    out = out_flat[:, :ho * wo, :c_out].reshape(n, ho, wo, c_out)
    return jnp.transpose(out, (0, 3, 1, 2))       # back to NCHW


# -----------------------------------------------------------------------------
# Pure-jnp reference.  operand_dtype=bfloat16 emulates exactly what the kernel
# feeds the MXU (bf16 operands, f32 accumulation, all other math in f32).
# -----------------------------------------------------------------------------
def densenet_forward_ref(x_nchw, params, operand_dtype=jnp.float32):
    dt = operand_dtype
    x = jnp.transpose(x_nchw, (0, 2, 3, 1)).astype(jnp.float32)
    for dense_layers, (tw, tb) in params:
        for (w, b) in dense_layers:
            N, H, W, _ = x.shape
            xp = jnp.pad(x, ((0, 0), (0, 1), (0, 1), (0, 0)))
            cols = jnp.concatenate(
                [xp[:, dh:dh + H, dw:dw + W, :]
                 for dh in range(2) for dw in range(2)], axis=-1)
            o = jnp.dot(cols.reshape(N * H * W, -1).astype(dt),
                        w.reshape(-1, w.shape[-1]).astype(dt),
                        preferred_element_type=jnp.float32) + b
            o = jnp.maximum(o, 0.0).reshape(N, H, W, -1)
            x = jnp.concatenate([x, o], axis=-1)
        N, H, W, C = x.shape
        x = (jnp.dot(x.reshape(N * H * W, C).astype(dt), tw.astype(dt),
                     preferred_element_type=jnp.float32)
             + tb).reshape(N, H, W, -1)
        Ho, Wo = H // 2, W // 2
        x = jnp.max(x[:, :2 * Ho, :2 * Wo, :].reshape(N, Ho, 2, Wo, 2, -1),
                    axis=(2, 4))
    return jnp.transpose(x, (0, 3, 1, 2))


if __name__ == "__main__":
    key = jax.random.PRNGKey(0)
    k_x, k_p = jax.random.split(key)

    # Small shapes consistent with the module: N=2, C_in=4, H=W=16 (NCHW).
    N, C_in, H, W = 2, 4, 16, 16
    x = jax.random.normal(k_x, (N, C_in, H, W), dtype=jnp.float32)

    params, out_channels = init_densenet_params(k_p, in_channels=C_in)
    packed = pack_params(params, h=H, w=W)

    fwd = jax.jit(lambda v: densenet_forward(v, packed))
    out = jax.block_until_ready(fwd(x))

    # Channels 4 -> (34->17) -> (47->23) -> (53->26); spatial 16 -> 8 -> 4 -> 2.
    assert out.shape == (N, out_channels, H // 8, W // 8), out.shape

    # Correctness: compare against the module's math with the matmul operands
    # rounded to bf16 (exactly what the kernel feeds the MXU; accumulation,
    # bias, ReLU, concat and pooling are f32 in both).  Remaining difference
    # is only f32 accumulation order.
    ref = densenet_forward_ref(x, params, operand_dtype=jnp.bfloat16)
    assert jnp.allclose(out, ref, atol=1e-3, rtol=1e-3), (
        float(jnp.max(jnp.abs(out - ref))))

    print("KERNEL_OK")
</pallas_src>

<mosaic_0001>
module attributes {stable_mosaic.version = 11 : i64} {
  func.func @_densenet_kernel(%arg0: i32, %arg1: memref<1x16x16x128xf32, #tpu.memory_space<vmem>>, %arg2: memref<3x3x512x128xbf16, #tpu.memory_space<vmem>>, %arg3: memref<3x3x1x128xf32, #tpu.memory_space<vmem>>, %arg4: memref<3x128x128xbf16, #tpu.memory_space<vmem>>, %arg5: memref<3x1x128xf32, #tpu.memory_space<vmem>>, %arg6: memref<1x8x128xf32, #tpu.memory_space<vmem>>, %arg7: memref<312x128xf32, #tpu.memory_space<vmem>>, %arg8: memref<96x128xf32, #tpu.memory_space<vmem>>) attributes {dimension_semantics = [#tpu.dimension_semantics<parallel>], iteration_bounds = array<i64: 2>, scalar_prefetch = 0 : i64, scratch_operands = 2 : i64, tpu.core_type = #tpu.core_type<tc>, window_params = [{transform_indices = @transform_0, window_bounds = array<i64: 1, 16, 16, 128>}, {pipeline_mode = #tpu.pipeline_mode<synchronous>, transform_indices = @transform_1, window_bounds = array<i64: 3, 3, 512, 128>}, {pipeline_mode = #tpu.pipeline_mode<synchronous>, transform_indices = @transform_2, window_bounds = array<i64: 3, 3, 1, 128>}, {pipeline_mode = #tpu.pipeline_mode<synchronous>, transform_indices = @transform_3, window_bounds = array<i64: 3, 128, 128>}, {pipeline_mode = #tpu.pipeline_mode<synchronous>, transform_indices = @transform_4, window_bounds = array<i64: 3, 1, 128>}, {transform_indices = @transform_5, window_bounds = array<i64: 1, 8, 128>}]} {
    %cst = arith.constant 0.000000e+00 : f32
    %0 = vector.broadcast %cst : f32 to vector<312x128xf32>
    %c0 = arith.constant 0 : index
    %c0_0 = arith.constant 0 : index
    %1 = vector.load %arg7[%c0, %c0_0] : memref<312x128xf32, #tpu.memory_space<vmem>>, vector<312x128xf32>
    tpu.vector_store %arg7[%c0, %c0_0], %0 {strides = array<i32>} : memref<312x128xf32, #tpu.memory_space<vmem>>, vector<312x128xf32>,
    %c0_1 = arith.constant 0 : index
    %c0_2 = arith.constant 0 : index
    %c0_3 = arith.constant 0 : index
    %c0_4 = arith.constant 0 : index
    %2 = vector.load %arg1[%c0_1, %c0_2, %c0_3, %c0_4] : memref<1x16x16x128xf32, #tpu.memory_space<vmem>>, vector<1x1x16x128xf32>
    %3 = vector.shape_cast %2 : vector<1x1x16x128xf32> to vector<16x128xf32>
    %c0_5 = arith.constant 0 : index
    %c0_6 = arith.constant 0 : index
    %4 = vector.load %arg7[%c0_5, %c0_6] : memref<312x128xf32, #tpu.memory_space<vmem>>, vector<16x128xf32>
    tpu.vector_store %arg7[%c0_5, %c0_6], %3 {strides = array<i32>} : memref<312x128xf32, #tpu.memory_space<vmem>>, vector<16x128xf32>,
    %c0_7 = arith.constant 0 : index
    %c1 = arith.constant 1 : index
    %c0_8 = arith.constant 0 : index
    %c0_9 = arith.constant 0 : index
    %5 = vector.load %arg1[%c0_7, %c1, %c0_8, %c0_9] : memref<1x16x16x128xf32, #tpu.memory_space<vmem>>, vector<1x1x16x128xf32>
    %6 = vector.shape_cast %5 : vector<1x1x16x128xf32> to vector<16x128xf32>
    %c17 = arith.constant 17 : index
    %c0_10 = arith.constant 0 : index
    %7 = vector.load %arg7[%c17, %c0_10] : memref<312x128xf32, #tpu.memory_space<vmem>>, vector<16x128xf32>
    tpu.vector_store %arg7[%c17, %c0_10], %6 {strides = array<i32>} : memref<312x128xf32, #tpu.memory_space<vmem>>, vector<16x128xf32>,
    %c0_11 = arith.constant 0 : index
    %c2 = arith.constant 2 : index
    %c0_12 = arith.constant 0 : index
    %c0_13 = arith.constant 0 : index
    %8 = vector.load %arg1[%c0_11, %c2, %c0_12, %c0_13] : memref<1x16x16x128xf32, #tpu.memory_space<vmem>>, vector<1x1x16x128xf32>
    %9 = vector.shape_cast %8 : vector<1x1x16x128xf32> to vector<16x128xf32>
    %c34 = arith.constant 34 : index
    %c0_14 = arith.constant 0 : index
    %10 = vector.load %arg7[%c34, %c0_14] : memref<312x128xf32, #tpu.memory_space<vmem>>, vector<16x128xf32>
    tpu.vector_store %arg7[%c34, %c0_14], %9 {strides = array<i32>} : memref<312x128xf32, #tpu.memory_space<vmem>>, vector<16x128xf32>,
    %c0_15 = arith.constant 0 : index
    %c3 = arith.constant 3 : index
    %c0_16 = arith.constant 0 : index
    %c0_17 = arith.constant 0 : index
    %11 = vector.load %arg1[%c0_15, %c3, %c0_16, %c0_17] : memref<1x16x16x128xf32, #tpu.memory_space<vmem>>, vector<1x1x16x128xf32>
    %12 = vector.shape_cast %11 : vector<1x1x16x128xf32> to vector<16x128xf32>
    %c51 = arith.constant 51 : index
    %c0_18 = arith.constant 0 : index
    %13 = vector.load %arg7[%c51, %c0_18] : memref<312x128xf32, #tpu.memory_space<vmem>>, vector<16x128xf32>
    tpu.vector_store %arg7[%c51, %c0_18], %12 {strides = array<i32>} : memref<312x128xf32, #tpu.memory_space<vmem>>, vector<16x128xf32>,
    %c0_19 = arith.constant 0 : index
    %c4 = arith.constant 4 : index
    %c0_20 = arith.constant 0 : index
    %c0_21 = arith.constant 0 : index
    %14 = vector.load %arg1[%c0_19, %c4, %c0_20, %c0_21] : memref<1x16x16x128xf32, #tpu.memory_space<vmem>>, vector<1x1x16x128xf32>
    %15 = vector.shape_cast %14 : vector<1x1x16x128xf32> to vector<16x128xf32>
    %c68 = arith.constant 68 : index
    %c0_22 = arith.constant 0 : index
    %16 = vector.load %arg7[%c68, %c0_22] : memref<312x128xf32, #tpu.memory_space<vmem>>, vector<16x128xf32>
    tpu.vector_store %arg7[%c68, %c0_22], %15 {strides = array<i32>} : memref<312x128xf32, #tpu.memory_space<vmem>>, vector<16x128xf32>,
    %c0_23 = arith.constant 0 : index
    %c5 = arith.constant 5 : index
    %c0_24 = arith.constant 0 : index
    %c0_25 = arith.constant 0 : index
    %17 = vector.load %arg1[%c0_23, %c5, %c0_24, %c0_25] : memref<1x16x16x128xf32, #tpu.memory_space<vmem>>, vector<1x1x16x128xf32>
    %18 = vector.shape_cast %17 : vector<1x1x16x128xf32> to vector<16x128xf32>
    %c85 = arith.constant 85 : index
    %c0_26 = arith.constant 0 : index
    %19 = vector.load %arg7[%c85, %c0_26] : memref<312x128xf32, #tpu.memory_space<vmem>>, vector<16x128xf32>
    tpu.vector_store %arg7[%c85, %c0_26], %18 {strides = array<i32>} : memref<312x128xf32, #tpu.memory_space<vmem>>, vector<16x128xf32>,
    %c0_27 = arith.constant 0 : index
    %c6 = arith.constant 6 : index
    %c0_28 = arith.constant 0 : index
    %c0_29 = arith.constant 0 : index
    %20 = vector.load %arg1[%c0_27, %c6, %c0_28, %c0_29] : memref<1x16x16x128xf32, #tpu.memory_space<vmem>>, vector<1x1x16x128xf32>
    %21 = vector.shape_cast %20 : vector<1x1x16x128xf32> to vector<16x128xf32>
    %c102 = arith.constant 102 : index
    %c0_30 = arith.constant 0 : index
    %22 = vector.load %arg7[%c102, %c0_30] : memref<312x128xf32, #tpu.memory_space<vmem>>, vector<16x128xf32>
    tpu.vector_store %arg7[%c102, %c0_30], %21 {strides = array<i32>} : memref<312x128xf32, #tpu.memory_space<vmem>>, vector<16x128xf32>,
    %c0_31 = arith.constant 0 : index
    %c7 = arith.constant 7 : index
    %c0_32 = arith.constant 0 : index
    %c0_33 = arith.constant 0 : index
    %23 = vector.load %arg1[%c0_31, %c7, %c0_32, %c0_33] : memref<1x16x16x128xf32, #tpu.memory_space<vmem>>, vector<1x1x16x128xf32>
    %24 = vector.shape_cast %23 : vector<1x1x16x128xf32> to vector<16x128xf32>
    %c119 = arith.constant 119 : index
    %c0_34 = arith.constant 0 : index
    %25 = vector.load %arg7[%c119, %c0_34] : memref<312x128xf32, #tpu.memory_space<vmem>>, vector<16x128xf32>
    tpu.vector_store %arg7[%c119, %c0_34], %24 {strides = array<i32>} : memref<312x128xf32, #tpu.memory_space<vmem>>, vector<16x128xf32>,
    %c0_35 = arith.constant 0 : index
    %c8 = arith.constant 8 : index
    %c0_36 = arith.constant 0 : index
    %c0_37 = arith.constant 0 : index
    %26 = vector.load %arg1[%c0_35, %c8, %c0_36, %c0_37] : memref<1x16x16x128xf32, #tpu.memory_space<vmem>>, vector<1x1x16x128xf32>
    %27 = vector.shape_cast %26 : vector<1x1x16x128xf32> to vector<16x128xf32>
    %c136 = arith.constant 136 : index
    %c0_38 = arith.constant 0 : index
    %28 = vector.load %arg7[%c136, %c0_38] : memref<312x128xf32, #tpu.memory_space<vmem>>, vector<16x128xf32>
    tpu.vector_store %arg7[%c136, %c0_38], %27 {strides = array<i32>} : memref<312x128xf32, #tpu.memory_space<vmem>>, vector<16x128xf32>,
    %c0_39 = arith.constant 0 : index
    %c9 = arith.constant 9 : index
    %c0_40 = arith.constant 0 : index
    %c0_41 = arith.constant 0 : index
    %29 = vector.load %arg1[%c0_39, %c9, %c0_40, %c0_41] : memref<1x16x16x128xf32, #tpu.memory_space<vmem>>, vector<1x1x16x128xf32>
    %30 = vector.shape_cast %29 : vector<1x1x16x128xf32> to vector<16x128xf32>
    %c153 = arith.constant 153 : index
    %c0_42 = arith.constant 0 : index
    %31 = vector.load %arg7[%c153, %c0_42] : memref<312x128xf32, #tpu.memory_space<vmem>>, vector<16x128xf32>
    tpu.vector_store %arg7[%c153, %c0_42], %30 {strides = array<i32>} : memref<312x128xf32, #tpu.memory_space<vmem>>, vector<16x128xf32>,
    %c0_43 = arith.constant 0 : index
    %c10 = arith.constant 10 : index
    %c0_44 = arith.constant 0 : index
    %c0_45 = arith.constant 0 : index
    %32 = vector.load %arg1[%c0_43, %c10, %c0_44, %c0_45] : memref<1x16x16x128xf32, #tpu.memory_space<vmem>>, vector<1x1x16x128xf32>
    %33 = vector.shape_cast %32 : vector<1x1x16x128xf32> to vector<16x128xf32>
    %c170 = arith.constant 170 : index
    %c0_46 = arith.constant 0 : index
    %34 = vector.load %arg7[%c170, %c0_46] : memref<312x128xf32, #tpu.memory_space<vmem>>, vector<16x128xf32>
    tpu.vector_store %arg7[%c170, %c0_46], %33 {strides = array<i32>} : memref<312x128xf32, #tpu.memory_space<vmem>>, vector<16x128xf32>,
    %c0_47 = arith.constant 0 : index
    %c11 = arith.constant 11 : index
    %c0_48 = arith.constant 0 : index
    %c0_49 = arith.constant 0 : index
    %35 = vector.load %arg1[%c0_47, %c11, %c0_48, %c0_49] : memref<1x16x16x128xf32, #tpu.memory_space<vmem>>, vector<1x1x16x128xf32>
    %36 = vector.shape_cast %35 : vector<1x1x16x128xf32> to vector<16x128xf32>
    %c187 = arith.constant 187 : index
    %c0_50 = arith.constant 0 : index
    %37 = vector.load %arg7[%c187, %c0_50] : memref<312x128xf32, #tpu.memory_space<vmem>>, vector<16x128xf32>
    tpu.vector_store %arg7[%c187, %c0_50], %36 {strides = array<i32>} : memref<312x128xf32, #tpu.memory_space<vmem>>, vector<16x128xf32>,
    %c0_51 = arith.constant 0 : index
    %c12 = arith.constant 12 : index
    %c0_52 = arith.constant 0 : index
    %c0_53 = arith.constant 0 : index
    %38 = vector.load %arg1[%c0_51, %c12, %c0_52, %c0_53] : memref<1x16x16x128xf32, #tpu.memory_space<vmem>>, vector<1x1x16x128xf32>
    %39 = vector.shape_cast %38 : vector<1x1x16x128xf32> to vector<16x128xf32>
    %c204 = arith.constant 204 : index
    %c0_54 = arith.constant 0 : index
    %40 = vector.load %arg7[%c204, %c0_54] : memref<312x128xf32, #tpu.memory_space<vmem>>, vector<16x128xf32>
    tpu.vector_store %arg7[%c204, %c0_54], %39 {strides = array<i32>} : memref<312x128xf32, #tpu.memory_space<vmem>>, vector<16x128xf32>,
    %c0_55 = arith.constant 0 : index
    %c13 = arith.constant 13 : index
    %c0_56 = arith.constant 0 : index
    %c0_57 = arith.constant 0 : index
    %41 = vector.load %arg1[%c0_55, %c13, %c0_56, %c0_57] : memref<1x16x16x128xf32, #tpu.memory_space<vmem>>, vector<1x1x16x128xf32>
    %42 = vector.shape_cast %41 : vector<1x1x16x128xf32> to vector<16x128xf32>
    %c221 = arith.constant 221 : index
    %c0_58 = arith.constant 0 : index
    %43 = vector.load %arg7[%c221, %c0_58] : memref<312x128xf32, #tpu.memory_space<vmem>>, vector<16x128xf32>
    tpu.vector_store %arg7[%c221, %c0_58], %42 {strides = array<i32>} : memref<312x128xf32, #tpu.memory_space<vmem>>, vector<16x128xf32>,
    %c0_59 = arith.constant 0 : index
    %c14 = arith.constant 14 : index
    %c0_60 = arith.constant 0 : index
    %c0_61 = arith.constant 0 : index
    %44 = vector.load %arg1[%c0_59, %c14, %c0_60, %c0_61] : memref<1x16x16x128xf32, #tpu.memory_space<vmem>>, vector<1x1x16x128xf32>
    %45 = vector.shape_cast %44 : vector<1x1x16x128xf32> to vector<16x128xf32>
    %c238 = arith.constant 238 : index
    %c0_62 = arith.constant 0 : index
    %46 = vector.load %arg7[%c238, %c0_62] : memref<312x128xf32, #tpu.memory_space<vmem>>, vector<16x128xf32>
    tpu.vector_store %arg7[%c238, %c0_62], %45 {strides = array<i32>} : memref<312x128xf32, #tpu.memory_space<vmem>>, vector<16x128xf32>,
    %c0_63 = arith.constant 0 : index
    %c15 = arith.constant 15 : index
    %c0_64 = arith.constant 0 : index
    %c0_65 = arith.constant 0 : index
    %47 = vector.load %arg1[%c0_63, %c15, %c0_64, %c0_65] : memref<1x16x16x128xf32, #tpu.memory_space<vmem>>, vector<1x1x16x128xf32>
    %48 = vector.shape_cast %47 : vector<1x1x16x128xf32> to vector<16x128xf32>
    %c255 = arith.constant 255 : index
    %c0_66 = arith.constant 0 : index
    %49 = vector.load %arg7[%c255, %c0_66] : memref<312x128xf32, #tpu.memory_space<vmem>>, vector<16x128xf32>
    tpu.vector_store %arg7[%c255, %c0_66], %48 {strides = array<i32>} : memref<312x128xf32, #tpu.memory_space<vmem>>, vector<16x128xf32>,
    %50 = tpu.iota {dimensions = array<i32: 0>} : vector<289x128xi32>
    %51 = arith.sitofp %50 : vector<289x128xi32> to vector<289x128xf32>
    %cst_67 = arith.constant 5.000000e-01 : f32
    %52 = vector.broadcast %cst_67 : f32 to vector<289x128xf32>
    %53 = arith.addf %51, %52 : vector<289x128xf32>
    %cst_68 = arith.constant 0.0588235296 : f32
    %54 = vector.broadcast %cst_68 : f32 to vector<289x128xf32>
    %55 = arith.mulf %53, %54 : vector<289x128xf32>
    %56 = math.floor %55 : vector<289x128xf32>
    %cst_69 = arith.constant 1.700000e+01 : f32
    %57 = vector.broadcast %cst_69 : f32 to vector<289x128xf32>
    %58 = arith.mulf %56, %57 : vector<289x128xf32>
    %59 = arith.subf %51, %58 : vector<289x128xf32>
    %cst_70 = arith.constant 1.550000e+01 : f32
    %60 = vector.broadcast %cst_70 : f32 to vector<289x128xf32>
    %61 = arith.cmpf olt, %56, %60 : vector<289x128xf32>
    %cst_71 = arith.constant 1.550000e+01 : f32
    %62 = vector.broadcast %cst_71 : f32 to vector<289x128xf32>
    %63 = arith.cmpf olt, %59, %62 : vector<289x128xf32>
    %64 = arith.andi %61, %63 : vector<289x128xi1>
    %cst_72 = arith.constant 1.000000e+00 : f32
    %cst_73 = arith.constant 0.000000e+00 : f32
    %65 = vector.broadcast %cst_72 : f32 to vector<289x128xf32>
    %66 = vector.broadcast %cst_73 : f32 to vector<289x128xf32>
    %67 = arith.select %64, %65, %66 : vector<289x128xi1>, vector<289x128xf32>
    %c0_74 = arith.constant 0 : index
    %c0_75 = arith.constant 0 : index
    %68 = vector.load %arg7[%c0_74, %c0_75] : memref<312x128xf32, #tpu.memory_space<vmem>>, vector<289x128xf32>
    %69 = arith.truncf %68 : vector<289x128xf32> to vector<289x128xbf16>
    %c1_76 = arith.constant 1 : index
    %c0_77 = arith.constant 0 : index
    %70 = vector.load %arg7[%c1_76, %c0_77] : memref<312x128xf32, #tpu.memory_space<vmem>>, vector<289x128xf32>
    %71 = arith.truncf %70 : vector<289x128xf32> to vector<289x128xbf16>
    %c17_78 = arith.constant 17 : index
    %c0_79 = arith.constant 0 : index
    %72 = vector.load %arg7[%c17_78, %c0_79] : memref<312x128xf32, #tpu.memory_space<vmem>>, vector<289x128xf32>
    %73 = arith.truncf %72 : vector<289x128xf32> to vector<289x128xbf16>
    %c18 = arith.constant 18 : index
    %c0_80 = arith.constant 0 : index
    %74 = vector.load %arg7[%c18, %c0_80] : memref<312x128xf32, #tpu.memory_space<vmem>>, vector<289x128xf32>
    %75 = arith.truncf %74 : vector<289x128xf32> to vector<289x128xbf16>
    %76 = tpu.concatenate %69, %71, %73, %75 in 1 : vector<289x128xbf16>, vector<289x128xbf16>, vector<289x128xbf16>, vector<289x128xbf16> -> vector<289x512xbf16>
    %c0_81 = arith.constant 0 : index
    %c0_82 = arith.constant 0 : index
    %c0_83 = arith.constant 0 : index
    %c0_84 = arith.constant 0 : index
    %77 = vector.load %arg2[%c0_81, %c0_82, %c0_83, %c0_84] : memref<3x3x512x128xbf16, #tpu.memory_space<vmem>>, vector<1x1x512x128xbf16>
    %78 = vector.shape_cast %77 : vector<1x1x512x128xbf16> to vector<512x128xbf16>
    %cst_85 = arith.constant dense<0.000000e+00> : vector<289x128xf32>
    %79 = tpu.matmul %76, %78, %cst_85 {dimension_numbers = #tpu.dot_dimension_numbers<[1], [0], [0], [1], [0, 0, 1, 1], [], []>} : vector<289x512xbf16>, vector<512x128xbf16>, vector<289x128xf32> -> vector<289x128xf32>
    %c0_86 = arith.constant 0 : index
    %c0_87 = arith.constant 0 : index
    %c0_88 = arith.constant 0 : index
    %c0_89 = arith.constant 0 : index
    %80 = vector.load %arg3[%c0_86, %c0_87, %c0_88, %c0_89] : memref<3x3x1x128xf32, #tpu.memory_space<vmem>>, vector<1x1x1x128xf32>
    %81 = vector.shape_cast %80 : vector<1x1x1x128xf32> to vector<1x128xf32>
    %82 = vector.broadcast %81 : vector<1x128xf32> to vector<289x128xf32>
    %83 = arith.addf %79, %82 : vector<289x128xf32>
    %cst_90 = arith.constant 0.000000e+00 : f32
    %84 = vector.broadcast %cst_90 : f32 to vector<289x128xf32>
    %85 = arith.maximumf %83, %84 : vector<289x128xf32>
    %86 = arith.mulf %85, %67 : vector<289x128xf32>
    %c0_91 = arith.constant 0 : index
    %c0_92 = arith.constant 0 : index
    %87 = vector.load %arg7[%c0_91, %c0_92] : memref<312x128xf32, #tpu.memory_space<vmem>>, vector<289x128xf32>
    %88 = arith.addf %87, %86 : vector<289x128xf32>
    %c0_93 = arith.constant 0 : index
    %c0_94 = arith.constant 0 : index
    %89 = vector.load %arg7[%c0_93, %c0_94] : memref<312x128xf32, #tpu.memory_space<vmem>>, vector<289x128xf32>
    tpu.vector_store %arg7[%c0_93, %c0_94], %88 {strides = array<i32>} : memref<312x128xf32, #tpu.memory_space<vmem>>, vector<289x128xf32>,
    %c0_95 = arith.constant 0 : index
    %c0_96 = arith.constant 0 : index
    %90 = vector.load %arg7[%c0_95, %c0_96] : memref<312x128xf32, #tpu.memory_space<vmem>>, vector<289x128xf32>
    %91 = arith.truncf %90 : vector<289x128xf32> to vector<289x128xbf16>
    %c1_97 = arith.constant 1 : index
    %c0_98 = arith.constant 0 : index
    %92 = vector.load %arg7[%c1_97, %c0_98] : memref<312x128xf32, #tpu.memory_space<vmem>>, vector<289x128xf32>
    %93 = arith.truncf %92 : vector<289x128xf32> to vector<289x128xbf16>
    %c17_99 = arith.constant 17 : index
    %c0_100 = arith.constant 0 : index
    %94 = vector.load %arg7[%c17_99, %c0_100] : memref<312x128xf32, #tpu.memory_space<vmem>>, vector<289x128xf32>
    %95 = arith.truncf %94 : vector<289x128xf32> to vector<289x128xbf16>
    %c18_101 = arith.constant 18 : index
    %c0_102 = arith.constant 0 : index
    %96 = vector.load %arg7[%c18_101, %c0_102] : memref<312x128xf32, #tpu.memory_space<vmem>>, vector<289x128xf32>
    %97 = arith.truncf %96 : vector<289x128xf32> to vector<289x128xbf16>
    %98 = tpu.concatenate %91, %93, %95, %97 in 1 : vector<289x128xbf16>, vector<289x128xbf16>, vector<289x128xbf16>, vector<289x128xbf16> -> vector<289x512xbf16>
    %c0_103 = arith.constant 0 : index
    %c1_104 = arith.constant 1 : index
    %c0_105 = arith.constant 0 : index
    %c0_106 = arith.constant 0 : index
    %99 = vector.load %arg2[%c0_103, %c1_104, %c0_105, %c0_106] : memref<3x3x512x128xbf16, #tpu.memory_space<vmem>>, vector<1x1x512x128xbf16>
    %100 = vector.shape_cast %99 : vector<1x1x512x128xbf16> to vector<512x128xbf16>
    %cst_107 = arith.constant dense<0.000000e+00> : vector<289x128xf32>
    %101 = tpu.matmul %98, %100, %cst_107 {dimension_numbers = #tpu.dot_dimension_numbers<[1], [0], [0], [1], [0, 0, 1, 1], [], []>} : vector<289x512xbf16>, vector<512x128xbf16>, vector<289x128xf32> -> vector<289x128xf32>
    %c0_108 = arith.constant 0 : index
    %c1_109 = arith.constant 1 : index
    %c0_110 = arith.constant 0 : index
    %c0_111 = arith.constant 0 : index
    %102 = vector.load %arg3[%c0_108, %c1_109, %c0_110, %c0_111] : memref<3x3x1x128xf32, #tpu.memory_space<vmem>>, vector<1x1x1x128xf32>
    %103 = vector.shape_cast %102 : vector<1x1x1x128xf32> to vector<1x128xf32>
    %104 = vector.broadcast %103 : vector<1x128xf32> to vector<289x128xf32>
    %105 = arith.addf %101, %104 : vector<289x128xf32>
    %cst_112 = arith.constant 0.000000e+00 : f32
    %106 = vector.broadcast %cst_112 : f32 to vector<289x128xf32>
    %107 = arith.maximumf %105, %106 : vector<289x128xf32>
    %108 = arith.mulf %107, %67 : vector<289x128xf32>
    %c0_113 = arith.constant 0 : index
    %c0_114 = arith.constant 0 : index
    %109 = vector.load %arg7[%c0_113, %c0_114] : memref<312x128xf32, #tpu.memory_space<vmem>>, vector<289x128xf32>
    %110 = arith.addf %109, %108 : vector<289x128xf32>
    %c0_115 = arith.constant 0 : index
    %c0_116 = arith.constant 0 : index
    %111 = vector.load %arg7[%c0_115, %c0_116] : memref<312x128xf32, #tpu.memory_space<vmem>>, vector<289x128xf32>
    tpu.vector_store %arg7[%c0_115, %c0_116], %110 {strides = array<i32>} : memref<312x128xf32, #tpu.memory_space<vmem>>, vector<289x128xf32>,
    %c0_117 = arith.constant 0 : index
    %c0_118 = arith.constant 0 : index
    %112 = vector.load %arg7[%c0_117, %c0_118] : memref<312x128xf32, #tpu.memory_space<vmem>>, vector<289x128xf32>
    %113 = arith.truncf %112 : vector<289x128xf32> to vector<289x128xbf16>
    %c1_119 = arith.constant 1 : index
    %c0_120 = arith.constant 0 : index
    %114 = vector.load %arg7[%c1_119, %c0_120] : memref<312x128xf32, #tpu.memory_space<vmem>>, vector<289x128xf32>
    %115 = arith.truncf %114 : vector<289x128xf32> to vector<289x128xbf16>
    %c17_121 = arith.constant 17 : index
    %c0_122 = arith.constant 0 : index
    %116 = vector.load %arg7[%c17_121, %c0_122] : memref<312x128xf32, #tpu.memory_space<vmem>>, vector<289x128xf32>
    %117 = arith.truncf %116 : vector<289x128xf32> to vector<289x128xbf16>
    %c18_123 = arith.constant 18 : index
    %c0_124 = arith.constant 0 : index
    %118 = vector.load %arg7[%c18_123, %c0_124] : memref<312x128xf32, #tpu.memory_space<vmem>>, vector<289x128xf32>
    %119 = arith.truncf %118 : vector<289x128xf32> to vector<289x128xbf16>
    %120 = tpu.concatenate %113, %115, %117, %119 in 1 : vector<289x128xbf16>, vector<289x128xbf16>, vector<289x128xbf16>, vector<289x128xbf16> -> vector<289x512xbf16>
    %c0_125 = arith.constant 0 : index
    %c2_126 = arith.constant 2 : index
    %c0_127 = arith.constant 0 : index
    %c0_128 = arith.constant 0 : index
    %121 = vector.load %arg2[%c0_125, %c2_126, %c0_127, %c0_128] : memref<3x3x512x128xbf16, #tpu.memory_space<vmem>>, vector<1x1x512x128xbf16>
    %122 = vector.shape_cast %121 : vector<1x1x512x128xbf16> to vector<512x128xbf16>
    %cst_129 = arith.constant dense<0.000000e+00> : vector<289x128xf32>
    %123 = tpu.matmul %120, %122, %cst_129 {dimension_numbers = #tpu.dot_dimension_numbers<[1], [0], [0], [1], [0, 0, 1, 1], [], []>} : vector<289x512xbf16>, vector<512x128xbf16>, vector<289x128xf32> -> vector<289x128xf32>
    %c0_130 = arith.constant 0 : index
    %c2_131 = arith.constant 2 : index
    %c0_132 = arith.constant 0 : index
    %c0_133 = arith.constant 0 : index
    %124 = vector.load %arg3[%c0_130, %c2_131, %c0_132, %c0_133] : memref<3x3x1x128xf32, #tpu.memory_space<vmem>>, vector<1x1x1x128xf32>
    %125 = vector.shape_cast %124 : vector<1x1x1x128xf32> to vector<1x128xf32>
    %126 = vector.broadcast %125 : vector<1x128xf32> to vector<289x128xf32>
    %127 = arith.addf %123, %126 : vector<289x128xf32>
    %cst_134 = arith.constant 0.000000e+00 : f32
    %128 = vector.broadcast %cst_134 : f32 to vector<289x128xf32>
    %129 = arith.maximumf %127, %128 : vector<289x128xf32>
    %130 = arith.mulf %129, %67 : vector<289x128xf32>
    %c0_135 = arith.constant 0 : index
    %c0_136 = arith.constant 0 : index
    %131 = vector.load %arg7[%c0_135, %c0_136] : memref<312x128xf32, #tpu.memory_space<vmem>>, vector<289x128xf32>
    %132 = arith.addf %131, %130 : vector<289x128xf32>
    %c0_137 = arith.constant 0 : index
    %c0_138 = arith.constant 0 : index
    %133 = vector.load %arg7[%c0_137, %c0_138] : memref<312x128xf32, #tpu.memory_space<vmem>>, vector<289x128xf32>
    tpu.vector_store %arg7[%c0_137, %c0_138], %132 {strides = array<i32>} : memref<312x128xf32, #tpu.memory_space<vmem>>, vector<289x128xf32>,
    %c0_139 = arith.constant 0 : index
    %c0_140 = arith.constant 0 : index
    %134 = vector.load %arg7[%c0_139, %c0_140] : memref<312x128xf32, #tpu.memory_space<vmem>>, vector<289x128xf32>
    %135 = arith.truncf %134 : vector<289x128xf32> to vector<289x128xbf16>
    %c0_141 = arith.constant 0 : index
    %c0_142 = arith.constant 0 : index
    %c0_143 = arith.constant 0 : index
    %136 = vector.load %arg4[%c0_141, %c0_142, %c0_143] : memref<3x128x128xbf16, #tpu.memory_space<vmem>>, vector<1x128x128xbf16>
    %137 = vector.shape_cast %136 : vector<1x128x128xbf16> to vector<128x128xbf16>
    %cst_144 = arith.constant dense<0.000000e+00> : vector<289x128xf32>
    %138 = tpu.matmul %135, %137, %cst_144 {dimension_numbers = #tpu.dot_dimension_numbers<[1], [0], [0], [1], [0, 0, 1, 1], [], []>} : vector<289x128xbf16>, vector<128x128xbf16>, vector<289x128xf32> -> vector<289x128xf32>
    %c0_145 = arith.constant 0 : index
    %c0_146 = arith.constant 0 : index
    %c0_147 = arith.constant 0 : index
    %139 = vector.load %arg5[%c0_145, %c0_146, %c0_147] : memref<3x1x128xf32, #tpu.memory_space<vmem>>, vector<1x1x128xf32>
    %140 = vector.shape_cast %139 : vector<1x1x128xf32> to vector<1x128xf32>
    %141 = vector.broadcast %140 : vector<1x128xf32> to vector<289x128xf32>
    %142 = arith.addf %138, %141 : vector<289x128xf32>
    %c0_148 = arith.constant 0 : index
    %c0_149 = arith.constant 0 : index
    %143 = vector.load %arg7[%c0_148, %c0_149] : memref<312x128xf32, #tpu.memory_space<vmem>>, vector<289x128xf32>
    tpu.vector_store %arg7[%c0_148, %c0_149], %142 {strides = array<i32>} : memref<312x128xf32, #tpu.memory_space<vmem>>, vector<289x128xf32>,
    %cst_150 = arith.constant 0.000000e+00 : f32
    %144 = vector.broadcast %cst_150 : f32 to vector<96x128xf32>
    %c0_151 = arith.constant 0 : index
    %c0_152 = arith.constant 0 : index
    %145 = vector.load %arg8[%c0_151, %c0_152] : memref<96x128xf32, #tpu.memory_space<vmem>>, vector<96x128xf32>
    tpu.vector_store %arg8[%c0_151, %c0_152], %144 {strides = array<i32>} : memref<96x128xf32, #tpu.memory_space<vmem>>, vector<96x128xf32>,
    %c0_153 = arith.constant 0 : index
    %c0_154 = arith.constant 0 : index
    %146 = tpu.strided_load %arg7[%c0_153, %c0_154] {strides = array<i32: 2, 1>} : memref<312x128xf32, #tpu.memory_space<vmem>>, vector<8x128xf32>
    %c1_155 = arith.constant 1 : index
    %c0_156 = arith.constant 0 : index
    %147 = tpu.strided_load %arg7[%c1_155, %c0_156] {strides = array<i32: 2, 1>} : memref<312x128xf32, #tpu.memory_space<vmem>>, vector<8x128xf32>
    %148 = arith.maximumf %146, %147 : vector<8x128xf32>
    %c17_157 = arith.constant 17 : index
    %c0_158 = arith.constant 0 : index
    %149 = tpu.strided_load %arg7[%c17_157, %c0_158] {strides = array<i32: 2, 1>} : memref<312x128xf32, #tpu.memory_space<vmem>>, vector<8x128xf32>
    %c18_159 = arith.constant 18 : index
    %c0_160 = arith.constant 0 : index
    %150 = tpu.strided_load %arg7[%c18_159, %c0_160] {strides = array<i32: 2, 1>} : memref<312x128xf32, #tpu.memory_space<vmem>>, vector<8x128xf32>
    %151 = arith.maximumf %149, %150 : vector<8x128xf32>
    %152 = arith.maximumf %148, %151 : vector<8x128xf32>
    %c0_161 = arith.constant 0 : index
    %c0_162 = arith.constant 0 : index
    %153 = vector.load %arg8[%c0_161, %c0_162] : memref<96x128xf32, #tpu.memory_space<vmem>>, vector<8x128xf32>
    tpu.vector_store %arg8[%c0_161, %c0_162], %152 {strides = array<i32>} : memref<96x128xf32, #tpu.memory_space<vmem>>, vector<8x128xf32>,
    %c34_163 = arith.constant 34 : index
    %c0_164 = arith.constant 0 : index
    %154 = tpu.strided_load %arg7[%c34_163, %c0_164] {strides = array<i32: 2, 1>} : memref<312x128xf32, #tpu.memory_space<vmem>>, vector<8x128xf32>
    %c35 = arith.constant 35 : index
    %c0_165 = arith.constant 0 : index
    %155 = tpu.strided_load %arg7[%c35, %c0_165] {strides = array<i32: 2, 1>} : memref<312x128xf32, #tpu.memory_space<vmem>>, vector<8x128xf32>
    %156 = arith.maximumf %154, %155 : vector<8x128xf32>
    %c51_166 = arith.constant 51 : index
    %c0_167 = arith.constant 0 : index
    %157 = tpu.strided_load %arg7[%c51_166, %c0_167] {strides = array<i32: 2, 1>} : memref<312x128xf32, #tpu.memory_space<vmem>>, vector<8x128xf32>
    %c52 = arith.constant 52 : index
    %c0_168 = arith.constant 0 : index
    %158 = tpu.strided_load %arg7[%c52, %c0_168] {strides = array<i32: 2, 1>} : memref<312x128xf32, #tpu.memory_space<vmem>>, vector<8x128xf32>
    %159 = arith.maximumf %157, %158 : vector<8x128xf32>
    %160 = arith.maximumf %156, %159 : vector<8x128xf32>
    %c9_169 = arith.constant 9 : index
    %c0_170 = arith.constant 0 : index
    %161 = vector.load %arg8[%c9_169, %c0_170] : memref<96x128xf32, #tpu.memory_space<vmem>>, vector<8x128xf32>
    tpu.vector_store %arg8[%c9_169, %c0_170], %160 {strides = array<i32>} : memref<96x128xf32, #tpu.memory_space<vmem>>, vector<8x128xf32>,
    %c68_171 = arith.constant 68 : index
    %c0_172 = arith.constant 0 : index
    %162 = tpu.strided_load %arg7[%c68_171, %c0_172] {strides = array<i32: 2, 1>} : memref<312x128xf32, #tpu.memory_space<vmem>>, vector<8x128xf32>
    %c69 = arith.constant 69 : index
    %c0_173 = arith.constant 0 : index
    %163 = tpu.strided_load %arg7[%c69, %c0_173] {strides = array<i32: 2, 1>} : memref<312x128xf32, #tpu.memory_space<vmem>>, vector<8x128xf32>
    %164 = arith.maximumf %162, %163 : vector<8x128xf32>
    %c85_174 = arith.constant 85 : index
    %c0_175 = arith.constant 0 : index
    %165 = tpu.strided_load %arg7[%c85_174, %c0_175] {strides = array<i32: 2, 1>} : memref<312x128xf32, #tpu.memory_space<vmem>>, vector<8x128xf32>
    %c86 = arith.constant 86 : index
    %c0_176 = arith.constant 0 : index
    %166 = tpu.strided_load %arg7[%c86, %c0_176] {strides = array<i32: 2, 1>} : memref<312x128xf32, #tpu.memory_space<vmem>>, vector<8x128xf32>
    %167 = arith.maximumf %165, %166 : vector<8x128xf32>
    %168 = arith.maximumf %164, %167 : vector<8x128xf32>
    %c18_177 = arith.constant 18 : index
    %c0_178 = arith.constant 0 : index
    %169 = vector.load %arg8[%c18_177, %c0_178] : memref<96x128xf32, #tpu.memory_space<vmem>>, vector<8x128xf32>
    tpu.vector_store %arg8[%c18_177, %c0_178], %168 {strides = array<i32>} : memref<96x128xf32, #tpu.memory_space<vmem>>, vector<8x128xf32>,
    %c102_179 = arith.constant 102 : index
    %c0_180 = arith.constant 0 : index
    %170 = tpu.strided_load %arg7[%c102_179, %c0_180] {strides = array<i32: 2, 1>} : memref<312x128xf32, #tpu.memory_space<vmem>>, vector<8x128xf32>
    %c103 = arith.constant 103 : index
    %c0_181 = arith.constant 0 : index
    %171 = tpu.strided_load %arg7[%c103, %c0_181] {strides = array<i32: 2, 1>} : memref<312x128xf32, #tpu.memory_space<vmem>>, vector<8x128xf32>
    %172 = arith.maximumf %170, %171 : vector<8x128xf32>
    %c119_182 = arith.constant 119 : index
    %c0_183 = arith.constant 0 : index
    %173 = tpu.strided_load %arg7[%c119_182, %c0_183] {strides = array<i32: 2, 1>} : memref<312x128xf32, #tpu.memory_space<vmem>>, vector<8x128xf32>
    %c120 = arith.constant 120 : index
    %c0_184 = arith.constant 0 : index
    %174 = tpu.strided_load %arg7[%c120, %c0_184] {strides = array<i32: 2, 1>} : memref<312x128xf32, #tpu.memory_space<vmem>>, vector<8x128xf32>
    %175 = arith.maximumf %173, %174 : vector<8x128xf32>
    %176 = arith.maximumf %172, %175 : vector<8x128xf32>
    %c27 = arith.constant 27 : index
    %c0_185 = arith.constant 0 : index
    %177 = vector.load %arg8[%c27, %c0_185] : memref<96x128xf32, #tpu.memory_space<vmem>>, vector<8x128xf32>
    tpu.vector_store %arg8[%c27, %c0_185], %176 {strides = array<i32>} : memref<96x128xf32, #tpu.memory_space<vmem>>, vector<8x128xf32>,
    %c136_186 = arith.constant 136 : index
    %c0_187 = arith.constant 0 : index
    %178 = tpu.strided_load %arg7[%c136_186, %c0_187] {strides = array<i32: 2, 1>} : memref<312x128xf32, #tpu.memory_space<vmem>>, vector<8x128xf32>
    %c137 = arith.constant 137 : index
    %c0_188 = arith.constant 0 : index
    %179 = tpu.strided_load %arg7[%c137, %c0_188] {strides = array<i32: 2, 1>} : memref<312x128xf32, #tpu.memory_space<vmem>>, vector<8x128xf32>
    %180 = arith.maximumf %178, %179 : vector<8x128xf32>
    %c153_189 = arith.constant 153 : index
    %c0_190 = arith.constant 0 : index
    %181 = tpu.strided_load %arg7[%c153_189, %c0_190] {strides = array<i32: 2, 1>} : memref<312x128xf32, #tpu.memory_space<vmem>>, vector<8x128xf32>
    %c154 = arith.constant 154 : index
    %c0_191 = arith.constant 0 : index
    %182 = tpu.strided_load %arg7[%c154, %c0_191] {strides = array<i32: 2, 1>} : memref<312x128xf32, #tpu.memory_space<vmem>>, vector<8x128xf32>
    %183 = arith.maximumf %181, %182 : vector<8x128xf32>
    %184 = arith.maximumf %180, %183 : vector<8x128xf32>
    %c36 = arith.constant 36 : index
    %c0_192 = arith.constant 0 : index
    %185 = vector.load %arg8[%c36, %c0_192] : memref<96x128xf32, #tpu.memory_space<vmem>>, vector<8x128xf32>
    tpu.vector_store %arg8[%c36, %c0_192], %184 {strides = array<i32>} : memref<96x128xf32, #tpu.memory_space<vmem>>, vector<8x128xf32>,
    %c170_193 = arith.constant 170 : index
    %c0_194 = arith.constant 0 : index
    %186 = tpu.strided_load %arg7[%c170_193, %c0_194] {strides = array<i32: 2, 1>} : memref<312x128xf32, #tpu.memory_space<vmem>>, vector<8x128xf32>
    %c171 = arith.constant 171 : index
    %c0_195 = arith.constant 0 : index
    %187 = tpu.strided_load %arg7[%c171, %c0_195] {strides = array<i32: 2, 1>} : memref<312x128xf32, #tpu.memory_space<vmem>>, vector<8x128xf32>
    %188 = arith.maximumf %186, %187 : vector<8x128xf32>
    %c187_196 = arith.constant 187 : index
    %c0_197 = arith.constant 0 : index
    %189 = tpu.strided_load %arg7[%c187_196, %c0_197] {strides = array<i32: 2, 1>} : memref<312x128xf32, #tpu.memory_space<vmem>>, vector<8x128xf32>
    %c188 = arith.constant 188 : index
    %c0_198 = arith.constant 0 : index
    %190 = tpu.strided_load %arg7[%c188, %c0_198] {strides = array<i32: 2, 1>} : memref<312x128xf32, #tpu.memory_space<vmem>>, vector<8x128xf32>
    %191 = arith.maximumf %189, %190 : vector<8x128xf32>
    %192 = arith.maximumf %188, %191 : vector<8x128xf32>
    %c45 = arith.constant 45 : index
    %c0_199 = arith.constant 0 : index
    %193 = vector.load %arg8[%c45, %c0_199] : memref<96x128xf32, #tpu.memory_space<vmem>>, vector<8x128xf32>
    tpu.vector_store %arg8[%c45, %c0_199], %192 {strides = array<i32>} : memref<96x128xf32, #tpu.memory_space<vmem>>, vector<8x128xf32>,
    %c204_200 = arith.constant 204 : index
    %c0_201 = arith.constant 0 : index
    %194 = tpu.strided_load %arg7[%c204_200, %c0_201] {strides = array<i32: 2, 1>} : memref<312x128xf32, #tpu.memory_space<vmem>>, vector<8x128xf32>
    %c205 = arith.constant 205 : index
    %c0_202 = arith.constant 0 : index
    %195 = tpu.strided_load %arg7[%c205, %c0_202] {strides = array<i32: 2, 1>} : memref<312x128xf32, #tpu.memory_space<vmem>>, vector<8x128xf32>
    %196 = arith.maximumf %194, %195 : vector<8x128xf32>
    %c221_203 = arith.constant 221 : index
    %c0_204 = arith.constant 0 : index
    %197 = tpu.strided_load %arg7[%c221_203, %c0_204] {strides = array<i32: 2, 1>} : memref<312x128xf32, #tpu.memory_space<vmem>>, vector<8x128xf32>
    %c222 = arith.constant 222 : index
    %c0_205 = arith.constant 0 : index
    %198 = tpu.strided_load %arg7[%c222, %c0_205] {strides = array<i32: 2, 1>} : memref<312x128xf32, #tpu.memory_space<vmem>>, vector<8x128xf32>
    %199 = arith.maximumf %197, %198 : vector<8x128xf32>
    %200 = arith.maximumf %196, %199 : vector<8x128xf32>
    %c54 = arith.constant 54 : index
    %c0_206 = arith.constant 0 : index
    %201 = vector.load %arg8[%c54, %c0_206] : memref<96x128xf32, #tpu.memory_space<vmem>>, vector<8x128xf32>
    tpu.vector_store %arg8[%c54, %c0_206], %200 {strides = array<i32>} : memref<96x128xf32, #tpu.memory_space<vmem>>, vector<8x128xf32>,
    %c238_207 = arith.constant 238 : index
    %c0_208 = arith.constant 0 : index
    %202 = tpu.strided_load %arg7[%c238_207, %c0_208] {strides = array<i32: 2, 1>} : memref<312x128xf32, #tpu.memory_space<vmem>>, vector<8x128xf32>
    %c239 = arith.constant 239 : index
    %c0_209 = arith.constant 0 : index
    %203 = tpu.strided_load %arg7[%c239, %c0_209] {strides = array<i32: 2, 1>} : memref<312x128xf32, #tpu.memory_space<vmem>>, vector<8x128xf32>
    %204 = arith.maximumf %202, %203 : vector<8x128xf32>
    %c255_210 = arith.constant 255 : index
    %c0_211 = arith.constant 0 : index
    %205 = tpu.strided_load %arg7[%c255_210, %c0_211] {strides = array<i32: 2, 1>} : memref<312x128xf32, #tpu.memory_space<vmem>>, vector<8x128xf32>
    %c256 = arith.constant 256 : index
    %c0_212 = arith.constant 0 : index
    %206 = tpu.strided_load %arg7[%c256, %c0_212] {strides = array<i32: 2, 1>} : memref<312x128xf32, #tpu.memory_space<vmem>>, vector<8x128xf32>
    %207 = arith.maximumf %205, %206 : vector<8x128xf32>
    %208 = arith.maximumf %204, %207 : vector<8x128xf32>
    %c63 = arith.constant 63 : index
    %c0_213 = arith.constant 0 : index
    %209 = vector.load %arg8[%c63, %c0_213] : memref<96x128xf32, #tpu.memory_space<vmem>>, vector<8x128xf32>
    tpu.vector_store %arg8[%c63, %c0_213], %208 {strides = array<i32>} : memref<96x128xf32, #tpu.memory_space<vmem>>, vector<8x128xf32>,
    %210 = tpu.iota {dimensions = array<i32: 0>} : vector<81x128xi32>
    %211 = arith.sitofp %210 : vector<81x128xi32> to vector<81x128xf32>
    %cst_214 = arith.constant 5.000000e-01 : f32
    %212 = vector.broadcast %cst_214 : f32 to vector<81x128xf32>
    %213 = arith.addf %211, %212 : vector<81x128xf32>
    %cst_215 = arith.constant 0.111111112 : f32
    %214 = vector.broadcast %cst_215 : f32 to vector<81x128xf32>
    %215 = arith.mulf %213, %214 : vector<81x128xf32>
    %216 = math.floor %215 : vector<81x128xf32>
    %cst_216 = arith.constant 9.000000e+00 : f32
    %217 = vector.broadcast %cst_216 : f32 to vector<81x128xf32>
    %218 = arith.mulf %216, %217 : vector<81x128xf32>
    %219 = arith.subf %211, %218 : vector<81x128xf32>
    %cst_217 = arith.constant 7.500000e+00 : f32
    %220 = vector.broadcast %cst_217 : f32 to vector<81x128xf32>
    %221 = arith.cmpf olt, %216, %220 : vector<81x128xf32>
    %cst_218 = arith.constant 7.500000e+00 : f32
    %222 = vector.broadcast %cst_218 : f32 to vector<81x128xf32>
    %223 = arith.cmpf olt, %219, %222 : vector<81x128xf32>
    %224 = arith.andi %221, %223 : vector<81x128xi1>
    %cst_219 = arith.constant 1.000000e+00 : f32
    %cst_220 = arith.constant 0.000000e+00 : f32
    %225 = vector.broadcast %cst_219 : f32 to vector<81x128xf32>
    %226 = vector.broadcast %cst_220 : f32 to vector<81x128xf32>
    %227 = arith.select %224, %225, %226 : vector<81x128xi1>, vector<81x128xf32>
    %c0_221 = arith.constant 0 : index
    %c0_222 = arith.constant 0 : index
    %228 = vector.load %arg8[%c0_221, %c0_222] : memref<96x128xf32, #tpu.memory_space<vmem>>, vector<81x128xf32>
    %229 = arith.truncf %228 : vector<81x128xf32> to vector<81x128xbf16>
    %c1_223 = arith.constant 1 : index
    %c0_224 = arith.constant 0 : index
    %230 = vector.load %arg8[%c1_223, %c0_224] : memref<96x128xf32, #tpu.memory_space<vmem>>, vector<81x128xf32>
    %231 = arith.truncf %230 : vector<81x128xf32> to vector<81x128xbf16>
    %c9_225 = arith.constant 9 : index
    %c0_226 = arith.constant 0 : index
    %232 = vector.load %arg8[%c9_225, %c0_226] : memref<96x128xf32, #tpu.memory_space<vmem>>, vector<81x128xf32>
    %233 = arith.truncf %232 : vector<81x128xf32> to vector<81x128xbf16>
    %c10_227 = arith.constant 10 : index
    %c0_228 = arith.constant 0 : index
    %234 = vector.load %arg8[%c10_227, %c0_228] : memref<96x128xf32, #tpu.memory_space<vmem>>, vector<81x128xf32>
    %235 = arith.truncf %234 : vector<81x128xf32> to vector<81x128xbf16>
    %236 = tpu.concatenate %229, %231, %233, %235 in 1 : vector<81x128xbf16>, vector<81x128xbf16>, vector<81x128xbf16>, vector<81x128xbf16> -> vector<81x512xbf16>
    %c1_229 = arith.constant 1 : index
    %c0_230 = arith.constant 0 : index
    %c0_231 = arith.constant 0 : index
    %c0_232 = arith.constant 0 : index
    %237 = vector.load %arg2[%c1_229, %c0_230, %c0_231, %c0_232] : memref<3x3x512x128xbf16, #tpu.memory_space<vmem>>, vector<1x1x512x128xbf16>
    %238 = vector.shape_cast %237 : vector<1x1x512x128xbf16> to vector<512x128xbf16>
    %cst_233 = arith.constant dense<0.000000e+00> : vector<81x128xf32>
    %239 = tpu.matmul %236, %238, %cst_233 {dimension_numbers = #tpu.dot_dimension_numbers<[1], [0], [0], [1], [0, 0, 1, 1], [], []>} : vector<81x512xbf16>, vector<512x128xbf16>, vector<81x128xf32> -> vector<81x128xf32>
    %c1_234 = arith.constant 1 : index
    %c0_235 = arith.constant 0 : index
    %c0_236 = arith.constant 0 : index
    %c0_237 = arith.constant 0 : index
    %240 = vector.load %arg3[%c1_234, %c0_235, %c0_236, %c0_237] : memref<3x3x1x128xf32, #tpu.memory_space<vmem>>, vector<1x1x1x128xf32>
    %241 = vector.shape_cast %240 : vector<1x1x1x128xf32> to vector<1x128xf32>
    %242 = vector.broadcast %241 : vector<1x128xf32> to vector<81x128xf32>
    %243 = arith.addf %239, %242 : vector<81x128xf32>
    %cst_238 = arith.constant 0.000000e+00 : f32
    %244 = vector.broadcast %cst_238 : f32 to vector<81x128xf32>
    %245 = arith.maximumf %243, %244 : vector<81x128xf32>
    %246 = arith.mulf %245, %227 : vector<81x128xf32>
    %c0_239 = arith.constant 0 : index
    %c0_240 = arith.constant 0 : index
    %247 = vector.load %arg8[%c0_239, %c0_240] : memref<96x128xf32, #tpu.memory_space<vmem>>, vector<81x128xf32>
    %248 = arith.addf %247, %246 : vector<81x128xf32>
    %c0_241 = arith.constant 0 : index
    %c0_242 = arith.constant 0 : index
    %249 = vector.load %arg8[%c0_241, %c0_242] : memref<96x128xf32, #tpu.memory_space<vmem>>, vector<81x128xf32>
    tpu.vector_store %arg8[%c0_241, %c0_242], %248 {strides = array<i32>} : memref<96x128xf32, #tpu.memory_space<vmem>>, vector<81x128xf32>,
    %c0_243 = arith.constant 0 : index
    %c0_244 = arith.constant 0 : index
    %250 = vector.load %arg8[%c0_243, %c0_244] : memref<96x128xf32, #tpu.memory_space<vmem>>, vector<81x128xf32>
    %251 = arith.truncf %250 : vector<81x128xf32> to vector<81x128xbf16>
    %c1_245 = arith.constant 1 : index
    %c0_246 = arith.constant 0 : index
    %252 = vector.load %arg8[%c1_245, %c0_246] : memref<96x128xf32, #tpu.memory_space<vmem>>, vector<81x128xf32>
    %253 = arith.truncf %252 : vector<81x128xf32> to vector<81x128xbf16>
    %c9_247 = arith.constant 9 : index
    %c0_248 = arith.constant 0 : index
    %254 = vector.load %arg8[%c9_247, %c0_248] : memref<96x128xf32, #tpu.memory_space<vmem>>, vector<81x128xf32>
    %255 = arith.truncf %254 : vector<81x128xf32> to vector<81x128xbf16>
    %c10_249 = arith.constant 10 : index
    %c0_250 = arith.constant 0 : index
    %256 = vector.load %arg8[%c10_249, %c0_250] : memref<96x128xf32, #tpu.memory_space<vmem>>, vector<81x128xf32>
    %257 = arith.truncf %256 : vector<81x128xf32> to vector<81x128xbf16>
    %258 = tpu.concatenate %251, %253, %255, %257 in 1 : vector<81x128xbf16>, vector<81x128xbf16>, vector<81x128xbf16>, vector<81x128xbf16> -> vector<81x512xbf16>
    %c1_251 = arith.constant 1 : index
    %c1_252 = arith.constant 1 : index
    %c0_253 = arith.constant 0 : index
    %c0_254 = arith.constant 0 : index
    %259 = vector.load %arg2[%c1_251, %c1_252, %c0_253, %c0_254] : memref<3x3x512x128xbf16, #tpu.memory_space<vmem>>, vector<1x1x512x128xbf16>
    %260 = vector.shape_cast %259 : vector<1x1x512x128xbf16> to vector<512x128xbf16>
    %cst_255 = arith.constant dense<0.000000e+00> : vector<81x128xf32>
    %261 = tpu.matmul %258, %260, %cst_255 {dimension_numbers = #tpu.dot_dimension_numbers<[1], [0], [0], [1], [0, 0, 1, 1], [], []>} : vector<81x512xbf16>, vector<512x128xbf16>, vector<81x128xf32> -> vector<81x128xf32>
    %c1_256 = arith.constant 1 : index
    %c1_257 = arith.constant 1 : index
    %c0_258 = arith.constant 0 : index
    %c0_259 = arith.constant 0 : index
    %262 = vector.load %arg3[%c1_256, %c1_257, %c0_258, %c0_259] : memref<3x3x1x128xf32, #tpu.memory_space<vmem>>, vector<1x1x1x128xf32>
    %263 = vector.shape_cast %262 : vector<1x1x1x128xf32> to vector<1x128xf32>
    %264 = vector.broadcast %263 : vector<1x128xf32> to vector<81x128xf32>
    %265 = arith.addf %261, %264 : vector<81x128xf32>
    %cst_260 = arith.constant 0.000000e+00 : f32
    %266 = vector.broadcast %cst_260 : f32 to vector<81x128xf32>
    %267 = arith.maximumf %265, %266 : vector<81x128xf32>
    %268 = arith.mulf %267, %227 : vector<81x128xf32>
    %c0_261 = arith.constant 0 : index
    %c0_262 = arith.constant 0 : index
    %269 = vector.load %arg8[%c0_261, %c0_262] : memref<96x128xf32, #tpu.memory_space<vmem>>, vector<81x128xf32>
    %270 = arith.addf %269, %268 : vector<81x128xf32>
    %c0_263 = arith.constant 0 : index
    %c0_264 = arith.constant 0 : index
    %271 = vector.load %arg8[%c0_263, %c0_264] : memref<96x128xf32, #tpu.memory_space<vmem>>, vector<81x128xf32>
    tpu.vector_store %arg8[%c0_263, %c0_264], %270 {strides = array<i32>} : memref<96x128xf32, #tpu.memory_space<vmem>>, vector<81x128xf32>,
    %c0_265 = arith.constant 0 : index
    %c0_266 = arith.constant 0 : index
    %272 = vector.load %arg8[%c0_265, %c0_266] : memref<96x128xf32, #tpu.memory_space<vmem>>, vector<81x128xf32>
    %273 = arith.truncf %272 : vector<81x128xf32> to vector<81x128xbf16>
    %c1_267 = arith.constant 1 : index
    %c0_268 = arith.constant 0 : index
    %274 = vector.load %arg8[%c1_267, %c0_268] : memref<96x128xf32, #tpu.memory_space<vmem>>, vector<81x128xf32>
    %275 = arith.truncf %274 : vector<81x128xf32> to vector<81x128xbf16>
    %c9_269 = arith.constant 9 : index
    %c0_270 = arith.constant 0 : index
    %276 = vector.load %arg8[%c9_269, %c0_270] : memref<96x128xf32, #tpu.memory_space<vmem>>, vector<81x128xf32>
    %277 = arith.truncf %276 : vector<81x128xf32> to vector<81x128xbf16>
    %c10_271 = arith.constant 10 : index
    %c0_272 = arith.constant 0 : index
    %278 = vector.load %arg8[%c10_271, %c0_272] : memref<96x128xf32, #tpu.memory_space<vmem>>, vector<81x128xf32>
    %279 = arith.truncf %278 : vector<81x128xf32> to vector<81x128xbf16>
    %280 = tpu.concatenate %273, %275, %277, %279 in 1 : vector<81x128xbf16>, vector<81x128xbf16>, vector<81x128xbf16>, vector<81x128xbf16> -> vector<81x512xbf16>
    %c1_273 = arith.constant 1 : index
    %c2_274 = arith.constant 2 : index
    %c0_275 = arith.constant 0 : index
    %c0_276 = arith.constant 0 : index
    %281 = vector.load %arg2[%c1_273, %c2_274, %c0_275, %c0_276] : memref<3x3x512x128xbf16, #tpu.memory_space<vmem>>, vector<1x1x512x128xbf16>
    %282 = vector.shape_cast %281 : vector<1x1x512x128xbf16> to vector<512x128xbf16>
    %cst_277 = arith.constant dense<0.000000e+00> : vector<81x128xf32>
    %283 = tpu.matmul %280, %282, %cst_277 {dimension_numbers = #tpu.dot_dimension_numbers<[1], [0], [0], [1], [0, 0, 1, 1], [], []>} : vector<81x512xbf16>, vector<512x128xbf16>, vector<81x128xf32> -> vector<81x128xf32>
    %c1_278 = arith.constant 1 : index
    %c2_279 = arith.constant 2 : index
    %c0_280 = arith.constant 0 : index
    %c0_281 = arith.constant 0 : index
    %284 = vector.load %arg3[%c1_278, %c2_279, %c0_280, %c0_281] : memref<3x3x1x128xf32, #tpu.memory_space<vmem>>, vector<1x1x1x128xf32>
    %285 = vector.shape_cast %284 : vector<1x1x1x128xf32> to vector<1x128xf32>
    %286 = vector.broadcast %285 : vector<1x128xf32> to vector<81x128xf32>
    %287 = arith.addf %283, %286 : vector<81x128xf32>
    %cst_282 = arith.constant 0.000000e+00 : f32
    %288 = vector.broadcast %cst_282 : f32 to vector<81x128xf32>
    %289 = arith.maximumf %287, %288 : vector<81x128xf32>
    %290 = arith.mulf %289, %227 : vector<81x128xf32>
    %c0_283 = arith.constant 0 : index
    %c0_284 = arith.constant 0 : index
    %291 = vector.load %arg8[%c0_283, %c0_284] : memref<96x128xf32, #tpu.memory_space<vmem>>, vector<81x128xf32>
    %292 = arith.addf %291, %290 : vector<81x128xf32>
    %c0_285 = arith.constant 0 : index
    %c0_286 = arith.constant 0 : index
    %293 = vector.load %arg8[%c0_285, %c0_286] : memref<96x128xf32, #tpu.memory_space<vmem>>, vector<81x128xf32>
    tpu.vector_store %arg8[%c0_285, %c0_286], %292 {strides = array<i32>} : memref<96x128xf32, #tpu.memory_space<vmem>>, vector<81x128xf32>,
    %c0_287 = arith.constant 0 : index
    %c0_288 = arith.constant 0 : index
    %294 = vector.load %arg8[%c0_287, %c0_288] : memref<96x128xf32, #tpu.memory_space<vmem>>, vector<81x128xf32>
    %295 = arith.truncf %294 : vector<81x128xf32> to vector<81x128xbf16>
    %c1_289 = arith.constant 1 : index
    %c0_290 = arith.constant 0 : index
    %c0_291 = arith.constant 0 : index
    %296 = vector.load %arg4[%c1_289, %c0_290, %c0_291] : memref<3x128x128xbf16, #tpu.memory_space<vmem>>, vector<1x128x128xbf16>
    %297 = vector.shape_cast %296 : vector<1x128x128xbf16> to vector<128x128xbf16>
    %cst_292 = arith.constant dense<0.000000e+00> : vector<81x128xf32>
    %298 = tpu.matmul %295, %297, %cst_292 {dimension_numbers = #tpu.dot_dimension_numbers<[1], [0], [0], [1], [0, 0, 1, 1], [], []>} : vector<81x128xbf16>, vector<128x128xbf16>, vector<81x128xf32> -> vector<81x128xf32>
    %c1_293 = arith.constant 1 : index
    %c0_294 = arith.constant 0 : index
    %c0_295 = arith.constant 0 : index
    %299 = vector.load %arg5[%c1_293, %c0_294, %c0_295] : memref<3x1x128xf32, #tpu.memory_space<vmem>>, vector<1x1x128xf32>
    %300 = vector.shape_cast %299 : vector<1x1x128xf32> to vector<1x128xf32>
    %301 = vector.broadcast %300 : vector<1x128xf32> to vector<81x128xf32>
    %302 = arith.addf %298, %301 : vector<81x128xf32>
    %c0_296 = arith.constant 0 : index
    %c0_297 = arith.constant 0 : index
    %303 = vector.load %arg8[%c0_296, %c0_297] : memref<96x128xf32, #tpu.memory_space<vmem>>, vector<81x128xf32>
    tpu.vector_store %arg8[%c0_296, %c0_297], %302 {strides = array<i32>} : memref<96x128xf32, #tpu.memory_space<vmem>>, vector<81x128xf32>,
    %cst_298 = arith.constant 0.000000e+00 : f32
    %304 = vector.broadcast %cst_298 : f32 to vector<312x128xf32>
    %c0_299 = arith.constant 0 : index
    %c0_300 = arith.constant 0 : index
    %305 = vector.load %arg7[%c0_299, %c0_300] : memref<312x128xf32, #tpu.memory_space<vmem>>, vector<312x128xf32>
    tpu.vector_store %arg7[%c0_299, %c0_300], %304 {strides = array<i32>} : memref<312x128xf32, #tpu.memory_space<vmem>>, vector<312x128xf32>,
    %c0_301 = arith.constant 0 : index
    %c0_302 = arith.constant 0 : index
    %306 = tpu.strided_load %arg8[%c0_301, %c0_302] {strides = array<i32: 2, 1>} : memref<96x128xf32, #tpu.memory_space<vmem>>, vector<4x128xf32>
    %c1_303 = arith.constant 1 : index
    %c0_304 = arith.constant 0 : index
    %307 = tpu.strided_load %arg8[%c1_303, %c0_304] {strides = array<i32: 2, 1>} : memref<96x128xf32, #tpu.memory_space<vmem>>, vector<4x128xf32>
    %308 = arith.maximumf %306, %307 : vector<4x128xf32>
    %c9_305 = arith.constant 9 : index
    %c0_306 = arith.constant 0 : index
    %309 = tpu.strided_load %arg8[%c9_305, %c0_306] {strides = array<i32: 2, 1>} : memref<96x128xf32, #tpu.memory_space<vmem>>, vector<4x128xf32>
    %c10_307 = arith.constant 10 : index
    %c0_308 = arith.constant 0 : index
    %310 = tpu.strided_load %arg8[%c10_307, %c0_308] {strides = array<i32: 2, 1>} : memref<96x128xf32, #tpu.memory_space<vmem>>, vector<4x128xf32>
    %311 = arith.maximumf %309, %310 : vector<4x128xf32>
    %312 = arith.maximumf %308, %311 : vector<4x128xf32>
    %c0_309 = arith.constant 0 : index
    %c0_310 = arith.constant 0 : index
    %313 = vector.load %arg7[%c0_309, %c0_310] : memref<312x128xf32, #tpu.memory_space<vmem>>, vector<4x128xf32>
    tpu.vector_store %arg7[%c0_309, %c0_310], %312 {strides = array<i32>} : memref<312x128xf32, #tpu.memory_space<vmem>>, vector<4x128xf32>,
    %c18_311 = arith.constant 18 : index
    %c0_312 = arith.constant 0 : index
    %314 = tpu.strided_load %arg8[%c18_311, %c0_312] {strides = array<i32: 2, 1>} : memref<96x128xf32, #tpu.memory_space<vmem>>, vector<4x128xf32>
    %c19 = arith.constant 19 : index
    %c0_313 = arith.constant 0 : index
    %315 = tpu.strided_load %arg8[%c19, %c0_313] {strides = array<i32: 2, 1>} : memref<96x128xf32, #tpu.memory_space<vmem>>, vector<4x128xf32>
    %316 = arith.maximumf %314, %315 : vector<4x128xf32>
    %c27_314 = arith.constant 27 : index
    %c0_315 = arith.constant 0 : index
    %317 = tpu.strided_load %arg8[%c27_314, %c0_315] {strides = array<i32: 2, 1>} : memref<96x128xf32, #tpu.memory_space<vmem>>, vector<4x128xf32>
    %c28 = arith.constant 28 : index
    %c0_316 = arith.constant 0 : index
    %318 = tpu.strided_load %arg8[%c28, %c0_316] {strides = array<i32: 2, 1>} : memref<96x128xf32, #tpu.memory_space<vmem>>, vector<4x128xf32>
    %319 = arith.maximumf %317, %318 : vector<4x128xf32>
    %320 = arith.maximumf %316, %319 : vector<4x128xf32>
    %c5_317 = arith.constant 5 : index
    %c0_318 = arith.constant 0 : index
    %321 = vector.load %arg7[%c5_317, %c0_318] : memref<312x128xf32, #tpu.memory_space<vmem>>, vector<4x128xf32>
    tpu.vector_store %arg7[%c5_317, %c0_318], %320 {strides = array<i32>} : memref<312x128xf32, #tpu.memory_space<vmem>>, vector<4x128xf32>,
    %c36_319 = arith.constant 36 : index
    %c0_320 = arith.constant 0 : index
    %322 = tpu.strided_load %arg8[%c36_319, %c0_320] {strides = array<i32: 2, 1>} : memref<96x128xf32, #tpu.memory_space<vmem>>, vector<4x128xf32>
    %c37 = arith.constant 37 : index
    %c0_321 = arith.constant 0 : index
    %323 = tpu.strided_load %arg8[%c37, %c0_321] {strides = array<i32: 2, 1>} : memref<96x128xf32, #tpu.memory_space<vmem>>, vector<4x128xf32>
    %324 = arith.maximumf %322, %323 : vector<4x128xf32>
    %c45_322 = arith.constant 45 : index
    %c0_323 = arith.constant 0 : index
    %325 = tpu.strided_load %arg8[%c45_322, %c0_323] {strides = array<i32: 2, 1>} : memref<96x128xf32, #tpu.memory_space<vmem>>, vector<4x128xf32>
    %c46 = arith.constant 46 : index
    %c0_324 = arith.constant 0 : index
    %326 = tpu.strided_load %arg8[%c46, %c0_324] {strides = array<i32: 2, 1>} : memref<96x128xf32, #tpu.memory_space<vmem>>, vector<4x128xf32>
    %327 = arith.maximumf %325, %326 : vector<4x128xf32>
    %328 = arith.maximumf %324, %327 : vector<4x128xf32>
    %c10_325 = arith.constant 10 : index
    %c0_326 = arith.constant 0 : index
    %329 = vector.load %arg7[%c10_325, %c0_326] : memref<312x128xf32, #tpu.memory_space<vmem>>, vector<4x128xf32>
    tpu.vector_store %arg7[%c10_325, %c0_326], %328 {strides = array<i32>} : memref<312x128xf32, #tpu.memory_space<vmem>>, vector<4x128xf32>,
    %c54_327 = arith.constant 54 : index
    %c0_328 = arith.constant 0 : index
    %330 = tpu.strided_load %arg8[%c54_327, %c0_328] {strides = array<i32: 2, 1>} : memref<96x128xf32, #tpu.memory_space<vmem>>, vector<4x128xf32>
    %c55 = arith.constant 55 : index
    %c0_329 = arith.constant 0 : index
    %331 = tpu.strided_load %arg8[%c55, %c0_329] {strides = array<i32: 2, 1>} : memref<96x128xf32, #tpu.memory_space<vmem>>, vector<4x128xf32>
    %332 = arith.maximumf %330, %331 : vector<4x128xf32>
    %c63_330 = arith.constant 63 : index
    %c0_331 = arith.constant 0 : index
    %333 = tpu.strided_load %arg8[%c63_330, %c0_331] {strides = array<i32: 2, 1>} : memref<96x128xf32, #tpu.memory_space<vmem>>, vector<4x128xf32>
    %c64 = arith.constant 64 : index
    %c0_332 = arith.constant 0 : index
    %334 = tpu.strided_load %arg8[%c64, %c0_332] {strides = array<i32: 2, 1>} : memref<96x128xf32, #tpu.memory_space<vmem>>, vector<4x128xf32>
    %335 = arith.maximumf %333, %334 : vector<4x128xf32>
    %336 = arith.maximumf %332, %335 : vector<4x128xf32>
    %c15_333 = arith.constant 15 : index
    %c0_334 = arith.constant 0 : index
    %337 = vector.load %arg7[%c15_333, %c0_334] : memref<312x128xf32, #tpu.memory_space<vmem>>, vector<4x128xf32>
    tpu.vector_store %arg7[%c15_333, %c0_334], %336 {strides = array<i32>} : memref<312x128xf32, #tpu.memory_space<vmem>>, vector<4x128xf32>,
    %338 = tpu.iota {dimensions = array<i32: 0>} : vector<25x128xi32>
    %339 = arith.sitofp %338 : vector<25x128xi32> to vector<25x128xf32>
    %cst_335 = arith.constant 5.000000e-01 : f32
    %340 = vector.broadcast %cst_335 : f32 to vector<25x128xf32>
    %341 = arith.addf %339, %340 : vector<25x128xf32>
    %cst_336 = arith.constant 2.000000e-01 : f32
    %342 = vector.broadcast %cst_336 : f32 to vector<25x128xf32>
    %343 = arith.mulf %341, %342 : vector<25x128xf32>
    %344 = math.floor %343 : vector<25x128xf32>
    %cst_337 = arith.constant 5.000000e+00 : f32
    %345 = vector.broadcast %cst_337 : f32 to vector<25x128xf32>
    %346 = arith.mulf %344, %345 : vector<25x128xf32>
    %347 = arith.subf %339, %346 : vector<25x128xf32>
    %cst_338 = arith.constant 3.500000e+00 : f32
    %348 = vector.broadcast %cst_338 : f32 to vector<25x128xf32>
    %349 = arith.cmpf olt, %344, %348 : vector<25x128xf32>
    %cst_339 = arith.constant 3.500000e+00 : f32
    %350 = vector.broadcast %cst_339 : f32 to vector<25x128xf32>
    %351 = arith.cmpf olt, %347, %350 : vector<25x128xf32>
    %352 = arith.andi %349, %351 : vector<25x128xi1>
    %cst_340 = arith.constant 1.000000e+00 : f32
    %cst_341 = arith.constant 0.000000e+00 : f32
    %353 = vector.broadcast %cst_340 : f32 to vector<25x128xf32>
    %354 = vector.broadcast %cst_341 : f32 to vector<25x128xf32>
    %355 = arith.select %352, %353, %354 : vector<25x128xi1>, vector<25x128xf32>
    %c0_342 = arith.constant 0 : index
    %c0_343 = arith.constant 0 : index
    %356 = vector.load %arg7[%c0_342, %c0_343] : memref<312x128xf32, #tpu.memory_space<vmem>>, vector<25x128xf32>
    %357 = arith.truncf %356 : vector<25x128xf32> to vector<25x128xbf16>
    %c1_344 = arith.constant 1 : index
    %c0_345 = arith.constant 0 : index
    %358 = vector.load %arg7[%c1_344, %c0_345] : memref<312x128xf32, #tpu.memory_space<vmem>>, vector<25x128xf32>
    %359 = arith.truncf %358 : vector<25x128xf32> to vector<25x128xbf16>
    %c5_346 = arith.constant 5 : index
    %c0_347 = arith.constant 0 : index
    %360 = vector.load %arg7[%c5_346, %c0_347] : memref<312x128xf32, #tpu.memory_space<vmem>>, vector<25x128xf32>
    %361 = arith.truncf %360 : vector<25x128xf32> to vector<25x128xbf16>
    %c6_348 = arith.constant 6 : index
    %c0_349 = arith.constant 0 : index
    %362 = vector.load %arg7[%c6_348, %c0_349] : memref<312x128xf32, #tpu.memory_space<vmem>>, vector<25x128xf32>
    %363 = arith.truncf %362 : vector<25x128xf32> to vector<25x128xbf16>
    %364 = tpu.concatenate %357, %359, %361, %363 in 1 : vector<25x128xbf16>, vector<25x128xbf16>, vector<25x128xbf16>, vector<25x128xbf16> -> vector<25x512xbf16>
    %c2_350 = arith.constant 2 : index
    %c0_351 = arith.constant 0 : index
    %c0_352 = arith.constant 0 : index
    %c0_353 = arith.constant 0 : index
    %365 = vector.load %arg2[%c2_350, %c0_351, %c0_352, %c0_353] : memref<3x3x512x128xbf16, #tpu.memory_space<vmem>>, vector<1x1x512x128xbf16>
    %366 = vector.shape_cast %365 : vector<1x1x512x128xbf16> to vector<512x128xbf16>
    %cst_354 = arith.constant dense<0.000000e+00> : vector<25x128xf32>
    %367 = tpu.matmul %364, %366, %cst_354 {dimension_numbers = #tpu.dot_dimension_numbers<[1], [0], [0], [1], [0, 0, 1, 1], [], []>} : vector<25x512xbf16>, vector<512x128xbf16>, vector<25x128xf32> -> vector<25x128xf32>
    %c2_355 = arith.constant 2 : index
    %c0_356 = arith.constant 0 : index
    %c0_357 = arith.constant 0 : index
    %c0_358 = arith.constant 0 : index
    %368 = vector.load %arg3[%c2_355, %c0_356, %c0_357, %c0_358] : memref<3x3x1x128xf32, #tpu.memory_space<vmem>>, vector<1x1x1x128xf32>
    %369 = vector.shape_cast %368 : vector<1x1x1x128xf32> to vector<1x128xf32>
    %370 = vector.broadcast %369 : vector<1x128xf32> to vector<25x128xf32>
    %371 = arith.addf %367, %370 : vector<25x128xf32>
    %cst_359 = arith.constant 0.000000e+00 : f32
    %372 = vector.broadcast %cst_359 : f32 to vector<25x128xf32>
    %373 = arith.maximumf %371, %372 : vector<25x128xf32>
    %374 = arith.mulf %373, %355 : vector<25x128xf32>
    %c0_360 = arith.constant 0 : index
    %c0_361 = arith.constant 0 : index
    %375 = vector.load %arg7[%c0_360, %c0_361] : memref<312x128xf32, #tpu.memory_space<vmem>>, vector<25x128xf32>
    %376 = arith.addf %375, %374 : vector<25x128xf32>
    %c0_362 = arith.constant 0 : index
    %c0_363 = arith.constant 0 : index
    %377 = vector.load %arg7[%c0_362, %c0_363] : memref<312x128xf32, #tpu.memory_space<vmem>>, vector<25x128xf32>
    tpu.vector_store %arg7[%c0_362, %c0_363], %376 {strides = array<i32>} : memref<312x128xf32, #tpu.memory_space<vmem>>, vector<25x128xf32>,
    %c0_364 = arith.constant 0 : index
    %c0_365 = arith.constant 0 : index
    %378 = vector.load %arg7[%c0_364, %c0_365] : memref<312x128xf32, #tpu.memory_space<vmem>>, vector<25x128xf32>
    %379 = arith.truncf %378 : vector<25x128xf32> to vector<25x128xbf16>
    %c1_366 = arith.constant 1 : index
    %c0_367 = arith.constant 0 : index
    %380 = vector.load %arg7[%c1_366, %c0_367] : memref<312x128xf32, #tpu.memory_space<vmem>>, vector<25x128xf32>
    %381 = arith.truncf %380 : vector<25x128xf32> to vector<25x128xbf16>
    %c5_368 = arith.constant 5 : index
    %c0_369 = arith.constant 0 : index
    %382 = vector.load %arg7[%c5_368, %c0_369] : memref<312x128xf32, #tpu.memory_space<vmem>>, vector<25x128xf32>
    %383 = arith.truncf %382 : vector<25x128xf32> to vector<25x128xbf16>
    %c6_370 = arith.constant 6 : index
    %c0_371 = arith.constant 0 : index
    %384 = vector.load %arg7[%c6_370, %c0_371] : memref<312x128xf32, #tpu.memory_space<vmem>>, vector<25x128xf32>
    %385 = arith.truncf %384 : vector<25x128xf32> to vector<25x128xbf16>
    %386 = tpu.concatenate %379, %381, %383, %385 in 1 : vector<25x128xbf16>, vector<25x128xbf16>, vector<25x128xbf16>, vector<25x128xbf16> -> vector<25x512xbf16>
    %c2_372 = arith.constant 2 : index
    %c1_373 = arith.constant 1 : index
    %c0_374 = arith.constant 0 : index
    %c0_375 = arith.constant 0 : index
    %387 = vector.load %arg2[%c2_372, %c1_373, %c0_374, %c0_375] : memref<3x3x512x128xbf16, #tpu.memory_space<vmem>>, vector<1x1x512x128xbf16>
    %388 = vector.shape_cast %387 : vector<1x1x512x128xbf16> to vector<512x128xbf16>
    %cst_376 = arith.constant dense<0.000000e+00> : vector<25x128xf32>
    %389 = tpu.matmul %386, %388, %cst_376 {dimension_numbers = #tpu.dot_dimension_numbers<[1], [0], [0], [1], [0, 0, 1, 1], [], []>} : vector<25x512xbf16>, vector<512x128xbf16>, vector<25x128xf32> -> vector<25x128xf32>
    %c2_377 = arith.constant 2 : index
    %c1_378 = arith.constant 1 : index
    %c0_379 = arith.constant 0 : index
    %c0_380 = arith.constant 0 : index
    %390 = vector.load %arg3[%c2_377, %c1_378, %c0_379, %c0_380] : memref<3x3x1x128xf32, #tpu.memory_space<vmem>>, vector<1x1x1x128xf32>
    %391 = vector.shape_cast %390 : vector<1x1x1x128xf32> to vector<1x128xf32>
    %392 = vector.broadcast %391 : vector<1x128xf32> to vector<25x128xf32>
    %393 = arith.addf %389, %392 : vector<25x128xf32>
    %cst_381 = arith.constant 0.000000e+00 : f32
    %394 = vector.broadcast %cst_381 : f32 to vector<25x128xf32>
    %395 = arith.maximumf %393, %394 : vector<25x128xf32>
    %396 = arith.mulf %395, %355 : vector<25x128xf32>
    %c0_382 = arith.constant 0 : index
    %c0_383 = arith.constant 0 : index
    %397 = vector.load %arg7[%c0_382, %c0_383] : memref<312x128xf32, #tpu.memory_space<vmem>>, vector<25x128xf32>
    %398 = arith.addf %397, %396 : vector<25x128xf32>
    %c0_384 = arith.constant 0 : index
    %c0_385 = arith.constant 0 : index
    %399 = vector.load %arg7[%c0_384, %c0_385] : memref<312x128xf32, #tpu.memory_space<vmem>>, vector<25x128xf32>
    tpu.vector_store %arg7[%c0_384, %c0_385], %398 {strides = array<i32>} : memref<312x128xf32, #tpu.memory_space<vmem>>, vector<25x128xf32>,
    %c0_386 = arith.constant 0 : index
    %c0_387 = arith.constant 0 : index
    %400 = vector.load %arg7[%c0_386, %c0_387] : memref<312x128xf32, #tpu.memory_space<vmem>>, vector<25x128xf32>
    %401 = arith.truncf %400 : vector<25x128xf32> to vector<25x128xbf16>
    %c1_388 = arith.constant 1 : index
    %c0_389 = arith.constant 0 : index
    %402 = vector.load %arg7[%c1_388, %c0_389] : memref<312x128xf32, #tpu.memory_space<vmem>>, vector<25x128xf32>
    %403 = arith.truncf %402 : vector<25x128xf32> to vector<25x128xbf16>
    %c5_390 = arith.constant 5 : index
    %c0_391 = arith.constant 0 : index
    %404 = vector.load %arg7[%c5_390, %c0_391] : memref<312x128xf32, #tpu.memory_space<vmem>>, vector<25x128xf32>
    %405 = arith.truncf %404 : vector<25x128xf32> to vector<25x128xbf16>
    %c6_392 = arith.constant 6 : index
    %c0_393 = arith.constant 0 : index
    %406 = vector.load %arg7[%c6_392, %c0_393] : memref<312x128xf32, #tpu.memory_space<vmem>>, vector<25x128xf32>
    %407 = arith.truncf %406 : vector<25x128xf32> to vector<25x128xbf16>
    %408 = tpu.concatenate %401, %403, %405, %407 in 1 : vector<25x128xbf16>, vector<25x128xbf16>, vector<25x128xbf16>, vector<25x128xbf16> -> vector<25x512xbf16>
    %c2_394 = arith.constant 2 : index
    %c2_395 = arith.constant 2 : index
    %c0_396 = arith.constant 0 : index
    %c0_397 = arith.constant 0 : index
    %409 = vector.load %arg2[%c2_394, %c2_395, %c0_396, %c0_397] : memref<3x3x512x128xbf16, #tpu.memory_space<vmem>>, vector<1x1x512x128xbf16>
    %410 = vector.shape_cast %409 : vector<1x1x512x128xbf16> to vector<512x128xbf16>
    %cst_398 = arith.constant dense<0.000000e+00> : vector<25x128xf32>
    %411 = tpu.matmul %408, %410, %cst_398 {dimension_numbers = #tpu.dot_dimension_numbers<[1], [0], [0], [1], [0, 0, 1, 1], [], []>} : vector<25x512xbf16>, vector<512x128xbf16>, vector<25x128xf32> -> vector<25x128xf32>
    %c2_399 = arith.constant 2 : index
    %c2_400 = arith.constant 2 : index
    %c0_401 = arith.constant 0 : index
    %c0_402 = arith.constant 0 : index
    %412 = vector.load %arg3[%c2_399, %c2_400, %c0_401, %c0_402] : memref<3x3x1x128xf32, #tpu.memory_space<vmem>>, vector<1x1x1x128xf32>
    %413 = vector.shape_cast %412 : vector<1x1x1x128xf32> to vector<1x128xf32>
    %414 = vector.broadcast %413 : vector<1x128xf32> to vector<25x128xf32>
    %415 = arith.addf %411, %414 : vector<25x128xf32>
    %cst_403 = arith.constant 0.000000e+00 : f32
    %416 = vector.broadcast %cst_403 : f32 to vector<25x128xf32>
    %417 = arith.maximumf %415, %416 : vector<25x128xf32>
    %418 = arith.mulf %417, %355 : vector<25x128xf32>
    %c0_404 = arith.constant 0 : index
    %c0_405 = arith.constant 0 : index
    %419 = vector.load %arg7[%c0_404, %c0_405] : memref<312x128xf32, #tpu.memory_space<vmem>>, vector<25x128xf32>
    %420 = arith.addf %419, %418 : vector<25x128xf32>
    %c0_406 = arith.constant 0 : index
    %c0_407 = arith.constant 0 : index
    %421 = vector.load %arg7[%c0_406, %c0_407] : memref<312x128xf32, #tpu.memory_space<vmem>>, vector<25x128xf32>
    tpu.vector_store %arg7[%c0_406, %c0_407], %420 {strides = array<i32>} : memref<312x128xf32, #tpu.memory_space<vmem>>, vector<25x128xf32>,
    %c0_408 = arith.constant 0 : index
    %c0_409 = arith.constant 0 : index
    %422 = vector.load %arg7[%c0_408, %c0_409] : memref<312x128xf32, #tpu.memory_space<vmem>>, vector<25x128xf32>
    %423 = arith.truncf %422 : vector<25x128xf32> to vector<25x128xbf16>
    %c2_410 = arith.constant 2 : index
    %c0_411 = arith.constant 0 : index
    %c0_412 = arith.constant 0 : index
    %424 = vector.load %arg4[%c2_410, %c0_411, %c0_412] : memref<3x128x128xbf16, #tpu.memory_space<vmem>>, vector<1x128x128xbf16>
    %425 = vector.shape_cast %424 : vector<1x128x128xbf16> to vector<128x128xbf16>
    %cst_413 = arith.constant dense<0.000000e+00> : vector<25x128xf32>
    %426 = tpu.matmul %423, %425, %cst_413 {dimension_numbers = #tpu.dot_dimension_numbers<[1], [0], [0], [1], [0, 0, 1, 1], [], []>} : vector<25x128xbf16>, vector<128x128xbf16>, vector<25x128xf32> -> vector<25x128xf32>
    %c2_414 = arith.constant 2 : index
    %c0_415 = arith.constant 0 : index
    %c0_416 = arith.constant 0 : index
    %427 = vector.load %arg5[%c2_414, %c0_415, %c0_416] : memref<3x1x128xf32, #tpu.memory_space<vmem>>, vector<1x1x128xf32>
    %428 = vector.shape_cast %427 : vector<1x1x128xf32> to vector<1x128xf32>
    %429 = vector.broadcast %428 : vector<1x128xf32> to vector<25x128xf32>
    %430 = arith.addf %426, %429 : vector<25x128xf32>
    %c0_417 = arith.constant 0 : index
    %c0_418 = arith.constant 0 : index
    %431 = vector.load %arg7[%c0_417, %c0_418] : memref<312x128xf32, #tpu.memory_space<vmem>>, vector<25x128xf32>
    tpu.vector_store %arg7[%c0_417, %c0_418], %430 {strides = array<i32>} : memref<312x128xf32, #tpu.memory_space<vmem>>, vector<25x128xf32>,
    %cst_419 = arith.constant 0.000000e+00 : f32
    %432 = vector.broadcast %cst_419 : f32 to vector<1x8x128xf32>
    %c0_420 = arith.constant 0 : index
    %c0_421 = arith.constant 0 : index
    %c0_422 = arith.constant 0 : index
    %433 = vector.load %arg6[%c0_420, %c0_421, %c0_422] : memref<1x8x128xf32, #tpu.memory_space<vmem>>, vector<1x8x128xf32>
    tpu.vector_store %arg6[%c0_420, %c0_421, %c0_422], %432 {strides = array<i32>} : memref<1x8x128xf32, #tpu.memory_space<vmem>>, vector<1x8x128xf32>,
    %c0_423 = arith.constant 0 : index
    %c0_424 = arith.constant 0 : index
    %434 = tpu.strided_load %arg7[%c0_423, %c0_424] {strides = array<i32: 2, 1>} : memref<312x128xf32, #tpu.memory_space<vmem>>, vector<2x128xf32>
    %c1_425 = arith.constant 1 : index
    %c0_426 = arith.constant 0 : index
    %435 = tpu.strided_load %arg7[%c1_425, %c0_426] {strides = array<i32: 2, 1>} : memref<312x128xf32, #tpu.memory_space<vmem>>, vector<2x128xf32>
    %436 = arith.maximumf %434, %435 : vector<2x128xf32>
    %c5_427 = arith.constant 5 : index
    %c0_428 = arith.constant 0 : index
    %437 = tpu.strided_load %arg7[%c5_427, %c0_428] {strides = array<i32: 2, 1>} : memref<312x128xf32, #tpu.memory_space<vmem>>, vector<2x128xf32>
    %c6_429 = arith.constant 6 : index
    %c0_430 = arith.constant 0 : index
    %438 = tpu.strided_load %arg7[%c6_429, %c0_430] {strides = array<i32: 2, 1>} : memref<312x128xf32, #tpu.memory_space<vmem>>, vector<2x128xf32>
    %439 = arith.maximumf %437, %438 : vector<2x128xf32>
    %440 = arith.maximumf %436, %439 : vector<2x128xf32>
    %c0_431 = arith.constant 0 : index
    %c0_432 = arith.constant 0 : index
    %c0_433 = arith.constant 0 : index
    %441 = vector.load %arg6[%c0_431, %c0_432, %c0_433] : memref<1x8x128xf32, #tpu.memory_space<vmem>>, vector<1x2x128xf32>
    %442 = vector.shape_cast %441 : vector<1x2x128xf32> to vector<2x128xf32>
    %443 = vector.shape_cast %440 : vector<2x128xf32> to vector<1x2x128xf32>
    tpu.vector_store %arg6[%c0_431, %c0_432, %c0_433], %443 {strides = array<i32>} : memref<1x8x128xf32, #tpu.memory_space<vmem>>, vector<1x2x128xf32>,
    %c10_434 = arith.constant 10 : index
    %c0_435 = arith.constant 0 : index
    %444 = tpu.strided_load %arg7[%c10_434, %c0_435] {strides = array<i32: 2, 1>} : memref<312x128xf32, #tpu.memory_space<vmem>>, vector<2x128xf32>
    %c11_436 = arith.constant 11 : index
    %c0_437 = arith.constant 0 : index
    %445 = tpu.strided_load %arg7[%c11_436, %c0_437] {strides = array<i32: 2, 1>} : memref<312x128xf32, #tpu.memory_space<vmem>>, vector<2x128xf32>
    %446 = arith.maximumf %444, %445 : vector<2x128xf32>
    %c15_438 = arith.constant 15 : index
    %c0_439 = arith.constant 0 : index
    %447 = tpu.strided_load %arg7[%c15_438, %c0_439] {strides = array<i32: 2, 1>} : memref<312x128xf32, #tpu.memory_space<vmem>>, vector<2x128xf32>
    %c16 = arith.constant 16 : index
    %c0_440 = arith.constant 0 : index
    %448 = tpu.strided_load %arg7[%c16, %c0_440] {strides = array<i32: 2, 1>} : memref<312x128xf32, #tpu.memory_space<vmem>>, vector<2x128xf32>
    %449 = arith.maximumf %447, %448 : vector<2x128xf32>
    %450 = arith.maximumf %446, %449 : vector<2x128xf32>
    %c0_441 = arith.constant 0 : index
    %c2_442 = arith.constant 2 : index
    %c0_443 = arith.constant 0 : index
    %451 = vector.load %arg6[%c0_441, %c2_442, %c0_443] : memref<1x8x128xf32, #tpu.memory_space<vmem>>, vector<1x2x128xf32>
    %452 = vector.shape_cast %451 : vector<1x2x128xf32> to vector<2x128xf32>
    %453 = vector.shape_cast %450 : vector<2x128xf32> to vector<1x2x128xf32>
    tpu.vector_store %arg6[%c0_441, %c2_442, %c0_443], %453 {strides = array<i32>} : memref<1x8x128xf32, #tpu.memory_space<vmem>>, vector<1x2x128xf32>,
    return
  }
  func.func @transform_0(%arg0: i32) -> (i32, i32, i32, i32) {
    %c0_i32 = arith.constant 0 : i32
    %c0_i32_0 = arith.constant 0 : i32
    %c0_i32_1 = arith.constant 0 : i32
    %c0_i32_2 = arith.constant 0 : i32
    return %arg0, %c0_i32, %c0_i32_0, %c0_i32_1 : i32, i32, i32, i32
  }
  func.func @transform_1(%arg0: i32) -> (i32, i32, i32, i32) {
    %c0_i32 = arith.constant 0 : i32
    %c0_i32_0 = arith.constant 0 : i32
    %c0_i32_1 = arith.constant 0 : i32
    %c0_i32_2 = arith.constant 0 : i32
    %c0_i32_3 = arith.constant 0 : i32
    return %c0_i32, %c0_i32_0, %c0_i32_1, %c0_i32_2 : i32, i32, i32, i32
  }
  func.func @transform_2(%arg0: i32) -> (i32, i32, i32, i32) {
    %c0_i32 = arith.constant 0 : i32
    %c0_i32_0 = arith.constant 0 : i32
    %c0_i32_1 = arith.constant 0 : i32
    %c0_i32_2 = arith.constant 0 : i32
    %c0_i32_3 = arith.constant 0 : i32
    return %c0_i32, %c0_i32_0, %c0_i32_1, %c0_i32_2 : i32, i32, i32, i32
  }
  func.func @transform_3(%arg0: i32) -> (i32, i32, i32) {
    %c0_i32 = arith.constant 0 : i32
    %c0_i32_0 = arith.constant 0 : i32
    %c0_i32_1 = arith.constant 0 : i32
    %c0_i32_2 = arith.constant 0 : i32
    return %c0_i32, %c0_i32_0, %c0_i32_1 : i32, i32, i32
  }
  func.func @transform_4(%arg0: i32) -> (i32, i32, i32) {
    %c0_i32 = arith.constant 0 : i32
    %c0_i32_0 = arith.constant 0 : i32
    %c0_i32_1 = arith.constant 0 : i32
    %c0_i32_2 = arith.constant 0 : i32
    return %c0_i32, %c0_i32_0, %c0_i32_1 : i32, i32, i32
  }
  func.func @transform_5(%arg0: i32) -> (i32, i32, i32) {
    %c0_i32 = arith.constant 0 : i32
    %c0_i32_0 = arith.constant 0 : i32
    %c0_i32_1 = arith.constant 0 : i32
    return %arg0, %c0_i32, %c0_i32_0 : i32, i32, i32
  }
}

</mosaic_0001>

<llo_original>
// kernel: _lambda_.1
$region0: #{_lambda_.1}
  #allocation0 [shape = 'u32[]', space=smem, size = 0x4, offset = 0x4, fixed_abs, tag = 'smem constant byte address 0x4 - core index']
  #allocation1 [shape = 'u32[144,128]{1,0:T(1,128)}', space=vmem, size = 0x12000, scoped, tag = 'internal scratch']
  #allocation2 [shape = 'f32[312,128]{1,0:T(8,128)}', space=vmem, size = 0x27000, scoped, tag = 'scratch operand']
  #allocation3 [shape = 'f32[96,128]{1,0:T(8,128)}', space=vmem, size = 0xc000, scoped, tag = 'scratch operand']
  %s0 = inlined_call_operand.vmem [shape: f32[2,16,16,128], index: 0, kind: input, shape index: {}]
  %s1 = inlined_call_operand.hbm [shape: bf16[3,3,512,128], index: 1, kind: input, shape index: {}]
  %s2 = inlined_call_operand.hbm [shape: f32[3,3,1,128], index: 2, kind: input, shape index: {}]
  %s3 = inlined_call_operand.hbm [shape: bf16[3,128,128], index: 3, kind: input, shape index: {}]
  %s4 = inlined_call_operand.hbm [shape: f32[3,1,128], index: 4, kind: input, shape index: {}]
  %s5 = inlined_call_operand.vmem [shape: f32[2,8,128], index: 5, kind: output, shape index: {}]
  %s6 = sld [smem:[#allocation0]]
  $region69: #{_lambda_.1} parent=0
    _
  %s8 = ssub.s32 1, %s6
  %s9 = scalar_select 0, %s8, %s6
  $region1: #{_lambda_.1} parent=0
    #allocation4 [shape = 'u8[1179648]{0}', space=vmem, size = 0x120000, scoped, tag = 'input window, operand 1, single buffered']
    #allocation5 [shape = 's32[2]{0}', space=sflag, size = 0x8, scoped, tag = 'scoped memory for _lambda_.1']
    #allocation6 [shape = 'u8[4608]{0}', space=vmem, size = 0x1400, scoped, tag = 'input window, operand 2, single buffered']
    #allocation7 [shape = 's32[1]{0}', space=sflag, size = 0x4, scoped, tag = 'scoped memory for _lambda_.1']
    #allocation8 [shape = 'u8[98304]{0}', space=vmem, size = 0x18000, scoped, tag = 'input window, operand 3, single buffered']
    #allocation9 [shape = 'u8[1536]{0}', space=vmem, size = 0x800, scoped, tag = 'input window, operand 4, single buffered']
    #allocation10 [shape = 's32[1]{0}', space=sflag, size = 0x4, scoped, tag = 'scoped memory for _lambda_.1']
    %10 = vsyncpa [#allocation5], 0
    %11 = vsyncpa [#allocation7], 0
    %12 = vsyncpa [#allocation10], 0
    loop: start=0, step=1, limit=4
    $region2: #{_lambda_.1} parent=1 // loop_pre_header
      _
    $region3: #{_lambda_.1} parent=1 // loop_header
      %s14 = sphi 0, %s18
      %p15 = scmp.ge.s32.totalorder %s14, 4
      %s24 = sphi 0, %s26
      %s27 = sphi 0, %s24
      %s28 = sphi 0, %s27
      %s44 = sphi 0, %s28
      %s48 = sphi 0, %s48
      %s50 = sphi 0, %s48
      %s51 = sphi 0, %s50
      %s65 = sphi 0, %s51
      %s69 = sphi 0, %s69
      %s71 = sphi 0, %s69
      %s72 = sphi 0, %s71
      %s86 = sphi 0, %s72
      %s90 = sphi 0, %s90
      %s92 = sphi 0, %s90
      %s93 = sphi 0, %s92
      %s107 = sphi 0, %s93
      %s111 = sphi 0, %s111
      %s113 = sphi 0, %s111
      %s114 = sphi 0, %s113
      %s128 = sphi 0, %s114
      %s134 = sphi 0, %s136
      %s137 = sphi 0, %s134
      %s138 = sphi 0, %s137
      %s154 = sphi 0, %s138
    $region4: #{_lambda_.1} parent=1 // loop_header_branch
      %17 = sbr.rel (%p15) target = $region8
    $region5: #{_lambda_.1} parent=1 // loop_body
      %s19 = ssub.s32 %s14, 1
      %s20 = ssub.s32 %s14, 2
      %s21 = sadd.s32 %s14, 1
      %s22 = ssub.s32 %s14, %s21
      %p23 = scmp.eq.s32.totalorder %s22, 0
      %s25 = sadd.s32 %s24, 1
      %s26 = scalar_select %p23, %s24, %s25
      %p29 = pneg %p23
      %p30 = scmp.eq.s32.totalorder %s14, 1
      %p31 = por %p29, %p30
      %p32 = scmp.ne.s32.totalorder %s24, %s27
      %p33 = scmp.eq.s32.totalorder %s14, 0
      %p34 = por %p32, %p33
      %p35 = scmp.ne.s32.totalorder %s24, %s27
      %p36 = scmp.eq.s32.totalorder %s19, 1
      %p37 = por %p35, %p36
      %p38 = scmp.ne.s32.totalorder %s27, %s28
      %p39 = scmp.eq.s32.totalorder %s19, 0
      %p40 = por %p38, %p39
      %p41 = scmp.ne.s32.totalorder %s27, %s28
      %p42 = scmp.eq.s32.totalorder %s20, 1
      %p43 = por %p41, %p42
      %p45 = scmp.ne.s32.totalorder %s28, %s44
      %p46 = scmp.eq.s32.totalorder %s20, 0
      %p47 = por %p45, %p46
      %s49 = sadd.s32 %s48, 1
      %p52 = scmp.eq.s32.totalorder %s14, 1
      %p53 = scmp.ne.s32.totalorder %s48, %s50
      %p54 = scmp.eq.s32.totalorder %s14, 0
      %p55 = por %p53, %p54
      %p56 = scmp.ne.s32.totalorder %s48, %s50
      %p57 = scmp.eq.s32.totalorder %s19, 1
      %p58 = por %p56, %p57
      %p59 = scmp.ne.s32.totalorder %s50, %s51
      %p60 = scmp.eq.s32.totalorder %s19, 0
      %p61 = por %p59, %p60
      %p62 = scmp.ne.s32.totalorder %s50, %s51
      %p63 = scmp.eq.s32.totalorder %s20, 1
      %p64 = por %p62, %p63
      %p66 = scmp.ne.s32.totalorder %s51, %s65
      %p67 = scmp.eq.s32.totalorder %s20, 0
      %p68 = por %p66, %p67
      %s70 = sadd.s32 %s69, 1
      %p73 = scmp.eq.s32.totalorder %s14, 1
      %p74 = scmp.ne.s32.totalorder %s69, %s71
      %p75 = scmp.eq.s32.totalorder %s14, 0
      %p76 = por %p74, %p75
      %p77 = scmp.ne.s32.totalorder %s69, %s71
      %p78 = scmp.eq.s32.totalorder %s19, 1
      %p79 = por %p77, %p78
      %p80 = scmp.ne.s32.totalorder %s71, %s72
      %p81 = scmp.eq.s32.totalorder %s19, 0
      %p82 = por %p80, %p81
      %p83 = scmp.ne.s32.totalorder %s71, %s72
      %p84 = scmp.eq.s32.totalorder %s20, 1
      %p85 = por %p83, %p84
      %p87 = scmp.ne.s32.totalorder %s72, %s86
      %p88 = scmp.eq.s32.totalorder %s20, 0
      %p89 = por %p87, %p88
      %s91 = sadd.s32 %s90, 1
      %p94 = scmp.eq.s32.totalorder %s14, 1
      %p95 = scmp.ne.s32.totalorder %s90, %s92
      %p96 = scmp.eq.s32.totalorder %s14, 0
      %p97 = por %p95, %p96
      %p98 = scmp.ne.s32.totalorder %s90, %s92
      %p99 = scmp.eq.s32.totalorder %s19, 1
      %p100 = por %p98, %p99
      %p101 = scmp.ne.s32.totalorder %s92, %s93
      %p102 = scmp.eq.s32.totalorder %s19, 0
      %p103 = por %p101, %p102
      %p104 = scmp.ne.s32.totalorder %s92, %s93
      %p105 = scmp.eq.s32.totalorder %s20, 1
      %p106 = por %p104, %p105
      %p108 = scmp.ne.s32.totalorder %s93, %s107
      %p109 = scmp.eq.s32.totalorder %s20, 0
      %p110 = por %p108, %p109
      %s112 = sadd.s32 %s111, 1
      %p115 = scmp.eq.s32.totalorder %s14, 1
      %p116 = scmp.ne.s32.totalorder %s111, %s113
      %p117 = scmp.eq.s32.totalorder %s14, 0
      %p118 = por %p116, %p117
      %p119 = scmp.ne.s32.totalorder %s111, %s113
      %p120 = scmp.eq.s32.totalorder %s19, 1
      %p121 = por %p119, %p120
      %p122 = scmp.ne.s32.totalorder %s113, %s114
      %p123 = scmp.eq.s32.totalorder %s19, 0
      %p124 = por %p122, %p123
      %p125 = scmp.ne.s32.totalorder %s113, %s114
      %p126 = scmp.eq.s32.totalorder %s20, 1
      %p127 = por %p125, %p126
      %p129 = scmp.ne.s32.totalorder %s114, %s128
      %p130 = scmp.eq.s32.totalorder %s20, 0
      %p131 = por %p129, %p130
      %s132 = ssub.s32 %s14, %s21
      %p133 = scmp.eq.s32.totalorder %s132, 0
      %s135 = sadd.s32 %s134, 1
      %s136 = scalar_select %p133, %s134, %s135
      %p139 = pneg %p133
      %p140 = scmp.eq.s32.totalorder %s14, 1
      %p141 = por %p139, %p140
      %p142 = scmp.ne.s32.totalorder %s134, %s137
      %p143 = scmp.eq.s32.totalorder %s14, 0
      %p144 = por %p142, %p143
      %p145 = scmp.ne.s32.totalorder %s134, %s137
      %p146 = scmp.eq.s32.totalorder %s19, 1
      %p147 = por %p145, %p146
      %p148 = scmp.ne.s32.totalorder %s137, %s138
      %p149 = scmp.eq.s32.totalorder %s19, 0
      %p150 = por %p148, %p149
      %p151 = scmp.ne.s32.totalorder %s137, %s138
      %p152 = scmp.eq.s32.totalorder %s20, 1
      %p153 = por %p151, %p152
      %p155 = scmp.ne.s32.totalorder %s138, %s154
      %p156 = scmp.eq.s32.totalorder %s20, 0
      %p157 = por %p155, %p156
      %p158 = scmp.le.s32.totalorder 1, %s14
      %p159 = scmp.lt.s32.totalorder %s14, 3
      %p160 = pnand %p158, %p159
      %p161 = pneg %p160
      // Predicated region
      $region9: #{_lambda_.1} parent=5 // pred_check
        _
      $region10: #{_lambda_.1} parent=5 // pred_check_branch
        %163 = sbr.rel (%p160) target = $region12
      $region11: #{_lambda_.1} parent=5 // pred_region
        %s164 = ssub.s32 %s14, 1
        // Predicated region
        $region13: #{_lambda_.1} parent=11 // pred_check
          %p165 = pneg %p61
        $region14: #{_lambda_.1} parent=11 // pred_check_branch
          %167 = sbr.rel (%p165) target = $region16
        $region15: #{_lambda_.1} parent=11 // pred_region
          %s169 = ssub.s32 36864, 36864
          %170 = vsyncadd [#allocation5], %s169
          %s171 = sshll.u32 [#allocation4], 4
          %s172 = int_to_ptr.vmem [resolvable:$true] %s171
          %177 = dma.hbm_to_vmem [thread:$0]  %s1, 36864, %s172, [#allocation5], 64, 64, 4
        $region16: #{_lambda_.1} parent=11 // pred_fallthru
          _
        // Predicated region
        $region17: #{_lambda_.1} parent=11 // pred_check
          %p178 = pneg %p82
        $region18: #{_lambda_.1} parent=11 // pred_check_branch
          %180 = sbr.rel (%p178) target = $region20
        $region19: #{_lambda_.1} parent=11 // pred_region
          %s182 = ssub.s32 144, 144
          %183 = vsyncadd [#allocation7], %s182
          %s184 = sshll.u32 [#allocation6], 4
          %s185 = int_to_ptr.vmem [resolvable:$true] %s184
          %190 = dma.hbm_to_vmem [thread:$0]  %s2, 144, %s185, [#allocation7], 16, 16, 1
        $region20: #{_lambda_.1} parent=11 // pred_fallthru
          _
        // Predicated region
        $region21: #{_lambda_.1} parent=11 // pred_check
          %p191 = pneg %p103
        $region22: #{_lambda_.1} parent=11 // pred_check_branch
          %193 = sbr.rel (%p191) target = $region24
        $region23: #{_lambda_.1} parent=11 // pred_region
          %s195 = ssub.s32 3072, 3072
          %196 = vsyncadd [#allocation7], %s195
          %s197 = sshll.u32 [#allocation8], 4
          %s198 = int_to_ptr.vmem [resolvable:$true] %s197
          %203 = dma.hbm_to_vmem [thread:$0]  %s3, 3072, %s198, [#allocation7], 64, 64, 4
        $region24: #{_lambda_.1} parent=11 // pred_fallthru
          _
        // Predicated region
        $region25: #{_lambda_.1} parent=11 // pred_check
          %p204 = pneg %p124
        $region26: #{_lambda_.1} parent=11 // pred_check_branch
          %206 = sbr.rel (%p204) target = $region28
        $region27: #{_lambda_.1} parent=11 // pred_region
          %s208 = ssub.s32 48, 48
          %209 = vsyncadd [#allocation10], %s208
          %s210 = sshll.u32 [#allocation9], 4
          %s211 = int_to_ptr.vmem [resolvable:$true] %s210
          %216 = dma.hbm_to_vmem [thread:$0]  %s4, 48, %s211, [#allocation10], 16, 16, 1
        $region28: #{_lambda_.1} parent=11 // pred_fallthru
          _
      $region12: #{_lambda_.1} parent=5 // pred_fallthru
        _
      %p217 = scmp.lt.s32.totalorder %s14, 2
      // Predicated region
      $region29: #{_lambda_.1} parent=5 // pred_check
        %p218 = pneg %p217
      $region30: #{_lambda_.1} parent=5 // pred_check_branch
        %220 = sbr.rel (%p218) target = $region32
      $region31: #{_lambda_.1} parent=5 // pred_region
        // Predicated region
        $region33: #{_lambda_.1} parent=31 // pred_check
          %p221 = pneg %p34
        $region34: #{_lambda_.1} parent=31 // pred_check_branch
          %223 = sbr.rel (%p221) target = $region36
        $region35: #{_lambda_.1} parent=31 // pred_region
          %p224 = scmp.lt.s32.totalorder %s14, 1
          %s225 = scalar_select %p224, %s14, 1
          %s226 = smul.addr %s225, 32
          %s227 = smul.addr %s226, 8
          %s228 = scalar_lea.vmem %s0, %s227
        $region36: #{_lambda_.1} parent=31 // pred_fallthru
          _
      $region32: #{_lambda_.1} parent=5 // pred_fallthru
        _
      %p229 = scmp.le.s32.totalorder 1, %s14
      %p230 = scmp.lt.s32.totalorder %s14, 3
      %p231 = pnand %p229, %p230
      %p232 = pneg %p231
      // Predicated region
      $region37: #{_lambda_.1} parent=5 // pred_check
        _
      $region38: #{_lambda_.1} parent=5 // pred_check_branch
        %234 = sbr.rel (%p231) target = $region40
      $region39: #{_lambda_.1} parent=5 // pred_region
        %s235 = ssub.s32 %s14, 1
        // Predicated region
        $region41: #{_lambda_.1} parent=39 // pred_check
          %p236 = pneg %p61
        $region42: #{_lambda_.1} parent=39 // pred_check_branch
          %238 = sbr.rel (%p236) target = $region44
        $region43: #{_lambda_.1} parent=39 // pred_region
          %239 = dma.done [#allocation5], 36864
        $region44: #{_lambda_.1} parent=39 // pred_fallthru
          _
        // Predicated region
        $region45: #{_lambda_.1} parent=39 // pred_check
          %p240 = pneg %p82
        $region46: #{_lambda_.1} parent=39 // pred_check_branch
          %242 = sbr.rel (%p240) target = $region48
        $region47: #{_lambda_.1} parent=39 // pred_region
          %243 = dma.done [#allocation7], 144
        $region48: #{_lambda_.1} parent=39 // pred_fallthru
          _
        // Predicated region
        $region49: #{_lambda_.1} parent=39 // pred_check
          %p244 = pneg %p103
        $region50: #{_lambda_.1} parent=39 // pred_check_branch
          %246 = sbr.rel (%p244) target = $region52
        $region51: #{_lambda_.1} parent=39 // pred_region
          %247 = dma.done [#allocation7], 3072
        $region52: #{_lambda_.1} parent=39 // pred_fallthru
          _
        // Predicated region
        $region53: #{_lambda_.1} parent=39 // pred_check
          %p248 = pneg %p124
        $region54: #{_lambda_.1} parent=39 // pred_check_branch
          %250 = sbr.rel (%p248) target = $region56
        $region55: #{_lambda_.1} parent=39 // pred_region
          %251 = dma.done [#allocation10], 48
        $region56: #{_lambda_.1} parent=39 // pred_fallthru
          _
        %p252 = scmp.lt.s32.totalorder %s19, 1
        %s253 = scalar_select %p252, %s19, 1
        %s254 = smul.addr %s253, 32
        %s255 = smul.addr %s254, 8
        %s256 = scalar_lea.vmem %s0, %s255
        %p257 = pneg %p40
        %p258 = pneg %p37
        %p259 = pneg %p61
        %p260 = pneg %p58
        %p261 = pneg %p82
        %p262 = pneg %p79
        %p263 = pneg %p103
        %p264 = pneg %p100
        %p265 = pneg %p124
        %p266 = pneg %p121
        %p267 = pneg %p150
        %p268 = pneg %p147
        %p269 = scmp.lt.s32.totalorder %s19, 1
        %s270 = scalar_select %p269, %s19, 1
        %s271 = smul.addr %s270, 8
        %s272 = scalar_lea.vmem %s5, %s271
        %p273 = scmp.lt.s32.totalorder %s19, 1
        %s274 = scalar_select %p273, %s19, 1
        %s275 = smul.addr %s274, 32
        %s276 = smul.addr %s275, 8
        %s277 = scalar_lea.vmem %s0, %s276
        %p278 = scmp.lt.s32.totalorder %s19, 1
        %s279 = scalar_select %p278, %s19, 1
        %s280 = smul.addr %s279, 8
        %s281 = scalar_lea.vmem %s5, %s280
        %283 = vst [vmem:[#allocation2] sm:$0xff] 0.0
        %284 = vst [vmem:[#allocation2 + $0x8] sm:$0xff] 0.0
        %285 = vst [vmem:[#allocation2 + $0x10] sm:$0xff] 0.0
        %286 = vst [vmem:[#allocation2 + $0x18] sm:$0xff] 0.0
        %287 = vst [vmem:[#allocation2 + $0x20] sm:$0xff] 0.0
        %288 = vst [vmem:[#allocation2 + $0x28] sm:$0xff] 0.0
        %289 = vst [vmem:[#allocation2 + $0x30] sm:$0xff] 0.0
        %290 = vst [vmem:[#allocation2 + $0x38] sm:$0xff] 0.0
        %291 = vst [vmem:[#allocation2 + $0x40] sm:$0xff] 0.0
        %292 = vst [vmem:[#allocation2 + $0x48] sm:$0xff] 0.0
        %293 = vst [vmem:[#allocation2 + $0x50] sm:$0xff] 0.0
        %294 = vst [vmem:[#allocation2 + $0x58] sm:$0xff] 0.0
        %295 = vst [vmem:[#allocation2 + $0x60] sm:$0xff] 0.0
        %296 = vst [vmem:[#allocation2 + $0x68] sm:$0xff] 0.0
        %297 = vst [vmem:[#allocation2 + $0x70] sm:$0xff] 0.0
        %298 = vst [vmem:[#allocation2 + $0x78] sm:$0xff] 0.0
        %299 = vst [vmem:[#allocation2 + $0x80] sm:$0xff] 0.0
        %300 = vst [vmem:[#allocation2 + $0x88] sm:$0xff] 0.0
        %301 = vst [vmem:[#allocation2 + $0x90] sm:$0xff] 0.0
        %302 = vst [vmem:[#allocation2 + $0x98] sm:$0xff] 0.0
        %303 = vst [vmem:[#allocation2 + $0xa0] sm:$0xff] 0.0
        %304 = vst [vmem:[#allocation2 + $0xa8] sm:$0xff] 0.0
        %305 = vst [vmem:[#allocation2 + $0xb0] sm:$0xff] 0.0
        %306 = vst [vmem:[#allocation2 + $0xb8] sm:$0xff] 0.0
        %307 = vst [vmem:[#allocation2 + $0xc0] sm:$0xff] 0.0
        %308 = vst [vmem:[#allocation2 + $0xc8] sm:$0xff] 0.0
        %309 = vst [vmem:[#allocation2 + $0xd0] sm:$0xff] 0.0
        %310 = vst [vmem:[#allocation2 + $0xd8] sm:$0xff] 0.0
        %311 = vst [vmem:[#allocation2 + $0xe0] sm:$0xff] 0.0
        %312 = vst [vmem:[#allocation2 + $0xe8] sm:$0xff] 0.0
        %313 = vst [vmem:[#allocation2 + $0xf0] sm:$0xff] 0.0
        %314 = vst [vmem:[#allocation2 + $0xf8] sm:$0xff] 0.0
        %315 = vst [vmem:[#allocation2 + $0x100] sm:$0xff] 0.0
        %316 = vst [vmem:[#allocation2 + $0x108] sm:$0xff] 0.0
        %317 = vst [vmem:[#allocation2 + $0x110] sm:$0xff] 0.0
        %318 = vst [vmem:[#allocation2 + $0x118] sm:$0xff] 0.0
        %319 = vst [vmem:[#allocation2 + $0x120] sm:$0xff] 0.0
        %320 = vst [vmem:[#allocation2 + $0x128] sm:$0xff] 0.0
        %321 = vst [vmem:[#allocation2 + $0x130] sm:$0xff] 0.0
        %v322 = vld [vmem:[%s277] sm:$0xff]
        %v323 = vld [vmem:[%s277 + $0x8] sm:$0xff]
        %324 = vst [vmem:[#allocation2] sm:$0xff] %v322
        %325 = vst [vmem:[#allocation2 + $0x8] sm:$0xff] %v323
        %s326 = scalar_lea.vmem %s277, 16
        %v327 = vld [vmem:[%s326] sm:$0xff]
        %v328 = vld [vmem:[%s326 + $0x8] sm:$0xff]
        %329 = vst [vmem:[#allocation2 + $0x11] sm:$0xff] %v327
        %330 = vst [vmem:[#allocation2 + $0x19] sm:$0xff] %v328
        %s331 = scalar_lea.vmem %s277, 32
        %v332 = vld [vmem:[%s331] sm:$0xff]
        %v333 = vld [vmem:[%s331 + $0x8] sm:$0xff]
        %334 = vst [vmem:[#allocation2 + $0x22] sm:$0xff] %v332
        %335 = vst [vmem:[#allocation2 + $0x2a] sm:$0xff] %v333
        %s336 = scalar_lea.vmem %s277, 48
        %v337 = vld [vmem:[%s336] sm:$0xff]
        %v338 = vld [vmem:[%s336 + $0x8] sm:$0xff]
        %339 = vst [vmem:[#allocation2 + $0x33] sm:$0xff] %v337
        %340 = vst [vmem:[#allocation2 + $0x3b] sm:$0xff] %v338
        %s341 = scalar_lea.vmem %s277, 64
        %v342 = vld [vmem:[%s341] sm:$0xff]
        %v343 = vld [vmem:[%s341 + $0x8] sm:$0xff]
        %344 = vst [vmem:[#allocation2 + $0x44] sm:$0xff] %v342
        %345 = vst [vmem:[#allocation2 + $0x4c] sm:$0xff] %v343
        %s346 = scalar_lea.vmem %s277, 80
        %v347 = vld [vmem:[%s346] sm:$0xff]
        %v348 = vld [vmem:[%s346 + $0x8] sm:$0xff]
        %349 = vst [vmem:[#allocation2 + $0x55] sm:$0xff] %v347
        %350 = vst [vmem:[#allocation2 + $0x5d] sm:$0xff] %v348
        %s351 = scalar_lea.vmem %s277, 96
        %v352 = vld [vmem:[%s351] sm:$0xff]
        %v353 = vld [vmem:[%s351 + $0x8] sm:$0xff]
        %354 = vst [vmem:[#allocation2 + $0x66] sm:$0xff] %v352
        %355 = vst [vmem:[#allocation2 + $0x6e] sm:$0xff] %v353
        %s356 = scalar_lea.vmem %s277, 112
        %v357 = vld [vmem:[%s356] sm:$0xff]
        %v358 = vld [vmem:[%s356 + $0x8] sm:$0xff]
        %359 = vst [vmem:[#allocation2 + $0x77] sm:$0xff] %v357
        %360 = vst [vmem:[#allocation2 + $0x7f] sm:$0xff] %v358
        %s361 = scalar_lea.vmem %s277, 128
        %v362 = vld [vmem:[%s361] sm:$0xff]
        %v363 = vld [vmem:[%s361 + $0x8] sm:$0xff]
        %364 = vst [vmem:[#allocation2 + $0x88] sm:$0xff] %v362
        %365 = vst [vmem:[#allocation2 + $0x90] sm:$0xff] %v363
        %s366 = scalar_lea.vmem %s277, 144
        %v367 = vld [vmem:[%s366] sm:$0xff]
        %v368 = vld [vmem:[%s366 + $0x8] sm:$0xff]
        %369 = vst [vmem:[#allocation2 + $0x99] sm:$0xff] %v367
        %370 = vst [vmem:[#allocation2 + $0xa1] sm:$0xff] %v368
        %s371 = scalar_lea.vmem %s277, 160
        %v372 = vld [vmem:[%s371] sm:$0xff]
        %v373 = vld [vmem:[%s371 + $0x8] sm:$0xff]
        %374 = vst [vmem:[#allocation2 + $0xaa] sm:$0xff] %v372
        %375 = vst [vmem:[#allocation2 + $0xb2] sm:$0xff] %v373
        %s376 = scalar_lea.vmem %s277, 176
        %v377 = vld [vmem:[%s376] sm:$0xff]
        %v378 = vld [vmem:[%s376 + $0x8] sm:$0xff]
        %379 = vst [vmem:[#allocation2 + $0xbb] sm:$0xff] %v377
        %380 = vst [vmem:[#allocation2 + $0xc3] sm:$0xff] %v378
        %s381 = scalar_lea.vmem %s277, 192
        %v382 = vld [vmem:[%s381] sm:$0xff]
        %v383 = vld [vmem:[%s381 + $0x8] sm:$0xff]
        %384 = vst [vmem:[#allocation2 + $0xcc] sm:$0xff] %v382
        %385 = vst [vmem:[#allocation2 + $0xd4] sm:$0xff] %v383
        %s386 = scalar_lea.vmem %s277, 208
        %v387 = vld [vmem:[%s386] sm:$0xff]
        %v388 = vld [vmem:[%s386 + $0x8] sm:$0xff]
        %389 = vst [vmem:[#allocation2 + $0xdd] sm:$0xff] %v387
        %390 = vst [vmem:[#allocation2 + $0xe5] sm:$0xff] %v388
        %s391 = scalar_lea.vmem %s277, 224
        %v392 = vld [vmem:[%s391] sm:$0xff]
        %v393 = vld [vmem:[%s391 + $0x8] sm:$0xff]
        %394 = vst [vmem:[#allocation2 + $0xee] sm:$0xff] %v392
        %395 = vst [vmem:[#allocation2 + $0xf6] sm:$0xff] %v393
        %s396 = scalar_lea.vmem %s277, 240
        %v397 = vld [vmem:[%s396] sm:$0xff]
        %v398 = vld [vmem:[%s396 + $0x8] sm:$0xff]
        %399 = vst [vmem:[#allocation2 + $0xff] sm:$0xff] %v397
        %400 = vst [vmem:[#allocation2 + $0x107] sm:$0xff] %v398
        %v401 = vlaneseq
        %v402 = vshrl.u32 %v401, 7
        %v403 = vadd.s32 %v402, 8
        %v404 = vadd.s32 %v402, 16
        %v405 = vadd.s32 %v402, 24
        %v406 = vadd.s32 %v402, 32
        %v407 = vadd.s32 %v402, 40
        %v408 = vadd.s32 %v402, 48
        %v409 = vadd.s32 %v402, 56
        %v410 = vadd.s32 %v402, 64
        %v411 = vadd.s32 %v402, 72
        %v412 = vadd.s32 %v402, 80
        %v413 = vadd.s32 %v402, 88
        %v414 = vadd.s32 %v402, 96
        %v415 = vadd.s32 %v402, 104
        %v416 = vadd.s32 %v402, 112
        %v417 = vadd.s32 %v402, 120
        %v418 = vadd.s32 %v402, 128
        %v419 = vadd.s32 %v402, 136
        %v420 = vadd.s32 %v402, 144
        %v421 = vadd.s32 %v402, 152
        %v422 = vadd.s32 %v402, 160
        %v423 = vadd.s32 %v402, 168
        %v424 = vadd.s32 %v402, 176
        %v425 = vadd.s32 %v402, 184
        %v426 = vadd.s32 %v402, 192
        %v427 = vadd.s32 %v402, 200
        %v428 = vadd.s32 %v402, 208
        %v429 = vadd.s32 %v402, 216
        %v430 = vadd.s32 %v402, 224
        %v431 = vadd.s32 %v402, 232
        %v432 = vadd.s32 %v402, 240
        %v433 = vadd.s32 %v402, 248
        %v434 = vadd.s32 %v402, 256
        %v435 = vadd.s32 %v402, 264
        %v436 = vadd.s32 %v402, 272
        %v437 = vadd.s32 %v402, 280
        %v438 = vadd.s32 %v402, 288
        %v439 = vcvt.s32.f32 %v402
        %v440 = vcvt.s32.f32 %v403
        %v441 = vcvt.s32.f32 %v404
        %v442 = vcvt.s32.f32 %v405
        %v443 = vcvt.s32.f32 %v406
        %v444 = vcvt.s32.f32 %v407
        %v445 = vcvt.s32.f32 %v408
        %v446 = vcvt.s32.f32 %v409
        %v447 = vcvt.s32.f32 %v410
        %v448 = vcvt.s32.f32 %v411
        %v449 = vcvt.s32.f32 %v412
        %v450 = vcvt.s32.f32 %v413
        %v451 = vcvt.s32.f32 %v414
        %v452 = vcvt.s32.f32 %v415
        %v453 = vcvt.s32.f32 %v416
        %v454 = vcvt.s32.f32 %v417
        %v455 = vcvt.s32.f32 %v418
        %v456 = vcvt.s32.f32 %v419
        %v457 = vcvt.s32.f32 %v420
        %v458 = vcvt.s32.f32 %v421
        %v459 = vcvt.s32.f32 %v422
        %v460 = vcvt.s32.f32 %v423
        %v461 = vcvt.s32.f32 %v424
        %v462 = vcvt.s32.f32 %v425
        %v463 = vcvt.s32.f32 %v426
        %v464 = vcvt.s32.f32 %v427
        %v465 = vcvt.s32.f32 %v428
        %v466 = vcvt.s32.f32 %v429
        %v467 = vcvt.s32.f32 %v430
        %v468 = vcvt.s32.f32 %v431
        %v469 = vcvt.s32.f32 %v432
        %v470 = vcvt.s32.f32 %v433
        %v471 = vcvt.s32.f32 %v434
        %v472 = vcvt.s32.f32 %v435
        %v473 = vcvt.s32.f32 %v436
        %v474 = vcvt.s32.f32 %v437
        %v475 = vcvt.s32.f32 %v438
        %v476 = vadd.f32 %v439, 0.5
        %v477 = vadd.f32 %v440, 0.5
        %v478 = vadd.f32 %v441, 0.5
        %v479 = vadd.f32 %v442, 0.5
        %v480 = vadd.f32 %v443, 0.5
        %v481 = vadd.f32 %v444, 0.5
        %v482 = vadd.f32 %v445, 0.5
        %v483 = vadd.f32 %v446, 0.5
        %v484 = vadd.f32 %v447, 0.5
        %v485 = vadd.f32 %v448, 0.5
        %v486 = vadd.f32 %v449, 0.5
        %v487 = vadd.f32 %v450, 0.5
        %v488 = vadd.f32 %v451, 0.5
        %v489 = vadd.f32 %v452, 0.5
        %v490 = vadd.f32 %v453, 0.5
        %v491 = vadd.f32 %v454, 0.5
        %v492 = vadd.f32 %v455, 0.5
        %v493 = vadd.f32 %v456, 0.5
        %v494 = vadd.f32 %v457, 0.5
        %v495 = vadd.f32 %v458, 0.5
        %v496 = vadd.f32 %v459, 0.5
        %v497 = vadd.f32 %v460, 0.5
        %v498 = vadd.f32 %v461, 0.5
        %v499 = vadd.f32 %v462, 0.5
        %v500 = vadd.f32 %v463, 0.5
        %v501 = vadd.f32 %v464, 0.5
        %v502 = vadd.f32 %v465, 0.5
        %v503 = vadd.f32 %v466, 0.5
        %v504 = vadd.f32 %v467, 0.5
        %v505 = vadd.f32 %v468, 0.5
        %v506 = vadd.f32 %v469, 0.5
        %v507 = vadd.f32 %v470, 0.5
        %v508 = vadd.f32 %v471, 0.5
        %v509 = vadd.f32 %v472, 0.5
        %v510 = vadd.f32 %v473, 0.5
        %v511 = vadd.f32 %v474, 0.5
        %v512 = vadd.f32 %v475, 0.5
        %v513 = vmul.f32 %v476, 0.05882353
        %v514 = vmul.f32 %v477, 0.05882353
        %v515 = vmul.f32 %v478, 0.05882353
        %v516 = vmul.f32 %v479, 0.05882353
        %v517 = vmul.f32 %v480, 0.05882353
        %v518 = vmul.f32 %v481, 0.05882353
        %v519 = vmul.f32 %v482, 0.05882353
        %v520 = vmul.f32 %v483, 0.05882353
        %v521 = vmul.f32 %v484, 0.05882353
        %v522 = vmul.f32 %v485, 0.05882353
        %v523 = vmul.f32 %v486, 0.05882353
        %v524 = vmul.f32 %v487, 0.05882353
        %v525 = vmul.f32 %v488, 0.05882353
        %v526 = vmul.f32 %v489, 0.05882353
        %v527 = vmul.f32 %v490, 0.05882353
        %v528 = vmul.f32 %v491, 0.05882353
        %v529 = vmul.f32 %v492, 0.05882353
        %v530 = vmul.f32 %v493, 0.05882353
        %v531 = vmul.f32 %v494, 0.05882353
        %v532 = vmul.f32 %v495, 0.05882353
        %v533 = vmul.f32 %v496, 0.05882353
        %v534 = vmul.f32 %v497, 0.05882353
        %v535 = vmul.f32 %v498, 0.05882353
        %v536 = vmul.f32 %v499, 0.05882353
        %v537 = vmul.f32 %v500, 0.05882353
        %v538 = vmul.f32 %v501, 0.05882353
        %v539 = vmul.f32 %v502, 0.05882353
        %v540 = vmul.f32 %v503, 0.05882353
        %v541 = vmul.f32 %v504, 0.05882353
        %v542 = vmul.f32 %v505, 0.05882353
        %v543 = vmul.f32 %v506, 0.05882353
        %v544 = vmul.f32 %v507, 0.05882353
        %v545 = vmul.f32 %v508, 0.05882353
        %v546 = vmul.f32 %v509, 0.05882353
        %v547 = vmul.f32 %v510, 0.05882353
        %v548 = vmul.f32 %v511, 0.05882353
        %v549 = vmul.f32 %v512, 0.05882353
        %v550 = vfloor.f32 %v513
        %v551 = vfloor.f32 %v514
        %v552 = vfloor.f32 %v515
        %v553 = vfloor.f32 %v516
        %v554 = vfloor.f32 %v517
        %v555 = vfloor.f32 %v518
        %v556 = vfloor.f32 %v519
        %v557 = vfloor.f32 %v520
        %v558 = vfloor.f32 %v521
        %v559 = vfloor.f32 %v522
        %v560 = vfloor.f32 %v523
        %v561 = vfloor.f32 %v524
        %v562 = vfloor.f32 %v525
        %v563 = vfloor.f32 %v526
        %v564 = vfloor.f32 %v527
        %v565 = vfloor.f32 %v528
        %v566 = vfloor.f32 %v529
        %v567 = vfloor.f32 %v530
        %v568 = vfloor.f32 %v531
        %v569 = vfloor.f32 %v532
        %v570 = vfloor.f32 %v533
        %v571 = vfloor.f32 %v534
        %v572 = vfloor.f32 %v535
        %v573 = vfloor.f32 %v536
        %v574 = vfloor.f32 %v537
        %v575 = vfloor.f32 %v538
        %v576 = vfloor.f32 %v539
        %v577 = vfloor.f32 %v540
        %v578 = vfloor.f32 %v541
        %v579 = vfloor.f32 %v542
        %v580 = vfloor.f32 %v543
        %v581 = vfloor.f32 %v544
        %v582 = vfloor.f32 %v545
        %v583 = vfloor.f32 %v546
        %v584 = vfloor.f32 %v547
        %v585 = vfloor.f32 %v548
        %v586 = vfloor.f32 %v549
        %v587 = vmul.f32 %v550, 17.0
        %v588 = vmul.f32 %v551, 17.0
        %v589 = vmul.f32 %v552, 17.0
        %v590 = vmul.f32 %v553, 17.0
        %v591 = vmul.f32 %v554, 17.0
        %v592 = vmul.f32 %v555, 17.0
        %v593 = vmul.f32 %v556, 17.0
        %v594 = vmul.f32 %v557, 17.0
        %v595 = vmul.f32 %v558, 17.0
        %v596 = vmul.f32 %v559, 17.0
        %v597 = vmul.f32 %v560, 17.0
        %v598 = vmul.f32 %v561, 17.0
        %v599 = vmul.f32 %v562, 17.0
        %v600 = vmul.f32 %v563, 17.0
        %v601 = vmul.f32 %v564, 17.0
        %v602 = vmul.f32 %v565, 17.0
        %v603 = vmul.f32 %v566, 17.0
        %v604 = vmul.f32 %v567, 17.0
        %v605 = vmul.f32 %v568, 17.0
        %v606 = vmul.f32 %v569, 17.0
        %v607 = vmul.f32 %v570, 17.0
        %v608 = vmul.f32 %v571, 17.0
        %v609 = vmul.f32 %v572, 17.0
        %v610 = vmul.f32 %v573, 17.0
        %v611 = vmul.f32 %v574, 17.0
        %v612 = vmul.f32 %v575, 17.0
        %v613 = vmul.f32 %v576, 17.0
        %v614 = vmul.f32 %v577, 17.0
        %v615 = vmul.f32 %v578, 17.0
        %v616 = vmul.f32 %v579, 17.0
        %v617 = vmul.f32 %v580, 17.0
        %v618 = vmul.f32 %v581, 17.0
        %v619 = vmul.f32 %v582, 17.0
        %v620 = vmul.f32 %v583, 17.0
        %v621 = vmul.f32 %v584, 17.0
        %v622 = vmul.f32 %v585, 17.0
        %v623 = vmul.f32 %v586, 17.0
        %v624 = vsub.f32 %v439, %v587
        %v625 = vsub.f32 %v440, %v588
        %v626 = vsub.f32 %v441, %v589
        %v627 = vsub.f32 %v442, %v590
        %v628 = vsub.f32 %v443, %v591
        %v629 = vsub.f32 %v444, %v592
        %v630 = vsub.f32 %v445, %v593
        %v631 = vsub.f32 %v446, %v594
        %v632 = vsub.f32 %v447, %v595
        %v633 = vsub.f32 %v448, %v596
        %v634 = vsub.f32 %v449, %v597
        %v635 = vsub.f32 %v450, %v598
        %v636 = vsub.f32 %v451, %v599
        %v637 = vsub.f32 %v452, %v600
        %v638 = vsub.f32 %v453, %v601
        %v639 = vsub.f32 %v454, %v602
        %v640 = vsub.f32 %v455, %v603
        %v641 = vsub.f32 %v456, %v604
        %v642 = vsub.f32 %v457, %v605
        %v643 = vsub.f32 %v458, %v606
        %v644 = vsub.f32 %v459, %v607
        %v645 = vsub.f32 %v460, %v608
        %v646 = vsub.f32 %v461, %v609
        %v647 = vsub.f32 %v462, %v610
        %v648 = vsub.f32 %v463, %v611
        %v649 = vsub.f32 %v464, %v612
        %v650 = vsub.f32 %v465, %v613
        %v651 = vsub.f32 %v466, %v614
        %v652 = vsub.f32 %v467, %v615
        %v653 = vsub.f32 %v468, %v616
        %v654 = vsub.f32 %v469, %v617
        %v655 = vsub.f32 %v470, %v618
        %v656 = vsub.f32 %v471, %v619
        %v657 = vsub.f32 %v472, %v620
        %v658 = vsub.f32 %v473, %v621
        %v659 = vsub.f32 %v474, %v622
        %v660 = vsub.f32 %v475, %v623
        %vm661 = vcmp.lt.f32.partialorder %v550, 15.5
        %vm662 = vcmp.lt.f32.partialorder %v551, 15.5
        %vm663 = vcmp.lt.f32.partialorder %v552, 15.5
        %vm664 = vcmp.lt.f32.partialorder %v553, 15.5
        %vm665 = vcmp.lt.f32.partialorder %v554, 15.5
        %vm666 = vcmp.lt.f32.partialorder %v555, 15.5
        %vm667 = vcmp.lt.f32.partialorder %v556, 15.5
        %vm668 = vcmp.lt.f32.partialorder %v557, 15.5
        %vm669 = vcmp.lt.f32.partialorder %v558, 15.5
        %vm670 = vcmp.lt.f32.partialorder %v559, 15.5
        %vm671 = vcmp.lt.f32.partialorder %v560, 15.5
        %vm672 = vcmp.lt.f32.partialorder %v561, 15.5
        %vm673 = vcmp.lt.f32.partialorder %v562, 15.5
        %vm674 = vcmp.lt.f32.partialorder %v563, 15.5
        %vm675 = vcmp.lt.f32.partialorder %v564, 15.5
        %vm676 = vcmp.lt.f32.partialorder %v565, 15.5
        %vm677 = vcmp.lt.f32.partialorder %v566, 15.5
        %vm678 = vcmp.lt.f32.partialorder %v567, 15.5
        %vm679 = vcmp.lt.f32.partialorder %v568, 15.5
        %vm680 = vcmp.lt.f32.partialorder %v569, 15.5
        %vm681 = vcmp.lt.f32.partialorder %v570, 15.5
        %vm682 = vcmp.lt.f32.partialorder %v571, 15.5
        %vm683 = vcmp.lt.f32.partialorder %v572, 15.5
        %vm684 = vcmp.lt.f32.partialorder %v573, 15.5
        %vm685 = vcmp.lt.f32.partialorder %v574, 15.5
        %vm686 = vcmp.lt.f32.partialorder %v575, 15.5
        %vm687 = vcmp.lt.f32.partialorder %v576, 15.5
        %vm688 = vcmp.lt.f32.partialorder %v577, 15.5
        %vm689 = vcmp.lt.f32.partialorder %v578, 15.5
        %vm690 = vcmp.lt.f32.partialorder %v579, 15.5
        %vm691 = vcmp.lt.f32.partialorder %v580, 15.5
        %vm692 = vcmp.lt.f32.partialorder %v581, 15.5
        %vm693 = vcmp.lt.f32.partialorder %v582, 15.5
        %vm694 = vcmp.lt.f32.partialorder %v583, 15.5
        %vm695 = vcmp.lt.f32.partialorder %v584, 15.5
        %vm696 = vcmp.lt.f32.partialorder %v585, 15.5
        %vm697 = vcmp.lt.f32.partialorder %v586, 15.5
        %vm698 = vcmp.lt.f32.partialorder %v624, 15.5
        %vm699 = vcmp.lt.f32.partialorder %v625, 15.5
        %vm700 = vcmp.lt.f32.partialorder %v626, 15.5
        %vm701 = vcmp.lt.f32.partialorder %v627, 15.5
        %vm702 = vcmp.lt.f32.partialorder %v628, 15.5
        %vm703 = vcmp.lt.f32.partialorder %v629, 15.5
        %vm704 = vcmp.lt.f32.partialorder %v630, 15.5
        %vm705 = vcmp.lt.f32.partialorder %v631, 15.5
        %vm706 = vcmp.lt.f32.partialorder %v632, 15.5
        %vm707 = vcmp.lt.f32.partialorder %v633, 15.5
        %vm708 = vcmp.lt.f32.partialorder %v634, 15.5
        %vm709 = vcmp.lt.f32.partialorder %v635, 15.5
        %vm710 = vcmp.lt.f32.partialorder %v636, 15.5
        %vm711 = vcmp.lt.f32.partialorder %v637, 15.5
        %vm712 = vcmp.lt.f32.partialorder %v638, 15.5
        %vm713 = vcmp.lt.f32.partialorder %v639, 15.5
        %vm714 = vcmp.lt.f32.partialorder %v640, 15.5
        %vm715 = vcmp.lt.f32.partialorder %v641, 15.5
        %vm716 = vcmp.lt.f32.partialorder %v642, 15.5
        %vm717 = vcmp.lt.f32.partialorder %v643, 15.5
        %vm718 = vcmp.lt.f32.partialorder %v644, 15.5
        %vm719 = vcmp.lt.f32.partialorder %v645, 15.5
        %vm720 = vcmp.lt.f32.partialorder %v646, 15.5
        %vm721 = vcmp.lt.f32.partialorder %v647, 15.5
        %vm722 = vcmp.lt.f32.partialorder %v648, 15.5
        %vm723 = vcmp.lt.f32.partialorder %v649, 15.5
        %vm724 = vcmp.lt.f32.partialorder %v650, 15.5
        %vm725 = vcmp.lt.f32.partialorder %v651, 15.5
        %vm726 = vcmp.lt.f32.partialorder %v652, 15.5
        %vm727 = vcmp.lt.f32.partialorder %v653, 15.5
        %vm728 = vcmp.lt.f32.partialorder %v654, 15.5
        %vm729 = vcmp.lt.f32.partialorder %v655, 15.5
        %vm730 = vcmp.lt.f32.partialorder %v656, 15.5
        %vm731 = vcmp.lt.f32.partialorder %v657, 15.5
        %vm732 = vcmp.lt.f32.partialorder %v658, 15.5
        %vm733 = vcmp.lt.f32.partialorder %v659, 15.5
        %vm734 = vcmp.lt.f32.partialorder %v660, 15.5
        %vm735 = vmand %vm661, %vm698
        %vm736 = vmand %vm662, %vm699
        %vm737 = vmand %vm663, %vm700
        %vm738 = vmand %vm664, %vm701
        %vm739 = vmand %vm665, %vm702
        %vm740 = vmand %vm666, %vm703
        %vm741 = vmand %vm667, %vm704
        %vm742 = vmand %vm668, %vm705
        %vm743 = vmand %vm669, %vm706
        %vm744 = vmand %vm670, %vm707
        %vm745 = vmand %vm671, %vm708
        %vm746 = vmand %vm672, %vm709
        %vm747 = vmand %vm673, %vm710
        %vm748 = vmand %vm674, %vm711
        %vm749 = vmand %vm675, %vm712
        %vm750 = vmand %vm676, %vm713
        %vm751 = vmand %vm677, %vm714
        %vm752 = vmand %vm678, %vm715
        %vm753 = vmand %vm679, %vm716
        %vm754 = vmand %vm680, %vm717
        %vm755 = vmand %vm681, %vm718
        %vm756 = vmand %vm682, %vm719
        %vm757 = vmand %vm683, %vm720
        %vm758 = vmand %vm684, %vm721
        %vm759 = vmand %vm685, %vm722
        %vm760 = vmand %vm686, %vm723
        %vm761 = vmand %vm687, %vm724
        %vm762 = vmand %vm688, %vm725
        %vm763 = vmand %vm689, %vm726
        %vm764 = vmand %vm690, %vm727
        %vm765 = vmand %vm691, %vm728
        %vm766 = vmand %vm692, %vm729
        %vm767 = vmand %vm693, %vm730
        %vm768 = vmand %vm694, %vm731
        %vm769 = vmand %vm695, %vm732
        %vm770 = vmand %vm696, %vm733
        %vm771 = vmand %vm697, %vm734
        %v772 = vsel %vm735, 1.0, 0.0
        %v773 = vsel %vm736, 1.0, 0.0
        %v774 = vsel %vm737, 1.0, 0.0
        %v775 = vsel %vm738, 1.0, 0.0
        %v776 = vsel %vm739, 1.0, 0.0
        %v777 = vsel %vm740, 1.0, 0.0
        %v778 = vsel %vm741, 1.0, 0.0
        %v779 = vsel %vm742, 1.0, 0.0
        %v780 = vsel %vm743, 1.0, 0.0
        %v781 = vsel %vm744, 1.0, 0.0
        %v782 = vsel %vm745, 1.0, 0.0
        %v783 = vsel %vm746, 1.0, 0.0
        %v784 = vsel %vm747, 1.0, 0.0
        %v785 = vsel %vm748, 1.0, 0.0
        %v786 = vsel %vm749, 1.0, 0.0
        %v787 = vsel %vm750, 1.0, 0.0
        %v788 = vsel %vm751, 1.0, 0.0
        %v789 = vsel %vm752, 1.0, 0.0
        %v790 = vsel %vm753, 1.0, 0.0
        %v791 = vsel %vm754, 1.0, 0.0
        %v792 = vsel %vm755, 1.0, 0.0
        %v793 = vsel %vm756, 1.0, 0.0
        %v794 = vsel %vm757, 1.0, 0.0
        %v795 = vsel %vm758, 1.0, 0.0
        %v796 = vsel %vm759, 1.0, 0.0
        %v797 = vsel %vm760, 1.0, 0.0
        %v798 = vsel %vm761, 1.0, 0.0
        %v799 = vsel %vm762, 1.0, 0.0
        %v800 = vsel %vm763, 1.0, 0.0
        %v801 = vsel %vm764, 1.0, 0.0
        %v802 = vsel %vm765, 1.0, 0.0
        %v803 = vsel %vm766, 1.0, 0.0
        %v804 = vsel %vm767, 1.0, 0.0
        %v805 = vsel %vm768, 1.0, 0.0
        %v806 = vsel %vm769, 1.0, 0.0
        %v807 = vsel %vm770, 1.0, 0.0
        %v808 = vsel %vm771, 1.0, 0.0
        %v809 = vld [vmem:[#allocation2] sm:$0xff]
        %v810 = vld [vmem:[#allocation2 + $0x8] sm:$0xff]
        %v811 = vld [vmem:[#allocation2 + $0x10] sm:$0xff]
        %v812 = vld [vmem:[#allocation2 + $0x18] sm:$0xff]
        %v813 = vld [vmem:[#allocation2 + $0x20] sm:$0xff]
        %v814 = vld [vmem:[#allocation2 + $0x28] sm:$0xff]
        %v815 = vld [vmem:[#allocation2 + $0x30] sm:$0xff]
        %v816 = vld [vmem:[#allocation2 + $0x38] sm:$0xff]
        %v817 = vld [vmem:[#allocation2 + $0x40] sm:$0xff]
        %v818 = vld [vmem:[#allocation2 + $0x48] sm:$0xff]
        %v819 = vld [vmem:[#allocation2 + $0x50] sm:$0xff]
        %v820 = vld [vmem:[#allocation2 + $0x58] sm:$0xff]
        %v821 = vld [vmem:[#allocation2 + $0x60] sm:$0xff]
        %v822 = vld [vmem:[#allocation2 + $0x68] sm:$0xff]
        %v823 = vld [vmem:[#allocation2 + $0x70] sm:$0xff]
        %v824 = vld [vmem:[#allocation2 + $0x78] sm:$0xff]
        %v825 = vld [vmem:[#allocation2 + $0x80] sm:$0xff]
        %v826 = vld [vmem:[#allocation2 + $0x88] sm:$0xff]
        %v827 = vld [vmem:[#allocation2 + $0x90] sm:$0xff]
        %v828 = vld [vmem:[#allocation2 + $0x98] sm:$0xff]
        %v829 = vld [vmem:[#allocation2 + $0xa0] sm:$0xff]
        %v830 = vld [vmem:[#allocation2 + $0xa8] sm:$0xff]
        %v831 = vld [vmem:[#allocation2 + $0xb0] sm:$0xff]
        %v832 = vld [vmem:[#allocation2 + $0xb8] sm:$0xff]
        %v833 = vld [vmem:[#allocation2 + $0xc0] sm:$0xff]
        %v834 = vld [vmem:[#allocation2 + $0xc8] sm:$0xff]
        %v835 = vld [vmem:[#allocation2 + $0xd0] sm:$0xff]
        %v836 = vld [vmem:[#allocation2 + $0xd8] sm:$0xff]
        %v837 = vld [vmem:[#allocation2 + $0xe0] sm:$0xff]
        %v838 = vld [vmem:[#allocation2 + $0xe8] sm:$0xff]
        %v839 = vld [vmem:[#allocation2 + $0xf0] sm:$0xff]
        %v840 = vld [vmem:[#allocation2 + $0xf8] sm:$0xff]
        %v841 = vld [vmem:[#allocation2 + $0x100] sm:$0xff]
        %v842 = vld [vmem:[#allocation2 + $0x108] sm:$0xff]
        %v843 = vld [vmem:[#allocation2 + $0x110] sm:$0xff]
        %v844 = vld [vmem:[#allocation2 + $0x118] sm:$0xff]
        %v845 = vld [vmem:[#allocation2 + $0x120] sm:$0x1]
        %v846 = vpack.c.bf16 %v810, %v809
        %v847 = vpack.c.bf16 %v812, %v811
        %v848 = vpack.c.bf16 %v814, %v813
        %v849 = vpack.c.bf16 %v816, %v815
        %v850 = vpack.c.bf16 %v818, %v817
        %v851 = vpack.c.bf16 %v820, %v819
        %v852 = vpack.c.bf16 %v822, %v821
        %v853 = vpack.c.bf16 %v824, %v823
        %v854 = vpack.c.bf16 %v826, %v825
        %v855 = vpack.c.bf16 %v828, %v827
        %v856 = vpack.c.bf16 %v830, %v829
        %v857 = vpack.c.bf16 %v832, %v831
        %v858 = vpack.c.bf16 %v834, %v833
        %v859 = vpack.c.bf16 %v836, %v835
        %v860 = vpack.c.bf16 %v838, %v837
        %v861 = vpack.c.bf16 %v840, %v839
        %v862 = vpack.c.bf16 %v842, %v841
        %v863 = vpack.c.bf16 %v844, %v843
        %v864 = vpack.c.bf16 %v845, %v845
        %v865 = vld [vmem:[#allocation2 + $0x1] sm:$0xff]
        %v866 = vld [vmem:[#allocation2 + $0x9] sm:$0xff]
        %v867 = vld [vmem:[#allocation2 + $0x11] sm:$0xff]
        %v868 = vld [vmem:[#allocation2 + $0x19] sm:$0xff]
        %v869 = vld [vmem:[#allocation2 + $0x21] sm:$0xff]
        %v870 = vld [vmem:[#allocation2 + $0x29] sm:$0xff]
        %v871 = vld [vmem:[#allocation2 + $0x31] sm:$0xff]
        %v872 = vld [vmem:[#allocation2 + $0x39] sm:$0xff]
        %v873 = vld [vmem:[#allocation2 + $0x41] sm:$0xff]
        %v874 = vld [vmem:[#allocation2 + $0x49] sm:$0xff]
        %v875 = vld [vmem:[#allocation2 + $0x51] sm:$0xff]
        %v876 = vld [vmem:[#allocation2 + $0x59] sm:$0xff]
        %v877 = vld [vmem:[#allocation2 + $0x61] sm:$0xff]
        %v878 = vld [vmem:[#allocation2 + $0x69] sm:$0xff]
        %v879 = vld [vmem:[#allocation2 + $0x71] sm:$0xff]
        %v880 = vld [vmem:[#allocation2 + $0x79] sm:$0xff]
        %v881 = vld [vmem:[#allocation2 + $0x81] sm:$0xff]
        %v882 = vld [vmem:[#allocation2 + $0x89] sm:$0xff]
        %v883 = vld [vmem:[#allocation2 + $0x91] sm:$0xff]
        %v884 = vld [vmem:[#allocation2 + $0x99] sm:$0xff]
        %v885 = vld [vmem:[#allocation2 + $0xa1] sm:$0xff]
        %v886 = vld [vmem:[#allocation2 + $0xa9] sm:$0xff]
        %v887 = vld [vmem:[#allocation2 + $0xb1] sm:$0xff]
        %v888 = vld [vmem:[#allocation2 + $0xb9] sm:$0xff]
        %v889 = vld [vmem:[#allocation2 + $0xc1] sm:$0xff]
        %v890 = vld [vmem:[#allocation2 + $0xc9] sm:$0xff]
        %v891 = vld [vmem:[#allocation2 + $0xd1] sm:$0xff]
        %v892 = vld [vmem:[#allocation2 + $0xd9] sm:$0xff]
        %v893 = vld [vmem:[#allocation2 + $0xe1] sm:$0xff]
        %v894 = vld [vmem:[#allocation2 + $0xe9] sm:$0xff]
        %v895 = vld [vmem:[#allocation2 + $0xf1] sm:$0xff]
        %v896 = vld [vmem:[#allocation2 + $0xf9] sm:$0xff]
        %v897 = vld [vmem:[#allocation2 + $0x101] sm:$0xff]
        %v898 = vld [vmem:[#allocation2 + $0x109] sm:$0xff]
        %v899 = vld [vmem:[#allocation2 + $0x111] sm:$0xff]
        %v900 = vld [vmem:[#allocation2 + $0x119] sm:$0xff]
        %v901 = vld [vmem:[#allocation2 + $0x121] sm:$0x1]
        %v902 = vpack.c.bf16 %v866, %v865
        %v903 = vpack.c.bf16 %v868, %v867
        %v904 = vpack.c.bf16 %v870, %v869
        %v905 = vpack.c.bf16 %v872, %v871
        %v906 = vpack.c.bf16 %v874, %v873
        %v907 = vpack.c.bf16 %v876, %v875
        %v908 = vpack.c.bf16 %v878, %v877
        %v909 = vpack.c.bf16 %v880, %v879
        %v910 = vpack.c.bf16 %v882, %v881
        %v911 = vpack.c.bf16 %v884, %v883
        %v912 = vpack.c.bf16 %v886, %v885
        %v913 = vpack.c.bf16 %v888, %v887
        %v914 = vpack.c.bf16 %v890, %v889
        %v915 = vpack.c.bf16 %v892, %v891
        %v916 = vpack.c.bf16 %v894, %v893
        %v917 = vpack.c.bf16 %v896, %v895
        %v918 = vpack.c.bf16 %v898, %v897
        %v919 = vpack.c.bf16 %v900, %v899
        %v920 = vpack.c.bf16 %v901, %v901
        %v921 = vld [vmem:[#allocation2 + $0x121] sm:$0xff]
        %v922 = vld [vmem:[#allocation2 + $0x129] sm:$0xff]
        %v923 = vld [vmem:[#allocation2 + $0x131] sm:$0x1]
        %v924 = vpack.c.bf16 %v922, %v921
        %v925 = vpack.c.bf16 %v923, %v923
        %v926 = vld [vmem:[#allocation2 + $0x12] sm:$0xff]
        %v927 = vld [vmem:[#allocation2 + $0x1a] sm:$0xff]
        %v928 = vld [vmem:[#allocation2 + $0x22] sm:$0xff]
        %v929 = vld [vmem:[#allocation2 + $0x2a] sm:$0xff]
        %v930 = vld [vmem:[#allocation2 + $0x32] sm:$0xff]
        %v931 = vld [vmem:[#allocation2 + $0x3a] sm:$0xff]
        %v932 = vld [vmem:[#allocation2 + $0x42] sm:$0xff]
        %v933 = vld [vmem:[#allocation2 + $0x4a] sm:$0xff]
        %v934 = vld [vmem:[#allocation2 + $0x52] sm:$0xff]
        %v935 = vld [vmem:[#allocation2 + $0x5a] sm:$0xff]
        %v936 = vld [vmem:[#allocation2 + $0x62] sm:$0xff]
        %v937 = vld [vmem:[#allocation2 + $0x6a] sm:$0xff]
        %v938 = vld [vmem:[#allocation2 + $0x72] sm:$0xff]
        %v939 = vld [vmem:[#allocation2 + $0x7a] sm:$0xff]
        %v940 = vld [vmem:[#allocation2 + $0x82] sm:$0xff]
        %v941 = vld [vmem:[#allocation2 + $0x8a] sm:$0xff]
        %v942 = vld [vmem:[#allocation2 + $0x92] sm:$0xff]
        %v943 = vld [vmem:[#allocation2 + $0x9a] sm:$0xff]
        %v944 = vld [vmem:[#allocation2 + $0xa2] sm:$0xff]
        %v945 = vld [vmem:[#allocation2 + $0xaa] sm:$0xff]
        %v946 = vld [vmem:[#allocation2 + $0xb2] sm:$0xff]
        %v947 = vld [vmem:[#allocation2 + $0xba] sm:$0xff]
        %v948 = vld [vmem:[#allocation2 + $0xc2] sm:$0xff]
        %v949 = vld [vmem:[#allocation2 + $0xca] sm:$0xff]
        %v950 = vld [vmem:[#allocation2 + $0xd2] sm:$0xff]
        %v951 = vld [vmem:[#allocation2 + $0xda] sm:$0xff]
        %v952 = vld [vmem:[#allocation2 + $0xe2] sm:$0xff]
        %v953 = vld [vmem:[#allocation2 + $0xea] sm:$0xff]
        %v954 = vld [vmem:[#allocation2 + $0xf2] sm:$0xff]
        %v955 = vld [vmem:[#allocation2 + $0xfa] sm:$0xff]
        %v956 = vld [vmem:[#allocation2 + $0x102] sm:$0xff]
        %v957 = vld [vmem:[#allocation2 + $0x10a] sm:$0xff]
        %v958 = vld [vmem:[#allocation2 + $0x112] sm:$0xff]
        %v959 = vld [vmem:[#allocation2 + $0x11a] sm:$0xff]
        %v960 = vld [vmem:[#allocation2 + $0x122] sm:$0xff]
        %v961 = vld [vmem:[#allocation2 + $0x12a] sm:$0xff]
        %v962 = vld [vmem:[#allocation2 + $0x132] sm:$0x1]
        %v963 = vpack.c.bf16 %v927, %v926
        %v964 = vpack.c.bf16 %v929, %v928
        %v965 = vpack.c.bf16 %v931, %v930
        %v966 = vpack.c.bf16 %v933, %v932
        %v967 = vpack.c.bf16 %v935, %v934
        %v968 = vpack.c.bf16 %v937, %v936
        %v969 = vpack.c.bf16 %v939, %v938
        %v970 = vpack.c.bf16 %v941, %v940
        %v971 = vpack.c.bf16 %v943, %v942
        %v972 = vpack.c.bf16 %v945, %v944
        %v973 = vpack.c.bf16 %v947, %v946
        %v974 = vpack.c.bf16 %v949, %v948
        %v975 = vpack.c.bf16 %v951, %v950
        %v976 = vpack.c.bf16 %v953, %v952
        %v977 = vpack.c.bf16 %v955, %v954
        %v978 = vpack.c.bf16 %v957, %v956
        %v979 = vpack.c.bf16 %v959, %v958
        %v980 = vpack.c.bf16 %v961, %v960
        %v981 = vpack.c.bf16 %v962, %v962
        %v982 = vld [vmem:[#allocation4] sm:$0xf]
        %v983 = vld [vmem:[#allocation4 + $0x4] sm:$0xf]
        %v984 = vld [vmem:[#allocation4 + $0x8] sm:$0xf]
        %v985 = vld [vmem:[#allocation4 + $0xc] sm:$0xf]
        %v986 = vld [vmem:[#allocation4 + $0x10] sm:$0xf]
        %v987 = vld [vmem:[#allocation4 + $0x14] sm:$0xf]
        %v988 = vld [vmem:[#allocation4 + $0x18] sm:$0xf]
        %v989 = vld [vmem:[#allocation4 + $0x1c] sm:$0xf]
        %v990 = vld [vmem:[#allocation4 + $0x20] sm:$0xf]
        %v991 = vld [vmem:[#allocation4 + $0x24] sm:$0xf]
        %v992 = vld [vmem:[#allocation4 + $0x28] sm:$0xf]
        %v993 = vld [vmem:[#allocation4 + $0x2c] sm:$0xf]
        %v994 = vld [vmem:[#allocation4 + $0x30] sm:$0xf]
        %v995 = vld [vmem:[#allocation4 + $0x34] sm:$0xf]
        %v996 = vld [vmem:[#allocation4 + $0x38] sm:$0xf]
        %v997 = vld [vmem:[#allocation4 + $0x3c] sm:$0xf]
        %v998 = vld [vmem:[#allocation4 + $0x40] sm:$0xf]
        %v999 = vld [vmem:[#allocation4 + $0x44] sm:$0xf]
        %v1000 = vld [vmem:[#allocation4 + $0x48] sm:$0xf]
        %v1001 = vld [vmem:[#allocation4 + $0x4c] sm:$0xf]
        %v1002 = vld [vmem:[#allocation4 + $0x50] sm:$0xf]
        %v1003 = vld [vmem:[#allocation4 + $0x54] sm:$0xf]
        %v1004 = vld [vmem:[#allocation4 + $0x58] sm:$0xf]
        %v1005 = vld [vmem:[#allocation4 + $0x5c] sm:$0xf]
        %v1006 = vld [vmem:[#allocation4 + $0x60] sm:$0xf]
        %v1007 = vld [vmem:[#allocation4 + $0x64] sm:$0xf]
        %v1008 = vld [vmem:[#allocation4 + $0x68] sm:$0xf]
        %v1009 = vld [vmem:[#allocation4 + $0x6c] sm:$0xf]
        %v1010 = vld [vmem:[#allocation4 + $0x70] sm:$0xf]
        %v1011 = vld [vmem:[#allocation4 + $0x74] sm:$0xf]
        %v1012 = vld [vmem:[#allocation4 + $0x78] sm:$0xf]
        %v1013 = vld [vmem:[#allocation4 + $0x7c] sm:$0xf]
        %v1014 = vld [vmem:[#allocation4 + $0x80] sm:$0xf]
        %v1015 = vld [vmem:[#allocation4 + $0x84] sm:$0xf]
        %v1016 = vld [vmem:[#allocation4 + $0x88] sm:$0xf]
        %v1017 = vld [vmem:[#allocation4 + $0x8c] sm:$0xf]
        %v1018 = vld [vmem:[#allocation4 + $0x90] sm:$0xf]
        %v1019 = vld [vmem:[#allocation4 + $0x94] sm:$0xf]
        %v1020 = vld [vmem:[#allocation4 + $0x98] sm:$0xf]
        %v1021 = vld [vmem:[#allocation4 + $0x9c] sm:$0xf]
        %v1022 = vld [vmem:[#allocation4 + $0xa0] sm:$0xf]
        %v1023 = vld [vmem:[#allocation4 + $0xa4] sm:$0xf]
        %v1024 = vld [vmem:[#allocation4 + $0xa8] sm:$0xf]
        %v1025 = vld [vmem:[#allocation4 + $0xac] sm:$0xf]
        %v1026 = vld [vmem:[#allocation4 + $0xb0] sm:$0xf]
        %v1027 = vld [vmem:[#allocation4 + $0xb4] sm:$0xf]
        %v1028 = vld [vmem:[#allocation4 + $0xb8] sm:$0xf]
        %v1029 = vld [vmem:[#allocation4 + $0xbc] sm:$0xf]
        %v1030 = vld [vmem:[#allocation4 + $0xc0] sm:$0xf]
        %v1031 = vld [vmem:[#allocation4 + $0xc4] sm:$0xf]
        %v1032 = vld [vmem:[#allocation4 + $0xc8] sm:$0xf]
        %v1033 = vld [vmem:[#allocation4 + $0xcc] sm:$0xf]
        %v1034 = vld [vmem:[#allocation4 + $0xd0] sm:$0xf]
        %v1035 = vld [vmem:[#allocation4 + $0xd4] sm:$0xf]
        %v1036 = vld [vmem:[#allocation4 + $0xd8] sm:$0xf]
        %v1037 = vld [vmem:[#allocation4 + $0xdc] sm:$0xf]
        %v1038 = vld [vmem:[#allocation4 + $0xe0] sm:$0xf]
        %v1039 = vld [vmem:[#allocation4 + $0xe4] sm:$0xf]
        %v1040 = vld [vmem:[#allocation4 + $0xe8] sm:$0xf]
        %v1041 = vld [vmem:[#allocation4 + $0xec] sm:$0xf]
        %v1042 = vld [vmem:[#allocation4 + $0xf0] sm:$0xf]
        %v1043 = vld [vmem:[#allocation4 + $0xf4] sm:$0xf]
        %v1044 = vld [vmem:[#allocation4 + $0xf8] sm:$0xf]
        %v1045 = vld [vmem:[#allocation4 + $0xfc] sm:$0xf]
        %v1046 = vld [vmem:[#allocation6] sm:$0x1]
        %v1048 = vlaneseq
        %v1049 = vshrl.u32 %v1048, 7
        %v1050 = vsub.s32 0, %v1049
        %v1051 = vrot.slane %v1046, %v1050
        %v1117 = vunpack.c.l.b16 %v982
        %v1118 = vunpack.c.l.b16 %v983
        %v1119 = vunpack.c.l.b16 %v984
        %v1120 = vunpack.c.l.b16 %v985
        %v1121 = vunpack.c.l.b16 %v986
        %v1122 = vunpack.c.l.b16 %v987
        %v1123 = vunpack.c.l.b16 %v988
        %v1124 = vunpack.c.l.b16 %v989
        %v1125 = vunpack.c.l.b16 %v990
        %v1126 = vunpack.c.l.b16 %v991
        %v1127 = vunpack.c.l.b16 %v992
        %v1128 = vunpack.c.l.b16 %v993
        %v1129 = vunpack.c.l.b16 %v994
        %v1130 = vunpack.c.l.b16 %v995
        %v1131 = vunpack.c.l.b16 %v996
        %v1132 = vunpack.c.l.b16 %v997
        %v1133 = vunpack.c.l.b16 %v998
        %v1134 = vunpack.c.l.b16 %v999
        %v1135 = vunpack.c.l.b16 %v1000
        %v1136 = vunpack.c.l.b16 %v1001
        %v1137 = vunpack.c.l.b16 %v1002
        %v1138 = vunpack.c.l.b16 %v1003
        %v1139 = vunpack.c.l.b16 %v1004
        %v1140 = vunpack.c.l.b16 %v1005
        %v1141 = vunpack.c.l.b16 %v1006
        %v1142 = vunpack.c.l.b16 %v1007
        %v1143 = vunpack.c.l.b16 %v1008
        %v1144 = vunpack.c.l.b16 %v1009
        %v1145 = vunpack.c.l.b16 %v1010
        %v1146 = vunpack.c.l.b16 %v1011
        %v1147 = vunpack.c.l.b16 %v1012
        %v1148 = vunpack.c.l.b16 %v1013
        %v1149 = vunpack.c.l.b16 %v1014
        %v1150 = vunpack.c.l.b16 %v1015
        %v1151 = vunpack.c.l.b16 %v1016
        %v1152 = vunpack.c.l.b16 %v1017
        %v1153 = vunpack.c.l.b16 %v1018
        %v1154 = vunpack.c.l.b16 %v1019
        %v1155 = vunpack.c.l.b16 %v1020
        %v1156 = vunpack.c.l.b16 %v1021
        %v1157 = vunpack.c.l.b16 %v1022
        %v1158 = vunpack.c.l.b16 %v1023
        %v1159 = vunpack.c.l.b16 %v1024
        %v1160 = vunpack.c.l.b16 %v1025
        %v1161 = vunpack.c.l.b16 %v1026
        %v1162 = vunpack.c.l.b16 %v1027
        %v1163 = vunpack.c.l.b16 %v1028
        %v1164 = vunpack.c.l.b16 %v1029
        %v1165 = vunpack.c.l.b16 %v1030
        %v1166 = vunpack.c.l.b16 %v1031
        %v1167 = vunpack.c.l.b16 %v1032
        %v1168 = vunpack.c.l.b16 %v1033
        %v1169 = vunpack.c.l.b16 %v1034
        %v1170 = vunpack.c.l.b16 %v1035
        %v1171 = vunpack.c.l.b16 %v1036
        %v1172 = vunpack.c.l.b16 %v1037
        %v1173 = vunpack.c.l.b16 %v1038
        %v1174 = vunpack.c.l.b16 %v1039
        %v1175 = vunpack.c.l.b16 %v1040
        %v1176 = vunpack.c.l.b16 %v1041
        %v1177 = vunpack.c.l.b16 %v1042
        %v1178 = vunpack.c.l.b16 %v1043
        %v1179 = vunpack.c.l.b16 %v1044
        %v1180 = vunpack.c.l.b16 %v1045
        %v1181 = vpack.c.b16 %v1118, %v1117
        %v1182 = vpack.c.b16 %v1120, %v1119
        %v1183 = vpack.c.b16 %v1122, %v1121
        %v1184 = vpack.c.b16 %v1124, %v1123
        %v1185 = vpack.c.b16 %v1126, %v1125
        %v1186 = vpack.c.b16 %v1128, %v1127
        %v1187 = vpack.c.b16 %v1130, %v1129
        %v1188 = vpack.c.b16 %v1132, %v1131
        %v1189 = vpack.c.b16 %v1134, %v1133
        %v1190 = vpack.c.b16 %v1136, %v1135
        %v1191 = vpack.c.b16 %v1138, %v1137
        %v1192 = vpack.c.b16 %v1140, %v1139
        %v1193 = vpack.c.b16 %v1142, %v1141
        %v1194 = vpack.c.b16 %v1144, %v1143
        %v1195 = vpack.c.b16 %v1146, %v1145
        %v1196 = vpack.c.b16 %v1148, %v1147
        %v1197 = vpack.c.b16 %v1150, %v1149
        %v1198 = vpack.c.b16 %v1152, %v1151
        %v1199 = vpack.c.b16 %v1154, %v1153
        %v1200 = vpack.c.b16 %v1156, %v1155
        %v1201 = vpack.c.b16 %v1158, %v1157
        %v1202 = vpack.c.b16 %v1160, %v1159
        %v1203 = vpack.c.b16 %v1162, %v1161
        %v1204 = vpack.c.b16 %v1164, %v1163
        %v1205 = vpack.c.b16 %v1166, %v1165
        %v1206 = vpack.c.b16 %v1168, %v1167
        %v1207 = vpack.c.b16 %v1170, %v1169
        %v1208 = vpack.c.b16 %v1172, %v1171
        %v1209 = vpack.c.b16 %v1174, %v1173
        %v1210 = vpack.c.b16 %v1176, %v1175
        %v1211 = vpack.c.b16 %v1178, %v1177
        %v1212 = vpack.c.b16 %v1180, %v1179
        %1245 = vmatprep.subr.bf16.mxu0 0
        %1246 = vmatpush1.bf16.msra.mxu0 %v1181
        %1247 = vmatprep.subr.bf16.mxu0 0
        %1248 = vmatpush1.bf16.msra.mxu0 %v1182
        %1249 = vmatprep.subr.bf16.mxu0 0
        %1250 = vmatpush1.bf16.msra.mxu0 %v1183
        %1251 = vmatprep.subr.bf16.mxu0 0
        %1252 = vmatpush1.bf16.msra.mxu0 %v1184
        %1253 = vmatprep.subr.bf16.mxu0 0
        %1254 = vmatpush1.bf16.msra.mxu0 %v1185
        %1255 = vmatprep.subr.bf16.mxu0 0
        %1256 = vmatpush1.bf16.msra.mxu0 %v1186
        %1257 = vmatprep.subr.bf16.mxu0 0
        %1258 = vmatpush1.bf16.msra.mxu0 %v1187
        %1259 = vmatprep.subr.bf16.mxu0 0
        %1260 = vmatpush1.bf16.msra.mxu0 %v1188
        %1261 = vmatprep.subr.bf16.mxu0 0
        %1262 = vmatpush1.bf16.msra.mxu0 %v1189
        %1263 = vmatprep.subr.bf16.mxu0 0
        %1264 = vmatpush1.bf16.msra.mxu0 %v1190
        %1265 = vmatprep.subr.bf16.mxu0 0
        %1266 = vmatpush1.bf16.msra.mxu0 %v1191
        %1267 = vmatprep.subr.bf16.mxu0 0
        %1268 = vmatpush1.bf16.msra.mxu0 %v1192
        %1269 = vmatprep.subr.bf16.mxu0 0
        %1270 = vmatpush1.bf16.msra.mxu0 %v1193
        %1271 = vmatprep.subr.bf16.mxu0 0
        %1272 = vmatpush1.bf16.msra.mxu0 %v1194
        %1273 = vmatprep.subr.bf16.mxu0 0
        %1274 = vmatpush1.bf16.msra.mxu0 %v1195
        %1275 = vmatprep.subr.bf16.mxu0 0
        %1276 = vmatpush1.bf16.msra.mxu0 %v1196
        %1277 = vmatprep.mubr.bf16.mxu0 %v902
        %1278 = vmatmul.mubr.bf16.gmra.mrb[0].mxu0 %v846
        %v1279 = vpop.f32.mrb[0].mxu0
        %v1280 = vadd.f32 %v1051, %v1279
        %v1281 = vpop.f32.mrb[0].mxu0
        %v1282 = vpop.f32.mrb[0].mxu0
        %v1283 = vadd.f32 %v1051, %v1282
        %v1284 = vpop.f32.mrb[0].mxu0
        %1285 = vmatprep.mubr.bf16.mxu0 %v903
        %1286 = vmatmul.mubr.bf16.gmra.mrb[0].mxu0 %v847
        %v1287 = vpop.f32.mrb[0].mxu0
        %v1288 = vadd.f32 %v1051, %v1287
        %v1289 = vpop.f32.mrb[0].mxu0
        %v1290 = vpop.f32.mrb[0].mxu0
        %v1291 = vadd.f32 %v1051, %v1290
        %v1292 = vpop.f32.mrb[0].mxu0
        %1293 = vmatprep.mubr.bf16.mxu0 %v904
        %1294 = vmatmul.mubr.bf16.gmra.mrb[0].mxu0 %v848
        %v1295 = vpop.f32.mrb[0].mxu0
        %v1296 = vadd.f32 %v1051, %v1295
        %v1297 = vpop.f32.mrb[0].mxu0
        %v1298 = vpop.f32.mrb[0].mxu0
        %v1299 = vadd.f32 %v1051, %v1298
        %v1300 = vpop.f32.mrb[0].mxu0
        %1301 = vmatprep.mubr.bf16.mxu0 %v905
        %1302 = vmatmul.mubr.bf16.gmra.mrb[0].mxu0 %v849
        %v1303 = vpop.f32.mrb[0].mxu0
        %v1304 = vadd.f32 %v1051, %v1303
        %v1305 = vpop.f32.mrb[0].mxu0
        %v1306 = vpop.f32.mrb[0].mxu0
        %v1307 = vadd.f32 %v1051, %v1306
        %v1308 = vpop.f32.mrb[0].mxu0
        %1309 = vmatprep.mubr.bf16.mxu0 %v906
        %1310 = vmatmul.mubr.bf16.gmra.mrb[0].mxu0 %v850
        %v1311 = vpop.f32.mrb[0].mxu0
        %v1312 = vadd.f32 %v1051, %v1311
        %v1313 = vpop.f32.mrb[0].mxu0
        %v1314 = vpop.f32.mrb[0].mxu0
        %v1315 = vadd.f32 %v1051, %v1314
        %v1316 = vpop.f32.mrb[0].mxu0
        %1317 = vmatprep.mubr.bf16.mxu0 %v907
        %1318 = vmatmul.mubr.bf16.gmra.mrb[0].mxu0 %v851
        %v1319 = vpop.f32.mrb[0].mxu0
        %v1320 = vadd.f32 %v1051, %v1319
        %v1321 = vpop.f32.mrb[0].mxu0
        %v1322 = vpop.f32.mrb[0].mxu0
        %v1323 = vadd.f32 %v1051, %v1322
        %v1324 = vpop.f32.mrb[0].mxu0
        %1325 = vmatprep.mubr.bf16.mxu0 %v908
        %1326 = vmatmul.mubr.bf16.gmra.mrb[0].mxu0 %v852
        %v1327 = vpop.f32.mrb[0].mxu0
        %v1328 = vadd.f32 %v1051, %v1327
        %v1329 = vpop.f32.mrb[0].mxu0
        %v1330 = vpop.f32.mrb[0].mxu0
        %v1331 = vadd.f32 %v1051, %v1330
        %v1332 = vpop.f32.mrb[0].mxu0
        %1333 = vmatprep.mubr.bf16.mxu0 %v909
        %1334 = vmatmul.mubr.bf16.gmra.mrb[0].mxu0 %v853
        %v1335 = vpop.f32.mrb[0].mxu0
        %v1336 = vadd.f32 %v1051, %v1335
        %v1337 = vpop.f32.mrb[0].mxu0
        %v1338 = vpop.f32.mrb[0].mxu0
        %v1339 = vadd.f32 %v1051, %v1338
        %v1340 = vpop.f32.mrb[0].mxu0
        %1341 = vmatprep.mubr.bf16.mxu0 %v910
        %1342 = vmatmul.mubr.bf16.gmra.mrb[0].mxu0 %v854
        %v1343 = vpop.f32.mrb[0].mxu0
        %v1344 = vadd.f32 %v1051, %v1343
        %v1345 = vpop.f32.mrb[0].mxu0
        %v1346 = vpop.f32.mrb[0].mxu0
        %v1347 = vadd.f32 %v1051, %v1346
        %v1348 = vpop.f32.mrb[0].mxu0
        %1349 = vmatprep.mubr.bf16.mxu0 %v911
        %1350 = vmatmul.mubr.bf16.gmra.mrb[0].mxu0 %v855
        %v1351 = vpop.f32.mrb[0].mxu0
        %v1352 = vadd.f32 %v1051, %v1351
        %v1353 = vpop.f32.mrb[0].mxu0
        %v1354 = vpop.f32.mrb[0].mxu0
        %v1355 = vadd.f32 %v1051, %v1354
        %v1356 = vpop.f32.mrb[0].mxu0
        %1357 = vmatprep.mubr.bf16.mxu0 %v912
        %1358 = vmatmul.mubr.bf16.gmra.mrb[0].mxu0 %v856
        %v1359 = vpop.f32.mrb[0].mxu0
        %v1360 = vadd.f32 %v1051, %v1359
        %v1361 = vpop.f32.mrb[0].mxu0
        %v1362 = vpop.f32.mrb[0].mxu0
        %v1363 = vadd.f32 %v1051, %v1362
        %v1364 = vpop.f32.mrb[0].mxu0
        %1365 = vmatprep.mubr.bf16.mxu0 %v913
        %1366 = vmatmul.mubr.bf16.gmra.mrb[0].mxu0 %v857
        %v1367 = vpop.f32.mrb[0].mxu0
        %v1368 = vadd.f32 %v1051, %v1367
        %v1369 = vpop.f32.mrb[0].mxu0
        %v1370 = vpop.f32.mrb[0].mxu0
        %v1371 = vadd.f32 %v1051, %v1370
        %v1372 = vpop.f32.mrb[0].mxu0
        %1373 = vmatprep.mubr.bf16.mxu0 %v914
        %1374 = vmatmul.mubr.bf16.gmra.mrb[0].mxu0 %v858
        %v1375 = vpop.f32.mrb[0].mxu0
        %v1376 = vadd.f32 %v1051, %v1375
        %v1377 = vpop.f32.mrb[0].mxu0
        %v1378 = vpop.f32.mrb[0].mxu0
        %v1379 = vadd.f32 %v1051, %v1378
        %v1380 = vpop.f32.mrb[0].mxu0
        %1381 = vmatprep.mubr.bf16.mxu0 %v915
        %1382 = vmatmul.mubr.bf16.gmra.mrb[0].mxu0 %v859
        %v1383 = vpop.f32.mrb[0].mxu0
        %v1384 = vadd.f32 %v1051, %v1383
        %v1385 = vpop.f32.mrb[0].mxu0
        %v1386 = vpop.f32.mrb[0].mxu0
        %v1387 = vadd.f32 %v1051, %v1386
        %v1388 = vpop.f32.mrb[0].mxu0
        %1389 = vmatprep.mubr.bf16.mxu0 %v916
        %1390 = vmatmul.mubr.bf16.gmra.mrb[0].mxu0 %v860
        %v1391 = vpop.f32.mrb[0].mxu0
        %v1392 = vadd.f32 %v1051, %v1391
        %v1393 = vpop.f32.mrb[0].mxu0
        %v1394 = vpop.f32.mrb[0].mxu0
        %v1395 = vadd.f32 %v1051, %v1394
        %v1396 = vpop.f32.mrb[0].mxu0
        %1397 = vmatprep.mubr.bf16.mxu0 %v917
        %1398 = vmatmul.mubr.bf16.gmra.mrb[0].mxu0 %v861
        %v1399 = vpop.f32.mrb[0].mxu0
        %v1400 = vadd.f32 %v1051, %v1399
        %v1401 = vpop.f32.mrb[0].mxu0
        %v1402 = vpop.f32.mrb[0].mxu0
        %v1403 = vadd.f32 %v1051, %v1402
        %v1404 = vpop.f32.mrb[0].mxu0
        %1405 = vmatprep.mubr.bf16.mxu0 %v918
        %1406 = vmatmul.mubr.bf16.gmra.mrb[0].mxu0 %v862
        %v1407 = vpop.f32.mrb[0].mxu0
        %v1408 = vadd.f32 %v1051, %v1407
        %v1409 = vpop.f32.mrb[0].mxu0
        %v1410 = vpop.f32.mrb[0].mxu0
        %v1411 = vadd.f32 %v1051, %v1410
        %v1412 = vpop.f32.mrb[0].mxu0
        %1413 = vmatprep.mubr.bf16.mxu0 %v919
        %1414 = vmatmul.mubr.bf16.gmra.mrb[0].mxu0 %v863
        %v1415 = vpop.f32.mrb[0].mxu0
        %v1416 = vadd.f32 %v1051, %v1415
        %v1417 = vpop.f32.mrb[0].mxu0
        %v1418 = vpop.f32.mrb[0].mxu0
        %v1419 = vadd.f32 %v1051, %v1418
        %v1420 = vpop.f32.mrb[0].mxu0
        %1421 = vmatprep.mubr.bf16.mxu0 %v920
        %1422 = vmatmul.mubr.bf16.gmra.mrb[0].mxu0 %v864
        %v1423 = vpop.f32.mrb[0].mxu0
        %v1424 = vadd.f32 %v1051, %v1423
        %v1425 = vpop.f32.mrb[0].mxu0
        %v1426 = vpop.f32.mrb[0].mxu0
        %v1427 = vpop.f32.mrb[0].mxu0
        %1428 = vdwg.mxu0
        %1429 = vmatprep.subr.bf16.mxu0 0
        %1430 = vmatpush1.bf16.msra.mxu0 %v1197
        %1431 = vmatprep.subr.bf16.mxu0 0
        %1432 = vmatpush1.bf16.msra.mxu0 %v1198
        %1433 = vmatprep.subr.bf16.mxu0 0
        %1434 = vmatpush1.bf16.msra.mxu0 %v1199
        %1435 = vmatprep.subr.bf16.mxu0 0
        %1436 = vmatpush1.bf16.msra.mxu0 %v1200
        %1437 = vmatprep.subr.bf16.mxu0 0
        %1438 = vmatpush1.bf16.msra.mxu0 %v1201
        %1439 = vmatprep.subr.bf16.mxu0 0
        %1440 = vmatpush1.bf16.msra.mxu0 %v1202
        %1441 = vmatprep.subr.bf16.mxu0 0
        %1442 = vmatpush1.bf16.msra.mxu0 %v1203
        %1443 = vmatprep.subr.bf16.mxu0 0
        %1444 = vmatpush1.bf16.msra.mxu0 %v1204
        %1445 = vmatprep.subr.bf16.mxu0 0
        %1446 = vmatpush1.bf16.msra.mxu0 %v1205
        %1447 = vmatprep.subr.bf16.mxu0 0
        %1448 = vmatpush1.bf16.msra.mxu0 %v1206
        %1449 = vmatprep.subr.bf16.mxu0 0
        %1450 = vmatpush1.bf16.msra.mxu0 %v1207
        %1451 = vmatprep.subr.bf16.mxu0 0
        %1452 = vmatpush1.bf16.msra.mxu0 %v1208
        %1453 = vmatprep.subr.bf16.mxu0 0
        %1454 = vmatpush1.bf16.msra.mxu0 %v1209
        %1455 = vmatprep.subr.bf16.mxu0 0
        %1456 = vmatpush1.bf16.msra.mxu0 %v1210
        %1457 = vmatprep.subr.bf16.mxu0 0
        %1458 = vmatpush1.bf16.msra.mxu0 %v1211
        %1459 = vmatprep.subr.bf16.mxu0 0
        %1460 = vmatpush1.bf16.msra.mxu0 %v1212
        %1461 = vmatprep.mubr.bf16.mxu0 %v963
        %1462 = vmatmul.mubr.bf16.gmra.mrb[0].mxu0 %v903
        %v1463 = vpop.f32.mrb[0].mxu0
        %v1464 = vadd.f32 %v1280, %v1463
        %v1465 = vpop.f32.mrb[0].mxu0
        %v1466 = vpop.f32.mrb[0].mxu0
        %v1467 = vadd.f32 %v1283, %v1466
        %v1468 = vpop.f32.mrb[0].mxu0
        %1469 = vmatprep.mubr.bf16.mxu0 %v964
        %1470 = vmatmul.mubr.bf16.gmra.mrb[0].mxu0 %v904
        %v1471 = vpop.f32.mrb[0].mxu0
        %v1472 = vadd.f32 %v1288, %v1471
        %v1473 = vpop.f32.mrb[0].mxu0
        %v1474 = vpop.f32.mrb[0].mxu0
        %v1475 = vadd.f32 %v1291, %v1474
        %v1476 = vpop.f32.mrb[0].mxu0
        %1477 = vmatprep.mubr.bf16.mxu0 %v965
        %1478 = vmatmul.mubr.bf16.gmra.mrb[0].mxu0 %v905
        %v1479 = vpop.f32.mrb[0].mxu0
        %v1480 = vadd.f32 %v1296, %v1479
        %v1481 = vpop.f32.mrb[0].mxu0
        %v1482 = vpop.f32.mrb[0].mxu0
        %v1483 = vadd.f32 %v1299, %v1482
        %v1484 = vpop.f32.mrb[0].mxu0
        %1485 = vmatprep.mubr.bf16.mxu0 %v966
        %1486 = vmatmul.mubr.bf16.gmra.mrb[0].mxu0 %v906
        %v1487 = vpop.f32.mrb[0].mxu0
        %v1488 = vadd.f32 %v1304, %v1487
        %v1489 = vpop.f32.mrb[0].mxu0
        %v1490 = vpop.f32.mrb[0].mxu0
        %v1491 = vadd.f32 %v1307, %v1490
        %v1492 = vpop.f32.mrb[0].mxu0
        %1493 = vmatprep.mubr.bf16.mxu0 %v967
        %1494 = vmatmul.mubr.bf16.gmra.mrb[0].mxu0 %v907
        %v1495 = vpop.f32.mrb[0].mxu0
        %v1496 = vadd.f32 %v1312, %v1495
        %v1497 = vpop.f32.mrb[0].mxu0
        %v1498 = vpop.f32.mrb[0].mxu0
        %v1499 = vadd.f32 %v1315, %v1498
        %v1500 = vpop.f32.mrb[0].mxu0
        %1501 = vmatprep.mubr.bf16.mxu0 %v968
        %1502 = vmatmul.mubr.bf16.gmra.mrb[0].mxu0 %v908
        %v1503 = vpop.f32.mrb[0].mxu0
        %v1504 = vadd.f32 %v1320, %v1503
        %v1505 = vpop.f32.mrb[0].mxu0
        %v1506 = vpop.f32.mrb[0].mxu0
        %v1507 = vadd.f32 %v1323, %v1506
        %v1508 = vpop.f32.mrb[0].mxu0
        %1509 = vmatprep.mubr.bf16.mxu0 %v969
        %1510 = vmatmul.mubr.bf16.gmra.mrb[0].mxu0 %v909
        %v1511 = vpop.f32.mrb[0].mxu0
        %v1512 = vadd.f32 %v1328, %v1511
        %v1513 = vpop.f32.mrb[0].mxu0
        %v1514 = vpop.f32.mrb[0].mxu0
        %v1515 = vadd.f32 %v1331, %v1514
        %v1516 = vpop.f32.mrb[0].mxu0
        %1517 = vmatprep.mubr.bf16.mxu0 %v970
        %1518 = vmatmul.mubr.bf16.gmra.mrb[0].mxu0 %v910
        %v1519 = vpop.f32.mrb[0].mxu0
        %v1520 = vadd.f32 %v1336, %v1519
        %v1521 = vpop.f32.mrb[0].mxu0
        %v1522 = vpop.f32.mrb[0].mxu0
        %v1523 = vadd.f32 %v1339, %v1522
        %v1524 = vpop.f32.mrb[0].mxu0
        %1525 = vmatprep.mubr.bf16.mxu0 %v971
        %1526 = vmatmul.mubr.bf16.gmra.mrb[0].mxu0 %v911
        %v1527 = vpop.f32.mrb[0].mxu0
        %v1528 = vadd.f32 %v1344, %v1527
        %v1529 = vpop.f32.mrb[0].mxu0
        %v1530 = vpop.f32.mrb[0].mxu0
        %v1531 = vadd.f32 %v1347, %v1530
        %v1532 = vpop.f32.mrb[0].mxu0
        %1533 = vmatprep.mubr.bf16.mxu0 %v972
        %1534 = vmatmul.mubr.bf16.gmra.mrb[0].mxu0 %v912
        %v1535 = vpop.f32.mrb[0].mxu0
        %v1536 = vadd.f32 %v1352, %v1535
        %v1537 = vpop.f32.mrb[0].mxu0
        %v1538 = vpop.f32.mrb[0].mxu0
        %v1539 = vadd.f32 %v1355, %v1538
        %v1540 = vpop.f32.mrb[0].mxu0
        %1541 = vmatprep.mubr.bf16.mxu0 %v973
        %1542 = vmatmul.mubr.bf16.gmra.mrb[0].mxu0 %v913
        %v1543 = vpop.f32.mrb[0].mxu0
        %v1544 = vadd.f32 %v1360, %v1543
        %v1545 = vpop.f32.mrb[0].mxu0
        %v1546 = vpop.f32.mrb[0].mxu0
        %v1547 = vadd.f32 %v1363, %v1546
        %v1548 = vpop.f32.mrb[0].mxu0
        %1549 = vmatprep.mubr.bf16.mxu0 %v974
        %1550 = vmatmul.mubr.bf16.gmra.mrb[0].mxu0 %v914
        %v1551 = vpop.f32.mrb[0].mxu0
        %v1552 = vadd.f32 %v1368, %v1551
        %v1553 = vpop.f32.mrb[0].mxu0
        %v1554 = vpop.f32.mrb[0].mxu0
        %v1555 = vadd.f32 %v1371, %v1554
        %v1556 = vpop.f32.mrb[0].mxu0
        %1557 = vmatprep.mubr.bf16.mxu0 %v975
        %1558 = vmatmul.mubr.bf16.gmra.mrb[0].mxu0 %v915
        %v1559 = vpop.f32.mrb[0].mxu0
        %v1560 = vadd.f32 %v1376, %v1559
        %v1561 = vpop.f32.mrb[0].mxu0
        %v1562 = vpop.f32.mrb[0].mxu0
        %v1563 = vadd.f32 %v1379, %v1562
        %v1564 = vpop.f32.mrb[0].mxu0
        %1565 = vmatprep.mubr.bf16.mxu0 %v976
        %1566 = vmatmul.mubr.bf16.gmra.mrb[0].mxu0 %v916
        %v1567 = vpop.f32.mrb[0].mxu0
        %v1568 = vadd.f32 %v1384, %v1567
        %v1569 = vpop.f32.mrb[0].mxu0
        %v1570 = vpop.f32.mrb[0].mxu0
        %v1571 = vadd.f32 %v1387, %v1570
        %v1572 = vpop.f32.mrb[0].mxu0
        %1573 = vmatprep.mubr.bf16.mxu0 %v977
        %1574 = vmatmul.mubr.bf16.gmra.mrb[0].mxu0 %v917
        %v1575 = vpop.f32.mrb[0].mxu0
        %v1576 = vadd.f32 %v1392, %v1575
        %v1577 = vpop.f32.mrb[0].mxu0
        %v1578 = vpop.f32.mrb[0].mxu0
        %v1579 = vadd.f32 %v1395, %v1578
        %v1580 = vpop.f32.mrb[0].mxu0
        %1581 = vmatprep.mubr.bf16.mxu0 %v978
        %1582 = vmatmul.mubr.bf16.gmra.mrb[0].mxu0 %v918
        %v1583 = vpop.f32.mrb[0].mxu0
        %v1584 = vadd.f32 %v1400, %v1583
        %v1585 = vpop.f32.mrb[0].mxu0
        %v1586 = vpop.f32.mrb[0].mxu0
        %v1587 = vadd.f32 %v1403, %v1586
        %v1588 = vpop.f32.mrb[0].mxu0
        %1589 = vmatprep.mubr.bf16.mxu0 %v979
        %1590 = vmatmul.mubr.bf16.gmra.mrb[0].mxu0 %v919
        %v1591 = vpop.f32.mrb[0].mxu0
        %v1592 = vadd.f32 %v1408, %v1591
        %v1593 = vpop.f32.mrb[0].mxu0
        %v1594 = vpop.f32.mrb[0].mxu0
        %v1595 = vadd.f32 %v1411, %v1594
        %v1596 = vpop.f32.mrb[0].mxu0
        %1597 = vmatprep.mubr.bf16.mxu0 %v980
        %1598 = vmatmul.mubr.bf16.gmra.mrb[0].mxu0 %v924
        %v1599 = vpop.f32.mrb[0].mxu0
        %v1600 = vadd.f32 %v1416, %v1599
        %v1601 = vpop.f32.mrb[0].mxu0
        %v1602 = vpop.f32.mrb[0].mxu0
        %v1603 = vadd.f32 %v1419, %v1602
        %v1604 = vpop.f32.mrb[0].mxu0
        %1605 = vmatprep.mubr.bf16.mxu0 %v981
        %1606 = vmatmul.mubr.bf16.gmra.mrb[0].mxu0 %v925
        %v1607 = vpop.f32.mrb[0].mxu0
        %v1608 = vadd.f32 %v1424, %v1607
        %v1609 = vpop.f32.mrb[0].mxu0
        %v1610 = vpop.f32.mrb[0].mxu0
        %v1611 = vpop.f32.mrb[0].mxu0
        %1612 = vdwg.mxu0
        %v1613 = vmax.f32 %v1464, 0.0
        %v1614 = vmax.f32 %v1467, 0.0
        %v1615 = vmax.f32 %v1472, 0.0
        %v1616 = vmax.f32 %v1475, 0.0
        %v1617 = vmax.f32 %v1480, 0.0
        %v1618 = vmax.f32 %v1483, 0.0
        %v1619 = vmax.f32 %v1488, 0.0
        %v1620 = vmax.f32 %v1491, 0.0
        %v1621 = vmax.f32 %v1496, 0.0
        %v1622 = vmax.f32 %v1499, 0.0
        %v1623 = vmax.f32 %v1504, 0.0
        %v1624 = vmax.f32 %v1507, 0.0
        %v1625 = vmax.f32 %v1512, 0.0
        %v1626 = vmax.f32 %v1515, 0.0
        %v1627 = vmax.f32 %v1520, 0.0
        %v1628 = vmax.f32 %v1523, 0.0
        %v1629 = vmax.f32 %v1528, 0.0
        %v1630 = vmax.f32 %v1531, 0.0
        %v1631 = vmax.f32 %v1536, 0.0
        %v1632 = vmax.f32 %v1539, 0.0
        %v1633 = vmax.f32 %v1544, 0.0
        %v1634 = vmax.f32 %v1547, 0.0
        %v1635 = vmax.f32 %v1552, 0.0
        %v1636 = vmax.f32 %v1555, 0.0
        %v1637 = vmax.f32 %v1560, 0.0
        %v1638 = vmax.f32 %v1563, 0.0
        %v1639 = vmax.f32 %v1568, 0.0
        %v1640 = vmax.f32 %v1571, 0.0
        %v1641 = vmax.f32 %v1576, 0.0
        %v1642 = vmax.f32 %v1579, 0.0
        %v1643 = vmax.f32 %v1584, 0.0
        %v1644 = vmax.f32 %v1587, 0.0
        %v1645 = vmax.f32 %v1592, 0.0
        %v1646 = vmax.f32 %v1595, 0.0
        %v1647 = vmax.f32 %v1600, 0.0
        %v1648 = vmax.f32 %v1603, 0.0
        %v1649 = vmax.f32 %v1608, 0.0
        %v1650 = vmul.f32 %v1613, %v772
        %v1651 = vmul.f32 %v1614, %v773
        %v1652 = vmul.f32 %v1615, %v774
        %v1653 = vmul.f32 %v1616, %v775
        %v1654 = vmul.f32 %v1617, %v776
        %v1655 = vmul.f32 %v1618, %v777
        %v1656 = vmul.f32 %v1619, %v778
        %v1657 = vmul.f32 %v1620, %v779
        %v1658 = vmul.f32 %v1621, %v780
        %v1659 = vmul.f32 %v1622, %v781
        %v1660 = vmul.f32 %v1623, %v782
        %v1661 = vmul.f32 %v1624, %v783
        %v1662 = vmul.f32 %v1625, %v784
        %v1663 = vmul.f32 %v1626, %v785
        %v1664 = vmul.f32 %v1627, %v786
        %v1665 = vmul.f32 %v1628, %v787
        %v1666 = vmul.f32 %v1629, %v788
        %v1667 = vmul.f32 %v1630, %v789
        %v1668 = vmul.f32 %v1631, %v790
        %v1669 = vmul.f32 %v1632, %v791
        %v1670 = vmul.f32 %v1633, %v792
        %v1671 = vmul.f32 %v1634, %v793
        %v1672 = vmul.f32 %v1635, %v794
        %v1673 = vmul.f32 %v1636, %v795
        %v1674 = vmul.f32 %v1637, %v796
        %v1675 = vmul.f32 %v1638, %v797
        %v1676 = vmul.f32 %v1639, %v798
        %v1677 = vmul.f32 %v1640, %v799
        %v1678 = vmul.f32 %v1641, %v800
        %v1679 = vmul.f32 %v1642, %v801
        %v1680 = vmul.f32 %v1643, %v802
        %v1681 = vmul.f32 %v1644, %v803
        %v1682 = vmul.f32 %v1645, %v804
        %v1683 = vmul.f32 %v1646, %v805
        %v1684 = vmul.f32 %v1647, %v806
        %v1685 = vmul.f32 %v1648, %v807
        %v1686 = vmul.f32 %v1649, %v808
        %v1687 = vadd.f32 %v809, %v1650
        %v1688 = vadd.f32 %v810, %v1651
        %v1689 = vadd.f32 %v811, %v1652
        %v1690 = vadd.f32 %v812, %v1653
        %v1691 = vadd.f32 %v813, %v1654
        %v1692 = vadd.f32 %v814, %v1655
        %v1693 = vadd.f32 %v815, %v1656
        %v1694 = vadd.f32 %v816, %v1657
        %v1695 = vadd.f32 %v817, %v1658
        %v1696 = vadd.f32 %v818, %v1659
        %v1697 = vadd.f32 %v819, %v1660
        %v1698 = vadd.f32 %v820, %v1661
        %v1699 = vadd.f32 %v821, %v1662
        %v1700 = vadd.f32 %v822, %v1663
        %v1701 = vadd.f32 %v823, %v1664
        %v1702 = vadd.f32 %v824, %v1665
        %v1703 = vadd.f32 %v825, %v1666
        %v1704 = vadd.f32 %v826, %v1667
        %v1705 = vadd.f32 %v827, %v1668
        %v1706 = vadd.f32 %v828, %v1669
        %v1707 = vadd.f32 %v829, %v1670
        %v1708 = vadd.f32 %v830, %v1671
        %v1709 = vadd.f32 %v831, %v1672
        %v1710 = vadd.f32 %v832, %v1673
        %v1711 = vadd.f32 %v833, %v1674
        %v1712 = vadd.f32 %v834, %v1675
        %v1713 = vadd.f32 %v835, %v1676
        %v1714 = vadd.f32 %v836, %v1677
        %v1715 = vadd.f32 %v837, %v1678
        %v1716 = vadd.f32 %v838, %v1679
        %v1717 = vadd.f32 %v839, %v1680
        %v1718 = vadd.f32 %v840, %v1681
        %v1719 = vadd.f32 %v841, %v1682
        %v1720 = vadd.f32 %v842, %v1683
        %v1721 = vadd.f32 %v843, %v1684
        %v1722 = vadd.f32 %v844, %v1685
        %v1723 = vadd.f32 %v845, %v1686
        %1724 = vst [vmem:[#allocation2] sm:$0xff] %v1687
        %1725 = vst [vmem:[#allocation2 + $0x8] sm:$0xff] %v1688
        %1726 = vst [vmem:[#allocation2 + $0x10] sm:$0xff] %v1689
        %1727 = vst [vmem:[#allocation2 + $0x18] sm:$0xff] %v1690
        %1728 = vst [vmem:[#allocation2 + $0x20] sm:$0xff] %v1691
        %1729 = vst [vmem:[#allocation2 + $0x28] sm:$0xff] %v1692
        %1730 = vst [vmem:[#allocation2 + $0x30] sm:$0xff] %v1693
        %1731 = vst [vmem:[#allocation2 + $0x38] sm:$0xff] %v1694
        %1732 = vst [vmem:[#allocation2 + $0x40] sm:$0xff] %v1695
        %1733 = vst [vmem:[#allocation2 + $0x48] sm:$0xff] %v1696
        %1734 = vst [vmem:[#allocation2 + $0x50] sm:$0xff] %v1697
        %1735 = vst [vmem:[#allocation2 + $0x58] sm:$0xff] %v1698
        %1736 = vst [vmem:[#allocation2 + $0x60] sm:$0xff] %v1699
        %1737 = vst [vmem:[#allocation2 + $0x68] sm:$0xff] %v1700
        %1738 = vst [vmem:[#allocation2 + $0x70] sm:$0xff] %v1701
        %1739 = vst [vmem:[#allocation2 + $0x78] sm:$0xff] %v1702
        %1740 = vst [vmem:[#allocation2 + $0x80] sm:$0xff] %v1703
        %1741 = vst [vmem:[#allocation2 + $0x88] sm:$0xff] %v1704
        %1742 = vst [vmem:[#allocation2 + $0x90] sm:$0xff] %v1705
        %1743 = vst [vmem:[#allocation2 + $0x98] sm:$0xff] %v1706
        %1744 = vst [vmem:[#allocation2 + $0xa0] sm:$0xff] %v1707
        %1745 = vst [vmem:[#allocation2 + $0xa8] sm:$0xff] %v1708
        %1746 = vst [vmem:[#allocation2 + $0xb0] sm:$0xff] %v1709
        %1747 = vst [vmem:[#allocation2 + $0xb8] sm:$0xff] %v1710
        %1748 = vst [vmem:[#allocation2 + $0xc0] sm:$0xff] %v1711
        %1749 = vst [vmem:[#allocation2 + $0xc8] sm:$0xff] %v1712
        %1750 = vst [vmem:[#allocation2 + $0xd0] sm:$0xff] %v1713
        %1751 = vst [vmem:[#allocation2 + $0xd8] sm:$0xff] %v1714
        %1752 = vst [vmem:[#allocation2 + $0xe0] sm:$0xff] %v1715
        %1753 = vst [vmem:[#allocation2 + $0xe8] sm:$0xff] %v1716
        %1754 = vst [vmem:[#allocation2 + $0xf0] sm:$0xff] %v1717
        %1755 = vst [vmem:[#allocation2 + $0xf8] sm:$0xff] %v1718
        %1756 = vst [vmem:[#allocation2 + $0x100] sm:$0xff] %v1719
        %1757 = vst [vmem:[#allocation2 + $0x108] sm:$0xff] %v1720
        %1758 = vst [vmem:[#allocation2 + $0x110] sm:$0xff] %v1721
        %1759 = vst [vmem:[#allocation2 + $0x118] sm:$0xff] %v1722
        %1760 = vst [vmem:[#allocation2 + $0x120] sm:$0x1] %v1723
        %v1761 = vld [vmem:[#allocation2] sm:$0xff]
        %v1762 = vld [vmem:[#allocation2 + $0x8] sm:$0xff]
        %v1763 = vld [vmem:[#allocation2 + $0x10] sm:$0xff]
        %v1764 = vld [vmem:[#allocation2 + $0x18] sm:$0xff]
        %v1765 = vld [vmem:[#allocation2 + $0x20] sm:$0xff]
        %v1766 = vld [vmem:[#allocation2 + $0x28] sm:$0xff]
        %v1767 = vld [vmem:[#allocation2 + $0x30] sm:$0xff]
        %v1768 = vld [vmem:[#allocation2 + $0x38] sm:$0xff]
        %v1769 = vld [vmem:[#allocation2 + $0x40] sm:$0xff]
        %v1770 = vld [vmem:[#allocation2 + $0x48] sm:$0xff]
        %v1771 = vld [vmem:[#allocation2 + $0x50] sm:$0xff]
        %v1772 = vld [vmem:[#allocation2 + $0x58] sm:$0xff]
        %v1773 = vld [vmem:[#allocation2 + $0x60] sm:$0xff]
        %v1774 = vld [vmem:[#allocation2 + $0x68] sm:$0xff]
        %v1775 = vld [vmem:[#allocation2 + $0x70] sm:$0xff]
        %v1776 = vld [vmem:[#allocation2 + $0x78] sm:$0xff]
        %v1777 = vld [vmem:[#allocation2 + $0x80] sm:$0xff]
        %v1778 = vld [vmem:[#allocation2 + $0x88] sm:$0xff]
        %v1779 = vld [vmem:[#allocation2 + $0x90] sm:$0xff]
        %v1780 = vld [vmem:[#allocation2 + $0x98] sm:$0xff]
        %v1781 = vld [vmem:[#allocation2 + $0xa0] sm:$0xff]
        %v1782 = vld [vmem:[#allocation2 + $0xa8] sm:$0xff]
        %v1783 = vld [vmem:[#allocation2 + $0xb0] sm:$0xff]
        %v1784 = vld [vmem:[#allocation2 + $0xb8] sm:$0xff]
        %v1785 = vld [vmem:[#allocation2 + $0xc0] sm:$0xff]
        %v1786 = vld [vmem:[#allocation2 + $0xc8] sm:$0xff]
        %v1787 = vld [vmem:[#allocation2 + $0xd0] sm:$0xff]
        %v1788 = vld [vmem:[#allocation2 + $0xd8] sm:$0xff]
        %v1789 = vld [vmem:[#allocation2 + $0xe0] sm:$0xff]
        %v1790 = vld [vmem:[#allocation2 + $0xe8] sm:$0xff]
        %v1791 = vld [vmem:[#allocation2 + $0xf0] sm:$0xff]
        %v1792 = vld [vmem:[#allocation2 + $0xf8] sm:$0xff]
        %v1793 = vld [vmem:[#allocation2 + $0x100] sm:$0xff]
        %v1794 = vld [vmem:[#allocation2 + $0x108] sm:$0xff]
        %v1795 = vld [vmem:[#allocation2 + $0x110] sm:$0xff]
        %v1796 = vld [vmem:[#allocation2 + $0x118] sm:$0xff]
        %v1797 = vld [vmem:[#allocation2 + $0x120] sm:$0x1]
        %v1798 = vpack.c.bf16 %v1762, %v1761
        %v1799 = vpack.c.bf16 %v1764, %v1763
        %v1800 = vpack.c.bf16 %v1766, %v1765
        %v1801 = vpack.c.bf16 %v1768, %v1767
        %v1802 = vpack.c.bf16 %v1770, %v1769
        %v1803 = vpack.c.bf16 %v1772, %v1771
        %v1804 = vpack.c.bf16 %v1774, %v1773
        %v1805 = vpack.c.bf16 %v1776, %v1775
        %v1806 = vpack.c.bf16 %v1778, %v1777
        %v1807 = vpack.c.bf16 %v1780, %v1779
        %v1808 = vpack.c.bf16 %v1782, %v1781
        %v1809 = vpack.c.bf16 %v1784, %v1783
        %v1810 = vpack.c.bf16 %v1786, %v1785
        %v1811 = vpack.c.bf16 %v1788, %v1787
        %v1812 = vpack.c.bf16 %v1790, %v1789
        %v1813 = vpack.c.bf16 %v1792, %v1791
        %v1814 = vpack.c.bf16 %v1794, %v1793
        %v1815 = vpack.c.bf16 %v1796, %v1795
        %v1816 = vpack.c.bf16 %v1797, %v1797
        %v1817 = vld [vmem:[#allocation2 + $0x1] sm:$0xff]
        %v1818 = vld [vmem:[#allocation2 + $0x9] sm:$0xff]
        %v1819 = vld [vmem:[#allocation2 + $0x11] sm:$0xff]
        %v1820 = vld [vmem:[#allocation2 + $0x19] sm:$0xff]
        %v1821 = vld [vmem:[#allocation2 + $0x21] sm:$0xff]
        %v1822 = vld [vmem:[#allocation2 + $0x29] sm:$0xff]
        %v1823 = vld [vmem:[#allocation2 + $0x31] sm:$0xff]
        %v1824 = vld [vmem:[#allocation2 + $0x39] sm:$0xff]
        %v1825 = vld [vmem:[#allocation2 + $0x41] sm:$0xff]
        %v1826 = vld [vmem:[#allocation2 + $0x49] sm:$0xff]
        %v1827 = vld [vmem:[#allocation2 + $0x51] sm:$0xff]
        %v1828 = vld [vmem:[#allocation2 + $0x59] sm:$0xff]
        %v1829 = vld [vmem:[#allocation2 + $0x61] sm:$0xff]
        %v1830 = vld [vmem:[#allocation2 + $0x69] sm:$0xff]
        %v1831 = vld [vmem:[#allocation2 + $0x71] sm:$0xff]
        %v1832 = vld [vmem:[#allocation2 + $0x79] sm:$0xff]
        %v1833 = vld [vmem:[#allocation2 + $0x81] sm:$0xff]
        %v1834 = vld [vmem:[#allocation2 + $0x89] sm:$0xff]
        %v1835 = vld [vmem:[#allocation2 + $0x91] sm:$0xff]
        %v1836 = vld [vmem:[#allocation2 + $0x99] sm:$0xff]
        %v1837 = vld [vmem:[#allocation2 + $0xa1] sm:$0xff]
        %v1838 = vld [vmem:[#allocation2 + $0xa9] sm:$0xff]
        %v1839 = vld [vmem:[#allocation2 + $0xb1] sm:$0xff]
        %v1840 = vld [vmem:[#allocation2 + $0xb9] sm:$0xff]
        %v1841 = vld [vmem:[#allocation2 + $0xc1] sm:$0xff]
        %v1842 = vld [vmem:[#allocation2 + $0xc9] sm:$0xff]
        %v1843 = vld [vmem:[#allocation2 + $0xd1] sm:$0xff]
        %v1844 = vld [vmem:[#allocation2 + $0xd9] sm:$0xff]
        %v1845 = vld [vmem:[#allocation2 + $0xe1] sm:$0xff]
        %v1846 = vld [vmem:[#allocation2 + $0xe9] sm:$0xff]
        %v1847 = vld [vmem:[#allocation2 + $0xf1] sm:$0xff]
        %v1848 = vld [vmem:[#allocation2 + $0xf9] sm:$0xff]
        %v1849 = vld [vmem:[#allocation2 + $0x101] sm:$0xff]
        %v1850 = vld [vmem:[#allocation2 + $0x109] sm:$0xff]
        %v1851 = vld [vmem:[#allocation2 + $0x111] sm:$0xff]
        %v1852 = vld [vmem:[#allocation2 + $0x119] sm:$0xff]
        %v1853 = vld [vmem:[#allocation2 + $0x121] sm:$0x1]
        %v1854 = vpack.c.bf16 %v1818, %v1817
        %v1855 = vpack.c.bf16 %v1820, %v1819
        %v1856 = vpack.c.bf16 %v1822, %v1821
        %v1857 = vpack.c.bf16 %v1824, %v1823
        %v1858 = vpack.c.bf16 %v1826, %v1825
        %v1859 = vpack.c.bf16 %v1828, %v1827
        %v1860 = vpack.c.bf16 %v1830, %v1829
        %v1861 = vpack.c.bf16 %v1832, %v1831
        %v1862 = vpack.c.bf16 %v1834, %v1833
        %v1863 = vpack.c.bf16 %v1836, %v1835
        %v1864 = vpack.c.bf16 %v1838, %v1837
        %v1865 = vpack.c.bf16 %v1840, %v1839
        %v1866 = vpack.c.bf16 %v1842, %v1841
        %v1867 = vpack.c.bf16 %v1844, %v1843
        %v1868 = vpack.c.bf16 %v1846, %v1845
        %v1869 = vpack.c.bf16 %v1848, %v1847
        %v1870 = vpack.c.bf16 %v1850, %v1849
        %v1871 = vpack.c.bf16 %v1852, %v1851
        %v1872 = vpack.c.bf16 %v1853, %v1853
        %v1873 = vld [vmem:[#allocation2 + $0x121] sm:$0xff]
        %v1874 = vld [vmem:[#allocation2 + $0x129] sm:$0xff]
        %v1875 = vld [vmem:[#allocation2 + $0x131] sm:$0x1]
        %v1876 = vpack.c.bf16 %v1874, %v1873
        %v1877 = vpack.c.bf16 %v1875, %v1875
        %v1878 = vld [vmem:[#allocation2 + $0x12] sm:$0xff]
        %v1879 = vld [vmem:[#allocation2 + $0x1a] sm:$0xff]
        %v1880 = vld [vmem:[#allocation2 + $0x22] sm:$0xff]
        %v1881 = vld [vmem:[#allocation2 + $0x2a] sm:$0xff]
        %v1882 = vld [vmem:[#allocation2 + $0x32] sm:$0xff]
        %v1883 = vld [vmem:[#allocation2 + $0x3a] sm:$0xff]
        %v1884 = vld [vmem:[#allocation2 + $0x42] sm:$0xff]
        %v1885 = vld [vmem:[#allocation2 + $0x4a] sm:$0xff]
        %v1886 = vld [vmem:[#allocation2 + $0x52] sm:$0xff]
        %v1887 = vld [vmem:[#allocation2 + $0x5a] sm:$0xff]
        %v1888 = vld [vmem:[#allocation2 + $0x62] sm:$0xff]
        %v1889 = vld [vmem:[#allocation2 + $0x6a] sm:$0xff]
        %v1890 = vld [vmem:[#allocation2 + $0x72] sm:$0xff]
        %v1891 = vld [vmem:[#allocation2 + $0x7a] sm:$0xff]
        %v1892 = vld [vmem:[#allocation2 + $0x82] sm:$0xff]
        %v1893 = vld [vmem:[#allocation2 + $0x8a] sm:$0xff]
        %v1894 = vld [vmem:[#allocation2 + $0x92] sm:$0xff]
        %v1895 = vld [vmem:[#allocation2 + $0x9a] sm:$0xff]
        %v1896 = vld [vmem:[#allocation2 + $0xa2] sm:$0xff]
        %v1897 = vld [vmem:[#allocation2 + $0xaa] sm:$0xff]
        %v1898 = vld [vmem:[#allocation2 + $0xb2] sm:$0xff]
        %v1899 = vld [vmem:[#allocation2 + $0xba] sm:$0xff]
        %v1900 = vld [vmem:[#allocation2 + $0xc2] sm:$0xff]
        %v1901 = vld [vmem:[#allocation2 + $0xca] sm:$0xff]
        %v1902 = vld [vmem:[#allocation2 + $0xd2] sm:$0xff]
        %v1903 = vld [vmem:[#allocation2 + $0xda] sm:$0xff]
        %v1904 = vld [vmem:[#allocation2 + $0xe2] sm:$0xff]
        %v1905 = vld [vmem:[#allocation2 + $0xea] sm:$0xff]
        %v1906 = vld [vmem:[#allocation2 + $0xf2] sm:$0xff]
        %v1907 = vld [vmem:[#allocation2 + $0xfa] sm:$0xff]
        %v1908 = vld [vmem:[#allocation2 + $0x102] sm:$0xff]
        %v1909 = vld [vmem:[#allocation2 + $0x10a] sm:$0xff]
        %v1910 = vld [vmem:[#allocation2 + $0x112] sm:$0xff]
        %v1911 = vld [vmem:[#allocation2 + $0x11a] sm:$0xff]
        %v1912 = vld [vmem:[#allocation2 + $0x122] sm:$0xff]
        %v1913 = vld [vmem:[#allocation2 + $0x12a] sm:$0xff]
        %v1914 = vld [vmem:[#allocation2 + $0x132] sm:$0x1]
        %v1915 = vpack.c.bf16 %v1879, %v1878
        %v1916 = vpack.c.bf16 %v1881, %v1880
        %v1917 = vpack.c.bf16 %v1883, %v1882
        %v1918 = vpack.c.bf16 %v1885, %v1884
        %v1919 = vpack.c.bf16 %v1887, %v1886
        %v1920 = vpack.c.bf16 %v1889, %v1888
        %v1921 = vpack.c.bf16 %v1891, %v1890
        %v1922 = vpack.c.bf16 %v1893, %v1892
        %v1923 = vpack.c.bf16 %v1895, %v1894
        %v1924 = vpack.c.bf16 %v1897, %v1896
        %v1925 = vpack.c.bf16 %v1899, %v1898
        %v1926 = vpack.c.bf16 %v1901, %v1900
        %v1927 = vpack.c.bf16 %v1903, %v1902
        %v1928 = vpack.c.bf16 %v1905, %v1904
        %v1929 = vpack.c.bf16 %v1907, %v1906
        %v1930 = vpack.c.bf16 %v1909, %v1908
        %v1931 = vpack.c.bf16 %v1911, %v1910
        %v1932 = vpack.c.bf16 %v1913, %v1912
        %v1933 = vpack.c.bf16 %v1914, %v1914
        %s1934 = scalar_lea.vmem [#allocation4], 256
        %v1935 = vld [vmem:[%s1934] sm:$0xf]
        %v1936 = vld [vmem:[%s1934 + $0x4] sm:$0xf]
        %v1937 = vld [vmem:[%s1934 + $0x8] sm:$0xf]
        %v1938 = vld [vmem:[%s1934 + $0xc] sm:$0xf]
        %v1939 = vld [vmem:[%s1934 + $0x10] sm:$0xf]
        %v1940 = vld [vmem:[%s1934 + $0x14] sm:$0xf]
        %v1941 = vld [vmem:[%s1934 + $0x18] sm:$0xf]
        %v1942 = vld [vmem:[%s1934 + $0x1c] sm:$0xf]
        %v1943 = vld [vmem:[%s1934 + $0x20] sm:$0xf]
        %v1944 = vld [vmem:[%s1934 + $0x24] sm:$0xf]
        %v1945 = vld [vmem:[%s1934 + $0x28] sm:$0xf]
        %v1946 = vld [vmem:[%s1934 + $0x2c] sm:$0xf]
        %v1947 = vld [vmem:[%s1934 + $0x30] sm:$0xf]
        %v1948 = vld [vmem:[%s1934 + $0x34] sm:$0xf]
        %v1949 = vld [vmem:[%s1934 + $0x38] sm:$0xf]
        %v1950 = vld [vmem:[%s1934 + $0x3c] sm:$0xf]
        %v1951 = vld [vmem:[%s1934 + $0x40] sm:$0xf]
        %v1952 = vld [vmem:[%s1934 + $0x44] sm:$0xf]
        %v1953 = vld [vmem:[%s1934 + $0x48] sm:$0xf]
        %v1954 = vld [vmem:[%s1934 + $0x4c] sm:$0xf]
        %v1955 = vld [vmem:[%s1934 + $0x50] sm:$0xf]
        %v1956 = vld [vmem:[%s1934 + $0x54] sm:$0xf]
        %v1957 = vld [vmem:[%s1934 + $0x58] sm:$0xf]
        %v1958 = vld [vmem:[%s1934 + $0x5c] sm:$0xf]
        %v1959 = vld [vmem:[%s1934 + $0x60] sm:$0xf]
        %v1960 = vld [vmem:[%s1934 + $0x64] sm:$0xf]
        %v1961 = vld [vmem:[%s1934 + $0x68] sm:$0xf]
        %v1962 = vld [vmem:[%s1934 + $0x6c] sm:$0xf]
        %v1963 = vld [vmem:[%s1934 + $0x70] sm:$0xf]
        %v1964 = vld [vmem:[%s1934 + $0x74] sm:$0xf]
        %v1965 = vld [vmem:[%s1934 + $0x78] sm:$0xf]
        %v1966 = vld [vmem:[%s1934 + $0x7c] sm:$0xf]
        %v1967 = vld [vmem:[%s1934 + $0x80] sm:$0xf]
        %v1968 = vld [vmem:[%s1934 + $0x84] sm:$0xf]
        %v1969 = vld [vmem:[%s1934 + $0x88] sm:$0xf]
        %v1970 = vld [vmem:[%s1934 + $0x8c] sm:$0xf]
        %v1971 = vld [vmem:[%s1934 + $0x90] sm:$0xf]
        %v1972 = vld [vmem:[%s1934 + $0x94] sm:$0xf]
        %v1973 = vld [vmem:[%s1934 + $0x98] sm:$0xf]
        %v1974 = vld [vmem:[%s1934 + $0x9c] sm:$0xf]
        %v1975 = vld [vmem:[%s1934 + $0xa0] sm:$0xf]
        %v1976 = vld [vmem:[%s1934 + $0xa4] sm:$0xf]
        %v1977 = vld [vmem:[%s1934 + $0xa8] sm:$0xf]
        %v1978 = vld [vmem:[%s1934 + $0xac] sm:$0xf]
        %v1979 = vld [vmem:[%s1934 + $0xb0] sm:$0xf]
        %v1980 = vld [vmem:[%s1934 + $0xb4] sm:$0xf]
        %v1981 = vld [vmem:[%s1934 + $0xb8] sm:$0xf]
        %v1982 = vld [vmem:[%s1934 + $0xbc] sm:$0xf]
        %v1983 = vld [vmem:[%s1934 + $0xc0] sm:$0xf]
        %v1984 = vld [vmem:[%s1934 + $0xc4] sm:$0xf]
        %v1985 = vld [vmem:[%s1934 + $0xc8] sm:$0xf]
        %v1986 = vld [vmem:[%s1934 + $0xcc] sm:$0xf]
        %v1987 = vld [vmem:[%s1934 + $0xd0] sm:$0xf]
        %v1988 = vld [vmem:[%s1934 + $0xd4] sm:$0xf]
        %v1989 = vld [vmem:[%s1934 + $0xd8] sm:$0xf]
        %v1990 = vld [vmem:[%s1934 + $0xdc] sm:$0xf]
        %v1991 = vld [vmem:[%s1934 + $0xe0] sm:$0xf]
        %v1992 = vld [vmem:[%s1934 + $0xe4] sm:$0xf]
        %v1993 = vld [vmem:[%s1934 + $0xe8] sm:$0xf]
        %v1994 = vld [vmem:[%s1934 + $0xec] sm:$0xf]
        %v1995 = vld [vmem:[%s1934 + $0xf0] sm:$0xf]
        %v1996 = vld [vmem:[%s1934 + $0xf4] sm:$0xf]
        %v1997 = vld [vmem:[%s1934 + $0xf8] sm:$0xf]
        %v1998 = vld [vmem:[%s1934 + $0xfc] sm:$0xf]
        %s1999 = scalar_lea.vmem [#allocation6], 1
        %v2000 = vld [vmem:[%s1999] sm:$0x1]
        %v2002 = vlaneseq
        %v2003 = vshrl.u32 %v2002, 7
        %v2004 = vsub.s32 0, %v2003
        %v2005 = vrot.slane %v2000, %v2004
        %v2071 = vunpack.c.l.b16 %v1935
        %v2072 = vunpack.c.l.b16 %v1936
        %v2073 = vunpack.c.l.b16 %v1937
        %v2074 = vunpack.c.l.b16 %v1938
        %v2075 = vunpack.c.l.b16 %v1939
        %v2076 = vunpack.c.l.b16 %v1940
        %v2077 = vunpack.c.l.b16 %v1941
        %v2078 = vunpack.c.l.b16 %v1942
        %v2079 = vunpack.c.l.b16 %v1943
        %v2080 = vunpack.c.l.b16 %v1944
        %v2081 = vunpack.c.l.b16 %v1945
        %v2082 = vunpack.c.l.b16 %v1946
        %v2083 = vunpack.c.l.b16 %v1947
        %v2084 = vunpack.c.l.b16 %v1948
        %v2085 = vunpack.c.l.b16 %v1949
        %v2086 = vunpack.c.l.b16 %v1950
        %v2087 = vunpack.c.l.b16 %v1951
        %v2088 = vunpack.c.l.b16 %v1952
        %v2089 = vunpack.c.l.b16 %v1953
        %v2090 = vunpack.c.l.b16 %v1954
        %v2091 = vunpack.c.l.b16 %v1955
        %v2092 = vunpack.c.l.b16 %v1956
        %v2093 = vunpack.c.l.b16 %v1957
        %v2094 = vunpack.c.l.b16 %v1958
        %v2095 = vunpack.c.l.b16 %v1959
        %v2096 = vunpack.c.l.b16 %v1960
        %v2097 = vunpack.c.l.b16 %v1961
        %v2098 = vunpack.c.l.b16 %v1962
        %v2099 = vunpack.c.l.b16 %v1963
        %v2100 = vunpack.c.l.b16 %v1964
        %v2101 = vunpack.c.l.b16 %v1965
        %v2102 = vunpack.c.l.b16 %v1966
        %v2103 = vunpack.c.l.b16 %v1967
        %v2104 = vunpack.c.l.b16 %v1968
        %v2105 = vunpack.c.l.b16 %v1969
        %v2106 = vunpack.c.l.b16 %v1970
        %v2107 = vunpack.c.l.b16 %v1971
        %v2108 = vunpack.c.l.b16 %v1972
        %v2109 = vunpack.c.l.b16 %v1973
        %v2110 = vunpack.c.l.b16 %v1974
        %v2111 = vunpack.c.l.b16 %v1975
        %v2112 = vunpack.c.l.b16 %v1976
        %v2113 = vunpack.c.l.b16 %v1977
        %v2114 = vunpack.c.l.b16 %v1978
        %v2115 = vunpack.c.l.b16 %v1979
        %v2116 = vunpack.c.l.b16 %v1980
        %v2117 = vunpack.c.l.b16 %v1981
        %v2118 = vunpack.c.l.b16 %v1982
        %v2119 = vunpack.c.l.b16 %v1983
        %v2120 = vunpack.c.l.b16 %v1984
        %v2121 = vunpack.c.l.b16 %v1985
        %v2122 = vunpack.c.l.b16 %v1986
        %v2123 = vunpack.c.l.b16 %v1987
        %v2124 = vunpack.c.l.b16 %v1988
        %v2125 = vunpack.c.l.b16 %v1989
        %v2126 = vunpack.c.l.b16 %v1990
        %v2127 = vunpack.c.l.b16 %v1991
        %v2128 = vunpack.c.l.b16 %v1992
        %v2129 = vunpack.c.l.b16 %v1993
        %v2130 = vunpack.c.l.b16 %v1994
        %v2131 = vunpack.c.l.b16 %v1995
        %v2132 = vunpack.c.l.b16 %v1996
        %v2133 = vunpack.c.l.b16 %v1997
        %v2134 = vunpack.c.l.b16 %v1998
        %v2135 = vpack.c.b16 %v2072, %v2071
        %v2136 = vpack.c.b16 %v2074, %v2073
        %v2137 = vpack.c.b16 %v2076, %v2075
        %v2138 = vpack.c.b16 %v2078, %v2077
        %v2139 = vpack.c.b16 %v2080, %v2079
        %v2140 = vpack.c.b16 %v2082, %v2081
        %v2141 = vpack.c.b16 %v2084, %v2083
        %v2142 = vpack.c.b16 %v2086, %v2085
        %v2143 = vpack.c.b16 %v2088, %v2087
        %v2144 = vpack.c.b16 %v2090, %v2089
        %v2145 = vpack.c.b16 %v2092, %v2091
        %v2146 = vpack.c.b16 %v2094, %v2093
        %v2147 = vpack.c.b16 %v2096, %v2095
        %v2148 = vpack.c.b16 %v2098, %v2097
        %v2149 = vpack.c.b16 %v2100, %v2099
        %v2150 = vpack.c.b16 %v2102, %v2101
        %v2151 = vpack.c.b16 %v2104, %v2103
        %v2152 = vpack.c.b16 %v2106, %v2105
        %v2153 = vpack.c.b16 %v2108, %v2107
        %v2154 = vpack.c.b16 %v2110, %v2109
        %v2155 = vpack.c.b16 %v2112, %v2111
        %v2156 = vpack.c.b16 %v2114, %v2113
        %v2157 = vpack.c.b16 %v2116, %v2115
        %v2158 = vpack.c.b16 %v2118, %v2117
        %v2159 = vpack.c.b16 %v2120, %v2119
        %v2160 = vpack.c.b16 %v2122, %v2121
        %v2161 = vpack.c.b16 %v2124, %v2123
        %v2162 = vpack.c.b16 %v2126, %v2125
        %v2163 = vpack.c.b16 %v2128, %v2127
        %v2164 = vpack.c.b16 %v2130, %v2129
        %v2165 = vpack.c.b16 %v2132, %v2131
        %v2166 = vpack.c.b16 %v2134, %v2133
        %2199 = vmatprep.subr.bf16.mxu0 0
        %2200 = vmatpush1.bf16.msra.mxu0 %v2135
        %2201 = vmatprep.subr.bf16.mxu0 0
        %2202 = vmatpush1.bf16.msra.mxu0 %v2136
        %2203 = vmatprep.subr.bf16.mxu0 0
        %2204 = vmatpush1.bf16.msra.mxu0 %v2137
        %2205 = vmatprep.subr.bf16.mxu0 0
        %2206 = vmatpush1.bf16.msra.mxu0 %v2138
        %2207 = vmatprep.subr.bf16.mxu0 0
        %2208 = vmatpush1.bf16.msra.mxu0 %v2139
        %2209 = vmatprep.subr.bf16.mxu0 0
        %2210 = vmatpush1.bf16.msra.mxu0 %v2140
        %2211 = vmatprep.subr.bf16.mxu0 0
        %2212 = vmatpush1.bf16.msra.mxu0 %v2141
        %2213 = vmatprep.subr.bf16.mxu0 0
        %2214 = vmatpush1.bf16.msra.mxu0 %v2142
        %2215 = vmatprep.subr.bf16.mxu0 0
        %2216 = vmatpush1.bf16.msra.mxu0 %v2143
        %2217 = vmatprep.subr.bf16.mxu0 0
        %2218 = vmatpush1.bf16.msra.mxu0 %v2144
        %2219 = vmatprep.subr.bf16.mxu0 0
        %2220 = vmatpush1.bf16.msra.mxu0 %v2145
        %2221 = vmatprep.subr.bf16.mxu0 0
        %2222 = vmatpush1.bf16.msra.mxu0 %v2146
        %2223 = vmatprep.subr.bf16.mxu0 0
        %2224 = vmatpush1.bf16.msra.mxu0 %v2147
        %2225 = vmatprep.subr.bf16.mxu0 0
        %2226 = vmatpush1.bf16.msra.mxu0 %v2148
        %2227 = vmatprep.subr.bf16.mxu0 0
        %2228 = vmatpush1.bf16.msra.mxu0 %v2149
        %2229 = vmatprep.subr.bf16.mxu0 0
        %2230 = vmatpush1.bf16.msra.mxu0 %v2150
        %2231 = vmatprep.mubr.bf16.mxu0 %v1854
        %2232 = vmatmul.mubr.bf16.gmra.mrb[0].mxu0 %v1798
        %v2233 = vpop.f32.mrb[0].mxu0
        %v2234 = vadd.f32 %v2005, %v2233
        %v2235 = vpop.f32.mrb[0].mxu0
        %v2236 = vpop.f32.mrb[0].mxu0
        %v2237 = vadd.f32 %v2005, %v2236
        %v2238 = vpop.f32.mrb[0].mxu0
        %2239 = vmatprep.mubr.bf16.mxu0 %v1855
        %2240 = vmatmul.mubr.bf16.gmra.mrb[0].mxu0 %v1799
        %v2241 = vpop.f32.mrb[0].mxu0
        %v2242 = vadd.f32 %v2005, %v2241
        %v2243 = vpop.f32.mrb[0].mxu0
        %v2244 = vpop.f32.mrb[0].mxu0
        %v2245 = vadd.f32 %v2005, %v2244
        %v2246 = vpop.f32.mrb[0].mxu0
        %2247 = vmatprep.mubr.bf16.mxu0 %v1856
        %2248 = vmatmul.mubr.bf16.gmra.mrb[0].mxu0 %v1800
        %v2249 = vpop.f32.mrb[0].mxu0
        %v2250 = vadd.f32 %v2005, %v2249
        %v2251 = vpop.f32.mrb[0].mxu0
        %v2252 = vpop.f32.mrb[0].mxu0
        %v2253 = vadd.f32 %v2005, %v2252
        %v2254 = vpop.f32.mrb[0].mxu0
        %2255 = vmatprep.mubr.bf16.mxu0 %v1857
        %2256 = vmatmul.mubr.bf16.gmra.mrb[0].mxu0 %v1801
        %v2257 = vpop.f32.mrb[0].mxu0
        %v2258 = vadd.f32 %v2005, %v2257
        %v2259 = vpop.f32.mrb[0].mxu0
        %v2260 = vpop.f32.mrb[0].mxu0
        %v2261 = vadd.f32 %v2005, %v2260
        %v2262 = vpop.f32.mrb[0].mxu0
        %2263 = vmatprep.mubr.bf16.mxu0 %v1858
        %2264 = vmatmul.mubr.bf16.gmra.mrb[0].mxu0 %v1802
        %v2265 = vpop.f32.mrb[0].mxu0
        %v2266 = vadd.f32 %v2005, %v2265
        %v2267 = vpop.f32.mrb[0].mxu0
        %v2268 = vpop.f32.mrb[0].mxu0
        %v2269 = vadd.f32 %v2005, %v2268
        %v2270 = vpop.f32.mrb[0].mxu0
        %2271 = vmatprep.mubr.bf16.mxu0 %v1859
        %2272 = vmatmul.mubr.bf16.gmra.mrb[0].mxu0 %v1803
        %v2273 = vpop.f32.mrb[0].mxu0
        %v2274 = vadd.f32 %v2005, %v2273
        %v2275 = vpop.f32.mrb[0].mxu0
        %v2276 = vpop.f32.mrb[0].mxu0
        %v2277 = vadd.f32 %v2005, %v2276
        %v2278 = vpop.f32.mrb[0].mxu0
        %2279 = vmatprep.mubr.bf16.mxu0 %v1860
        %2280 = vmatmul.mubr.bf16.gmra.mrb[0].mxu0 %v1804
        %v2281 = vpop.f32.mrb[0].mxu0
        %v2282 = vadd.f32 %v2005, %v2281
        %v2283 = vpop.f32.mrb[0].mxu0
        %v2284 = vpop.f32.mrb[0].mxu0
        %v2285 = vadd.f32 %v2005, %v2284
        %v2286 = vpop.f32.mrb[0].mxu0
        %2287 = vmatprep.mubr.bf16.mxu0 %v1861
        %2288 = vmatmul.mubr.bf16.gmra.mrb[0].mxu0 %v1805
        %v2289 = vpop.f32.mrb[0].mxu0
        %v2290 = vadd.f32 %v2005, %v2289
        %v2291 = vpop.f32.mrb[0].mxu0
        %v2292 = vpop.f32.mrb[0].mxu0
        %v2293 = vadd.f32 %v2005, %v2292
        %v2294 = vpop.f32.mrb[0].mxu0
        %2295 = vmatprep.mubr.bf16.mxu0 %v1862
        %2296 = vmatmul.mubr.bf16.gmra.mrb[0].mxu0 %v1806
        %v2297 = vpop.f32.mrb[0].mxu0
        %v2298 = vadd.f32 %v2005, %v2297
        %v2299 = vpop.f32.mrb[0].mxu0
        %v2300 = vpop.f32.mrb[0].mxu0
        %v2301 = vadd.f32 %v2005, %v2300
        %v2302 = vpop.f32.mrb[0].mxu0
        %2303 = vmatprep.mubr.bf16.mxu0 %v1863
        %2304 = vmatmul.mubr.bf16.gmra.mrb[0].mxu0 %v1807
        %v2305 = vpop.f32.mrb[0].mxu0
        %v2306 = vadd.f32 %v2005, %v2305
        %v2307 = vpop.f32.mrb[0].mxu0
        %v2308 = vpop.f32.mrb[0].mxu0
        %v2309 = vadd.f32 %v2005, %v2308
        %v2310 = vpop.f32.mrb[0].mxu0
        %2311 = vmatprep.mubr.bf16.mxu0 %v1864
        %2312 = vmatmul.mubr.bf16.gmra.mrb[0].mxu0 %v1808
        %v2313 = vpop.f32.mrb[0].mxu0
        %v2314 = vadd.f32 %v2005, %v2313
        %v2315 = vpop.f32.mrb[0].mxu0
        %v2316 = vpop.f32.mrb[0].mxu0
        %v2317 = vadd.f32 %v2005, %v2316
        %v2318 = vpop.f32.mrb[0].mxu0
        %2319 = vmatprep.mubr.bf16.mxu0 %v1865
        %2320 = vmatmul.mubr.bf16.gmra.mrb[0].mxu0 %v1809
        %v2321 = vpop.f32.mrb[0].mxu0
        %v2322 = vadd.f32 %v2005, %v2321
        %v2323 = vpop.f32.mrb[0].mxu0
        %v2324 = vpop.f32.mrb[0].mxu0
        %v2325 = vadd.f32 %v2005, %v2324
        %v2326 = vpop.f32.mrb[0].mxu0
        %2327 = vmatprep.mubr.bf16.mxu0 %v1866
        %2328 = vmatmul.mubr.bf16.gmra.mrb[0].mxu0 %v1810
        %v2329 = vpop.f32.mrb[0].mxu0
        %v2330 = vadd.f32 %v2005, %v2329
        %v2331 = vpop.f32.mrb[0].mxu0
        %v2332 = vpop.f32.mrb[0].mxu0
        %v2333 = vadd.f32 %v2005, %v2332
        %v2334 = vpop.f32.mrb[0].mxu0
        %2335 = vmatprep.mubr.bf16.mxu0 %v1867
        %2336 = vmatmul.mubr.bf16.gmra.mrb[0].mxu0 %v1811
        %v2337 = vpop.f32.mrb[0].mxu0
        %v2338 = vadd.f32 %v2005, %v2337
        %v2339 = vpop.f32.mrb[0].mxu0
        %v2340 = vpop.f32.mrb[0].mxu0
        %v2341 = vadd.f32 %v2005, %v2340
        %v2342 = vpop.f32.mrb[0].mxu0
        %2343 = vmatprep.mubr.bf16.mxu0 %v1868
        %2344 = vmatmul.mubr.bf16.gmra.mrb[0].mxu0 %v1812
        %v2345 = vpop.f32.mrb[0].mxu0
        %v2346 = vadd.f32 %v2005, %v2345
        %v2347 = vpop.f32.mrb[0].mxu0
        %v2348 = vpop.f32.mrb[0].mxu0
        %v2349 = vadd.f32 %v2005, %v2348
        %v2350 = vpop.f32.mrb[0].mxu0
        %2351 = vmatprep.mubr.bf16.mxu0 %v1869
        %2352 = vmatmul.mubr.bf16.gmra.mrb[0].mxu0 %v1813
        %v2353 = vpop.f32.mrb[0].mxu0
        %v2354 = vadd.f32 %v2005, %v2353
        %v2355 = vpop.f32.mrb[0].mxu0
        %v2356 = vpop.f32.mrb[0].mxu0
        %v2357 = vadd.f32 %v2005, %v2356
        %v2358 = vpop.f32.mrb[0].mxu0
        %2359 = vmatprep.mubr.bf16.mxu0 %v1870
        %2360 = vmatmul.mubr.bf16.gmra.mrb[0].mxu0 %v1814
        %v2361 = vpop.f32.mrb[0].mxu0
        %v2362 = vadd.f32 %v2005, %v2361
        %v2363 = vpop.f32.mrb[0].mxu0
        %v2364 = vpop.f32.mrb[0].mxu0
        %v2365 = vadd.f32 %v2005, %v2364
        %v2366 = vpop.f32.mrb[0].mxu0
        %2367 = vmatprep.mubr.bf16.mxu0 %v1871
        %2368 = vmatmul.mubr.bf16.gmra.mrb[0].mxu0 %v1815
        %v2369 = vpop.f32.mrb[0].mxu0
        %v2370 = vadd.f32 %v2005, %v2369
        %v2371 = vpop.f32.mrb[0].mxu0
        %v2372 = vpop.f32.mrb[0].mxu0
        %v2373 = vadd.f32 %v2005, %v2372
        %v2374 = vpop.f32.mrb[0].mxu0
        %2375 = vmatprep.mubr.bf16.mxu0 %v1872
        %2376 = vmatmul.mubr.bf16.gmra.mrb[0].mxu0 %v1816
        %v2377 = vpop.f32.mrb[0].mxu0
        %v2378 = vadd.f32 %v2005, %v2377
        %v2379 = vpop.f32.mrb[0].mxu0
        %v2380 = vpop.f32.mrb[0].mxu0
        %v2381 = vpop.f32.mrb[0].mxu0
        %2382 = vdwg.mxu0
        %2383 = vmatprep.subr.bf16.mxu0 0
        %2384 = vmatpush1.bf16.msra.mxu0 %v2151
        %2385 = vmatprep.subr.bf16.mxu0 0
        %2386 = vmatpush1.bf16.msra.mxu0 %v2152
        %2387 = vmatprep.subr.bf16.mxu0 0
        %2388 = vmatpush1.bf16.msra.mxu0 %v2153
        %2389 = vmatprep.subr.bf16.mxu0 0
        %2390 = vmatpush1.bf16.msra.mxu0 %v2154
        %2391 = vmatprep.subr.bf16.mxu0 0
        %2392 = vmatpush1.bf16.msra.mxu0 %v2155
        %2393 = vmatprep.subr.bf16.mxu0 0
        %2394 = vmatpush1.bf16.msra.mxu0 %v2156
        %2395 = vmatprep.subr.bf16.mxu0 0
        %2396 = vmatpush1.bf16.msra.mxu0 %v2157
        %2397 = vmatprep.subr.bf16.mxu0 0
        %2398 = vmatpush1.bf16.msra.mxu0 %v2158
        %2399 = vmatprep.subr.bf16.mxu0 0
        %2400 = vmatpush1.bf16.msra.mxu0 %v2159
        %2401 = vmatprep.subr.bf16.mxu0 0
        %2402 = vmatpush1.bf16.msra.mxu0 %v2160
        %2403 = vmatprep.subr.bf16.mxu0 0
        %2404 = vmatpush1.bf16.msra.mxu0 %v2161
        %2405 = vmatprep.subr.bf16.mxu0 0
        %2406 = vmatpush1.bf16.msra.mxu0 %v2162
        %2407 = vmatprep.subr.bf16.mxu0 0
        %2408 = vmatpush1.bf16.msra.mxu0 %v2163
        %2409 = vmatprep.subr.bf16.mxu0 0
        %2410 = vmatpush1.bf16.msra.mxu0 %v2164
        %2411 = vmatprep.subr.bf16.mxu0 0
        %2412 = vmatpush1.bf16.msra.mxu0 %v2165
        %2413 = vmatprep.subr.bf16.mxu0 0
        %2414 = vmatpush1.bf16.msra.mxu0 %v2166
        %2415 = vmatprep.mubr.bf16.mxu0 %v1915
        %2416 = vmatmul.mubr.bf16.gmra.mrb[0].mxu0 %v1855
        %v2417 = vpop.f32.mrb[0].mxu0
        %v2418 = vadd.f32 %v2234, %v2417
        %v2419 = vpop.f32.mrb[0].mxu0
        %v2420 = vpop.f32.mrb[0].mxu0
        %v2421 = vadd.f32 %v2237, %v2420
        %v2422 = vpop.f32.mrb[0].mxu0
        %2423 = vmatprep.mubr.bf16.mxu0 %v1916
        %2424 = vmatmul.mubr.bf16.gmra.mrb[0].mxu0 %v1856
        %v2425 = vpop.f32.mrb[0].mxu0
        %v2426 = vadd.f32 %v2242, %v2425
        %v2427 = vpop.f32.mrb[0].mxu0
        %v2428 = vpop.f32.mrb[0].mxu0
        %v2429 = vadd.f32 %v2245, %v2428
        %v2430 = vpop.f32.mrb[0].mxu0
        %2431 = vmatprep.mubr.bf16.mxu0 %v1917
        %2432 = vmatmul.mubr.bf16.gmra.mrb[0].mxu0 %v1857
        %v2433 = vpop.f32.mrb[0].mxu0
        %v2434 = vadd.f32 %v2250, %v2433
        %v2435 = vpop.f32.mrb[0].mxu0
        %v2436 = vpop.f32.mrb[0].mxu0
        %v2437 = vadd.f32 %v2253, %v2436
        %v2438 = vpop.f32.mrb[0].mxu0
        %2439 = vmatprep.mubr.bf16.mxu0 %v1918
        %2440 = vmatmul.mubr.bf16.gmra.mrb[0].mxu0 %v1858
        %v2441 = vpop.f32.mrb[0].mxu0
        %v2442 = vadd.f32 %v2258, %v2441
        %v2443 = vpop.f32.mrb[0].mxu0
        %v2444 = vpop.f32.mrb[0].mxu0
        %v2445 = vadd.f32 %v2261, %v2444
        %v2446 = vpop.f32.mrb[0].mxu0
        %2447 = vmatprep.mubr.bf16.mxu0 %v1919
        %2448 = vmatmul.mubr.bf16.gmra.mrb[0].mxu0 %v1859
        %v2449 = vpop.f32.mrb[0].mxu0
        %v2450 = vadd.f32 %v2266, %v2449
        %v2451 = vpop.f32.mrb[0].mxu0
        %v2452 = vpop.f32.mrb[0].mxu0
        %v2453 = vadd.f32 %v2269, %v2452
        %v2454 = vpop.f32.mrb[0].mxu0
        %2455 = vmatprep.mubr.bf16.mxu0 %v1920
        %2456 = vmatmul.mubr.bf16.gmra.mrb[0].mxu0 %v1860
        %v2457 = vpop.f32.mrb[0].mxu0
        %v2458 = vadd.f32 %v2274, %v2457
        %v2459 = vpop.f32.mrb[0].mxu0
        %v2460 = vpop.f32.mrb[0].mxu0
        %v2461 = vadd.f32 %v2277, %v2460
        %v2462 = vpop.f32.mrb[0].mxu0
        %2463 = vmatprep.mubr.bf16.mxu0 %v1921
        %2464 = vmatmul.mubr.bf16.gmra.mrb[0].mxu0 %v1861
        %v2465 = vpop.f32.mrb[0].mxu0
        %v2466 = vadd.f32 %v2282, %v2465
        %v2467 = vpop.f32.mrb[0].mxu0
        %v2468 = vpop.f32.mrb[0].mxu0
        %v2469 = vadd.f32 %v2285, %v2468
        %v2470 = vpop.f32.mrb[0].mxu0
        %2471 = vmatprep.mubr.bf16.mxu0 %v1922
        %2472 = vmatmul.mubr.bf16.gmra.mrb[0].mxu0 %v1862
        %v2473 = vpop.f32.mrb[0].mxu0
        %v2474 = vadd.f32 %v2290, %v2473
        %v2475 = vpop.f32.mrb[0].mxu0
        %v2476 = vpop.f32.mrb[0].mxu0
        %v2477 = vadd.f32 %v2293, %v2476
        %v2478 = vpop.f32.mrb[0].mxu0
        %2479 = vmatprep.mubr.bf16.mxu0 %v1923
        %2480 = vmatmul.mubr.bf16.gmra.mrb[0].mxu0 %v1863
        %v2481 = vpop.f32.mrb[0].mxu0
        %v2482 = vadd.f32 %v2298, %v2481
        %v2483 = vpop.f32.mrb[0].mxu0
        %v2484 = vpop.f32.mrb[0].mxu0
        %v2485 = vadd.f32 %v2301, %v2484
        %v2486 = vpop.f32.mrb[0].mxu0
        %2487 = vmatprep.mubr.bf16.mxu0 %v1924
        %2488 = vmatmul.mubr.bf16.gmra.mrb[0].mxu0 %v1864
        %v2489 = vpop.f32.mrb[0].mxu0
        %v2490 = vadd.f32 %v2306, %v2489
        %v2491 = vpop.f32.mrb[0].mxu0
        %v2492 = vpop.f32.mrb[0].mxu0
        %v2493 = vadd.f32 %v2309, %v2492
        %v2494 = vpop.f32.mrb[0].mxu0
        %2495 = vmatprep.mubr.bf16.mxu0 %v1925
        %2496 = vmatmul.mubr.bf16.gmra.mrb[0].mxu0 %v1865
        %v2497 = vpop.f32.mrb[0].mxu0
        %v2498 = vadd.f32 %v2314, %v2497
        %v2499 = vpop.f32.mrb[0].mxu0
        %v2500 = vpop.f32.mrb[0].mxu0
        %v2501 = vadd.f32 %v2317, %v2500
        %v2502 = vpop.f32.mrb[0].mxu0
        %2503 = vmatprep.mubr.bf16.mxu0 %v1926
        %2504 = vmatmul.mubr.bf16.gmra.mrb[0].mxu0 %v1866
        %v2505 = vpop.f32.mrb[0].mxu0
        %v2506 = vadd.f32 %v2322, %v2505
        %v2507 = vpop.f32.mrb[0].mxu0
        %v2508 = vpop.f32.mrb[0].mxu0
        %v2509 = vadd.f32 %v2325, %v2508
        %v2510 = vpop.f32.mrb[0].mxu0
        %2511 = vmatprep.mubr.bf16.mxu0 %v1927
        %2512 = vmatmul.mubr.bf16.gmra.mrb[0].mxu0 %v1867
        %v2513 = vpop.f32.mrb[0].mxu0
        %v2514 = vadd.f32 %v2330, %v2513
        %v2515 = vpop.f32.mrb[0].mxu0
        %v2516 = vpop.f32.mrb[0].mxu0
        %v2517 = vadd.f32 %v2333, %v2516
        %v2518 = vpop.f32.mrb[0].mxu0
        %2519 = vmatprep.mubr.bf16.mxu0 %v1928
        %2520 = vmatmul.mubr.bf16.gmra.mrb[0].mxu0 %v1868
        %v2521 = vpop.f32.mrb[0].mxu0
        %v2522 = vadd.f32 %v2338, %v2521
        %v2523 = vpop.f32.mrb[0].mxu0
        %v2524 = vpop.f32.mrb[0].mxu0
        %v2525 = vadd.f32 %v2341, %v2524
        %v2526 = vpop.f32.mrb[0].mxu0
        %2527 = vmatprep.mubr.bf16.mxu0 %v1929
        %2528 = vmatmul.mubr.bf16.gmra.mrb[0].mxu0 %v1869
        %v2529 = vpop.f32.mrb[0].mxu0
        %v2530 = vadd.f32 %v2346, %v2529
        %v2531 = vpop.f32.mrb[0].mxu0
        %v2532 = vpop.f32.mrb[0].mxu0
        %v2533 = vadd.f32 %v2349, %v2532
        %v2534 = vpop.f32.mrb[0].mxu0
        %2535 = vmatprep.mubr.bf16.mxu0 %v1930
        %2536 = vmatmul.mubr.bf16.gmra.mrb[0].mxu0 %v1870
        %v2537 = vpop.f32.mrb[0].mxu0
        %v2538 = vadd.f32 %v2354, %v2537
        %v2539 = vpop.f32.mrb[0].mxu0
        %v2540 = vpop.f32.mrb[0].mxu0
        %v2541 = vadd.f32 %v2357, %v2540
        %v2542 = vpop.f32.mrb[0].mxu0
        %2543 = vmatprep.mubr.bf16.mxu0 %v1931
        %2544 = vmatmul.mubr.bf16.gmra.mrb[0].mxu0 %v1871
        %v2545 = vpop.f32.mrb[0].mxu0
        %v2546 = vadd.f32 %v2362, %v2545
        %v2547 = vpop.f32.mrb[0].mxu0
        %v2548 = vpop.f32.mrb[0].mxu0
        %v2549 = vadd.f32 %v2365, %v2548
        %v2550 = vpop.f32.mrb[0].mxu0
        %2551 = vmatprep.mubr.bf16.mxu0 %v1932
        %2552 = vmatmul.mubr.bf16.gmra.mrb[0].mxu0 %v1876
        %v2553 = vpop.f32.mrb[0].mxu0
        %v2554 = vadd.f32 %v2370, %v2553
        %v2555 = vpop.f32.mrb[0].mxu0
        %v2556 = vpop.f32.mrb[0].mxu0
        %v2557 = vadd.f32 %v2373, %v2556
        %v2558 = vpop.f32.mrb[0].mxu0
        %2559 = vmatprep.mubr.bf16.mxu0 %v1933
        %2560 = vmatmul.mubr.bf16.gmra.mrb[0].mxu0 %v1877
        %v2561 = vpop.f32.mrb[0].mxu0
        %v2562 = vadd.f32 %v2378, %v2561
        %v2563 = vpop.f32.mrb[0].mxu0
        %v2564 = vpop.f32.mrb[0].mxu0
        %v2565 = vpop.f32.mrb[0].mxu0
        %2566 = vdwg.mxu0
        %v2567 = vmax.f32 %v2418, 0.0
        %v2568 = vmax.f32 %v2421, 0.0
        %v2569 = vmax.f32 %v2426, 0.0
        %v2570 = vmax.f32 %v2429, 0.0
        %v2571 = vmax.f32 %v2434, 0.0
        %v2572 = vmax.f32 %v2437, 0.0
        %v2573 = vmax.f32 %v2442, 0.0
        %v2574 = vmax.f32 %v2445, 0.0
        %v2575 = vmax.f32 %v2450, 0.0
        %v2576 = vmax.f32 %v2453, 0.0
        %v2577 = vmax.f32 %v2458, 0.0
        %v2578 = vmax.f32 %v2461, 0.0
        %v2579 = vmax.f32 %v2466, 0.0
        %v2580 = vmax.f32 %v2469, 0.0
        %v2581 = vmax.f32 %v2474, 0.0
        %v2582 = vmax.f32 %v2477, 0.0
        %v2583 = vmax.f32 %v2482, 0.0
        %v2584 = vmax.f32 %v2485, 0.0
        %v2585 = vmax.f32 %v2490, 0.0
        %v2586 = vmax.f32 %v2493, 0.0
        %v2587 = vmax.f32 %v2498, 0.0
        %v2588 = vmax.f32 %v2501, 0.0
        %v2589 = vmax.f32 %v2506, 0.0
        %v2590 = vmax.f32 %v2509, 0.0
        %v2591 = vmax.f32 %v2514, 0.0
        %v2592 = vmax.f32 %v2517, 0.0
        %v2593 = vmax.f32 %v2522, 0.0
        %v2594 = vmax.f32 %v2525, 0.0
        %v2595 = vmax.f32 %v2530, 0.0
        %v2596 = vmax.f32 %v2533, 0.0
        %v2597 = vmax.f32 %v2538, 0.0
        %v2598 = vmax.f32 %v2541, 0.0
        %v2599 = vmax.f32 %v2546, 0.0
        %v2600 = vmax.f32 %v2549, 0.0
        %v2601 = vmax.f32 %v2554, 0.0
        %v2602 = vmax.f32 %v2557, 0.0
        %v2603 = vmax.f32 %v2562, 0.0
        %v2604 = vmul.f32 %v2567, %v772
        %v2605 = vmul.f32 %v2568, %v773
        %v2606 = vmul.f32 %v2569, %v774
        %v2607 = vmul.f32 %v2570, %v775
        %v2608 = vmul.f32 %v2571, %v776
        %v2609 = vmul.f32 %v2572, %v777
        %v2610 = vmul.f32 %v2573, %v778
        %v2611 = vmul.f32 %v2574, %v779
        %v2612 = vmul.f32 %v2575, %v780
        %v2613 = vmul.f32 %v2576, %v781
        %v2614 = vmul.f32 %v2577, %v782
        %v2615 = vmul.f32 %v2578, %v783
        %v2616 = vmul.f32 %v2579, %v784
        %v2617 = vmul.f32 %v2580, %v785
        %v2618 = vmul.f32 %v2581, %v786
        %v2619 = vmul.f32 %v2582, %v787
        %v2620 = vmul.f32 %v2583, %v788
        %v2621 = vmul.f32 %v2584, %v789
        %v2622 = vmul.f32 %v2585, %v790
        %v2623 = vmul.f32 %v2586, %v791
        %v2624 = vmul.f32 %v2587, %v792
        %v2625 = vmul.f32 %v2588, %v793
        %v2626 = vmul.f32 %v2589, %v794
        %v2627 = vmul.f32 %v2590, %v795
        %v2628 = vmul.f32 %v2591, %v796
        %v2629 = vmul.f32 %v2592, %v797
        %v2630 = vmul.f32 %v2593, %v798
        %v2631 = vmul.f32 %v2594, %v799
        %v2632 = vmul.f32 %v2595, %v800
        %v2633 = vmul.f32 %v2596, %v801
        %v2634 = vmul.f32 %v2597, %v802
        %v2635 = vmul.f32 %v2598, %v803
        %v2636 = vmul.f32 %v2599, %v804
        %v2637 = vmul.f32 %v2600, %v805
        %v2638 = vmul.f32 %v2601, %v806
        %v2639 = vmul.f32 %v2602, %v807
        %v2640 = vmul.f32 %v2603, %v808
        %v2641 = vadd.f32 %v1761, %v2604
        %v2642 = vadd.f32 %v1762, %v2605
        %v2643 = vadd.f32 %v1763, %v2606
        %v2644 = vadd.f32 %v1764, %v2607
        %v2645 = vadd.f32 %v1765, %v2608
        %v2646 = vadd.f32 %v1766, %v2609
        %v2647 = vadd.f32 %v1767, %v2610
        %v2648 = vadd.f32 %v1768, %v2611
        %v2649 = vadd.f32 %v1769, %v2612
        %v2650 = vadd.f32 %v1770, %v2613
        %v2651 = vadd.f32 %v1771, %v2614
        %v2652 = vadd.f32 %v1772, %v2615
        %v2653 = vadd.f32 %v1773, %v2616
        %v2654 = vadd.f32 %v1774, %v2617
        %v2655 = vadd.f32 %v1775, %v2618
        %v2656 = vadd.f32 %v1776, %v2619
        %v2657 = vadd.f32 %v1777, %v2620
        %v2658 = vadd.f32 %v1778, %v2621
        %v2659 = vadd.f32 %v1779, %v2622
        %v2660 = vadd.f32 %v1780, %v2623
        %v2661 = vadd.f32 %v1781, %v2624
        %v2662 = vadd.f32 %v1782, %v2625
        %v2663 = vadd.f32 %v1783, %v2626
        %v2664 = vadd.f32 %v1784, %v2627
        %v2665 = vadd.f32 %v1785, %v2628
        %v2666 = vadd.f32 %v1786, %v2629
        %v2667 = vadd.f32 %v1787, %v2630
        %v2668 = vadd.f32 %v1788, %v2631
        %v2669 = vadd.f32 %v1789, %v2632
        %v2670 = vadd.f32 %v1790, %v2633
        %v2671 = vadd.f32 %v1791, %v2634
        %v2672 = vadd.f32 %v1792, %v2635
        %v2673 = vadd.f32 %v1793, %v2636
        %v2674 = vadd.f32 %v1794, %v2637
        %v2675 = vadd.f32 %v1795, %v2638
        %v2676 = vadd.f32 %v1796, %v2639
        %v2677 = vadd.f32 %v1797, %v2640
        %2678 = vst [vmem:[#allocation2] sm:$0xff] %v2641
        %2679 = vst [vmem:[#allocation2 + $0x8] sm:$0xff] %v2642
        %2680 = vst [vmem:[#allocation2 + $0x10] sm:$0xff] %v2643
        %2681 = vst [vmem:[#allocation2 + $0x18] sm:$0xff] %v2644
        %2682 = vst [vmem:[#allocation2 + $0x20] sm:$0xff] %v2645
        %2683 = vst [vmem:[#allocation2 + $0x28] sm:$0xff] %v2646
        %2684 = vst [vmem:[#allocation2 + $0x30] sm:$0xff] %v2647
        %2685 = vst [vmem:[#allocation2 + $0x38] sm:$0xff] %v2648
        %2686 = vst [vmem:[#allocation2 + $0x40] sm:$0xff] %v2649
        %2687 = vst [vmem:[#allocation2 + $0x48] sm:$0xff] %v2650
        %2688 = vst [vmem:[#allocation2 + $0x50] sm:$0xff] %v2651
        %2689 = vst [vmem:[#allocation2 + $0x58] sm:$0xff] %v2652
        %2690 = vst [vmem:[#allocation2 + $0x60] sm:$0xff] %v2653
        %2691 = vst [vmem:[#allocation2 + $0x68] sm:$0xff] %v2654
        %2692 = vst [vmem:[#allocation2 + $0x70] sm:$0xff] %v2655
        %2693 = vst [vmem:[#allocation2 + $0x78] sm:$0xff] %v2656
        %2694 = vst [vmem:[#allocation2 + $0x80] sm:$0xff] %v2657
        %2695 = vst [vmem:[#allocation2 + $0x88] sm:$0xff] %v2658
        %2696 = vst [vmem:[#allocation2 + $0x90] sm:$0xff] %v2659
        %2697 = vst [vmem:[#allocation2 + $0x98] sm:$0xff] %v2660
        %2698 = vst [vmem:[#allocation2 + $0xa0] sm:$0xff] %v2661
        %2699 = vst [vmem:[#allocation2 + $0xa8] sm:$0xff] %v2662
        %2700 = vst [vmem:[#allocation2 + $0xb0] sm:$0xff] %v2663
        %2701 = vst [vmem:[#allocation2 + $0xb8] sm:$0xff] %v2664
        %2702 = vst [vmem:[#allocation2 + $0xc0] sm:$0xff] %v2665
        %2703 = vst [vmem:[#allocation2 + $0xc8] sm:$0xff] %v2666
        %2704 = vst [vmem:[#allocation2 + $0xd0] sm:$0xff] %v2667
        %2705 = vst [vmem:[#allocation2 + $0xd8] sm:$0xff] %v2668
        %2706 = vst [vmem:[#allocation2 + $0xe0] sm:$0xff] %v2669
        %2707 = vst [vmem:[#allocation2 + $0xe8] sm:$0xff] %v2670
        %2708 = vst [vmem:[#allocation2 + $0xf0] sm:$0xff] %v2671
        %2709 = vst [vmem:[#allocation2 + $0xf8] sm:$0xff] %v2672
        %2710 = vst [vmem:[#allocation2 + $0x100] sm:$0xff] %v2673
        %2711 = vst [vmem:[#allocation2 + $0x108] sm:$0xff] %v2674
        %2712 = vst [vmem:[#allocation2 + $0x110] sm:$0xff] %v2675
        %2713 = vst [vmem:[#allocation2 + $0x118] sm:$0xff] %v2676
        %2714 = vst [vmem:[#allocation2 + $0x120] sm:$0x1] %v2677
        %v2715 = vld [vmem:[#allocation2] sm:$0xff]
        %v2716 = vld [vmem:[#allocation2 + $0x8] sm:$0xff]
        %v2717 = vld [vmem:[#allocation2 + $0x10] sm:$0xff]
        %v2718 = vld [vmem:[#allocation2 + $0x18] sm:$0xff]
        %v2719 = vld [vmem:[#allocation2 + $0x20] sm:$0xff]
        %v2720 = vld [vmem:[#allocation2 + $0x28] sm:$0xff]
        %v2721 = vld [vmem:[#allocation2 + $0x30] sm:$0xff]
        %v2722 = vld [vmem:[#allocation2 + $0x38] sm:$0xff]
        %v2723 = vld [vmem:[#allocation2 + $0x40] sm:$0xff]
        %v2724 = vld [vmem:[#allocation2 + $0x48] sm:$0xff]
        %v2725 = vld [vmem:[#allocation2 + $0x50] sm:$0xff]
        %v2726 = vld [vmem:[#allocation2 + $0x58] sm:$0xff]
        %v2727 = vld [vmem:[#allocation2 + $0x60] sm:$0xff]
        %v2728 = vld [vmem:[#allocation2 + $0x68] sm:$0xff]
        %v2729 = vld [vmem:[#allocation2 + $0x70] sm:$0xff]
        %v2730 = vld [vmem:[#allocation2 + $0x78] sm:$0xff]
        %v2731 = vld [vmem:[#allocation2 + $0x80] sm:$0xff]
        %v2732 = vld [vmem:[#allocation2 + $0x88] sm:$0xff]
        %v2733 = vld [vmem:[#allocation2 + $0x90] sm:$0xff]
        %v2734 = vld [vmem:[#allocation2 + $0x98] sm:$0xff]
        %v2735 = vld [vmem:[#allocation2 + $0xa0] sm:$0xff]
        %v2736 = vld [vmem:[#allocation2 + $0xa8] sm:$0xff]
        %v2737 = vld [vmem:[#allocation2 + $0xb0] sm:$0xff]
        %v2738 = vld [vmem:[#allocation2 + $0xb8] sm:$0xff]
        %v2739 = vld [vmem:[#allocation2 + $0xc0] sm:$0xff]
        %v2740 = vld [vmem:[#allocation2 + $0xc8] sm:$0xff]
        %v2741 = vld [vmem:[#allocation2 + $0xd0] sm:$0xff]
        %v2742 = vld [vmem:[#allocation2 + $0xd8] sm:$0xff]
        %v2743 = vld [vmem:[#allocation2 + $0xe0] sm:$0xff]
        %v2744 = vld [vmem:[#allocation2 + $0xe8] sm:$0xff]
        %v2745 = vld [vmem:[#allocation2 + $0xf0] sm:$0xff]
        %v2746 = vld [vmem:[#allocation2 + $0xf8] sm:$0xff]
        %v2747 = vld [vmem:[#allocation2 + $0x100] sm:$0xff]
        %v2748 = vld [vmem:[#allocation2 + $0x108] sm:$0xff]
        %v2749 = vld [vmem:[#allocation2 + $0x110] sm:$0xff]
        %v2750 = vld [vmem:[#allocation2 + $0x118] sm:$0xff]
        %v2751 = vld [vmem:[#allocation2 + $0x120] sm:$0x1]
        %v2752 = vpack.c.bf16 %v2716, %v2715
        %v2753 = vpack.c.bf16 %v2718, %v2717
        %v2754 = vpack.c.bf16 %v2720, %v2719
        %v2755 = vpack.c.bf16 %v2722, %v2721
        %v2756 = vpack.c.bf16 %v2724, %v2723
        %v2757 = vpack.c.bf16 %v2726, %v2725
        %v2758 = vpack.c.bf16 %v2728, %v2727
        %v2759 = vpack.c.bf16 %v2730, %v2729
        %v2760 = vpack.c.bf16 %v2732, %v2731
        %v2761 = vpack.c.bf16 %v2734, %v2733
        %v2762 = vpack.c.bf16 %v2736, %v2735
        %v2763 = vpack.c.bf16 %v2738, %v2737
        %v2764 = vpack.c.bf16 %v2740, %v2739
        %v2765 = vpack.c.bf16 %v2742, %v2741
        %v2766 = vpack.c.bf16 %v2744, %v2743
        %v2767 = vpack.c.bf16 %v2746, %v2745
        %v2768 = vpack.c.bf16 %v2748, %v2747
        %v2769 = vpack.c.bf16 %v2750, %v2749
        %v2770 = vpack.c.bf16 %v2751, %v2751
        %v2771 = vld [vmem:[#allocation2 + $0x1] sm:$0xff]
        %v2772 = vld [vmem:[#allocation2 + $0x9] sm:$0xff]
        %v2773 = vld [vmem:[#allocation2 + $0x11] sm:$0xff]
        %v2774 = vld [vmem:[#allocation2 + $0x19] sm:$0xff]
        %v2775 = vld [vmem:[#allocation2 + $0x21] sm:$0xff]
        %v2776 = vld [vmem:[#allocation2 + $0x29] sm:$0xff]
        %v2777 = vld [vmem:[#allocation2 + $0x31] sm:$0xff]
        %v2778 = vld [vmem:[#allocation2 + $0x39] sm:$0xff]
        %v2779 = vld [vmem:[#allocation2 + $0x41] sm:$0xff]
        %v2780 = vld [vmem:[#allocation2 + $0x49] sm:$0xff]
        %v2781 = vld [vmem:[#allocation2 + $0x51] sm:$0xff]
        %v2782 = vld [vmem:[#allocation2 + $0x59] sm:$0xff]
        %v2783 = vld [vmem:[#allocation2 + $0x61] sm:$0xff]
        %v2784 = vld [vmem:[#allocation2 + $0x69] sm:$0xff]
        %v2785 = vld [vmem:[#allocation2 + $0x71] sm:$0xff]
        %v2786 = vld [vmem:[#allocation2 + $0x79] sm:$0xff]
        %v2787 = vld [vmem:[#allocation2 + $0x81] sm:$0xff]
        %v2788 = vld [vmem:[#allocation2 + $0x89] sm:$0xff]
        %v2789 = vld [vmem:[#allocation2 + $0x91] sm:$0xff]
        %v2790 = vld [vmem:[#allocation2 + $0x99] sm:$0xff]
        %v2791 = vld [vmem:[#allocation2 + $0xa1] sm:$0xff]
        %v2792 = vld [vmem:[#allocation2 + $0xa9] sm:$0xff]
        %v2793 = vld [vmem:[#allocation2 + $0xb1] sm:$0xff]
        %v2794 = vld [vmem:[#allocation2 + $0xb9] sm:$0xff]
        %v2795 = vld [vmem:[#allocation2 + $0xc1] sm:$0xff]
        %v2796 = vld [vmem:[#allocation2 + $0xc9] sm:$0xff]
        %v2797 = vld [vmem:[#allocation2 + $0xd1] sm:$0xff]
        %v2798 = vld [vmem:[#allocation2 + $0xd9] sm:$0xff]
        %v2799 = vld [vmem:[#allocation2 + $0xe1] sm:$0xff]
        %v2800 = vld [vmem:[#allocation2 + $0xe9] sm:$0xff]
        %v2801 = vld [vmem:[#allocation2 + $0xf1] sm:$0xff]
        %v2802 = vld [vmem:[#allocation2 + $0xf9] sm:$0xff]
        %v2803 = vld [vmem:[#allocation2 + $0x101] sm:$0xff]
        %v2804 = vld [vmem:[#allocation2 + $0x109] sm:$0xff]
        %v2805 = vld [vmem:[#allocation2 + $0x111] sm:$0xff]
        %v2806 = vld [vmem:[#allocation2 + $0x119] sm:$0xff]
        %v2807 = vld [vmem:[#allocation2 + $0x121] sm:$0x1]
        %v2808 = vpack.c.bf16 %v2772, %v2771
        %v2809 = vpack.c.bf16 %v2774, %v2773
        %v2810 = vpack.c.bf16 %v2776, %v2775
        %v2811 = vpack.c.bf16 %v2778, %v2777
        %v2812 = vpack.c.bf16 %v2780, %v2779
        %v2813 = vpack.c.bf16 %v2782, %v2781
        %v2814 = vpack.c.bf16 %v2784, %v2783
        %v2815 = vpack.c.bf16 %v2786, %v2785
        %v2816 = vpack.c.bf16 %v2788, %v2787
        %v2817 = vpack.c.bf16 %v2790, %v2789
        %v2818 = vpack.c.bf16 %v2792, %v2791
        %v2819 = vpack.c.bf16 %v2794, %v2793
        %v2820 = vpack.c.bf16 %v2796, %v2795
        %v2821 = vpack.c.bf16 %v2798, %v2797
        %v2822 = vpack.c.bf16 %v2800, %v2799
        %v2823 = vpack.c.bf16 %v2802, %v2801
        %v2824 = vpack.c.bf16 %v2804, %v2803
        %v2825 = vpack.c.bf16 %v2806, %v2805
        %v2826 = vpack.c.bf16 %v2807, %v2807
        %v2827 = vld [vmem:[#allocation2 + $0x121] sm:$0xff]
        %v2828 = vld [vmem:[#allocation2 + $0x129] sm:$0xff]
        %v2829 = vld [vmem:[#allocation2 + $0x131] sm:$0x1]
        %v2830 = vpack.c.bf16 %v2828, %v2827
        %v2831 = vpack.c.bf16 %v2829, %v2829
        %v2832 = vld [vmem:[#allocation2 + $0x12] sm:$0xff]
        %v2833 = vld [vmem:[#allocation2 + $0x1a] sm:$0xff]
        %v2834 = vld [vmem:[#allocation2 + $0x22] sm:$0xff]
        %v2835 = vld [vmem:[#allocation2 + $0x2a] sm:$0xff]
        %v2836 = vld [vmem:[#allocation2 + $0x32] sm:$0xff]
        %v2837 = vld [vmem:[#allocation2 + $0x3a] sm:$0xff]
        %v2838 = vld [vmem:[#allocation2 + $0x42] sm:$0xff]
        %v2839 = vld [vmem:[#allocation2 + $0x4a] sm:$0xff]
        %v2840 = vld [vmem:[#allocation2 + $0x52] sm:$0xff]
        %v2841 = vld [vmem:[#allocation2 + $0x5a] sm:$0xff]
        %v2842 = vld [vmem:[#allocation2 + $0x62] sm:$0xff]
        %v2843 = vld [vmem:[#allocation2 + $0x6a] sm:$0xff]
        %v2844 = vld [vmem:[#allocation2 + $0x72] sm:$0xff]
        %v2845 = vld [vmem:[#allocation2 + $0x7a] sm:$0xff]
        %v2846 = vld [vmem:[#allocation2 + $0x82] sm:$0xff]
        %v2847 = vld [vmem:[#allocation2 + $0x8a] sm:$0xff]
        %v2848 = vld [vmem:[#allocation2 + $0x92] sm:$0xff]
        %v2849 = vld [vmem:[#allocation2 + $0x9a] sm:$0xff]
        %v2850 = vld [vmem:[#allocation2 + $0xa2] sm:$0xff]
        %v2851 = vld [vmem:[#allocation2 + $0xaa] sm:$0xff]
        %v2852 = vld [vmem:[#allocation2 + $0xb2] sm:$0xff]
        %v2853 = vld [vmem:[#allocation2 + $0xba] sm:$0xff]
        %v2854 = vld [vmem:[#allocation2 + $0xc2] sm:$0xff]
        %v2855 = vld [vmem:[#allocation2 + $0xca] sm:$0xff]
        %v2856 = vld [vmem:[#allocation2 + $0xd2] sm:$0xff]
        %v2857 = vld [vmem:[#allocation2 + $0xda] sm:$0xff]
        %v2858 = vld [vmem:[#allocation2 + $0xe2] sm:$0xff]
        %v2859 = vld [vmem:[#allocation2 + $0xea] sm:$0xff]
        %v2860 = vld [vmem:[#allocation2 + $0xf2] sm:$0xff]
        %v2861 = vld [vmem:[#allocation2 + $0xfa] sm:$0xff]
        %v2862 = vld [vmem:[#allocation2 + $0x102] sm:$0xff]
        %v2863 = vld [vmem:[#allocation2 + $0x10a] sm:$0xff]
        %v2864 = vld [vmem:[#allocation2 + $0x112] sm:$0xff]
        %v2865 = vld [vmem:[#allocation2 + $0x11a] sm:$0xff]
        %v2866 = vld [vmem:[#allocation2 + $0x122] sm:$0xff]
        %v2867 = vld [vmem:[#allocation2 + $0x12a] sm:$0xff]
        %v2868 = vld [vmem:[#allocation2 + $0x132] sm:$0x1]
        %v2869 = vpack.c.bf16 %v2833, %v2832
        %v2870 = vpack.c.bf16 %v2835, %v2834
        %v2871 = vpack.c.bf16 %v2837, %v2836
        %v2872 = vpack.c.bf16 %v2839, %v2838
        %v2873 = vpack.c.bf16 %v2841, %v2840
        %v2874 = vpack.c.bf16 %v2843, %v2842
        %v2875 = vpack.c.bf16 %v2845, %v2844
        %v2876 = vpack.c.bf16 %v2847, %v2846
        %v2877 = vpack.c.bf16 %v2849, %v2848
        %v2878 = vpack.c.bf16 %v2851, %v2850
        %v2879 = vpack.c.bf16 %v2853, %v2852
        %v2880 = vpack.c.bf16 %v2855, %v2854
        %v2881 = vpack.c.bf16 %v2857, %v2856
        %v2882 = vpack.c.bf16 %v2859, %v2858
        %v2883 = vpack.c.bf16 %v2861, %v2860
        %v2884 = vpack.c.bf16 %v2863, %v2862
        %v2885 = vpack.c.bf16 %v2865, %v2864
        %v2886 = vpack.c.bf16 %v2867, %v2866
        %v2887 = vpack.c.bf16 %v2868, %v2868
        %s2888 = scalar_lea.vmem [#allocation4], 512
        %v2889 = vld [vmem:[%s2888] sm:$0xf]
        %v2890 = vld [vmem:[%s2888 + $0x4] sm:$0xf]
        %v2891 = vld [vmem:[%s2888 + $0x8] sm:$0xf]
        %v2892 = vld [vmem:[%s2888 + $0xc] sm:$0xf]
        %v2893 = vld [vmem:[%s2888 + $0x10] sm:$0xf]
        %v2894 = vld [vmem:[%s2888 + $0x14] sm:$0xf]
        %v2895 = vld [vmem:[%s2888 + $0x18] sm:$0xf]
        %v2896 = vld [vmem:[%s2888 + $0x1c] sm:$0xf]
        %v2897 = vld [vmem:[%s2888 + $0x20] sm:$0xf]
        %v2898 = vld [vmem:[%s2888 + $0x24] sm:$0xf]
        %v2899 = vld [vmem:[%s2888 + $0x28] sm:$0xf]
        %v2900 = vld [vmem:[%s2888 + $0x2c] sm:$0xf]
        %v2901 = vld [vmem:[%s2888 + $0x30] sm:$0xf]
        %v2902 = vld [vmem:[%s2888 + $0x34] sm:$0xf]
        %v2903 = vld [vmem:[%s2888 + $0x38] sm:$0xf]
        %v2904 = vld [vmem:[%s2888 + $0x3c] sm:$0xf]
        %v2905 = vld [vmem:[%s2888 + $0x40] sm:$0xf]
        %v2906 = vld [vmem:[%s2888 + $0x44] sm:$0xf]
        %v2907 = vld [vmem:[%s2888 + $0x48] sm:$0xf]
        %v2908 = vld [vmem:[%s2888 + $0x4c] sm:$0xf]
        %v2909 = vld [vmem:[%s2888 + $0x50] sm:$0xf]
        %v2910 = vld [vmem:[%s2888 + $0x54] sm:$0xf]
        %v2911 = vld [vmem:[%s2888 + $0x58] sm:$0xf]
        %v2912 = vld [vmem:[%s2888 + $0x5c] sm:$0xf]
        %v2913 = vld [vmem:[%s2888 + $0x60] sm:$0xf]
        %v2914 = vld [vmem:[%s2888 + $0x64] sm:$0xf]
        %v2915 = vld [vmem:[%s2888 + $0x68] sm:$0xf]
        %v2916 = vld [vmem:[%s2888 + $0x6c] sm:$0xf]
        %v2917 = vld [vmem:[%s2888 + $0x70] sm:$0xf]
        %v2918 = vld [vmem:[%s2888 + $0x74] sm:$0xf]
        %v2919 = vld [vmem:[%s2888 + $0x78] sm:$0xf]
        %v2920 = vld [vmem:[%s2888 + $0x7c] sm:$0xf]
        %v2921 = vld [vmem:[%s2888 + $0x80] sm:$0xf]
        %v2922 = vld [vmem:[%s2888 + $0x84] sm:$0xf]
        %v2923 = vld [vmem:[%s2888 + $0x88] sm:$0xf]
        %v2924 = vld [vmem:[%s2888 + $0x8c] sm:$0xf]
        %v2925 = vld [vmem:[%s2888 + $0x90] sm:$0xf]
        %v2926 = vld [vmem:[%s2888 + $0x94] sm:$0xf]
        %v2927 = vld [vmem:[%s2888 + $0x98] sm:$0xf]
        %v2928 = vld [vmem:[%s2888 + $0x9c] sm:$0xf]
        %v2929 = vld [vmem:[%s2888 + $0xa0] sm:$0xf]
        %v2930 = vld [vmem:[%s2888 + $0xa4] sm:$0xf]
        %v2931 = vld [vmem:[%s2888 + $0xa8] sm:$0xf]
        %v2932 = vld [vmem:[%s2888 + $0xac] sm:$0xf]
        %v2933 = vld [vmem:[%s2888 + $0xb0] sm:$0xf]
        %v2934 = vld [vmem:[%s2888 + $0xb4] sm:$0xf]
        %v2935 = vld [vmem:[%s2888 + $0xb8] sm:$0xf]
        %v2936 = vld [vmem:[%s2888 + $0xbc] sm:$0xf]
        %v2937 = vld [vmem:[%s2888 + $0xc0] sm:$0xf]
        %v2938 = vld [vmem:[%s2888 + $0xc4] sm:$0xf]
        %v2939 = vld [vmem:[%s2888 + $0xc8] sm:$0xf]
        %v2940 = vld [vmem:[%s2888 + $0xcc] sm:$0xf]
        %v2941 = vld [vmem:[%s2888 + $0xd0] sm:$0xf]
        %v2942 = vld [vmem:[%s2888 + $0xd4] sm:$0xf]
        %v2943 = vld [vmem:[%s2888 + $0xd8] sm:$0xf]
        %v2944 = vld [vmem:[%s2888 + $0xdc] sm:$0xf]
        %v2945 = vld [vmem:[%s2888 + $0xe0] sm:$0xf]
        %v2946 = vld [vmem:[%s2888 + $0xe4] sm:$0xf]
        %v2947 = vld [vmem:[%s2888 + $0xe8] sm:$0xf]
        %v2948 = vld [vmem:[%s2888 + $0xec] sm:$0xf]
        %v2949 = vld [vmem:[%s2888 + $0xf0] sm:$0xf]
        %v2950 = vld [vmem:[%s2888 + $0xf4] sm:$0xf]
        %v2951 = vld [vmem:[%s2888 + $0xf8] sm:$0xf]
        %v2952 = vld [vmem:[%s2888 + $0xfc] sm:$0xf]
        %s2953 = scalar_lea.vmem [#allocation6], 2
        %v2954 = vld [vmem:[%s2953] sm:$0x1]
        %v2956 = vlaneseq
        %v2957 = vshrl.u32 %v2956, 7
        %v2958 = vsub.s32 0, %v2957
        %v2959 = vrot.slane %v2954, %v2958
        %v3025 = vunpack.c.l.b16 %v2889
        %v3026 = vunpack.c.l.b16 %v2890
        %v3027 = vunpack.c.l.b16 %v2891
        %v3028 = vunpack.c.l.b16 %v2892
        %v3029 = vunpack.c.l.b16 %v2893
        %v3030 = vunpack.c.l.b16 %v2894
        %v3031 = vunpack.c.l.b16 %v2895
        %v3032 = vunpack.c.l.b16 %v2896
        %v3033 = vunpack.c.l.b16 %v2897
        %v3034 = vunpack.c.l.b16 %v2898
        %v3035 = vunpack.c.l.b16 %v2899
        %v3036 = vunpack.c.l.b16 %v2900
        %v3037 = vunpack.c.l.b16 %v2901
        %v3038 = vunpack.c.l.b16 %v2902
        %v3039 = vunpack.c.l.b16 %v2903
        %v3040 = vunpack.c.l.b16 %v2904
        %v3041 = vunpack.c.l.b16 %v2905
        %v3042 = vunpack.c.l.b16 %v2906
        %v3043 = vunpack.c.l.b16 %v2907
        %v3044 = vunpack.c.l.b16 %v2908
        %v3045 = vunpack.c.l.b16 %v2909
        %v3046 = vunpack.c.l.b16 %v2910
        %v3047 = vunpack.c.l.b16 %v2911
        %v3048 = vunpack.c.l.b16 %v2912
        %v3049 = vunpack.c.l.b16 %v2913
        %v3050 = vunpack.c.l.b16 %v2914
        %v3051 = vunpack.c.l.b16 %v2915
        %v3052 = vunpack.c.l.b16 %v2916
        %v3053 = vunpack.c.l.b16 %v2917
        %v3054 = vunpack.c.l.b16 %v2918
        %v3055 = vunpack.c.l.b16 %v2919
        %v3056 = vunpack.c.l.b16 %v2920
        %v3057 = vunpack.c.l.b16 %v2921
        %v3058 = vunpack.c.l.b16 %v2922
        %v3059 = vunpack.c.l.b16 %v2923
        %v3060 = vunpack.c.l.b16 %v2924
        %v3061 = vunpack.c.l.b16 %v2925
        %v3062 = vunpack.c.l.b16 %v2926
        %v3063 = vunpack.c.l.b16 %v2927
        %v3064 = vunpack.c.l.b16 %v2928
        %v3065 = vunpack.c.l.b16 %v2929
        %v3066 = vunpack.c.l.b16 %v2930
        %v3067 = vunpack.c.l.b16 %v2931
        %v3068 = vunpack.c.l.b16 %v2932
        %v3069 = vunpack.c.l.b16 %v2933
        %v3070 = vunpack.c.l.b16 %v2934
        %v3071 = vunpack.c.l.b16 %v2935
        %v3072 = vunpack.c.l.b16 %v2936
        %v3073 = vunpack.c.l.b16 %v2937
        %v3074 = vunpack.c.l.b16 %v2938
        %v3075 = vunpack.c.l.b16 %v2939
        %v3076 = vunpack.c.l.b16 %v2940
        %v3077 = vunpack.c.l.b16 %v2941
        %v3078 = vunpack.c.l.b16 %v2942
        %v3079 = vunpack.c.l.b16 %v2943
        %v3080 = vunpack.c.l.b16 %v2944
        %v3081 = vunpack.c.l.b16 %v2945
        %v3082 = vunpack.c.l.b16 %v2946
        %v3083 = vunpack.c.l.b16 %v2947
        %v3084 = vunpack.c.l.b16 %v2948
        %v3085 = vunpack.c.l.b16 %v2949
        %v3086 = vunpack.c.l.b16 %v2950
        %v3087 = vunpack.c.l.b16 %v2951
        %v3088 = vunpack.c.l.b16 %v2952
        %v3089 = vpack.c.b16 %v3026, %v3025
        %v3090 = vpack.c.b16 %v3028, %v3027
        %v3091 = vpack.c.b16 %v3030, %v3029
        %v3092 = vpack.c.b16 %v3032, %v3031
        %v3093 = vpack.c.b16 %v3034, %v3033
        %v3094 = vpack.c.b16 %v3036, %v3035
        %v3095 = vpack.c.b16 %v3038, %v3037
        %v3096 = vpack.c.b16 %v3040, %v3039
        %v3097 = vpack.c.b16 %v3042, %v3041
        %v3098 = vpack.c.b16 %v3044, %v3043
        %v3099 = vpack.c.b16 %v3046, %v3045
        %v3100 = vpack.c.b16 %v3048, %v3047
        %v3101 = vpack.c.b16 %v3050, %v3049
        %v3102 = vpack.c.b16 %v3052, %v3051
        %v3103 = vpack.c.b16 %v3054, %v3053
        %v3104 = vpack.c.b16 %v3056, %v3055
        %v3105 = vpack.c.b16 %v3058, %v3057
        %v3106 = vpack.c.b16 %v3060, %v3059
        %v3107 = vpack.c.b16 %v3062, %v3061
        %v3108 = vpack.c.b16 %v3064, %v3063
        %v3109 = vpack.c.b16 %v3066, %v3065
        %v3110 = vpack.c.b16 %v3068, %v3067
        %v3111 = vpack.c.b16 %v3070, %v3069
        %v3112 = vpack.c.b16 %v3072, %v3071
        %v3113 = vpack.c.b16 %v3074, %v3073
        %v3114 = vpack.c.b16 %v3076, %v3075
        %v3115 = vpack.c.b16 %v3078, %v3077
        %v3116 = vpack.c.b16 %v3080, %v3079
        %v3117 = vpack.c.b16 %v3082, %v3081
        %v3118 = vpack.c.b16 %v3084, %v3083
        %v3119 = vpack.c.b16 %v3086, %v3085
        %v3120 = vpack.c.b16 %v3088, %v3087
        %3153 = vmatprep.subr.bf16.mxu0 0
        %3154 = vmatpush1.bf16.msra.mxu0 %v3089
        %3155 = vmatprep.subr.bf16.mxu0 0
        %3156 = vmatpush1.bf16.msra.mxu0 %v3090
        %3157 = vmatprep.subr.bf16.mxu0 0
        %3158 = vmatpush1.bf16.msra.mxu0 %v3091
        %3159 = vmatprep.subr.bf16.mxu0 0
        %3160 = vmatpush1.bf16.msra.mxu0 %v3092
        %3161 = vmatprep.subr.bf16.mxu0 0
        %3162 = vmatpush1.bf16.msra.mxu0 %v3093
        %3163 = vmatprep.subr.bf16.mxu0 0
        %3164 = vmatpush1.bf16.msra.mxu0 %v3094
        %3165 = vmatprep.subr.bf16.mxu0 0
        %3166 = vmatpush1.bf16.msra.mxu0 %v3095
        %3167 = vmatprep.subr.bf16.mxu0 0
        %3168 = vmatpush1.bf16.msra.mxu0 %v3096
        %3169 = vmatprep.subr.bf16.mxu0 0
        %3170 = vmatpush1.bf16.msra.mxu0 %v3097
        %3171 = vmatprep.subr.bf16.mxu0 0
        %3172 = vmatpush1.bf16.msra.mxu0 %v3098
        %3173 = vmatprep.subr.bf16.mxu0 0
        %3174 = vmatpush1.bf16.msra.mxu0 %v3099
        %3175 = vmatprep.subr.bf16.mxu0 0
        %3176 = vmatpush1.bf16.msra.mxu0 %v3100
        %3177 = vmatprep.subr.bf16.mxu0 0
        %3178 = vmatpush1.bf16.msra.mxu0 %v3101
        %3179 = vmatprep.subr.bf16.mxu0 0
        %3180 = vmatpush1.bf16.msra.mxu0 %v3102
        %3181 = vmatprep.subr.bf16.mxu0 0
        %3182 = vmatpush1.bf16.msra.mxu0 %v3103
        %3183 = vmatprep.subr.bf16.mxu0 0
        %3184 = vmatpush1.bf16.msra.mxu0 %v3104
        %3185 = vmatprep.mubr.bf16.mxu0 %v2808
        %3186 = vmatmul.mubr.bf16.gmra.mrb[0].mxu0 %v2752
        %v3187 = vpop.f32.mrb[0].mxu0
        %v3188 = vadd.f32 %v2959, %v3187
        %v3189 = vpop.f32.mrb[0].mxu0
        %v3190 = vpop.f32.mrb[0].mxu0
        %v3191 = vadd.f32 %v2959, %v3190
        %v3192 = vpop.f32.mrb[0].mxu0
        %3193 = vmatprep.mubr.bf16.mxu0 %v2809
        %3194 = vmatmul.mubr.bf16.gmra.mrb[0].mxu0 %v2753
        %v3195 = vpop.f32.mrb[0].mxu0
        %v3196 = vadd.f32 %v2959, %v3195
        %v3197 = vpop.f32.mrb[0].mxu0
        %v3198 = vpop.f32.mrb[0].mxu0
        %v3199 = vadd.f32 %v2959, %v3198
        %v3200 = vpop.f32.mrb[0].mxu0
        %3201 = vmatprep.mubr.bf16.mxu0 %v2810
        %3202 = vmatmul.mubr.bf16.gmra.mrb[0].mxu0 %v2754
        %v3203 = vpop.f32.mrb[0].mxu0
        %v3204 = vadd.f32 %v2959, %v3203
        %v3205 = vpop.f32.mrb[0].mxu0
        %v3206 = vpop.f32.mrb[0].mxu0
        %v3207 = vadd.f32 %v2959, %v3206
        %v3208 = vpop.f32.mrb[0].mxu0
        %3209 = vmatprep.mubr.bf16.mxu0 %v2811
        %3210 = vmatmul.mubr.bf16.gmra.mrb[0].mxu0 %v2755
        %v3211 = vpop.f32.mrb[0].mxu0
        %v3212 = vadd.f32 %v2959, %v3211
        %v3213 = vpop.f32.mrb[0].mxu0
        %v3214 = vpop.f32.mrb[0].mxu0
        %v3215 = vadd.f32 %v2959, %v3214
        %v3216 = vpop.f32.mrb[0].mxu0
        %3217 = vmatprep.mubr.bf16.mxu0 %v2812
        %3218 = vmatmul.mubr.bf16.gmra.mrb[0].mxu0 %v2756
        %v3219 = vpop.f32.mrb[0].mxu0
        %v3220 = vadd.f32 %v2959, %v3219
        %v3221 = vpop.f32.mrb[0].mxu0
        %v3222 = vpop.f32.mrb[0].mxu0
        %v3223 = vadd.f32 %v2959, %v3222
        %v3224 = vpop.f32.mrb[0].mxu0
        %3225 = vmatprep.mubr.bf16.mxu0 %v2813
        %3226 = vmatmul.mubr.bf16.gmra.mrb[0].mxu0 %v2757
        %v3227 = vpop.f32.mrb[0].mxu0
        %v3228 = vadd.f32 %v2959, %v3227
        %v3229 = vpop.f32.mrb[0].mxu0
        %v3230 = vpop.f32.mrb[0].mxu0
        %v3231 = vadd.f32 %v2959, %v3230
        %v3232 = vpop.f32.mrb[0].mxu0
        %3233 = vmatprep.mubr.bf16.mxu0 %v2814
        %3234 = vmatmul.mubr.bf16.gmra.mrb[0].mxu0 %v2758
        %v3235 = vpop.f32.mrb[0].mxu0
        %v3236 = vadd.f32 %v2959, %v3235
        %v3237 = vpop.f32.mrb[0].mxu0
        %v3238 = vpop.f32.mrb[0].mxu0
        %v3239 = vadd.f32 %v2959, %v3238
        %v3240 = vpop.f32.mrb[0].mxu0
        %3241 = vmatprep.mubr.bf16.mxu0 %v2815
        %3242 = vmatmul.mubr.bf16.gmra.mrb[0].mxu0 %v2759
        %v3243 = vpop.f32.mrb[0].mxu0
        %v3244 = vadd.f32 %v2959, %v3243
        %v3245 = vpop.f32.mrb[0].mxu0
        %v3246 = vpop.f32.mrb[0].mxu0
        %v3247 = vadd.f32 %v2959, %v3246
        %v3248 = vpop.f32.mrb[0].mxu0
        %3249 = vmatprep.mubr.bf16.mxu0 %v2816
        %3250 = vmatmul.mubr.bf16.gmra.mrb[0].mxu0 %v2760
        %v3251 = vpop.f32.mrb[0].mxu0
        %v3252 = vadd.f32 %v2959, %v3251
        %v3253 = vpop.f32.mrb[0].mxu0
        %v3254 = vpop.f32.mrb[0].mxu0
        %v3255 = vadd.f32 %v2959, %v3254
        %v3256 = vpop.f32.mrb[0].mxu0
        %3257 = vmatprep.mubr.bf16.mxu0 %v2817
        %3258 = vmatmul.mubr.bf16.gmra.mrb[0].mxu0 %v2761
        %v3259 = vpop.f32.mrb[0].mxu0
        %v3260 = vadd.f32 %v2959, %v3259
        %v3261 = vpop.f32.mrb[0].mxu0
        %v3262 = vpop.f32.mrb[0].mxu0
        %v3263 = vadd.f32 %v2959, %v3262
        %v3264 = vpop.f32.mrb[0].mxu0
        %3265 = vmatprep.mubr.bf16.mxu0 %v2818
        %3266 = vmatmul.mubr.bf16.gmra.mrb[0].mxu0 %v2762
        %v3267 = vpop.f32.mrb[0].mxu0
        %v3268 = vadd.f32 %v2959, %v3267
        %v3269 = vpop.f32.mrb[0].mxu0
        %v3270 = vpop.f32.mrb[0].mxu0
        %v3271 = vadd.f32 %v2959, %v3270
        %v3272 = vpop.f32.mrb[0].mxu0
        %3273 = vmatprep.mubr.bf16.mxu0 %v2819
        %3274 = vmatmul.mubr.bf16.gmra.mrb[0].mxu0 %v2763
        %v3275 = vpop.f32.mrb[0].mxu0
        %v3276 = vadd.f32 %v2959, %v3275
        %v3277 = vpop.f32.mrb[0].mxu0
        %v3278 = vpop.f32.mrb[0].mxu0
        %v3279 = vadd.f32 %v2959, %v3278
        %v3280 = vpop.f32.mrb[0].mxu0
        %3281 = vmatprep.mubr.bf16.mxu0 %v2820
        %3282 = vmatmul.mubr.bf16.gmra.mrb[0].mxu0 %v2764
        %v3283 = vpop.f32.mrb[0].mxu0
        %v3284 = vadd.f32 %v2959, %v3283
        %v3285 = vpop.f32.mrb[0].mxu0
        %v3286 = vpop.f32.mrb[0].mxu0
        %v3287 = vadd.f32 %v2959, %v3286
        %v3288 = vpop.f32.mrb[0].mxu0
        %3289 = vmatprep.mubr.bf16.mxu0 %v2821
        %3290 = vmatmul.mubr.bf16.gmra.mrb[0].mxu0 %v2765
        %v3291 = vpop.f32.mrb[0].mxu0
        %v3292 = vadd.f32 %v2959, %v3291
        %v3293 = vpop.f32.mrb[0].mxu0
        %v3294 = vpop.f32.mrb[0].mxu0
        %v3295 = vadd.f32 %v2959, %v3294
        %v3296 = vpop.f32.mrb[0].mxu0
        %3297 = vmatprep.mubr.bf16.mxu0 %v2822
        %3298 = vmatmul.mubr.bf16.gmra.mrb[0].mxu0 %v2766
        %v3299 = vpop.f32.mrb[0].mxu0
        %v3300 = vadd.f32 %v2959, %v3299
        %v3301 = vpop.f32.mrb[0].mxu0
        %v3302 = vpop.f32.mrb[0].mxu0
        %v3303 = vadd.f32 %v2959, %v3302
        %v3304 = vpop.f32.mrb[0].mxu0
        %3305 = vmatprep.mubr.bf16.mxu0 %v2823
        %3306 = vmatmul.mubr.bf16.gmra.mrb[0].mxu0 %v2767
        %v3307 = vpop.f32.mrb[0].mxu0
        %v3308 = vadd.f32 %v2959, %v3307
        %v3309 = vpop.f32.mrb[0].mxu0
        %v3310 = vpop.f32.mrb[0].mxu0
        %v3311 = vadd.f32 %v2959, %v3310
        %v3312 = vpop.f32.mrb[0].mxu0
        %3313 = vmatprep.mubr.bf16.mxu0 %v2824
        %3314 = vmatmul.mubr.bf16.gmra.mrb[0].mxu0 %v2768
        %v3315 = vpop.f32.mrb[0].mxu0
        %v3316 = vadd.f32 %v2959, %v3315
        %v3317 = vpop.f32.mrb[0].mxu0
        %v3318 = vpop.f32.mrb[0].mxu0
        %v3319 = vadd.f32 %v2959, %v3318
        %v3320 = vpop.f32.mrb[0].mxu0
        %3321 = vmatprep.mubr.bf16.mxu0 %v2825
        %3322 = vmatmul.mubr.bf16.gmra.mrb[0].mxu0 %v2769
        %v3323 = vpop.f32.mrb[0].mxu0
        %v3324 = vadd.f32 %v2959, %v3323
        %v3325 = vpop.f32.mrb[0].mxu0
        %v3326 = vpop.f32.mrb[0].mxu0
        %v3327 = vadd.f32 %v2959, %v3326
        %v3328 = vpop.f32.mrb[0].mxu0
        %3329 = vmatprep.mubr.bf16.mxu0 %v2826
        %3330 = vmatmul.mubr.bf16.gmra.mrb[0].mxu0 %v2770
        %v3331 = vpop.f32.mrb[0].mxu0
        %v3332 = vadd.f32 %v2959, %v3331
        %v3333 = vpop.f32.mrb[0].mxu0
        %v3334 = vpop.f32.mrb[0].mxu0
        %v3335 = vpop.f32.mrb[0].mxu0
        %3336 = vdwg.mxu0
        %3337 = vmatprep.subr.bf16.mxu0 0
        %3338 = vmatpush1.bf16.msra.mxu0 %v3105
        %3339 = vmatprep.subr.bf16.mxu0 0
        %3340 = vmatpush1.bf16.msra.mxu0 %v3106
        %3341 = vmatprep.subr.bf16.mxu0 0
        %3342 = vmatpush1.bf16.msra.mxu0 %v3107
        %3343 = vmatprep.subr.bf16.mxu0 0
        %3344 = vmatpush1.bf16.msra.mxu0 %v3108
        %3345 = vmatprep.subr.bf16.mxu0 0
        %3346 = vmatpush1.bf16.msra.mxu0 %v3109
        %3347 = vmatprep.subr.bf16.mxu0 0
        %3348 = vmatpush1.bf16.msra.mxu0 %v3110
        %3349 = vmatprep.subr.bf16.mxu0 0
        %3350 = vmatpush1.bf16.msra.mxu0 %v3111
        %3351 = vmatprep.subr.bf16.mxu0 0
        %3352 = vmatpush1.bf16.msra.mxu0 %v3112
        %3353 = vmatprep.subr.bf16.mxu0 0
        %3354 = vmatpush1.bf16.msra.mxu0 %v3113
        %3355 = vmatprep.subr.bf16.mxu0 0
        %3356 = vmatpush1.bf16.msra.mxu0 %v3114
        %3357 = vmatprep.subr.bf16.mxu0 0
        %3358 = vmatpush1.bf16.msra.mxu0 %v3115
        %3359 = vmatprep.subr.bf16.mxu0 0
        %3360 = vmatpush1.bf16.msra.mxu0 %v3116
        %3361 = vmatprep.subr.bf16.mxu0 0
        %3362 = vmatpush1.bf16.msra.mxu0 %v3117
        %3363 = vmatprep.subr.bf16.mxu0 0
        %3364 = vmatpush1.bf16.msra.mxu0 %v3118
        %3365 = vmatprep.subr.bf16.mxu0 0
        %3366 = vmatpush1.bf16.msra.mxu0 %v3119
        %3367 = vmatprep.subr.bf16.mxu0 0
        %3368 = vmatpush1.bf16.msra.mxu0 %v3120
        %3369 = vmatprep.mubr.bf16.mxu0 %v2869
        %3370 = vmatmul.mubr.bf16.gmra.mrb[0].mxu0 %v2809
        %v3371 = vpop.f32.mrb[0].mxu0
        %v3372 = vadd.f32 %v3188, %v3371
        %v3373 = vpop.f32.mrb[0].mxu0
        %v3374 = vpop.f32.mrb[0].mxu0
        %v3375 = vadd.f32 %v3191, %v3374
        %v3376 = vpop.f32.mrb[0].mxu0
        %3377 = vmatprep.mubr.bf16.mxu0 %v2870
        %3378 = vmatmul.mubr.bf16.gmra.mrb[0].mxu0 %v2810
        %v3379 = vpop.f32.mrb[0].mxu0
        %v3380 = vadd.f32 %v3196, %v3379
        %v3381 = vpop.f32.mrb[0].mxu0
        %v3382 = vpop.f32.mrb[0].mxu0
        %v3383 = vadd.f32 %v3199, %v3382
        %v3384 = vpop.f32.mrb[0].mxu0
        %3385 = vmatprep.mubr.bf16.mxu0 %v2871
        %3386 = vmatmul.mubr.bf16.gmra.mrb[0].mxu0 %v2811
        %v3387 = vpop.f32.mrb[0].mxu0
        %v3388 = vadd.f32 %v3204, %v3387
        %v3389 = vpop.f32.mrb[0].mxu0
        %v3390 = vpop.f32.mrb[0].mxu0
        %v3391 = vadd.f32 %v3207, %v3390
        %v3392 = vpop.f32.mrb[0].mxu0
        %3393 = vmatprep.mubr.bf16.mxu0 %v2872
        %3394 = vmatmul.mubr.bf16.gmra.mrb[0].mxu0 %v2812
        %v3395 = vpop.f32.mrb[0].mxu0
        %v3396 = vadd.f32 %v3212, %v3395
        %v3397 = vpop.f32.mrb[0].mxu0
        %v3398 = vpop.f32.mrb[0].mxu0
        %v3399 = vadd.f32 %v3215, %v3398
        %v3400 = vpop.f32.mrb[0].mxu0
        %3401 = vmatprep.mubr.bf16.mxu0 %v2873
        %3402 = vmatmul.mubr.bf16.gmra.mrb[0].mxu0 %v2813
        %v3403 = vpop.f32.mrb[0].mxu0
        %v3404 = vadd.f32 %v3220, %v3403
        %v3405 = vpop.f32.mrb[0].mxu0
        %v3406 = vpop.f32.mrb[0].mxu0
        %v3407 = vadd.f32 %v3223, %v3406
        %v3408 = vpop.f32.mrb[0].mxu0
        %3409 = vmatprep.mubr.bf16.mxu0 %v2874
        %3410 = vmatmul.mubr.bf16.gmra.mrb[0].mxu0 %v2814
        %v3411 = vpop.f32.mrb[0].mxu0
        %v3412 = vadd.f32 %v3228, %v3411
        %v3413 = vpop.f32.mrb[0].mxu0
        %v3414 = vpop.f32.mrb[0].mxu0
        %v3415 = vadd.f32 %v3231, %v3414
        %v3416 = vpop.f32.mrb[0].mxu0
        %3417 = vmatprep.mubr.bf16.mxu0 %v2875
        %3418 = vmatmul.mubr.bf16.gmra.mrb[0].mxu0 %v2815
        %v3419 = vpop.f32.mrb[0].mxu0
        %v3420 = vadd.f32 %v3236, %v3419
        %v3421 = vpop.f32.mrb[0].mxu0
        %v3422 = vpop.f32.mrb[0].mxu0
        %v3423 = vadd.f32 %v3239, %v3422
        %v3424 = vpop.f32.mrb[0].mxu0
        %3425 = vmatprep.mubr.bf16.mxu0 %v2876
        %3426 = vmatmul.mubr.bf16.gmra.mrb[0].mxu0 %v2816
        %v3427 = vpop.f32.mrb[0].mxu0
        %v3428 = vadd.f32 %v3244, %v3427
        %v3429 = vpop.f32.mrb[0].mxu0
        %v3430 = vpop.f32.mrb[0].mxu0
        %v3431 = vadd.f32 %v3247, %v3430
        %v3432 = vpop.f32.mrb[0].mxu0
        %3433 = vmatprep.mubr.bf16.mxu0 %v2877
        %3434 = vmatmul.mubr.bf16.gmra.mrb[0].mxu0 %v2817
        %v3435 = vpop.f32.mrb[0].mxu0
        %v3436 = vadd.f32 %v3252, %v3435
        %v3437 = vpop.f32.mrb[0].mxu0
        %v3438 = vpop.f32.mrb[0].mxu0
        %v3439 = vadd.f32 %v3255, %v3438
        %v3440 = vpop.f32.mrb[0].mxu0
        %3441 = vmatprep.mubr.bf16.mxu0 %v2878
        %3442 = vmatmul.mubr.bf16.gmra.mrb[0].mxu0 %v2818
        %v3443 = vpop.f32.mrb[0].mxu0
        %v3444 = vadd.f32 %v3260, %v3443
        %v3445 = vpop.f32.mrb[0].mxu0
        %v3446 = vpop.f32.mrb[0].mxu0
        %v3447 = vadd.f32 %v3263, %v3446
        %v3448 = vpop.f32.mrb[0].mxu0
        %3449 = vmatprep.mubr.bf16.mxu0 %v2879
        %3450 = vmatmul.mubr.bf16.gmra.mrb[0].mxu0 %v2819
        %v3451 = vpop.f32.mrb[0].mxu0
        %v3452 = vadd.f32 %v3268, %v3451
        %v3453 = vpop.f32.mrb[0].mxu0
        %v3454 = vpop.f32.mrb[0].mxu0
        %v3455 = vadd.f32 %v3271, %v3454
        %v3456 = vpop.f32.mrb[0].mxu0
        %3457 = vmatprep.mubr.bf16.mxu0 %v2880
        %3458 = vmatmul.mubr.bf16.gmra.mrb[0].mxu0 %v2820
        %v3459 = vpop.f32.mrb[0].mxu0
        %v3460 = vadd.f32 %v3276, %v3459
        %v3461 = vpop.f32.mrb[0].mxu0
        %v3462 = vpop.f32.mrb[0].mxu0
        %v3463 = vadd.f32 %v3279, %v3462
        %v3464 = vpop.f32.mrb[0].mxu0
        %3465 = vmatprep.mubr.bf16.mxu0 %v2881
        %3466 = vmatmul.mubr.bf16.gmra.mrb[0].mxu0 %v2821
        %v3467 = vpop.f32.mrb[0].mxu0
        %v3468 = vadd.f32 %v3284, %v3467
        %v3469 = vpop.f32.mrb[0].mxu0
        %v3470 = vpop.f32.mrb[0].mxu0
        %v3471 = vadd.f32 %v3287, %v3470
        %v3472 = vpop.f32.mrb[0].mxu0
        %3473 = vmatprep.mubr.bf16.mxu0 %v2882
        %3474 = vmatmul.mubr.bf16.gmra.mrb[0].mxu0 %v2822
        %v3475 = vpop.f32.mrb[0].mxu0
        %v3476 = vadd.f32 %v3292, %v3475
        %v3477 = vpop.f32.mrb[0].mxu0
        %v3478 = vpop.f32.mrb[0].mxu0
        %v3479 = vadd.f32 %v3295, %v3478
        %v3480 = vpop.f32.mrb[0].mxu0
        %3481 = vmatprep.mubr.bf16.mxu0 %v2883
        %3482 = vmatmul.mubr.bf16.gmra.mrb[0].mxu0 %v2823
        %v3483 = vpop.f32.mrb[0].mxu0
        %v3484 = vadd.f32 %v3300, %v3483
        %v3485 = vpop.f32.mrb[0].mxu0
        %v3486 = vpop.f32.mrb[0].mxu0
        %v3487 = vadd.f32 %v3303, %v3486
        %v3488 = vpop.f32.mrb[0].mxu0
        %3489 = vmatprep.mubr.bf16.mxu0 %v2884
        %3490 = vmatmul.mubr.bf16.gmra.mrb[0].mxu0 %v2824
        %v3491 = vpop.f32.mrb[0].mxu0
        %v3492 = vadd.f32 %v3308, %v3491
        %v3493 = vpop.f32.mrb[0].mxu0
        %v3494 = vpop.f32.mrb[0].mxu0
        %v3495 = vadd.f32 %v3311, %v3494
        %v3496 = vpop.f32.mrb[0].mxu0
        %3497 = vmatprep.mubr.bf16.mxu0 %v2885
        %3498 = vmatmul.mubr.bf16.gmra.mrb[0].mxu0 %v2825
        %v3499 = vpop.f32.mrb[0].mxu0
        %v3500 = vadd.f32 %v3316, %v3499
        %v3501 = vpop.f32.mrb[0].mxu0
        %v3502 = vpop.f32.mrb[0].mxu0
        %v3503 = vadd.f32 %v3319, %v3502
        %v3504 = vpop.f32.mrb[0].mxu0
        %3505 = vmatprep.mubr.bf16.mxu0 %v2886
        %3506 = vmatmul.mubr.bf16.gmra.mrb[0].mxu0 %v2830
        %v3507 = vpop.f32.mrb[0].mxu0
        %v3508 = vadd.f32 %v3324, %v3507
        %v3509 = vpop.f32.mrb[0].mxu0
        %v3510 = vpop.f32.mrb[0].mxu0
        %v3511 = vadd.f32 %v3327, %v3510
        %v3512 = vpop.f32.mrb[0].mxu0
        %3513 = vmatprep.mubr.bf16.mxu0 %v2887
        %3514 = vmatmul.mubr.bf16.gmra.mrb[0].mxu0 %v2831
        %v3515 = vpop.f32.mrb[0].mxu0
        %v3516 = vadd.f32 %v3332, %v3515
        %v3517 = vpop.f32.mrb[0].mxu0
        %v3518 = vpop.f32.mrb[0].mxu0
        %v3519 = vpop.f32.mrb[0].mxu0
        %3520 = vdwg.mxu0
        %v3521 = vmax.f32 %v3372, 0.0
        %v3522 = vmax.f32 %v3375, 0.0
        %v3523 = vmax.f32 %v3380, 0.0
        %v3524 = vmax.f32 %v3383, 0.0
        %v3525 = vmax.f32 %v3388, 0.0
        %v3526 = vmax.f32 %v3391, 0.0
        %v3527 = vmax.f32 %v3396, 0.0
        %v3528 = vmax.f32 %v3399, 0.0
        %v3529 = vmax.f32 %v3404, 0.0
        %v3530 = vmax.f32 %v3407, 0.0
        %v3531 = vmax.f32 %v3412, 0.0
        %v3532 = vmax.f32 %v3415, 0.0
        %v3533 = vmax.f32 %v3420, 0.0
        %v3534 = vmax.f32 %v3423, 0.0
        %v3535 = vmax.f32 %v3428, 0.0
        %v3536 = vmax.f32 %v3431, 0.0
        %v3537 = vmax.f32 %v3436, 0.0
        %v3538 = vmax.f32 %v3439, 0.0
        %v3539 = vmax.f32 %v3444, 0.0
        %v3540 = vmax.f32 %v3447, 0.0
        %v3541 = vmax.f32 %v3452, 0.0
        %v3542 = vmax.f32 %v3455, 0.0
        %v3543 = vmax.f32 %v3460, 0.0
        %v3544 = vmax.f32 %v3463, 0.0
        %v3545 = vmax.f32 %v3468, 0.0
        %v3546 = vmax.f32 %v3471, 0.0
        %v3547 = vmax.f32 %v3476, 0.0
        %v3548 = vmax.f32 %v3479, 0.0
        %v3549 = vmax.f32 %v3484, 0.0
        %v3550 = vmax.f32 %v3487, 0.0
        %v3551 = vmax.f32 %v3492, 0.0
        %v3552 = vmax.f32 %v3495, 0.0
        %v3553 = vmax.f32 %v3500, 0.0
        %v3554 = vmax.f32 %v3503, 0.0
        %v3555 = vmax.f32 %v3508, 0.0
        %v3556 = vmax.f32 %v3511, 0.0
        %v3557 = vmax.f32 %v3516, 0.0
        %v3558 = vmul.f32 %v3521, %v772
        %v3559 = vmul.f32 %v3522, %v773
        %v3560 = vmul.f32 %v3523, %v774
        %v3561 = vmul.f32 %v3524, %v775
        %v3562 = vmul.f32 %v3525, %v776
        %v3563 = vmul.f32 %v3526, %v777
        %v3564 = vmul.f32 %v3527, %v778
        %v3565 = vmul.f32 %v3528, %v779
        %v3566 = vmul.f32 %v3529, %v780
        %v3567 = vmul.f32 %v3530, %v781
        %v3568 = vmul.f32 %v3531, %v782
        %v3569 = vmul.f32 %v3532, %v783
        %v3570 = vmul.f32 %v3533, %v784
        %v3571 = vmul.f32 %v3534, %v785
        %v3572 = vmul.f32 %v3535, %v786
        %v3573 = vmul.f32 %v3536, %v787
        %v3574 = vmul.f32 %v3537, %v788
        %v3575 = vmul.f32 %v3538, %v789
        %v3576 = vmul.f32 %v3539, %v790
        %v3577 = vmul.f32 %v3540, %v791
        %v3578 = vmul.f32 %v3541, %v792
        %v3579 = vmul.f32 %v3542, %v793
        %v3580 = vmul.f32 %v3543, %v794
        %v3581 = vmul.f32 %v3544, %v795
        %v3582 = vmul.f32 %v3545, %v796
        %v3583 = vmul.f32 %v3546, %v797
        %v3584 = vmul.f32 %v3547, %v798
        %v3585 = vmul.f32 %v3548, %v799
        %v3586 = vmul.f32 %v3549, %v800
        %v3587 = vmul.f32 %v3550, %v801
        %v3588 = vmul.f32 %v3551, %v802
        %v3589 = vmul.f32 %v3552, %v803
        %v3590 = vmul.f32 %v3553, %v804
        %v3591 = vmul.f32 %v3554, %v805
        %v3592 = vmul.f32 %v3555, %v806
        %v3593 = vmul.f32 %v3556, %v807
        %v3594 = vmul.f32 %v3557, %v808
        %v3595 = vadd.f32 %v2715, %v3558
        %v3596 = vadd.f32 %v2716, %v3559
        %v3597 = vadd.f32 %v2717, %v3560
        %v3598 = vadd.f32 %v2718, %v3561
        %v3599 = vadd.f32 %v2719, %v3562
        %v3600 = vadd.f32 %v2720, %v3563
        %v3601 = vadd.f32 %v2721, %v3564
        %v3602 = vadd.f32 %v2722, %v3565
        %v3603 = vadd.f32 %v2723, %v3566
        %v3604 = vadd.f32 %v2724, %v3567
        %v3605 = vadd.f32 %v2725, %v3568
        %v3606 = vadd.f32 %v2726, %v3569
        %v3607 = vadd.f32 %v2727, %v3570
        %v3608 = vadd.f32 %v2728, %v3571
        %v3609 = vadd.f32 %v2729, %v3572
        %v3610 = vadd.f32 %v2730, %v3573
        %v3611 = vadd.f32 %v2731, %v3574
        %v3612 = vadd.f32 %v2732, %v3575
        %v3613 = vadd.f32 %v2733, %v3576
        %v3614 = vadd.f32 %v2734, %v3577
        %v3615 = vadd.f32 %v2735, %v3578
        %v3616 = vadd.f32 %v2736, %v3579
        %v3617 = vadd.f32 %v2737, %v3580
        %v3618 = vadd.f32 %v2738, %v3581
        %v3619 = vadd.f32 %v2739, %v3582
        %v3620 = vadd.f32 %v2740, %v3583
        %v3621 = vadd.f32 %v2741, %v3584
        %v3622 = vadd.f32 %v2742, %v3585
        %v3623 = vadd.f32 %v2743, %v3586
        %v3624 = vadd.f32 %v2744, %v3587
        %v3625 = vadd.f32 %v2745, %v3588
        %v3626 = vadd.f32 %v2746, %v3589
        %v3627 = vadd.f32 %v2747, %v3590
        %v3628 = vadd.f32 %v2748, %v3591
        %v3629 = vadd.f32 %v2749, %v3592
        %v3630 = vadd.f32 %v2750, %v3593
        %v3631 = vadd.f32 %v2751, %v3594
        %3632 = vst [vmem:[#allocation2] sm:$0xff] %v3595
        %3633 = vst [vmem:[#allocation2 + $0x8] sm:$0xff] %v3596
        %3634 = vst [vmem:[#allocation2 + $0x10] sm:$0xff] %v3597
        %3635 = vst [vmem:[#allocation2 + $0x18] sm:$0xff] %v3598
        %3636 = vst [vmem:[#allocation2 + $0x20] sm:$0xff] %v3599
        %3637 = vst [vmem:[#allocation2 + $0x28] sm:$0xff] %v3600
        %3638 = vst [vmem:[#allocation2 + $0x30] sm:$0xff] %v3601
        %3639 = vst [vmem:[#allocation2 + $0x38] sm:$0xff] %v3602
        %3640 = vst [vmem:[#allocation2 + $0x40] sm:$0xff] %v3603
        %3641 = vst [vmem:[#allocation2 + $0x48] sm:$0xff] %v3604
        %3642 = vst [vmem:[#allocation2 + $0x50] sm:$0xff] %v3605
        %3643 = vst [vmem:[#allocation2 + $0x58] sm:$0xff] %v3606
        %3644 = vst [vmem:[#allocation2 + $0x60] sm:$0xff] %v3607
        %3645 = vst [vmem:[#allocation2 + $0x68] sm:$0xff] %v3608
        %3646 = vst [vmem:[#allocation2 + $0x70] sm:$0xff] %v3609
        %3647 = vst [vmem:[#allocation2 + $0x78] sm:$0xff] %v3610
        %3648 = vst [vmem:[#allocation2 + $0x80] sm:$0xff] %v3611
        %3649 = vst [vmem:[#allocation2 + $0x88] sm:$0xff] %v3612
        %3650 = vst [vmem:[#allocation2 + $0x90] sm:$0xff] %v3613
        %3651 = vst [vmem:[#allocation2 + $0x98] sm:$0xff] %v3614
        %3652 = vst [vmem:[#allocation2 + $0xa0] sm:$0xff] %v3615
        %3653 = vst [vmem:[#allocation2 + $0xa8] sm:$0xff] %v3616
        %3654 = vst [vmem:[#allocation2 + $0xb0] sm:$0xff] %v3617
        %3655 = vst [vmem:[#allocation2 + $0xb8] sm:$0xff] %v3618
        %3656 = vst [vmem:[#allocation2 + $0xc0] sm:$0xff] %v3619
        %3657 = vst [vmem:[#allocation2 + $0xc8] sm:$0xff] %v3620
        %3658 = vst [vmem:[#allocation2 + $0xd0] sm:$0xff] %v3621
        %3659 = vst [vmem:[#allocation2 + $0xd8] sm:$0xff] %v3622
        %3660 = vst [vmem:[#allocation2 + $0xe0] sm:$0xff] %v3623
        %3661 = vst [vmem:[#allocation2 + $0xe8] sm:$0xff] %v3624
        %3662 = vst [vmem:[#allocation2 + $0xf0] sm:$0xff] %v3625
        %3663 = vst [vmem:[#allocation2 + $0xf8] sm:$0xff] %v3626
        %3664 = vst [vmem:[#allocation2 + $0x100] sm:$0xff] %v3627
        %3665 = vst [vmem:[#allocation2 + $0x108] sm:$0xff] %v3628
        %3666 = vst [vmem:[#allocation2 + $0x110] sm:$0xff] %v3629
        %3667 = vst [vmem:[#allocation2 + $0x118] sm:$0xff] %v3630
        %3668 = vst [vmem:[#allocation2 + $0x120] sm:$0x1] %v3631
        %v3669 = vld [vmem:[#allocation2] sm:$0xff]
        %v3670 = vld [vmem:[#allocation2 + $0x8] sm:$0xff]
        %v3671 = vld [vmem:[#allocation2 + $0x10] sm:$0xff]
        %v3672 = vld [vmem:[#allocation2 + $0x18] sm:$0xff]
        %v3673 = vld [vmem:[#allocation2 + $0x20] sm:$0xff]
        %v3674 = vld [vmem:[#allocation2 + $0x28] sm:$0xff]
        %v3675 = vld [vmem:[#allocation2 + $0x30] sm:$0xff]
        %v3676 = vld [vmem:[#allocation2 + $0x38] sm:$0xff]
        %v3677 = vld [vmem:[#allocation2 + $0x40] sm:$0xff]
        %v3678 = vld [vmem:[#allocation2 + $0x48] sm:$0xff]
        %v3679 = vld [vmem:[#allocation2 + $0x50] sm:$0xff]
        %v3680 = vld [vmem:[#allocation2 + $0x58] sm:$0xff]
        %v3681 = vld [vmem:[#allocation2 + $0x60] sm:$0xff]
        %v3682 = vld [vmem:[#allocation2 + $0x68] sm:$0xff]
        %v3683 = vld [vmem:[#allocation2 + $0x70] sm:$0xff]
        %v3684 = vld [vmem:[#allocation2 + $0x78] sm:$0xff]
        %v3685 = vld [vmem:[#allocation2 + $0x80] sm:$0xff]
        %v3686 = vld [vmem:[#allocation2 + $0x88] sm:$0xff]
        %v3687 = vld [vmem:[#allocation2 + $0x90] sm:$0xff]
        %v3688 = vld [vmem:[#allocation2 + $0x98] sm:$0xff]
        %v3689 = vld [vmem:[#allocation2 + $0xa0] sm:$0xff]
        %v3690 = vld [vmem:[#allocation2 + $0xa8] sm:$0xff]
        %v3691 = vld [vmem:[#allocation2 + $0xb0] sm:$0xff]
        %v3692 = vld [vmem:[#allocation2 + $0xb8] sm:$0xff]
        %v3693 = vld [vmem:[#allocation2 + $0xc0] sm:$0xff]
        %v3694 = vld [vmem:[#allocation2 + $0xc8] sm:$0xff]
        %v3695 = vld [vmem:[#allocation2 + $0xd0] sm:$0xff]
        %v3696 = vld [vmem:[#allocation2 + $0xd8] sm:$0xff]
        %v3697 = vld [vmem:[#allocation2 + $0xe0] sm:$0xff]
        %v3698 = vld [vmem:[#allocation2 + $0xe8] sm:$0xff]
        %v3699 = vld [vmem:[#allocation2 + $0xf0] sm:$0xff]
        %v3700 = vld [vmem:[#allocation2 + $0xf8] sm:$0xff]
        %v3701 = vld [vmem:[#allocation2 + $0x100] sm:$0xff]
        %v3702 = vld [vmem:[#allocation2 + $0x108] sm:$0xff]
        %v3703 = vld [vmem:[#allocation2 + $0x110] sm:$0xff]
        %v3704 = vld [vmem:[#allocation2 + $0x118] sm:$0xff]
        %v3705 = vld [vmem:[#allocation2 + $0x120] sm:$0x1]
        %v3706 = vpack.c.bf16 %v3670, %v3669
        %v3707 = vpack.c.bf16 %v3672, %v3671
        %v3708 = vpack.c.bf16 %v3674, %v3673
        %v3709 = vpack.c.bf16 %v3676, %v3675
        %v3710 = vpack.c.bf16 %v3678, %v3677
        %v3711 = vpack.c.bf16 %v3680, %v3679
        %v3712 = vpack.c.bf16 %v3682, %v3681
        %v3713 = vpack.c.bf16 %v3684, %v3683
        %v3714 = vpack.c.bf16 %v3686, %v3685
        %v3715 = vpack.c.bf16 %v3688, %v3687
        %v3716 = vpack.c.bf16 %v3690, %v3689
        %v3717 = vpack.c.bf16 %v3692, %v3691
        %v3718 = vpack.c.bf16 %v3694, %v3693
        %v3719 = vpack.c.bf16 %v3696, %v3695
        %v3720 = vpack.c.bf16 %v3698, %v3697
        %v3721 = vpack.c.bf16 %v3700, %v3699
        %v3722 = vpack.c.bf16 %v3702, %v3701
        %v3723 = vpack.c.bf16 %v3704, %v3703
        %v3724 = vpack.c.bf16 %v3705, %v3705
        %v3725 = vld [vmem:[#allocation8] sm:$0xf]
        %v3726 = vld [vmem:[#allocation8 + $0x4] sm:$0xf]
        %v3727 = vld [vmem:[#allocation8 + $0x8] sm:$0xf]
        %v3728 = vld [vmem:[#allocation8 + $0xc] sm:$0xf]
        %v3729 = vld [vmem:[#allocation8 + $0x10] sm:$0xf]
        %v3730 = vld [vmem:[#allocation8 + $0x14] sm:$0xf]
        %v3731 = vld [vmem:[#allocation8 + $0x18] sm:$0xf]
        %v3732 = vld [vmem:[#allocation8 + $0x1c] sm:$0xf]
        %v3733 = vld [vmem:[#allocation8 + $0x20] sm:$0xf]
        %v3734 = vld [vmem:[#allocation8 + $0x24] sm:$0xf]
        %v3735 = vld [vmem:[#allocation8 + $0x28] sm:$0xf]
        %v3736 = vld [vmem:[#allocation8 + $0x2c] sm:$0xf]
        %v3737 = vld [vmem:[#allocation8 + $0x30] sm:$0xf]
        %v3738 = vld [vmem:[#allocation8 + $0x34] sm:$0xf]
        %v3739 = vld [vmem:[#allocation8 + $0x38] sm:$0xf]
        %v3740 = vld [vmem:[#allocation8 + $0x3c] sm:$0xf]
        %v3741 = vld [vmem:[#allocation9] sm:$0x1]
        %v3743 = vlaneseq
        %v3744 = vshrl.u32 %v3743, 7
        %v3745 = vsub.s32 0, %v3744
        %v3746 = vrot.slane %v3741, %v3745
        %v3764 = vunpack.c.l.b16 %v3725
        %v3765 = vunpack.c.l.b16 %v3726
        %v3766 = vunpack.c.l.b16 %v3727
        %v3767 = vunpack.c.l.b16 %v3728
        %v3768 = vunpack.c.l.b16 %v3729
        %v3769 = vunpack.c.l.b16 %v3730
        %v3770 = vunpack.c.l.b16 %v3731
        %v3771 = vunpack.c.l.b16 %v3732
        %v3772 = vunpack.c.l.b16 %v3733
        %v3773 = vunpack.c.l.b16 %v3734
        %v3774 = vunpack.c.l.b16 %v3735
        %v3775 = vunpack.c.l.b16 %v3736
        %v3776 = vunpack.c.l.b16 %v3737
        %v3777 = vunpack.c.l.b16 %v3738
        %v3778 = vunpack.c.l.b16 %v3739
        %v3779 = vunpack.c.l.b16 %v3740
        %v3780 = vpack.c.b16 %v3765, %v3764
        %v3781 = vpack.c.b16 %v3767, %v3766
        %v3782 = vpack.c.b16 %v3769, %v3768
        %v3783 = vpack.c.b16 %v3771, %v3770
        %v3784 = vpack.c.b16 %v3773, %v3772
        %v3785 = vpack.c.b16 %v3775, %v3774
        %v3786 = vpack.c.b16 %v3777, %v3776
        %v3787 = vpack.c.b16 %v3779, %v3778
        %3796 = vmatprep.subr.bf16.mxu0 0
        %3797 = vmatpush1.bf16.msra.mxu0 %v3780
        %3798 = vmatprep.subr.bf16.mxu0 0
        %3799 = vmatpush1.bf16.msra.mxu0 %v3781
        %3800 = vmatprep.subr.bf16.mxu0 0
        %3801 = vmatpush1.bf16.msra.mxu0 %v3782
        %3802 = vmatprep.subr.bf16.mxu0 0
        %3803 = vmatpush1.bf16.msra.mxu0 %v3783
        %3804 = vmatprep.subr.bf16.mxu0 0
        %3805 = vmatpush1.bf16.msra.mxu0 %v3784
        %3806 = vmatprep.subr.bf16.mxu0 0
        %3807 = vmatpush1.bf16.msra.mxu0 %v3785
        %3808 = vmatprep.subr.bf16.mxu0 0
        %3809 = vmatpush1.bf16.msra.mxu0 %v3786
        %3810 = vmatprep.subr.bf16.mxu0 0
        %3811 = vmatpush1.bf16.msra.mxu0 %v3787
        %3812 = vmatprep.subr.bf16.mxu0 0
        %3813 = vmatpush1.bf16.msra.mxu0 0
        %3814 = vmatprep.subr.bf16.mxu0 0
        %3815 = vmatpush1.bf16.msra.mxu0 0
        %3816 = vmatprep.subr.bf16.mxu0 0
        %3817 = vmatpush1.bf16.msra.mxu0 0
        %3818 = vmatprep.subr.bf16.mxu0 0
        %3819 = vmatpush1.bf16.msra.mxu0 0
        %3820 = vmatprep.subr.bf16.mxu0 0
        %3821 = vmatpush1.bf16.msra.mxu0 0
        %3822 = vmatprep.subr.bf16.mxu0 0
        %3823 = vmatpush1.bf16.msra.mxu0 0
        %3824 = vmatprep.subr.bf16.mxu0 0
        %3825 = vmatpush1.bf16.msra.mxu0 0
        %3826 = vmatprep.subr.bf16.mxu0 0
        %3827 = vmatpush1.bf16.msra.mxu0 0
        %3828 = vmatprep.mubr.bf16.mxu0 0
        %3829 = vmatmul.mubr.bf16.gmra.mrb[0].mxu0 %v3706
        %v3830 = vpop.f32.mrb[0].mxu0
        %v3831 = vadd.f32 %v3746, %v3830
        %v3832 = vpop.f32.mrb[0].mxu0
        %v3833 = vpop.f32.mrb[0].mxu0
        %v3834 = vadd.f32 %v3746, %v3833
        %v3835 = vpop.f32.mrb[0].mxu0
        %3836 = vmatprep.mubr.bf16.mxu0 0
        %3837 = vmatmul.mubr.bf16.gmra.mrb[0].mxu0 %v3707
        %v3838 = vpop.f32.mrb[0].mxu0
        %v3839 = vadd.f32 %v3746, %v3838
        %v3840 = vpop.f32.mrb[0].mxu0
        %v3841 = vpop.f32.mrb[0].mxu0
        %v3842 = vadd.f32 %v3746, %v3841
        %v3843 = vpop.f32.mrb[0].mxu0
        %3844 = vmatprep.mubr.bf16.mxu0 0
        %3845 = vmatmul.mubr.bf16.gmra.mrb[0].mxu0 %v3708
        %v3846 = vpop.f32.mrb[0].mxu0
        %v3847 = vadd.f32 %v3746, %v3846
        %v3848 = vpop.f32.mrb[0].mxu0
        %v3849 = vpop.f32.mrb[0].mxu0
        %v3850 = vadd.f32 %v3746, %v3849
        %v3851 = vpop.f32.mrb[0].mxu0
        %3852 = vmatprep.mubr.bf16.mxu0 0
        %3853 = vmatmul.mubr.bf16.gmra.mrb[0].mxu0 %v3709
        %v3854 = vpop.f32.mrb[0].mxu0
        %v3855 = vadd.f32 %v3746, %v3854
        %v3856 = vpop.f32.mrb[0].mxu0
        %v3857 = vpop.f32.mrb[0].mxu0
        %v3858 = vadd.f32 %v3746, %v3857
        %v3859 = vpop.f32.mrb[0].mxu0
        %3860 = vmatprep.mubr.bf16.mxu0 0
        %3861 = vmatmul.mubr.bf16.gmra.mrb[0].mxu0 %v3710
        %v3862 = vpop.f32.mrb[0].mxu0
        %v3863 = vadd.f32 %v3746, %v3862
        %v3864 = vpop.f32.mrb[0].mxu0
        %v3865 = vpop.f32.mrb[0].mxu0
        %v3866 = vadd.f32 %v3746, %v3865
        %v3867 = vpop.f32.mrb[0].mxu0
        %3868 = vmatprep.mubr.bf16.mxu0 0
        %3869 = vmatmul.mubr.bf16.gmra.mrb[0].mxu0 %v3711
        %v3870 = vpop.f32.mrb[0].mxu0
        %v3871 = vadd.f32 %v3746, %v3870
        %v3872 = vpop.f32.mrb[0].mxu0
        %v3873 = vpop.f32.mrb[0].mxu0
        %v3874 = vadd.f32 %v3746, %v3873
        %v3875 = vpop.f32.mrb[0].mxu0
        %3876 = vmatprep.mubr.bf16.mxu0 0
        %3877 = vmatmul.mubr.bf16.gmra.mrb[0].mxu0 %v3712
        %v3878 = vpop.f32.mrb[0].mxu0
        %v3879 = vadd.f32 %v3746, %v3878
        %v3880 = vpop.f32.mrb[0].mxu0
        %v3881 = vpop.f32.mrb[0].mxu0
        %v3882 = vadd.f32 %v3746, %v3881
        %v3883 = vpop.f32.mrb[0].mxu0
        %3884 = vmatprep.mubr.bf16.mxu0 0
        %3885 = vmatmul.mubr.bf16.gmra.mrb[0].mxu0 %v3713
        %v3886 = vpop.f32.mrb[0].mxu0
        %v3887 = vadd.f32 %v3746, %v3886
        %v3888 = vpop.f32.mrb[0].mxu0
        %v3889 = vpop.f32.mrb[0].mxu0
        %v3890 = vadd.f32 %v3746, %v3889
        %v3891 = vpop.f32.mrb[0].mxu0
        %3892 = vmatprep.mubr.bf16.mxu0 0
        %3893 = vmatmul.mubr.bf16.gmra.mrb[0].mxu0 %v3714
        %v3894 = vpop.f32.mrb[0].mxu0
        %v3895 = vadd.f32 %v3746, %v3894
        %v3896 = vpop.f32.mrb[0].mxu0
        %v3897 = vpop.f32.mrb[0].mxu0
        %v3898 = vadd.f32 %v3746, %v3897
        %v3899 = vpop.f32.mrb[0].mxu0
        %3900 = vmatprep.mubr.bf16.mxu0 0
        %3901 = vmatmul.mubr.bf16.gmra.mrb[0].mxu0 %v3715
        %v3902 = vpop.f32.mrb[0].mxu0
        %v3903 = vadd.f32 %v3746, %v3902
        %v3904 = vpop.f32.mrb[0].mxu0
        %v3905 = vpop.f32.mrb[0].mxu0
        %v3906 = vadd.f32 %v3746, %v3905
        %v3907 = vpop.f32.mrb[0].mxu0
        %3908 = vmatprep.mubr.bf16.mxu0 0
        %3909 = vmatmul.mubr.bf16.gmra.mrb[0].mxu0 %v3716
        %v3910 = vpop.f32.mrb[0].mxu0
        %v3911 = vadd.f32 %v3746, %v3910
        %v3912 = vpop.f32.mrb[0].mxu0
        %v3913 = vpop.f32.mrb[0].mxu0
        %v3914 = vadd.f32 %v3746, %v3913
        %v3915 = vpop.f32.mrb[0].mxu0
        %3916 = vmatprep.mubr.bf16.mxu0 0
        %3917 = vmatmul.mubr.bf16.gmra.mrb[0].mxu0 %v3717
        %v3918 = vpop.f32.mrb[0].mxu0
        %v3919 = vadd.f32 %v3746, %v3918
        %v3920 = vpop.f32.mrb[0].mxu0
        %v3921 = vpop.f32.mrb[0].mxu0
        %v3922 = vadd.f32 %v3746, %v3921
        %v3923 = vpop.f32.mrb[0].mxu0
        %3924 = vmatprep.mubr.bf16.mxu0 0
        %3925 = vmatmul.mubr.bf16.gmra.mrb[0].mxu0 %v3718
        %v3926 = vpop.f32.mrb[0].mxu0
        %v3927 = vadd.f32 %v3746, %v3926
        %v3928 = vpop.f32.mrb[0].mxu0
        %v3929 = vpop.f32.mrb[0].mxu0
        %v3930 = vadd.f32 %v3746, %v3929
        %v3931 = vpop.f32.mrb[0].mxu0
        %3932 = vmatprep.mubr.bf16.mxu0 0
        %3933 = vmatmul.mubr.bf16.gmra.mrb[0].mxu0 %v3719
        %v3934 = vpop.f32.mrb[0].mxu0
        %v3935 = vadd.f32 %v3746, %v3934
        %v3936 = vpop.f32.mrb[0].mxu0
        %v3937 = vpop.f32.mrb[0].mxu0
        %v3938 = vadd.f32 %v3746, %v3937
        %v3939 = vpop.f32.mrb[0].mxu0
        %3940 = vmatprep.mubr.bf16.mxu0 0
        %3941 = vmatmul.mubr.bf16.gmra.mrb[0].mxu0 %v3720
        %v3942 = vpop.f32.mrb[0].mxu0
        %v3943 = vadd.f32 %v3746, %v3942
        %v3944 = vpop.f32.mrb[0].mxu0
        %v3945 = vpop.f32.mrb[0].mxu0
        %v3946 = vadd.f32 %v3746, %v3945
        %v3947 = vpop.f32.mrb[0].mxu0
        %3948 = vmatprep.mubr.bf16.mxu0 0
        %3949 = vmatmul.mubr.bf16.gmra.mrb[0].mxu0 %v3721
        %v3950 = vpop.f32.mrb[0].mxu0
        %v3951 = vadd.f32 %v3746, %v3950
        %v3952 = vpop.f32.mrb[0].mxu0
        %v3953 = vpop.f32.mrb[0].mxu0
        %v3954 = vadd.f32 %v3746, %v3953
        %v3955 = vpop.f32.mrb[0].mxu0
        %3956 = vmatprep.mubr.bf16.mxu0 0
        %3957 = vmatmul.mubr.bf16.gmra.mrb[0].mxu0 %v3722
        %v3958 = vpop.f32.mrb[0].mxu0
        %v3959 = vadd.f32 %v3746, %v3958
        %v3960 = vpop.f32.mrb[0].mxu0
        %v3961 = vpop.f32.mrb[0].mxu0
        %v3962 = vadd.f32 %v3746, %v3961
        %v3963 = vpop.f32.mrb[0].mxu0
        %3964 = vmatprep.mubr.bf16.mxu0 0
        %3965 = vmatmul.mubr.bf16.gmra.mrb[0].mxu0 %v3723
        %v3966 = vpop.f32.mrb[0].mxu0
        %v3967 = vadd.f32 %v3746, %v3966
        %v3968 = vpop.f32.mrb[0].mxu0
        %v3969 = vpop.f32.mrb[0].mxu0
        %v3970 = vadd.f32 %v3746, %v3969
        %v3971 = vpop.f32.mrb[0].mxu0
        %3972 = vmatprep.mubr.bf16.mxu0 0
        %3973 = vmatmul.mubr.bf16.gmra.mrb[0].mxu0 %v3724
        %v3974 = vpop.f32.mrb[0].mxu0
        %v3975 = vadd.f32 %v3746, %v3974
        %v3976 = vpop.f32.mrb[0].mxu0
        %v3977 = vpop.f32.mrb[0].mxu0
        %v3978 = vpop.f32.mrb[0].mxu0
        %3979 = vdwg.mxu0
        %3980 = vst [vmem:[#allocation2] sm:$0xff] %v3831
        %3981 = vst [vmem:[#allocation2 + $0x8] sm:$0xff] %v3834
        %3982 = vst [vmem:[#allocation2 + $0x10] sm:$0xff] %v3839
        %3983 = vst [vmem:[#allocation2 + $0x18] sm:$0xff] %v3842
        %3984 = vst [vmem:[#allocation2 + $0x20] sm:$0xff] %v3847
        %3985 = vst [vmem:[#allocation2 + $0x28] sm:$0xff] %v3850
        %3986 = vst [vmem:[#allocation2 + $0x30] sm:$0xff] %v3855
        %3987 = vst [vmem:[#allocation2 + $0x38] sm:$0xff] %v3858
        %3988 = vst [vmem:[#allocation2 + $0x40] sm:$0xff] %v3863
        %3989 = vst [vmem:[#allocation2 + $0x48] sm:$0xff] %v3866
        %3990 = vst [vmem:[#allocation2 + $0x50] sm:$0xff] %v3871
        %3991 = vst [vmem:[#allocation2 + $0x58] sm:$0xff] %v3874
        %3992 = vst [vmem:[#allocation2 + $0x60] sm:$0xff] %v3879
        %3993 = vst [vmem:[#allocation2 + $0x68] sm:$0xff] %v3882
        %3994 = vst [vmem:[#allocation2 + $0x70] sm:$0xff] %v3887
        %3995 = vst [vmem:[#allocation2 + $0x78] sm:$0xff] %v3890
        %3996 = vst [vmem:[#allocation2 + $0x80] sm:$0xff] %v3895
        %3997 = vst [vmem:[#allocation2 + $0x88] sm:$0xff] %v3898
        %3998 = vst [vmem:[#allocation2 + $0x90] sm:$0xff] %v3903
        %3999 = vst [vmem:[#allocation2 + $0x98] sm:$0xff] %v3906
        %4000 = vst [vmem:[#allocation2 + $0xa0] sm:$0xff] %v3911
        %4001 = vst [vmem:[#allocation2 + $0xa8] sm:$0xff] %v3914
        %4002 = vst [vmem:[#allocation2 + $0xb0] sm:$0xff] %v3919
        %4003 = vst [vmem:[#allocation2 + $0xb8] sm:$0xff] %v3922
        %4004 = vst [vmem:[#allocation2 + $0xc0] sm:$0xff] %v3927
        %4005 = vst [vmem:[#allocation2 + $0xc8] sm:$0xff] %v3930
        %4006 = vst [vmem:[#allocation2 + $0xd0] sm:$0xff] %v3935
        %4007 = vst [vmem:[#allocation2 + $0xd8] sm:$0xff] %v3938
        %4008 = vst [vmem:[#allocation2 + $0xe0] sm:$0xff] %v3943
        %4009 = vst [vmem:[#allocation2 + $0xe8] sm:$0xff] %v3946
        %4010 = vst [vmem:[#allocation2 + $0xf0] sm:$0xff] %v3951
        %4011 = vst [vmem:[#allocation2 + $0xf8] sm:$0xff] %v3954
        %4012 = vst [vmem:[#allocation2 + $0x100] sm:$0xff] %v3959
        %4013 = vst [vmem:[#allocation2 + $0x108] sm:$0xff] %v3962
        %4014 = vst [vmem:[#allocation2 + $0x110] sm:$0xff] %v3967
        %4015 = vst [vmem:[#allocation2 + $0x118] sm:$0xff] %v3970
        %4016 = vst [vmem:[#allocation2 + $0x120] sm:$0x1] %v3975
        %4017 = vst [vmem:[#allocation3] sm:$0xff] 0.0
        %4018 = vst [vmem:[#allocation3 + $0x8] sm:$0xff] 0.0
        %4019 = vst [vmem:[#allocation3 + $0x10] sm:$0xff] 0.0
        %4020 = vst [vmem:[#allocation3 + $0x18] sm:$0xff] 0.0
        %4021 = vst [vmem:[#allocation3 + $0x20] sm:$0xff] 0.0
        %4022 = vst [vmem:[#allocation3 + $0x28] sm:$0xff] 0.0
        %4023 = vst [vmem:[#allocation3 + $0x30] sm:$0xff] 0.0
        %4024 = vst [vmem:[#allocation3 + $0x38] sm:$0xff] 0.0
        %4025 = vst [vmem:[#allocation3 + $0x40] sm:$0xff] 0.0
        %4026 = vst [vmem:[#allocation3 + $0x48] sm:$0xff] 0.0
        %4027 = vst [vmem:[#allocation3 + $0x50] sm:$0xff] 0.0
        %4028 = vst [vmem:[#allocation3 + $0x58] sm:$0xff] 0.0
        %v4029 = vld [vmem:[#allocation2] ss:$2 sm:$0xff]
        %s4030 = scalar_lea.vmem [#allocation2], 1
        %v4031 = vld [vmem:[%s4030] ss:$2 sm:$0xff]
        %v4032 = vmax.f32 %v4029, %v4031
        %s4033 = scalar_lea.vmem [#allocation2], 17
        %v4034 = vld [vmem:[%s4033] ss:$2 sm:$0xff]
        %s4035 = scalar_lea.vmem [#allocation2], 18
        %v4036 = vld [vmem:[%s4035] ss:$2 sm:$0xff]
        %v4037 = vmax.f32 %v4034, %v4036
        %v4038 = vmax.f32 %v4032, %v4037
        %4039 = vst [vmem:[#allocation3] sm:$0xff] %v4038
        %s4040 = scalar_lea.vmem [#allocation2], 34
        %v4041 = vld [vmem:[%s4040] ss:$2 sm:$0xff]
        %s4042 = scalar_lea.vmem [#allocation2], 35
        %v4043 = vld [vmem:[%s4042] ss:$2 sm:$0xff]
        %v4044 = vmax.f32 %v4041, %v4043
        %s4045 = scalar_lea.vmem [#allocation2], 51
        %v4046 = vld [vmem:[%s4045] ss:$2 sm:$0xff]
        %s4047 = scalar_lea.vmem [#allocation2], 52
        %v4048 = vld [vmem:[%s4047] ss:$2 sm:$0xff]
        %v4049 = vmax.f32 %v4046, %v4048
        %v4050 = vmax.f32 %v4044, %v4049
        %4051 = vst [vmem:[#allocation3 + $0x9] sm:$0xff] %v4050
        %s4052 = scalar_lea.vmem [#allocation2], 68
        %v4053 = vld [vmem:[%s4052] ss:$2 sm:$0xff]
        %s4054 = scalar_lea.vmem [#allocation2], 69
        %v4055 = vld [vmem:[%s4054] ss:$2 sm:$0xff]
        %v4056 = vmax.f32 %v4053, %v4055
        %s4057 = scalar_lea.vmem [#allocation2], 85
        %v4058 = vld [vmem:[%s4057] ss:$2 sm:$0xff]
        %s4059 = scalar_lea.vmem [#allocation2], 86
        %v4060 = vld [vmem:[%s4059] ss:$2 sm:$0xff]
        %v4061 = vmax.f32 %v4058, %v4060
        %v4062 = vmax.f32 %v4056, %v4061
        %4063 = vst [vmem:[#allocation3 + $0x12] sm:$0xff] %v4062
        %s4064 = scalar_lea.vmem [#allocation2], 102
        %v4065 = vld [vmem:[%s4064] ss:$2 sm:$0xff]
        %s4066 = scalar_lea.vmem [#allocation2], 103
        %v4067 = vld [vmem:[%s4066] ss:$2 sm:$0xff]
        %v4068 = vmax.f32 %v4065, %v4067
        %s4069 = scalar_lea.vmem [#allocation2], 119
        %v4070 = vld [vmem:[%s4069] ss:$2 sm:$0xff]
        %s4071 = scalar_lea.vmem [#allocation2], 120
        %v4072 = vld [vmem:[%s4071] ss:$2 sm:$0xff]
        %v4073 = vmax.f32 %v4070, %v4072
        %v4074 = vmax.f32 %v4068, %v4073
        %4075 = vst [vmem:[#allocation3 + $0x1b] sm:$0xff] %v4074
        %s4076 = scalar_lea.vmem [#allocation2], 136
        %v4077 = vld [vmem:[%s4076] ss:$2 sm:$0xff]
        %s4078 = scalar_lea.vmem [#allocation2], 137
        %v4079 = vld [vmem:[%s4078] ss:$2 sm:$0xff]
        %v4080 = vmax.f32 %v4077, %v4079
        %s4081 = scalar_lea.vmem [#allocation2], 153
        %v4082 = vld [vmem:[%s4081] ss:$2 sm:$0xff]
        %s4083 = scalar_lea.vmem [#allocation2], 154
        %v4084 = vld [vmem:[%s4083] ss:$2 sm:$0xff]
        %v4085 = vmax.f32 %v4082, %v4084
        %v4086 = vmax.f32 %v4080, %v4085
        %4087 = vst [vmem:[#allocation3 + $0x24] sm:$0xff] %v4086
        %s4088 = scalar_lea.vmem [#allocation2], 170
        %v4089 = vld [vmem:[%s4088] ss:$2 sm:$0xff]
        %s4090 = scalar_lea.vmem [#allocation2], 171
        %v4091 = vld [vmem:[%s4090] ss:$2 sm:$0xff]
        %v4092 = vmax.f32 %v4089, %v4091
        %s4093 = scalar_lea.vmem [#allocation2], 187
        %v4094 = vld [vmem:[%s4093] ss:$2 sm:$0xff]
        %s4095 = scalar_lea.vmem [#allocation2], 188
        %v4096 = vld [vmem:[%s4095] ss:$2 sm:$0xff]
        %v4097 = vmax.f32 %v4094, %v4096
        %v4098 = vmax.f32 %v4092, %v4097
        %4099 = vst [vmem:[#allocation3 + $0x2d] sm:$0xff] %v4098
        %s4100 = scalar_lea.vmem [#allocation2], 204
        %v4101 = vld [vmem:[%s4100] ss:$2 sm:$0xff]
        %s4102 = scalar_lea.vmem [#allocation2], 205
        %v4103 = vld [vmem:[%s4102] ss:$2 sm:$0xff]
        %v4104 = vmax.f32 %v4101, %v4103
        %s4105 = scalar_lea.vmem [#allocation2], 221
        %v4106 = vld [vmem:[%s4105] ss:$2 sm:$0xff]
        %s4107 = scalar_lea.vmem [#allocation2], 222
        %v4108 = vld [vmem:[%s4107] ss:$2 sm:$0xff]
        %v4109 = vmax.f32 %v4106, %v4108
        %v4110 = vmax.f32 %v4104, %v4109
        %4111 = vst [vmem:[#allocation3 + $0x36] sm:$0xff] %v4110
        %s4112 = scalar_lea.vmem [#allocation2], 238
        %v4113 = vld [vmem:[%s4112] ss:$2 sm:$0xff]
        %s4114 = scalar_lea.vmem [#allocation2], 239
        %v4115 = vld [vmem:[%s4114] ss:$2 sm:$0xff]
        %v4116 = vmax.f32 %v4113, %v4115
        %s4117 = scalar_lea.vmem [#allocation2], 255
        %v4118 = vld [vmem:[%s4117] ss:$2 sm:$0xff]
        %s4119 = scalar_lea.vmem [#allocation2], 256
        %v4120 = vld [vmem:[%s4119] ss:$2 sm:$0xff]
        %v4121 = vmax.f32 %v4118, %v4120
        %v4122 = vmax.f32 %v4116, %v4121
        %4123 = vst [vmem:[#allocation3 + $0x3f] sm:$0xff] %v4122
        %v4124 = vmul.f32 %v476, 0.11111111
        %v4125 = vmul.f32 %v477, 0.11111111
        %v4126 = vmul.f32 %v478, 0.11111111
        %v4127 = vmul.f32 %v479, 0.11111111
        %v4128 = vmul.f32 %v480, 0.11111111
        %v4129 = vmul.f32 %v481, 0.11111111
        %v4130 = vmul.f32 %v482, 0.11111111
        %v4131 = vmul.f32 %v483, 0.11111111
        %v4132 = vmul.f32 %v484, 0.11111111
        %v4133 = vmul.f32 %v485, 0.11111111
        %v4134 = vmul.f32 %v486, 0.11111111
        %v4135 = vfloor.f32 %v4124
        %v4136 = vfloor.f32 %v4125
        %v4137 = vfloor.f32 %v4126
        %v4138 = vfloor.f32 %v4127
        %v4139 = vfloor.f32 %v4128
        %v4140 = vfloor.f32 %v4129
        %v4141 = vfloor.f32 %v4130
        %v4142 = vfloor.f32 %v4131
        %v4143 = vfloor.f32 %v4132
        %v4144 = vfloor.f32 %v4133
        %v4145 = vfloor.f32 %v4134
        %v4146 = vmul.f32 %v4135, 9.0
        %v4147 = vmul.f32 %v4136, 9.0
        %v4148 = vmul.f32 %v4137, 9.0
        %v4149 = vmul.f32 %v4138, 9.0
        %v4150 = vmul.f32 %v4139, 9.0
        %v4151 = vmul.f32 %v4140, 9.0
        %v4152 = vmul.f32 %v4141, 9.0
        %v4153 = vmul.f32 %v4142, 9.0
        %v4154 = vmul.f32 %v4143, 9.0
        %v4155 = vmul.f32 %v4144, 9.0
        %v4156 = vmul.f32 %v4145, 9.0
        %v4157 = vsub.f32 %v439, %v4146
        %v4158 = vsub.f32 %v440, %v4147
        %v4159 = vsub.f32 %v441, %v4148
        %v4160 = vsub.f32 %v442, %v4149
        %v4161 = vsub.f32 %v443, %v4150
        %v4162 = vsub.f32 %v444, %v4151
        %v4163 = vsub.f32 %v445, %v4152
        %v4164 = vsub.f32 %v446, %v4153
        %v4165 = vsub.f32 %v447, %v4154
        %v4166 = vsub.f32 %v448, %v4155
        %v4167 = vsub.f32 %v449, %v4156
        %vm4168 = vcmp.lt.f32.partialorder %v4135, 7.5
        %vm4169 = vcmp.lt.f32.partialorder %v4136, 7.5
        %vm4170 = vcmp.lt.f32.partialorder %v4137, 7.5
        %vm4171 = vcmp.lt.f32.partialorder %v4138, 7.5
        %vm4172 = vcmp.lt.f32.partialorder %v4139, 7.5
        %vm4173 = vcmp.lt.f32.partialorder %v4140, 7.5
        %vm4174 = vcmp.lt.f32.partialorder %v4141, 7.5
        %vm4175 = vcmp.lt.f32.partialorder %v4142, 7.5
        %vm4176 = vcmp.lt.f32.partialorder %v4143, 7.5
        %vm4177 = vcmp.lt.f32.partialorder %v4144, 7.5
        %vm4178 = vcmp.lt.f32.partialorder %v4145, 7.5
        %vm4179 = vcmp.lt.f32.partialorder %v4157, 7.5
        %vm4180 = vcmp.lt.f32.partialorder %v4158, 7.5
        %vm4181 = vcmp.lt.f32.partialorder %v4159, 7.5
        %vm4182 = vcmp.lt.f32.partialorder %v4160, 7.5
        %vm4183 = vcmp.lt.f32.partialorder %v4161, 7.5
        %vm4184 = vcmp.lt.f32.partialorder %v4162, 7.5
        %vm4185 = vcmp.lt.f32.partialorder %v4163, 7.5
        %vm4186 = vcmp.lt.f32.partialorder %v4164, 7.5
        %vm4187 = vcmp.lt.f32.partialorder %v4165, 7.5
        %vm4188 = vcmp.lt.f32.partialorder %v4166, 7.5
        %vm4189 = vcmp.lt.f32.partialorder %v4167, 7.5
        %vm4190 = vmand %vm4168, %vm4179
        %vm4191 = vmand %vm4169, %vm4180
        %vm4192 = vmand %vm4170, %vm4181
        %vm4193 = vmand %vm4171, %vm4182
        %vm4194 = vmand %vm4172, %vm4183
        %vm4195 = vmand %vm4173, %vm4184
        %vm4196 = vmand %vm4174, %vm4185
        %vm4197 = vmand %vm4175, %vm4186
        %vm4198 = vmand %vm4176, %vm4187
        %vm4199 = vmand %vm4177, %vm4188
        %vm4200 = vmand %vm4178, %vm4189
        %v4201 = vsel %vm4190, 1.0, 0.0
        %v4202 = vsel %vm4191, 1.0, 0.0
        %v4203 = vsel %vm4192, 1.0, 0.0
        %v4204 = vsel %vm4193, 1.0, 0.0
        %v4205 = vsel %vm4194, 1.0, 0.0
        %v4206 = vsel %vm4195, 1.0, 0.0
        %v4207 = vsel %vm4196, 1.0, 0.0
        %v4208 = vsel %vm4197, 1.0, 0.0
        %v4209 = vsel %vm4198, 1.0, 0.0
        %v4210 = vsel %vm4199, 1.0, 0.0
        %v4211 = vsel %vm4200, 1.0, 0.0
        %v4212 = vld [vmem:[#allocation3] sm:$0xff]
        %v4213 = vld [vmem:[#allocation3 + $0x8] sm:$0xff]
        %v4214 = vld [vmem:[#allocation3 + $0x10] sm:$0xff]
        %v4215 = vld [vmem:[#allocation3 + $0x18] sm:$0xff]
        %v4216 = vld [vmem:[#allocation3 + $0x20] sm:$0xff]
        %v4217 = vld [vmem:[#allocation3 + $0x28] sm:$0xff]
        %v4218 = vld [vmem:[#allocation3 + $0x30] sm:$0xff]
        %v4219 = vld [vmem:[#allocation3 + $0x38] sm:$0xff]
        %v4220 = vld [vmem:[#allocation3 + $0x40] sm:$0xff]
        %v4221 = vld [vmem:[#allocation3 + $0x48] sm:$0xff]
        %v4222 = vld [vmem:[#allocation3 + $0x50] sm:$0x1]
        %v4223 = vpack.c.bf16 %v4213, %v4212
        %v4224 = vpack.c.bf16 %v4215, %v4214
        %v4225 = vpack.c.bf16 %v4217, %v4216
        %v4226 = vpack.c.bf16 %v4219, %v4218
        %v4227 = vpack.c.bf16 %v4221, %v4220
        %v4228 = vpack.c.bf16 %v4222, %v4222
        %v4229 = vld [vmem:[#allocation3 + $0x1] sm:$0xff]
        %v4230 = vld [vmem:[#allocation3 + $0x9] sm:$0xff]
        %v4231 = vld [vmem:[#allocation3 + $0x11] sm:$0xff]
        %v4232 = vld [vmem:[#allocation3 + $0x19] sm:$0xff]
        %v4233 = vld [vmem:[#allocation3 + $0x21] sm:$0xff]
        %v4234 = vld [vmem:[#allocation3 + $0x29] sm:$0xff]
        %v4235 = vld [vmem:[#allocation3 + $0x31] sm:$0xff]
        %v4236 = vld [vmem:[#allocation3 + $0x39] sm:$0xff]
        %v4237 = vld [vmem:[#allocation3 + $0x41] sm:$0xff]
        %v4238 = vld [vmem:[#allocation3 + $0x49] sm:$0xff]
        %v4239 = vld [vmem:[#allocation3 + $0x51] sm:$0x1]
        %v4240 = vpack.c.bf16 %v4230, %v4229
        %v4241 = vpack.c.bf16 %v4232, %v4231
        %v4242 = vpack.c.bf16 %v4234, %v4233
        %v4243 = vpack.c.bf16 %v4236, %v4235
        %v4244 = vpack.c.bf16 %v4238, %v4237
        %v4245 = vpack.c.bf16 %v4239, %v4239
        %v4246 = vld [vmem:[#allocation3 + $0x51] sm:$0xff]
        %v4247 = vld [vmem:[#allocation3 + $0x59] sm:$0x1]
        %v4248 = vpack.c.bf16 %v4231, %v4230
        %v4249 = vpack.c.bf16 %v4233, %v4232
        %v4250 = vpack.c.bf16 %v4235, %v4234
        %v4251 = vpack.c.bf16 %v4237, %v4236
        %v4252 = vpack.c.bf16 %v4246, %v4238
        %v4253 = vpack.c.bf16 %v4247, %v4247
        %v4254 = vld [vmem:[#allocation3 + $0xa] sm:$0xff]
        %v4255 = vld [vmem:[#allocation3 + $0x12] sm:$0xff]
        %v4256 = vld [vmem:[#allocation3 + $0x1a] sm:$0xff]
        %v4257 = vld [vmem:[#allocation3 + $0x22] sm:$0xff]
        %v4258 = vld [vmem:[#allocation3 + $0x2a] sm:$0xff]
        %v4259 = vld [vmem:[#allocation3 + $0x32] sm:$0xff]
        %v4260 = vld [vmem:[#allocation3 + $0x3a] sm:$0xff]
        %v4261 = vld [vmem:[#allocation3 + $0x42] sm:$0xff]
        %v4262 = vld [vmem:[#allocation3 + $0x4a] sm:$0xff]
        %v4263 = vld [vmem:[#allocation3 + $0x52] sm:$0xff]
        %v4264 = vld [vmem:[#allocation3 + $0x5a] sm:$0x1]
        %v4265 = vpack.c.bf16 %v4255, %v4254
        %v4266 = vpack.c.bf16 %v4257, %v4256
        %v4267 = vpack.c.bf16 %v4259, %v4258
        %v4268 = vpack.c.bf16 %v4261, %v4260
        %v4269 = vpack.c.bf16 %v4263, %v4262
        %v4270 = vpack.c.bf16 %v4264, %v4264
        %s4271 = scalar_lea.vmem [#allocation4], 768
        %v4272 = vld [vmem:[%s4271] sm:$0xf]
        %v4273 = vld [vmem:[%s4271 + $0x4] sm:$0xf]
        %v4274 = vld [vmem:[%s4271 + $0x8] sm:$0xf]
        %v4275 = vld [vmem:[%s4271 + $0xc] sm:$0xf]
        %v4276 = vld [vmem:[%s4271 + $0x10] sm:$0xf]
        %v4277 = vld [vmem:[%s4271 + $0x14] sm:$0xf]
        %v4278 = vld [vmem:[%s4271 + $0x18] sm:$0xf]
        %v4279 = vld [vmem:[%s4271 + $0x1c] sm:$0xf]
        %v4280 = vld [vmem:[%s4271 + $0x20] sm:$0xf]
        %v4281 = vld [vmem:[%s4271 + $0x24] sm:$0xf]
        %v4282 = vld [vmem:[%s4271 + $0x28] sm:$0xf]
        %v4283 = vld [vmem:[%s4271 + $0x2c] sm:$0xf]
        %v4284 = vld [vmem:[%s4271 + $0x30] sm:$0xf]
        %v4285 = vld [vmem:[%s4271 + $0x34] sm:$0xf]
        %v4286 = vld [vmem:[%s4271 + $0x38] sm:$0xf]
        %v4287 = vld [vmem:[%s4271 + $0x3c] sm:$0xf]
        %v4288 = vld [vmem:[%s4271 + $0x40] sm:$0xf]
        %v4289 = vld [vmem:[%s4271 + $0x44] sm:$0xf]
        %v4290 = vld [vmem:[%s4271 + $0x48] sm:$0xf]
        %v4291 = vld [vmem:[%s4271 + $0x4c] sm:$0xf]
        %v4292 = vld [vmem:[%s4271 + $0x50] sm:$0xf]
        %v4293 = vld [vmem:[%s4271 + $0x54] sm:$0xf]
        %v4294 = vld [vmem:[%s4271 + $0x58] sm:$0xf]
        %v4295 = vld [vmem:[%s4271 + $0x5c] sm:$0xf]
        %v4296 = vld [vmem:[%s4271 + $0x60] sm:$0xf]
        %v4297 = vld [vmem:[%s4271 + $0x64] sm:$0xf]
        %v4298 = vld [vmem:[%s4271 + $0x68] sm:$0xf]
        %v4299 = vld [vmem:[%s4271 + $0x6c] sm:$0xf]
        %v4300 = vld [vmem:[%s4271 + $0x70] sm:$0xf]
        %v4301 = vld [vmem:[%s4271 + $0x74] sm:$0xf]
        %v4302 = vld [vmem:[%s4271 + $0x78] sm:$0xf]
        %v4303 = vld [vmem:[%s4271 + $0x7c] sm:$0xf]
        %v4304 = vld [vmem:[%s4271 + $0x80] sm:$0xf]
        %v4305 = vld [vmem:[%s4271 + $0x84] sm:$0xf]
        %v4306 = vld [vmem:[%s4271 + $0x88] sm:$0xf]
        %v4307 = vld [vmem:[%s4271 + $0x8c] sm:$0xf]
        %v4308 = vld [vmem:[%s4271 + $0x90] sm:$0xf]
        %v4309 = vld [vmem:[%s4271 + $0x94] sm:$0xf]
        %v4310 = vld [vmem:[%s4271 + $0x98] sm:$0xf]
        %v4311 = vld [vmem:[%s4271 + $0x9c] sm:$0xf]
        %v4312 = vld [vmem:[%s4271 + $0xa0] sm:$0xf]
        %v4313 = vld [vmem:[%s4271 + $0xa4] sm:$0xf]
        %v4314 = vld [vmem:[%s4271 + $0xa8] sm:$0xf]
        %v4315 = vld [vmem:[%s4271 + $0xac] sm:$0xf]
        %v4316 = vld [vmem:[%s4271 + $0xb0] sm:$0xf]
        %v4317 = vld [vmem:[%s4271 + $0xb4] sm:$0xf]
        %v4318 = vld [vmem:[%s4271 + $0xb8] sm:$0xf]
        %v4319 = vld [vmem:[%s4271 + $0xbc] sm:$0xf]
        %v4320 = vld [vmem:[%s4271 + $0xc0] sm:$0xf]
        %v4321 = vld [vmem:[%s4271 + $0xc4] sm:$0xf]
        %v4322 = vld [vmem:[%s4271 + $0xc8] sm:$0xf]
        %v4323 = vld [vmem:[%s4271 + $0xcc] sm:$0xf]
        %v4324 = vld [vmem:[%s4271 + $0xd0] sm:$0xf]
        %v4325 = vld [vmem:[%s4271 + $0xd4] sm:$0xf]
        %v4326 = vld [vmem:[%s4271 + $0xd8] sm:$0xf]
        %v4327 = vld [vmem:[%s4271 + $0xdc] sm:$0xf]
        %v4328 = vld [vmem:[%s4271 + $0xe0] sm:$0xf]
        %v4329 = vld [vmem:[%s4271 + $0xe4] sm:$0xf]
        %v4330 = vld [vmem:[%s4271 + $0xe8] sm:$0xf]
        %v4331 = vld [vmem:[%s4271 + $0xec] sm:$0xf]
        %v4332 = vld [vmem:[%s4271 + $0xf0] sm:$0xf]
        %v4333 = vld [vmem:[%s4271 + $0xf4] sm:$0xf]
        %v4334 = vld [vmem:[%s4271 + $0xf8] sm:$0xf]
        %v4335 = vld [vmem:[%s4271 + $0xfc] sm:$0xf]
        %s4336 = scalar_lea.vmem [#allocation6], 3
        %v4337 = vld [vmem:[%s4336] sm:$0x1]
        %v4339 = vlaneseq
        %v4340 = vshrl.u32 %v4339, 7
        %v4341 = vsub.s32 0, %v4340
        %v4342 = vrot.slane %v4337, %v4341
        %v4408 = vunpack.c.l.b16 %v4272
        %v4409 = vunpack.c.l.b16 %v4273
        %v4410 = vunpack.c.l.b16 %v4274
        %v4411 = vunpack.c.l.b16 %v4275
        %v4412 = vunpack.c.l.b16 %v4276
        %v4413 = vunpack.c.l.b16 %v4277
        %v4414 = vunpack.c.l.b16 %v4278
        %v4415 = vunpack.c.l.b16 %v4279
        %v4416 = vunpack.c.l.b16 %v4280
        %v4417 = vunpack.c.l.b16 %v4281
        %v4418 = vunpack.c.l.b16 %v4282
        %v4419 = vunpack.c.l.b16 %v4283
        %v4420 = vunpack.c.l.b16 %v4284
        %v4421 = vunpack.c.l.b16 %v4285
        %v4422 = vunpack.c.l.b16 %v4286
        %v4423 = vunpack.c.l.b16 %v4287
        %v4424 = vunpack.c.l.b16 %v4288
        %v4425 = vunpack.c.l.b16 %v4289
        %v4426 = vunpack.c.l.b16 %v4290
        %v4427 = vunpack.c.l.b16 %v4291
        %v4428 = vunpack.c.l.b16 %v4292
        %v4429 = vunpack.c.l.b16 %v4293
        %v4430 = vunpack.c.l.b16 %v4294
        %v4431 = vunpack.c.l.b16 %v4295
        %v4432 = vunpack.c.l.b16 %v4296
        %v4433 = vunpack.c.l.b16 %v4297
        %v4434 = vunpack.c.l.b16 %v4298
        %v4435 = vunpack.c.l.b16 %v4299
        %v4436 = vunpack.c.l.b16 %v4300
        %v4437 = vunpack.c.l.b16 %v4301
        %v4438 = vunpack.c.l.b16 %v4302
        %v4439 = vunpack.c.l.b16 %v4303
        %v4440 = vunpack.c.l.b16 %v4304
        %v4441 = vunpack.c.l.b16 %v4305
        %v4442 = vunpack.c.l.b16 %v4306
        %v4443 = vunpack.c.l.b16 %v4307
        %v4444 = vunpack.c.l.b16 %v4308
        %v4445 = vunpack.c.l.b16 %v4309
        %v4446 = vunpack.c.l.b16 %v4310
        %v4447 = vunpack.c.l.b16 %v4311
        %v4448 = vunpack.c.l.b16 %v4312
        %v4449 = vunpack.c.l.b16 %v4313
        %v4450 = vunpack.c.l.b16 %v4314
        %v4451 = vunpack.c.l.b16 %v4315
        %v4452 = vunpack.c.l.b16 %v4316
        %v4453 = vunpack.c.l.b16 %v4317
        %v4454 = vunpack.c.l.b16 %v4318
        %v4455 = vunpack.c.l.b16 %v4319
        %v4456 = vunpack.c.l.b16 %v4320
        %v4457 = vunpack.c.l.b16 %v4321
        %v4458 = vunpack.c.l.b16 %v4322
        %v4459 = vunpack.c.l.b16 %v4323
        %v4460 = vunpack.c.l.b16 %v4324
        %v4461 = vunpack.c.l.b16 %v4325
        %v4462 = vunpack.c.l.b16 %v4326
        %v4463 = vunpack.c.l.b16 %v4327
        %v4464 = vunpack.c.l.b16 %v4328
        %v4465 = vunpack.c.l.b16 %v4329
        %v4466 = vunpack.c.l.b16 %v4330
        %v4467 = vunpack.c.l.b16 %v4331
        %v4468 = vunpack.c.l.b16 %v4332
        %v4469 = vunpack.c.l.b16 %v4333
        %v4470 = vunpack.c.l.b16 %v4334
        %v4471 = vunpack.c.l.b16 %v4335
        %v4472 = vpack.c.b16 %v4409, %v4408
        %v4473 = vpack.c.b16 %v4411, %v4410
        %v4474 = vpack.c.b16 %v4413, %v4412
        %v4475 = vpack.c.b16 %v4415, %v4414
        %v4476 = vpack.c.b16 %v4417, %v4416
        %v4477 = vpack.c.b16 %v4419, %v4418
        %v4478 = vpack.c.b16 %v4421, %v4420
        %v4479 = vpack.c.b16 %v4423, %v4422
        %v4480 = vpack.c.b16 %v4425, %v4424
        %v4481 = vpack.c.b16 %v4427, %v4426
        %v4482 = vpack.c.b16 %v4429, %v4428
        %v4483 = vpack.c.b16 %v4431, %v4430
        %v4484 = vpack.c.b16 %v4433, %v4432
        %v4485 = vpack.c.b16 %v4435, %v4434
        %v4486 = vpack.c.b16 %v4437, %v4436
        %v4487 = vpack.c.b16 %v4439, %v4438
        %v4488 = vpack.c.b16 %v4441, %v4440
        %v4489 = vpack.c.b16 %v4443, %v4442
        %v4490 = vpack.c.b16 %v4445, %v4444
        %v4491 = vpack.c.b16 %v4447, %v4446
        %v4492 = vpack.c.b16 %v4449, %v4448
        %v4493 = vpack.c.b16 %v4451, %v4450
        %v4494 = vpack.c.b16 %v4453, %v4452
        %v4495 = vpack.c.b16 %v4455, %v4454
        %v4496 = vpack.c.b16 %v4457, %v4456
        %v4497 = vpack.c.b16 %v4459, %v4458
        %v4498 = vpack.c.b16 %v4461, %v4460
        %v4499 = vpack.c.b16 %v4463, %v4462
        %v4500 = vpack.c.b16 %v4465, %v4464
        %v4501 = vpack.c.b16 %v4467, %v4466
        %v4502 = vpack.c.b16 %v4469, %v4468
        %v4503 = vpack.c.b16 %v4471, %v4470
        %4536 = vmatprep.subr.bf16.mxu0 0
        %4537 = vmatpush1.bf16.msra.mxu0 %v4472
        %4538 = vmatprep.subr.bf16.mxu0 0
        %4539 = vmatpush1.bf16.msra.mxu0 %v4473
        %4540 = vmatprep.subr.bf16.mxu0 0
        %4541 = vmatpush1.bf16.msra.mxu0 %v4474
        %4542 = vmatprep.subr.bf16.mxu0 0
        %4543 = vmatpush1.bf16.msra.mxu0 %v4475
        %4544 = vmatprep.subr.bf16.mxu0 0
        %4545 = vmatpush1.bf16.msra.mxu0 %v4476
        %4546 = vmatprep.subr.bf16.mxu0 0
        %4547 = vmatpush1.bf16.msra.mxu0 %v4477
        %4548 = vmatprep.subr.bf16.mxu0 0
        %4549 = vmatpush1.bf16.msra.mxu0 %v4478
        %4550 = vmatprep.subr.bf16.mxu0 0
        %4551 = vmatpush1.bf16.msra.mxu0 %v4479
        %4552 = vmatprep.subr.bf16.mxu0 0
        %4553 = vmatpush1.bf16.msra.mxu0 %v4480
        %4554 = vmatprep.subr.bf16.mxu0 0
        %4555 = vmatpush1.bf16.msra.mxu0 %v4481
        %4556 = vmatprep.subr.bf16.mxu0 0
        %4557 = vmatpush1.bf16.msra.mxu0 %v4482
        %4558 = vmatprep.subr.bf16.mxu0 0
        %4559 = vmatpush1.bf16.msra.mxu0 %v4483
        %4560 = vmatprep.subr.bf16.mxu0 0
        %4561 = vmatpush1.bf16.msra.mxu0 %v4484
        %4562 = vmatprep.subr.bf16.mxu0 0
        %4563 = vmatpush1.bf16.msra.mxu0 %v4485
        %4564 = vmatprep.subr.bf16.mxu0 0
        %4565 = vmatpush1.bf16.msra.mxu0 %v4486
        %4566 = vmatprep.subr.bf16.mxu0 0
        %4567 = vmatpush1.bf16.msra.mxu0 %v4487
        %4568 = vmatprep.mubr.bf16.mxu0 %v4240
        %4569 = vmatmul.mubr.bf16.gmra.mrb[0].mxu0 %v4223
        %v4570 = vpop.f32.mrb[0].mxu0
        %v4571 = vadd.f32 %v4342, %v4570
        %v4572 = vpop.f32.mrb[0].mxu0
        %v4573 = vpop.f32.mrb[0].mxu0
        %v4574 = vadd.f32 %v4342, %v4573
        %v4575 = vpop.f32.mrb[0].mxu0
        %4576 = vmatprep.mubr.bf16.mxu0 %v4241
        %4577 = vmatmul.mubr.bf16.gmra.mrb[0].mxu0 %v4224
        %v4578 = vpop.f32.mrb[0].mxu0
        %v4579 = vadd.f32 %v4342, %v4578
        %v4580 = vpop.f32.mrb[0].mxu0
        %v4581 = vpop.f32.mrb[0].mxu0
        %v4582 = vadd.f32 %v4342, %v4581
        %v4583 = vpop.f32.mrb[0].mxu0
        %4584 = vmatprep.mubr.bf16.mxu0 %v4242
        %4585 = vmatmul.mubr.bf16.gmra.mrb[0].mxu0 %v4225
        %v4586 = vpop.f32.mrb[0].mxu0
        %v4587 = vadd.f32 %v4342, %v4586
        %v4588 = vpop.f32.mrb[0].mxu0
        %v4589 = vpop.f32.mrb[0].mxu0
        %v4590 = vadd.f32 %v4342, %v4589
        %v4591 = vpop.f32.mrb[0].mxu0
        %4592 = vmatprep.mubr.bf16.mxu0 %v4243
        %4593 = vmatmul.mubr.bf16.gmra.mrb[0].mxu0 %v4226
        %v4594 = vpop.f32.mrb[0].mxu0
        %v4595 = vadd.f32 %v4342, %v4594
        %v4596 = vpop.f32.mrb[0].mxu0
        %v4597 = vpop.f32.mrb[0].mxu0
        %v4598 = vadd.f32 %v4342, %v4597
        %v4599 = vpop.f32.mrb[0].mxu0
        %4600 = vmatprep.mubr.bf16.mxu0 %v4244
        %4601 = vmatmul.mubr.bf16.gmra.mrb[0].mxu0 %v4227
        %v4602 = vpop.f32.mrb[0].mxu0
        %v4603 = vadd.f32 %v4342, %v4602
        %v4604 = vpop.f32.mrb[0].mxu0
        %v4605 = vpop.f32.mrb[0].mxu0
        %v4606 = vadd.f32 %v4342, %v4605
        %v4607 = vpop.f32.mrb[0].mxu0
        %4608 = vmatprep.mubr.bf16.mxu0 %v4245
        %4609 = vmatmul.mubr.bf16.gmra.mrb[0].mxu0 %v4228
        %v4610 = vpop.f32.mrb[0].mxu0
        %v4611 = vadd.f32 %v4342, %v4610
        %v4612 = vpop.f32.mrb[0].mxu0
        %v4613 = vpop.f32.mrb[0].mxu0
        %v4614 = vpop.f32.mrb[0].mxu0
        %4615 = vdwg.mxu0
        %4616 = vmatprep.subr.bf16.mxu0 0
        %4617 = vmatpush1.bf16.msra.mxu0 %v4488
        %4618 = vmatprep.subr.bf16.mxu0 0
        %4619 = vmatpush1.bf16.msra.mxu0 %v4489
        %4620 = vmatprep.subr.bf16.mxu0 0
        %4621 = vmatpush1.bf16.msra.mxu0 %v4490
        %4622 = vmatprep.subr.bf16.mxu0 0
        %4623 = vmatpush1.bf16.msra.mxu0 %v4491
        %4624 = vmatprep.subr.bf16.mxu0 0
        %4625 = vmatpush1.bf16.msra.mxu0 %v4492
        %4626 = vmatprep.subr.bf16.mxu0 0
        %4627 = vmatpush1.bf16.msra.mxu0 %v4493
        %4628 = vmatprep.subr.bf16.mxu0 0
        %4629 = vmatpush1.bf16.msra.mxu0 %v4494
        %4630 = vmatprep.subr.bf16.mxu0 0
        %4631 = vmatpush1.bf16.msra.mxu0 %v4495
        %4632 = vmatprep.subr.bf16.mxu0 0
        %4633 = vmatpush1.bf16.msra.mxu0 %v4496
        %4634 = vmatprep.subr.bf16.mxu0 0
        %4635 = vmatpush1.bf16.msra.mxu0 %v4497
        %4636 = vmatprep.subr.bf16.mxu0 0
        %4637 = vmatpush1.bf16.msra.mxu0 %v4498
        %4638 = vmatprep.subr.bf16.mxu0 0
        %4639 = vmatpush1.bf16.msra.mxu0 %v4499
        %4640 = vmatprep.subr.bf16.mxu0 0
        %4641 = vmatpush1.bf16.msra.mxu0 %v4500
        %4642 = vmatprep.subr.bf16.mxu0 0
        %4643 = vmatpush1.bf16.msra.mxu0 %v4501
        %4644 = vmatprep.subr.bf16.mxu0 0
        %4645 = vmatpush1.bf16.msra.mxu0 %v4502
        %4646 = vmatprep.subr.bf16.mxu0 0
        %4647 = vmatpush1.bf16.msra.mxu0 %v4503
        %4648 = vmatprep.mubr.bf16.mxu0 %v4265
        %4649 = vmatmul.mubr.bf16.gmra.mrb[0].mxu0 %v4248
        %v4650 = vpop.f32.mrb[0].mxu0
        %v4651 = vadd.f32 %v4571, %v4650
        %v4652 = vpop.f32.mrb[0].mxu0
        %v4653 = vpop.f32.mrb[0].mxu0
        %v4654 = vadd.f32 %v4574, %v4653
        %v4655 = vpop.f32.mrb[0].mxu0
        %4656 = vmatprep.mubr.bf16.mxu0 %v4266
        %4657 = vmatmul.mubr.bf16.gmra.mrb[0].mxu0 %v4249
        %v4658 = vpop.f32.mrb[0].mxu0
        %v4659 = vadd.f32 %v4579, %v4658
        %v4660 = vpop.f32.mrb[0].mxu0
        %v4661 = vpop.f32.mrb[0].mxu0
        %v4662 = vadd.f32 %v4582, %v4661
        %v4663 = vpop.f32.mrb[0].mxu0
        %4664 = vmatprep.mubr.bf16.mxu0 %v4267
        %4665 = vmatmul.mubr.bf16.gmra.mrb[0].mxu0 %v4250
        %v4666 = vpop.f32.mrb[0].mxu0
        %v4667 = vadd.f32 %v4587, %v4666
        %v4668 = vpop.f32.mrb[0].mxu0
        %v4669 = vpop.f32.mrb[0].mxu0
        %v4670 = vadd.f32 %v4590, %v4669
        %v4671 = vpop.f32.mrb[0].mxu0
        %4672 = vmatprep.mubr.bf16.mxu0 %v4268
        %4673 = vmatmul.mubr.bf16.gmra.mrb[0].mxu0 %v4251
        %v4674 = vpop.f32.mrb[0].mxu0
        %v4675 = vadd.f32 %v4595, %v4674
        %v4676 = vpop.f32.mrb[0].mxu0
        %v4677 = vpop.f32.mrb[0].mxu0
        %v4678 = vadd.f32 %v4598, %v4677
        %v4679 = vpop.f32.mrb[0].mxu0
        %4680 = vmatprep.mubr.bf16.mxu0 %v4269
        %4681 = vmatmul.mubr.bf16.gmra.mrb[0].mxu0 %v4252
        %v4682 = vpop.f32.mrb[0].mxu0
        %v4683 = vadd.f32 %v4603, %v4682
        %v4684 = vpop.f32.mrb[0].mxu0
        %v4685 = vpop.f32.mrb[0].mxu0
        %v4686 = vadd.f32 %v4606, %v4685
        %v4687 = vpop.f32.mrb[0].mxu0
        %4688 = vmatprep.mubr.bf16.mxu0 %v4270
        %4689 = vmatmul.mubr.bf16.gmra.mrb[0].mxu0 %v4253
        %v4690 = vpop.f32.mrb[0].mxu0
        %v4691 = vadd.f32 %v4611, %v4690
        %v4692 = vpop.f32.mrb[0].mxu0
        %v4693 = vpop.f32.mrb[0].mxu0
        %v4694 = vpop.f32.mrb[0].mxu0
        %4695 = vdwg.mxu0
        %v4696 = vmax.f32 %v4651, 0.0
        %v4697 = vmax.f32 %v4654, 0.0
        %v4698 = vmax.f32 %v4659, 0.0
        %v4699 = vmax.f32 %v4662, 0.0
        %v4700 = vmax.f32 %v4667, 0.0
        %v4701 = vmax.f32 %v4670, 0.0
        %v4702 = vmax.f32 %v4675, 0.0
        %v4703 = vmax.f32 %v4678, 0.0
        %v4704 = vmax.f32 %v4683, 0.0
        %v4705 = vmax.f32 %v4686, 0.0
        %v4706 = vmax.f32 %v4691, 0.0
        %v4707 = vmul.f32 %v4696, %v4201
        %v4708 = vmul.f32 %v4697, %v4202
        %v4709 = vmul.f32 %v4698, %v4203
        %v4710 = vmul.f32 %v4699, %v4204
        %v4711 = vmul.f32 %v4700, %v4205
        %v4712 = vmul.f32 %v4701, %v4206
        %v4713 = vmul.f32 %v4702, %v4207
        %v4714 = vmul.f32 %v4703, %v4208
        %v4715 = vmul.f32 %v4704, %v4209
        %v4716 = vmul.f32 %v4705, %v4210
        %v4717 = vmul.f32 %v4706, %v4211
        %v4718 = vadd.f32 %v4212, %v4707
        %v4719 = vadd.f32 %v4213, %v4708
        %v4720 = vadd.f32 %v4214, %v4709
        %v4721 = vadd.f32 %v4215, %v4710
        %v4722 = vadd.f32 %v4216, %v4711
        %v4723 = vadd.f32 %v4217, %v4712
        %v4724 = vadd.f32 %v4218, %v4713
        %v4725 = vadd.f32 %v4219, %v4714
        %v4726 = vadd.f32 %v4220, %v4715
        %v4727 = vadd.f32 %v4221, %v4716
        %v4728 = vadd.f32 %v4222, %v4717
        %4729 = vst [vmem:[#allocation3] sm:$0xff] %v4718
        %4730 = vst [vmem:[#allocation3 + $0x8] sm:$0xff] %v4719
        %4731 = vst [vmem:[#allocation3 + $0x10] sm:$0xff] %v4720
        %4732 = vst [vmem:[#allocation3 + $0x18] sm:$0xff] %v4721
        %4733 = vst [vmem:[#allocation3 + $0x20] sm:$0xff] %v4722
        %4734 = vst [vmem:[#allocation3 + $0x28] sm:$0xff] %v4723
        %4735 = vst [vmem:[#allocation3 + $0x30] sm:$0xff] %v4724
        %4736 = vst [vmem:[#allocation3 + $0x38] sm:$0xff] %v4725
        %4737 = vst [vmem:[#allocation3 + $0x40] sm:$0xff] %v4726
        %4738 = vst [vmem:[#allocation3 + $0x48] sm:$0xff] %v4727
        %4739 = vst [vmem:[#allocation3 + $0x50] sm:$0x1] %v4728
        %v4740 = vld [vmem:[#allocation3] sm:$0xff]
        %v4741 = vld [vmem:[#allocation3 + $0x8] sm:$0xff]
        %v4742 = vld [vmem:[#allocation3 + $0x10] sm:$0xff]
        %v4743 = vld [vmem:[#allocation3 + $0x18] sm:$0xff]
        %v4744 = vld [vmem:[#allocation3 + $0x20] sm:$0xff]
        %v4745 = vld [vmem:[#allocation3 + $0x28] sm:$0xff]
        %v4746 = vld [vmem:[#allocation3 + $0x30] sm:$0xff]
        %v4747 = vld [vmem:[#allocation3 + $0x38] sm:$0xff]
        %v4748 = vld [vmem:[#allocation3 + $0x40] sm:$0xff]
        %v4749 = vld [vmem:[#allocation3 + $0x48] sm:$0xff]
        %v4750 = vld [vmem:[#allocation3 + $0x50] sm:$0x1]
        %v4751 = vpack.c.bf16 %v4741, %v4740
        %v4752 = vpack.c.bf16 %v4743, %v4742
        %v4753 = vpack.c.bf16 %v4745, %v4744
        %v4754 = vpack.c.bf16 %v4747, %v4746
        %v4755 = vpack.c.bf16 %v4749, %v4748
        %v4756 = vpack.c.bf16 %v4750, %v4750
        %v4757 = vld [vmem:[#allocation3 + $0x1] sm:$0xff]
        %v4758 = vld [vmem:[#allocation3 + $0x9] sm:$0xff]
        %v4759 = vld [vmem:[#allocation3 + $0x11] sm:$0xff]
        %v4760 = vld [vmem:[#allocation3 + $0x19] sm:$0xff]
        %v4761 = vld [vmem:[#allocation3 + $0x21] sm:$0xff]
        %v4762 = vld [vmem:[#allocation3 + $0x29] sm:$0xff]
        %v4763 = vld [vmem:[#allocation3 + $0x31] sm:$0xff]
        %v4764 = vld [vmem:[#allocation3 + $0x39] sm:$0xff]
        %v4765 = vld [vmem:[#allocation3 + $0x41] sm:$0xff]
        %v4766 = vld [vmem:[#allocation3 + $0x49] sm:$0xff]
        %v4767 = vld [vmem:[#allocation3 + $0x51] sm:$0x1]
        %v4768 = vpack.c.bf16 %v4758, %v4757
        %v4769 = vpack.c.bf16 %v4760, %v4759
        %v4770 = vpack.c.bf16 %v4762, %v4761
        %v4771 = vpack.c.bf16 %v4764, %v4763
        %v4772 = vpack.c.bf16 %v4766, %v4765
        %v4773 = vpack.c.bf16 %v4767, %v4767
        %v4774 = vld [vmem:[#allocation3 + $0x51] sm:$0xff]
        %v4775 = vld [vmem:[#allocation3 + $0x59] sm:$0x1]
        %v4776 = vpack.c.bf16 %v4759, %v4758
        %v4777 = vpack.c.bf16 %v4761, %v4760
        %v4778 = vpack.c.bf16 %v4763, %v4762
        %v4779 = vpack.c.bf16 %v4765, %v4764
        %v4780 = vpack.c.bf16 %v4774, %v4766
        %v4781 = vpack.c.bf16 %v4775, %v4775
        %v4782 = vld [vmem:[#allocation3 + $0xa] sm:$0xff]
        %v4783 = vld [vmem:[#allocation3 + $0x12] sm:$0xff]
        %v4784 = vld [vmem:[#allocation3 + $0x1a] sm:$0xff]
        %v4785 = vld [vmem:[#allocation3 + $0x22] sm:$0xff]
        %v4786 = vld [vmem:[#allocation3 + $0x2a] sm:$0xff]
        %v4787 = vld [vmem:[#allocation3 + $0x32] sm:$0xff]
        %v4788 = vld [vmem:[#allocation3 + $0x3a] sm:$0xff]
        %v4789 = vld [vmem:[#allocation3 + $0x42] sm:$0xff]
        %v4790 = vld [vmem:[#allocation3 + $0x4a] sm:$0xff]
        %v4791 = vld [vmem:[#allocation3 + $0x52] sm:$0xff]
        %v4792 = vld [vmem:[#allocation3 + $0x5a] sm:$0x1]
        %v4793 = vpack.c.bf16 %v4783, %v4782
        %v4794 = vpack.c.bf16 %v4785, %v4784
        %v4795 = vpack.c.bf16 %v4787, %v4786
        %v4796 = vpack.c.bf16 %v4789, %v4788
        %v4797 = vpack.c.bf16 %v4791, %v4790
        %v4798 = vpack.c.bf16 %v4792, %v4792
        %s4799 = scalar_lea.vmem [#allocation4], 1024
        %v4800 = vld [vmem:[%s4799] sm:$0xf]
        %v4801 = vld [vmem:[%s4799 + $0x4] sm:$0xf]
        %v4802 = vld [vmem:[%s4799 + $0x8] sm:$0xf]
        %v4803 = vld [vmem:[%s4799 + $0xc] sm:$0xf]
        %v4804 = vld [vmem:[%s4799 + $0x10] sm:$0xf]
        %v4805 = vld [vmem:[%s4799 + $0x14] sm:$0xf]
        %v4806 = vld [vmem:[%s4799 + $0x18] sm:$0xf]
        %v4807 = vld [vmem:[%s4799 + $0x1c] sm:$0xf]
        %v4808 = vld [vmem:[%s4799 + $0x20] sm:$0xf]
        %v4809 = vld [vmem:[%s4799 + $0x24] sm:$0xf]
        %v4810 = vld [vmem:[%s4799 + $0x28] sm:$0xf]
        %v4811 = vld [vmem:[%s4799 + $0x2c] sm:$0xf]
        %v4812 = vld [vmem:[%s4799 + $0x30] sm:$0xf]
        %v4813 = vld [vmem:[%s4799 + $0x34] sm:$0xf]
        %v4814 = vld [vmem:[%s4799 + $0x38] sm:$0xf]
        %v4815 = vld [vmem:[%s4799 + $0x3c] sm:$0xf]
        %v4816 = vld [vmem:[%s4799 + $0x40] sm:$0xf]
        %v4817 = vld [vmem:[%s4799 + $0x44] sm:$0xf]
        %v4818 = vld [vmem:[%s4799 + $0x48] sm:$0xf]
        %v4819 = vld [vmem:[%s4799 + $0x4c] sm:$0xf]
        %v4820 = vld [vmem:[%s4799 + $0x50] sm:$0xf]
        %v4821 = vld [vmem:[%s4799 + $0x54] sm:$0xf]
        %v4822 = vld [vmem:[%s4799 + $0x58] sm:$0xf]
        %v4823 = vld [vmem:[%s4799 + $0x5c] sm:$0xf]
        %v4824 = vld [vmem:[%s4799 + $0x60] sm:$0xf]
        %v4825 = vld [vmem:[%s4799 + $0x64] sm:$0xf]
        %v4826 = vld [vmem:[%s4799 + $0x68] sm:$0xf]
        %v4827 = vld [vmem:[%s4799 + $0x6c] sm:$0xf]
        %v4828 = vld [vmem:[%s4799 + $0x70] sm:$0xf]
        %v4829 = vld [vmem:[%s4799 + $0x74] sm:$0xf]
        %v4830 = vld [vmem:[%s4799 + $0x78] sm:$0xf]
        %v4831 = vld [vmem:[%s4799 + $0x7c] sm:$0xf]
        %v4832 = vld [vmem:[%s4799 + $0x80] sm:$0xf]
        %v4833 = vld [vmem:[%s4799 + $0x84] sm:$0xf]
        %v4834 = vld [vmem:[%s4799 + $0x88] sm:$0xf]
        %v4835 = vld [vmem:[%s4799 + $0x8c] sm:$0xf]
        %v4836 = vld [vmem:[%s4799 + $0x90] sm:$0xf]
        %v4837 = vld [vmem:[%s4799 + $0x94] sm:$0xf]
        %v4838 = vld [vmem:[%s4799 + $0x98] sm:$0xf]
        %v4839 = vld [vmem:[%s4799 + $0x9c] sm:$0xf]
        %v4840 = vld [vmem:[%s4799 + $0xa0] sm:$0xf]
        %v4841 = vld [vmem:[%s4799 + $0xa4] sm:$0xf]
        %v4842 = vld [vmem:[%s4799 + $0xa8] sm:$0xf]
        %v4843 = vld [vmem:[%s4799 + $0xac] sm:$0xf]
        %v4844 = vld [vmem:[%s4799 + $0xb0] sm:$0xf]
        %v4845 = vld [vmem:[%s4799 + $0xb4] sm:$0xf]
        %v4846 = vld [vmem:[%s4799 + $0xb8] sm:$0xf]
        %v4847 = vld [vmem:[%s4799 + $0xbc] sm:$0xf]
        %v4848 = vld [vmem:[%s4799 + $0xc0] sm:$0xf]
        %v4849 = vld [vmem:[%s4799 + $0xc4] sm:$0xf]
        %v4850 = vld [vmem:[%s4799 + $0xc8] sm:$0xf]
        %v4851 = vld [vmem:[%s4799 + $0xcc] sm:$0xf]
        %v4852 = vld [vmem:[%s4799 + $0xd0] sm:$0xf]
        %v4853 = vld [vmem:[%s4799 + $0xd4] sm:$0xf]
        %v4854 = vld [vmem:[%s4799 + $0xd8] sm:$0xf]
        %v4855 = vld [vmem:[%s4799 + $0xdc] sm:$0xf]
        %v4856 = vld [vmem:[%s4799 + $0xe0] sm:$0xf]
        %v4857 = vld [vmem:[%s4799 + $0xe4] sm:$0xf]
        %v4858 = vld [vmem:[%s4799 + $0xe8] sm:$0xf]
        %v4859 = vld [vmem:[%s4799 + $0xec] sm:$0xf]
        %v4860 = vld [vmem:[%s4799 + $0xf0] sm:$0xf]
        %v4861 = vld [vmem:[%s4799 + $0xf4] sm:$0xf]
        %v4862 = vld [vmem:[%s4799 + $0xf8] sm:$0xf]
        %v4863 = vld [vmem:[%s4799 + $0xfc] sm:$0xf]
        %s4864 = scalar_lea.vmem [#allocation6], 4
        %v4865 = vld [vmem:[%s4864] sm:$0x1]
        %v4867 = vlaneseq
        %v4868 = vshrl.u32 %v4867, 7
        %v4869 = vsub.s32 0, %v4868
        %v4870 = vrot.slane %v4865, %v4869
        %v4936 = vunpack.c.l.b16 %v4800
        %v4937 = vunpack.c.l.b16 %v4801
        %v4938 = vunpack.c.l.b16 %v4802
        %v4939 = vunpack.c.l.b16 %v4803
        %v4940 = vunpack.c.l.b16 %v4804
        %v4941 = vunpack.c.l.b16 %v4805
        %v4942 = vunpack.c.l.b16 %v4806
        %v4943 = vunpack.c.l.b16 %v4807
        %v4944 = vunpack.c.l.b16 %v4808
        %v4945 = vunpack.c.l.b16 %v4809
        %v4946 = vunpack.c.l.b16 %v4810
        %v4947 = vunpack.c.l.b16 %v4811
        %v4948 = vunpack.c.l.b16 %v4812
        %v4949 = vunpack.c.l.b16 %v4813
        %v4950 = vunpack.c.l.b16 %v4814
        %v4951 = vunpack.c.l.b16 %v4815
        %v4952 = vunpack.c.l.b16 %v4816
        %v4953 = vunpack.c.l.b16 %v4817
        %v4954 = vunpack.c.l.b16 %v4818
        %v4955 = vunpack.c.l.b16 %v4819
        %v4956 = vunpack.c.l.b16 %v4820
        %v4957 = vunpack.c.l.b16 %v4821
        %v4958 = vunpack.c.l.b16 %v4822
        %v4959 = vunpack.c.l.b16 %v4823
        %v4960 = vunpack.c.l.b16 %v4824
        %v4961 = vunpack.c.l.b16 %v4825
        %v4962 = vunpack.c.l.b16 %v4826
        %v4963 = vunpack.c.l.b16 %v4827
        %v4964 = vunpack.c.l.b16 %v4828
        %v4965 = vunpack.c.l.b16 %v4829
        %v4966 = vunpack.c.l.b16 %v4830
        %v4967 = vunpack.c.l.b16 %v4831
        %v4968 = vunpack.c.l.b16 %v4832
        %v4969 = vunpack.c.l.b16 %v4833
        %v4970 = vunpack.c.l.b16 %v4834
        %v4971 = vunpack.c.l.b16 %v4835
        %v4972 = vunpack.c.l.b16 %v4836
        %v4973 = vunpack.c.l.b16 %v4837
        %v4974 = vunpack.c.l.b16 %v4838
        %v4975 = vunpack.c.l.b16 %v4839
        %v4976 = vunpack.c.l.b16 %v4840
        %v4977 = vunpack.c.l.b16 %v4841
        %v4978 = vunpack.c.l.b16 %v4842
        %v4979 = vunpack.c.l.b16 %v4843
        %v4980 = vunpack.c.l.b16 %v4844
        %v4981 = vunpack.c.l.b16 %v4845
        %v4982 = vunpack.c.l.b16 %v4846
        %v4983 = vunpack.c.l.b16 %v4847
        %v4984 = vunpack.c.l.b16 %v4848
        %v4985 = vunpack.c.l.b16 %v4849
        %v4986 = vunpack.c.l.b16 %v4850
        %v4987 = vunpack.c.l.b16 %v4851
        %v4988 = vunpack.c.l.b16 %v4852
        %v4989 = vunpack.c.l.b16 %v4853
        %v4990 = vunpack.c.l.b16 %v4854
        %v4991 = vunpack.c.l.b16 %v4855
        %v4992 = vunpack.c.l.b16 %v4856
        %v4993 = vunpack.c.l.b16 %v4857
        %v4994 = vunpack.c.l.b16 %v4858
        %v4995 = vunpack.c.l.b16 %v4859
        %v4996 = vunpack.c.l.b16 %v4860
        %v4997 = vunpack.c.l.b16 %v4861
        %v4998 = vunpack.c.l.b16 %v4862
        %v4999 = vunpack.c.l.b16 %v4863
        %v5000 = vpack.c.b16 %v4937, %v4936
        %v5001 = vpack.c.b16 %v4939, %v4938
        %v5002 = vpack.c.b16 %v4941, %v4940
        %v5003 = vpack.c.b16 %v4943, %v4942
        %v5004 = vpack.c.b16 %v4945, %v4944
        %v5005 = vpack.c.b16 %v4947, %v4946
        %v5006 = vpack.c.b16 %v4949, %v4948
        %v5007 = vpack.c.b16 %v4951, %v4950
        %v5008 = vpack.c.b16 %v4953, %v4952
        %v5009 = vpack.c.b16 %v4955, %v4954
        %v5010 = vpack.c.b16 %v4957, %v4956
        %v5011 = vpack.c.b16 %v4959, %v4958
        %v5012 = vpack.c.b16 %v4961, %v4960
        %v5013 = vpack.c.b16 %v4963, %v4962
        %v5014 = vpack.c.b16 %v4965, %v4964
        %v5015 = vpack.c.b16 %v4967, %v4966
        %v5016 = vpack.c.b16 %v4969, %v4968
        %v5017 = vpack.c.b16 %v4971, %v4970
        %v5018 = vpack.c.b16 %v4973, %v4972
        %v5019 = vpack.c.b16 %v4975, %v4974
        %v5020 = vpack.c.b16 %v4977, %v4976
        %v5021 = vpack.c.b16 %v4979, %v4978
        %v5022 = vpack.c.b16 %v4981, %v4980
        %v5023 = vpack.c.b16 %v4983, %v4982
        %v5024 = vpack.c.b16 %v4985, %v4984
        %v5025 = vpack.c.b16 %v4987, %v4986
        %v5026 = vpack.c.b16 %v4989, %v4988
        %v5027 = vpack.c.b16 %v4991, %v4990
        %v5028 = vpack.c.b16 %v4993, %v4992
        %v5029 = vpack.c.b16 %v4995, %v4994
        %v5030 = vpack.c.b16 %v4997, %v4996
        %v5031 = vpack.c.b16 %v4999, %v4998
        %5064 = vmatprep.subr.bf16.mxu0 0
        %5065 = vmatpush1.bf16.msra.mxu0 %v5000
        %5066 = vmatprep.subr.bf16.mxu0 0
        %5067 = vmatpush1.bf16.msra.mxu0 %v5001
        %5068 = vmatprep.subr.bf16.mxu0 0
        %5069 = vmatpush1.bf16.msra.mxu0 %v5002
        %5070 = vmatprep.subr.bf16.mxu0 0
        %5071 = vmatpush1.bf16.msra.mxu0 %v5003
        %5072 = vmatprep.subr.bf16.mxu0 0
        %5073 = vmatpush1.bf16.msra.mxu0 %v5004
        %5074 = vmatprep.subr.bf16.mxu0 0
        %5075 = vmatpush1.bf16.msra.mxu0 %v5005
        %5076 = vmatprep.subr.bf16.mxu0 0
        %5077 = vmatpush1.bf16.msra.mxu0 %v5006
        %5078 = vmatprep.subr.bf16.mxu0 0
        %5079 = vmatpush1.bf16.msra.mxu0 %v5007
        %5080 = vmatprep.subr.bf16.mxu0 0
        %5081 = vmatpush1.bf16.msra.mxu0 %v5008
        %5082 = vmatprep.subr.bf16.mxu0 0
        %5083 = vmatpush1.bf16.msra.mxu0 %v5009
        %5084 = vmatprep.subr.bf16.mxu0 0
        %5085 = vmatpush1.bf16.msra.mxu0 %v5010
        %5086 = vmatprep.subr.bf16.mxu0 0
        %5087 = vmatpush1.bf16.msra.mxu0 %v5011
        %5088 = vmatprep.subr.bf16.mxu0 0
        %5089 = vmatpush1.bf16.msra.mxu0 %v5012
        %5090 = vmatprep.subr.bf16.mxu0 0
        %5091 = vmatpush1.bf16.msra.mxu0 %v5013
        %5092 = vmatprep.subr.bf16.mxu0 0
        %5093 = vmatpush1.bf16.msra.mxu0 %v5014
        %5094 = vmatprep.subr.bf16.mxu0 0
        %5095 = vmatpush1.bf16.msra.mxu0 %v5015
        %5096 = vmatprep.mubr.bf16.mxu0 %v4768
        %5097 = vmatmul.mubr.bf16.gmra.mrb[0].mxu0 %v4751
        %v5098 = vpop.f32.mrb[0].mxu0
        %v5099 = vadd.f32 %v4870, %v5098
        %v5100 = vpop.f32.mrb[0].mxu0
        %v5101 = vpop.f32.mrb[0].mxu0
        %v5102 = vadd.f32 %v4870, %v5101
        %v5103 = vpop.f32.mrb[0].mxu0
        %5104 = vmatprep.mubr.bf16.mxu0 %v4769
        %5105 = vmatmul.mubr.bf16.gmra.mrb[0].mxu0 %v4752
        %v5106 = vpop.f32.mrb[0].mxu0
        %v5107 = vadd.f32 %v4870, %v5106
        %v5108 = vpop.f32.mrb[0].mxu0
        %v5109 = vpop.f32.mrb[0].mxu0
        %v5110 = vadd.f32 %v4870, %v5109
        %v5111 = vpop.f32.mrb[0].mxu0
        %5112 = vmatprep.mubr.bf16.mxu0 %v4770
        %5113 = vmatmul.mubr.bf16.gmra.mrb[0].mxu0 %v4753
        %v5114 = vpop.f32.mrb[0].mxu0
        %v5115 = vadd.f32 %v4870, %v5114
        %v5116 = vpop.f32.mrb[0].mxu0
        %v5117 = vpop.f32.mrb[0].mxu0
        %v5118 = vadd.f32 %v4870, %v5117
        %v5119 = vpop.f32.mrb[0].mxu0
        %5120 = vmatprep.mubr.bf16.mxu0 %v4771
        %5121 = vmatmul.mubr.bf16.gmra.mrb[0].mxu0 %v4754
        %v5122 = vpop.f32.mrb[0].mxu0
        %v5123 = vadd.f32 %v4870, %v5122
        %v5124 = vpop.f32.mrb[0].mxu0
        %v5125 = vpop.f32.mrb[0].mxu0
        %v5126 = vadd.f32 %v4870, %v5125
        %v5127 = vpop.f32.mrb[0].mxu0
        %5128 = vmatprep.mubr.bf16.mxu0 %v4772
        %5129 = vmatmul.mubr.bf16.gmra.mrb[0].mxu0 %v4755
        %v5130 = vpop.f32.mrb[0].mxu0
        %v5131 = vadd.f32 %v4870, %v5130
        %v5132 = vpop.f32.mrb[0].mxu0
        %v5133 = vpop.f32.mrb[0].mxu0
        %v5134 = vadd.f32 %v4870, %v5133
        %v5135 = vpop.f32.mrb[0].mxu0
        %5136 = vmatprep.mubr.bf16.mxu0 %v4773
        %5137 = vmatmul.mubr.bf16.gmra.mrb[0].mxu0 %v4756
        %v5138 = vpop.f32.mrb[0].mxu0
        %v5139 = vadd.f32 %v4870, %v5138
        %v5140 = vpop.f32.mrb[0].mxu0
        %v5141 = vpop.f32.mrb[0].mxu0
        %v5142 = vpop.f32.mrb[0].mxu0
        %5143 = vdwg.mxu0
        %5144 = vmatprep.subr.bf16.mxu0 0
        %5145 = vmatpush1.bf16.msra.mxu0 %v5016
        %5146 = vmatprep.subr.bf16.mxu0 0
        %5147 = vmatpush1.bf16.msra.mxu0 %v5017
        %5148 = vmatprep.subr.bf16.mxu0 0
        %5149 = vmatpush1.bf16.msra.mxu0 %v5018
        %5150 = vmatprep.subr.bf16.mxu0 0
        %5151 = vmatpush1.bf16.msra.mxu0 %v5019
        %5152 = vmatprep.subr.bf16.mxu0 0
        %5153 = vmatpush1.bf16.msra.mxu0 %v5020
        %5154 = vmatprep.subr.bf16.mxu0 0
        %5155 = vmatpush1.bf16.msra.mxu0 %v5021
        %5156 = vmatprep.subr.bf16.mxu0 0
        %5157 = vmatpush1.bf16.msra.mxu0 %v5022
        %5158 = vmatprep.subr.bf16.mxu0 0
        %5159 = vmatpush1.bf16.msra.mxu0 %v5023
        %5160 = vmatprep.subr.bf16.mxu0 0
        %5161 = vmatpush1.bf16.msra.mxu0 %v5024
        %5162 = vmatprep.subr.bf16.mxu0 0
        %5163 = vmatpush1.bf16.msra.mxu0 %v5025
        %5164 = vmatprep.subr.bf16.mxu0 0
        %5165 = vmatpush1.bf16.msra.mxu0 %v5026
        %5166 = vmatprep.subr.bf16.mxu0 0
        %5167 = vmatpush1.bf16.msra.mxu0 %v5027
        %5168 = vmatprep.subr.bf16.mxu0 0
        %5169 = vmatpush1.bf16.msra.mxu0 %v5028
        %5170 = vmatprep.subr.bf16.mxu0 0
        %5171 = vmatpush1.bf16.msra.mxu0 %v5029
        %5172 = vmatprep.subr.bf16.mxu0 0
        %5173 = vmatpush1.bf16.msra.mxu0 %v5030
        %5174 = vmatprep.subr.bf16.mxu0 0
        %5175 = vmatpush1.bf16.msra.mxu0 %v5031
        %5176 = vmatprep.mubr.bf16.mxu0 %v4793
        %5177 = vmatmul.mubr.bf16.gmra.mrb[0].mxu0 %v4776
        %v5178 = vpop.f32.mrb[0].mxu0
        %v5179 = vadd.f32 %v5099, %v5178
        %v5180 = vpop.f32.mrb[0].mxu0
        %v5181 = vpop.f32.mrb[0].mxu0
        %v5182 = vadd.f32 %v5102, %v5181
        %v5183 = vpop.f32.mrb[0].mxu0
        %5184 = vmatprep.mubr.bf16.mxu0 %v4794
        %5185 = vmatmul.mubr.bf16.gmra.mrb[0].mxu0 %v4777
        %v5186 = vpop.f32.mrb[0].mxu0
        %v5187 = vadd.f32 %v5107, %v5186
        %v5188 = vpop.f32.mrb[0].mxu0
        %v5189 = vpop.f32.mrb[0].mxu0
        %v5190 = vadd.f32 %v5110, %v5189
        %v5191 = vpop.f32.mrb[0].mxu0
        %5192 = vmatprep.mubr.bf16.mxu0 %v4795
        %5193 = vmatmul.mubr.bf16.gmra.mrb[0].mxu0 %v4778
        %v5194 = vpop.f32.mrb[0].mxu0
        %v5195 = vadd.f32 %v5115, %v5194
        %v5196 = vpop.f32.mrb[0].mxu0
        %v5197 = vpop.f32.mrb[0].mxu0
        %v5198 = vadd.f32 %v5118, %v5197
        %v5199 = vpop.f32.mrb[0].mxu0
        %5200 = vmatprep.mubr.bf16.mxu0 %v4796
        %5201 = vmatmul.mubr.bf16.gmra.mrb[0].mxu0 %v4779
        %v5202 = vpop.f32.mrb[0].mxu0
        %v5203 = vadd.f32 %v5123, %v5202
        %v5204 = vpop.f32.mrb[0].mxu0
        %v5205 = vpop.f32.mrb[0].mxu0
        %v5206 = vadd.f32 %v5126, %v5205
        %v5207 = vpop.f32.mrb[0].mxu0
        %5208 = vmatprep.mubr.bf16.mxu0 %v4797
        %5209 = vmatmul.mubr.bf16.gmra.mrb[0].mxu0 %v4780
        %v5210 = vpop.f32.mrb[0].mxu0
        %v5211 = vadd.f32 %v5131, %v5210
        %v5212 = vpop.f32.mrb[0].mxu0
        %v5213 = vpop.f32.mrb[0].mxu0
        %v5214 = vadd.f32 %v5134, %v5213
        %v5215 = vpop.f32.mrb[0].mxu0
        %5216 = vmatprep.mubr.bf16.mxu0 %v4798
        %5217 = vmatmul.mubr.bf16.gmra.mrb[0].mxu0 %v4781
        %v5218 = vpop.f32.mrb[0].mxu0
        %v5219 = vadd.f32 %v5139, %v5218
        %v5220 = vpop.f32.mrb[0].mxu0
        %v5221 = vpop.f32.mrb[0].mxu0
        %v5222 = vpop.f32.mrb[0].mxu0
        %5223 = vdwg.mxu0
        %v5224 = vmax.f32 %v5179, 0.0
        %v5225 = vmax.f32 %v5182, 0.0
        %v5226 = vmax.f32 %v5187, 0.0
        %v5227 = vmax.f32 %v5190, 0.0
        %v5228 = vmax.f32 %v5195, 0.0
        %v5229 = vmax.f32 %v5198, 0.0
        %v5230 = vmax.f32 %v5203, 0.0
        %v5231 = vmax.f32 %v5206, 0.0
        %v5232 = vmax.f32 %v5211, 0.0
        %v5233 = vmax.f32 %v5214, 0.0
        %v5234 = vmax.f32 %v5219, 0.0
        %v5235 = vmul.f32 %v5224, %v4201
        %v5236 = vmul.f32 %v5225, %v4202
        %v5237 = vmul.f32 %v5226, %v4203
        %v5238 = vmul.f32 %v5227, %v4204
        %v5239 = vmul.f32 %v5228, %v4205
        %v5240 = vmul.f32 %v5229, %v4206
        %v5241 = vmul.f32 %v5230, %v4207
        %v5242 = vmul.f32 %v5231, %v4208
        %v5243 = vmul.f32 %v5232, %v4209
        %v5244 = vmul.f32 %v5233, %v4210
        %v5245 = vmul.f32 %v5234, %v4211
        %v5246 = vadd.f32 %v4740, %v5235
        %v5247 = vadd.f32 %v4741, %v5236
        %v5248 = vadd.f32 %v4742, %v5237
        %v5249 = vadd.f32 %v4743, %v5238
        %v5250 = vadd.f32 %v4744, %v5239
        %v5251 = vadd.f32 %v4745, %v5240
        %v5252 = vadd.f32 %v4746, %v5241
        %v5253 = vadd.f32 %v4747, %v5242
        %v5254 = vadd.f32 %v4748, %v5243
        %v5255 = vadd.f32 %v4749, %v5244
        %v5256 = vadd.f32 %v4750, %v5245
        %5257 = vst [vmem:[#allocation3] sm:$0xff] %v5246
        %5258 = vst [vmem:[#allocation3 + $0x8] sm:$0xff] %v5247
        %5259 = vst [vmem:[#allocation3 + $0x10] sm:$0xff] %v5248
        %5260 = vst [vmem:[#allocation3 + $0x18] sm:$0xff] %v5249
        %5261 = vst [vmem:[#allocation3 + $0x20] sm:$0xff] %v5250
        %5262 = vst [vmem:[#allocation3 + $0x28] sm:$0xff] %v5251
        %5263 = vst [vmem:[#allocation3 + $0x30] sm:$0xff] %v5252
        %5264 = vst [vmem:[#allocation3 + $0x38] sm:$0xff] %v5253
        %5265 = vst [vmem:[#allocation3 + $0x40] sm:$0xff] %v5254
        %5266 = vst [vmem:[#allocation3 + $0x48] sm:$0xff] %v5255
        %5267 = vst [vmem:[#allocation3 + $0x50] sm:$0x1] %v5256
        %v5268 = vld [vmem:[#allocation3] sm:$0xff]
        %v5269 = vld [vmem:[#allocation3 + $0x8] sm:$0xff]
        %v5270 = vld [vmem:[#allocation3 + $0x10] sm:$0xff]
        %v5271 = vld [vmem:[#allocation3 + $0x18] sm:$0xff]
        %v5272 = vld [vmem:[#allocation3 + $0x20] sm:$0xff]
        %v5273 = vld [vmem:[#allocation3 + $0x28] sm:$0xff]
        %v5274 = vld [vmem:[#allocation3 + $0x30] sm:$0xff]
        %v5275 = vld [vmem:[#allocation3 + $0x38] sm:$0xff]
        %v5276 = vld [vmem:[#allocation3 + $0x40] sm:$0xff]
        %v5277 = vld [vmem:[#allocation3 + $0x48] sm:$0xff]
        %v5278 = vld [vmem:[#allocation3 + $0x50] sm:$0x1]
        %v5279 = vpack.c.bf16 %v5269, %v5268
        %v5280 = vpack.c.bf16 %v5271, %v5270
        %v5281 = vpack.c.bf16 %v5273, %v5272
        %v5282 = vpack.c.bf16 %v5275, %v5274
        %v5283 = vpack.c.bf16 %v5277, %v5276
        %v5284 = vpack.c.bf16 %v5278, %v5278
        %v5285 = vld [vmem:[#allocation3 + $0x1] sm:$0xff]
        %v5286 = vld [vmem:[#allocation3 + $0x9] sm:$0xff]
        %v5287 = vld [vmem:[#allocation3 + $0x11] sm:$0xff]
        %v5288 = vld [vmem:[#allocation3 + $0x19] sm:$0xff]
        %v5289 = vld [vmem:[#allocation3 + $0x21] sm:$0xff]
        %v5290 = vld [vmem:[#allocation3 + $0x29] sm:$0xff]
        %v5291 = vld [vmem:[#allocation3 + $0x31] sm:$0xff]
        %v5292 = vld [vmem:[#allocation3 + $0x39] sm:$0xff]
        %v5293 = vld [vmem:[#allocation3 + $0x41] sm:$0xff]
        %v5294 = vld [vmem:[#allocation3 + $0x49] sm:$0xff]
        %v5295 = vld [vmem:[#allocation3 + $0x51] sm:$0x1]
        %v5296 = vpack.c.bf16 %v5286, %v5285
        %v5297 = vpack.c.bf16 %v5288, %v5287
        %v5298 = vpack.c.bf16 %v5290, %v5289
        %v5299 = vpack.c.bf16 %v5292, %v5291
        %v5300 = vpack.c.bf16 %v5294, %v5293
        %v5301 = vpack.c.bf16 %v5295, %v5295
        %v5302 = vld [vmem:[#allocation3 + $0x51] sm:$0xff]
        %v5303 = vld [vmem:[#allocation3 + $0x59] sm:$0x1]
        %v5304 = vpack.c.bf16 %v5287, %v5286
        %v5305 = vpack.c.bf16 %v5289, %v5288
        %v5306 = vpack.c.bf16 %v5291, %v5290
        %v5307 = vpack.c.bf16 %v5293, %v5292
        %v5308 = vpack.c.bf16 %v5302, %v5294
        %v5309 = vpack.c.bf16 %v5303, %v5303
        %v5310 = vld [vmem:[#allocation3 + $0xa] sm:$0xff]
        %v5311 = vld [vmem:[#allocation3 + $0x12] sm:$0xff]
        %v5312 = vld [vmem:[#allocation3 + $0x1a] sm:$0xff]
        %v5313 = vld [vmem:[#allocation3 + $0x22] sm:$0xff]
        %v5314 = vld [vmem:[#allocation3 + $0x2a] sm:$0xff]
        %v5315 = vld [vmem:[#allocation3 + $0x32] sm:$0xff]
        %v5316 = vld [vmem:[#allocation3 + $0x3a] sm:$0xff]
        %v5317 = vld [vmem:[#allocation3 + $0x42] sm:$0xff]
        %v5318 = vld [vmem:[#allocation3 + $0x4a] sm:$0xff]
        %v5319 = vld [vmem:[#allocation3 + $0x52] sm:$0xff]
        %v5320 = vld [vmem:[#allocation3 + $0x5a] sm:$0x1]
        %v5321 = vpack.c.bf16 %v5311, %v5310
        %v5322 = vpack.c.bf16 %v5313, %v5312
        %v5323 = vpack.c.bf16 %v5315, %v5314
        %v5324 = vpack.c.bf16 %v5317, %v5316
        %v5325 = vpack.c.bf16 %v5319, %v5318
        %v5326 = vpack.c.bf16 %v5320, %v5320
        %s5327 = scalar_lea.vmem [#allocation4], 1280
        %v5328 = vld [vmem:[%s5327] sm:$0xf]
        %v5329 = vld [vmem:[%s5327 + $0x4] sm:$0xf]
        %v5330 = vld [vmem:[%s5327 + $0x8] sm:$0xf]
        %v5331 = vld [vmem:[%s5327 + $0xc] sm:$0xf]
        %v5332 = vld [vmem:[%s5327 + $0x10] sm:$0xf]
        %v5333 = vld [vmem:[%s5327 + $0x14] sm:$0xf]
        %v5334 = vld [vmem:[%s5327 + $0x18] sm:$0xf]
        %v5335 = vld [vmem:[%s5327 + $0x1c] sm:$0xf]
        %v5336 = vld [vmem:[%s5327 + $0x20] sm:$0xf]
        %v5337 = vld [vmem:[%s5327 + $0x24] sm:$0xf]
        %v5338 = vld [vmem:[%s5327 + $0x28] sm:$0xf]
        %v5339 = vld [vmem:[%s5327 + $0x2c] sm:$0xf]
        %v5340 = vld [vmem:[%s5327 + $0x30] sm:$0xf]
        %v5341 = vld [vmem:[%s5327 + $0x34] sm:$0xf]
        %v5342 = vld [vmem:[%s5327 + $0x38] sm:$0xf]
        %v5343 = vld [vmem:[%s5327 + $0x3c] sm:$0xf]
        %v5344 = vld [vmem:[%s5327 + $0x40] sm:$0xf]
        %v5345 = vld [vmem:[%s5327 + $0x44] sm:$0xf]
        %v5346 = vld [vmem:[%s5327 + $0x48] sm:$0xf]
        %v5347 = vld [vmem:[%s5327 + $0x4c] sm:$0xf]
        %v5348 = vld [vmem:[%s5327 + $0x50] sm:$0xf]
        %v5349 = vld [vmem:[%s5327 + $0x54] sm:$0xf]
        %v5350 = vld [vmem:[%s5327 + $0x58] sm:$0xf]
        %v5351 = vld [vmem:[%s5327 + $0x5c] sm:$0xf]
        %v5352 = vld [vmem:[%s5327 + $0x60] sm:$0xf]
        %v5353 = vld [vmem:[%s5327 + $0x64] sm:$0xf]
        %v5354 = vld [vmem:[%s5327 + $0x68] sm:$0xf]
        %v5355 = vld [vmem:[%s5327 + $0x6c] sm:$0xf]
        %v5356 = vld [vmem:[%s5327 + $0x70] sm:$0xf]
        %v5357 = vld [vmem:[%s5327 + $0x74] sm:$0xf]
        %v5358 = vld [vmem:[%s5327 + $0x78] sm:$0xf]
        %v5359 = vld [vmem:[%s5327 + $0x7c] sm:$0xf]
        %v5360 = vld [vmem:[%s5327 + $0x80] sm:$0xf]
        %v5361 = vld [vmem:[%s5327 + $0x84] sm:$0xf]
        %v5362 = vld [vmem:[%s5327 + $0x88] sm:$0xf]
        %v5363 = vld [vmem:[%s5327 + $0x8c] sm:$0xf]
        %v5364 = vld [vmem:[%s5327 + $0x90] sm:$0xf]
        %v5365 = vld [vmem:[%s5327 + $0x94] sm:$0xf]
        %v5366 = vld [vmem:[%s5327 + $0x98] sm:$0xf]
        %v5367 = vld [vmem:[%s5327 + $0x9c] sm:$0xf]
        %v5368 = vld [vmem:[%s5327 + $0xa0] sm:$0xf]
        %v5369 = vld [vmem:[%s5327 + $0xa4] sm:$0xf]
        %v5370 = vld [vmem:[%s5327 + $0xa8] sm:$0xf]
        %v5371 = vld [vmem:[%s5327 + $0xac] sm:$0xf]
        %v5372 = vld [vmem:[%s5327 + $0xb0] sm:$0xf]
        %v5373 = vld [vmem:[%s5327 + $0xb4] sm:$0xf]
        %v5374 = vld [vmem:[%s5327 + $0xb8] sm:$0xf]
        %v5375 = vld [vmem:[%s5327 + $0xbc] sm:$0xf]
        %v5376 = vld [vmem:[%s5327 + $0xc0] sm:$0xf]
        %v5377 = vld [vmem:[%s5327 + $0xc4] sm:$0xf]
        %v5378 = vld [vmem:[%s5327 + $0xc8] sm:$0xf]
        %v5379 = vld [vmem:[%s5327 + $0xcc] sm:$0xf]
        %v5380 = vld [vmem:[%s5327 + $0xd0] sm:$0xf]
        %v5381 = vld [vmem:[%s5327 + $0xd4] sm:$0xf]
        %v5382 = vld [vmem:[%s5327 + $0xd8] sm:$0xf]
        %v5383 = vld [vmem:[%s5327 + $0xdc] sm:$0xf]
        %v5384 = vld [vmem:[%s5327 + $0xe0] sm:$0xf]
        %v5385 = vld [vmem:[%s5327 + $0xe4] sm:$0xf]
        %v5386 = vld [vmem:[%s5327 + $0xe8] sm:$0xf]
        %v5387 = vld [vmem:[%s5327 + $0xec] sm:$0xf]
        %v5388 = vld [vmem:[%s5327 + $0xf0] sm:$0xf]
        %v5389 = vld [vmem:[%s5327 + $0xf4] sm:$0xf]
        %v5390 = vld [vmem:[%s5327 + $0xf8] sm:$0xf]
        %v5391 = vld [vmem:[%s5327 + $0xfc] sm:$0xf]
        %s5392 = scalar_lea.vmem [#allocation6], 5
        %v5393 = vld [vmem:[%s5392] sm:$0x1]
        %v5395 = vlaneseq
        %v5396 = vshrl.u32 %v5395, 7
        %v5397 = vsub.s32 0, %v5396
        %v5398 = vrot.slane %v5393, %v5397
        %v5464 = vunpack.c.l.b16 %v5328
        %v5465 = vunpack.c.l.b16 %v5329
        %v5466 = vunpack.c.l.b16 %v5330
        %v5467 = vunpack.c.l.b16 %v5331
        %v5468 = vunpack.c.l.b16 %v5332
        %v5469 = vunpack.c.l.b16 %v5333
        %v5470 = vunpack.c.l.b16 %v5334
        %v5471 = vunpack.c.l.b16 %v5335
        %v5472 = vunpack.c.l.b16 %v5336
        %v5473 = vunpack.c.l.b16 %v5337
        %v5474 = vunpack.c.l.b16 %v5338
        %v5475 = vunpack.c.l.b16 %v5339
        %v5476 = vunpack.c.l.b16 %v5340
        %v5477 = vunpack.c.l.b16 %v5341
        %v5478 = vunpack.c.l.b16 %v5342
        %v5479 = vunpack.c.l.b16 %v5343
        %v5480 = vunpack.c.l.b16 %v5344
        %v5481 = vunpack.c.l.b16 %v5345
        %v5482 = vunpack.c.l.b16 %v5346
        %v5483 = vunpack.c.l.b16 %v5347
        %v5484 = vunpack.c.l.b16 %v5348
        %v5485 = vunpack.c.l.b16 %v5349
        %v5486 = vunpack.c.l.b16 %v5350
        %v5487 = vunpack.c.l.b16 %v5351
        %v5488 = vunpack.c.l.b16 %v5352
        %v5489 = vunpack.c.l.b16 %v5353
        %v5490 = vunpack.c.l.b16 %v5354
        %v5491 = vunpack.c.l.b16 %v5355
        %v5492 = vunpack.c.l.b16 %v5356
        %v5493 = vunpack.c.l.b16 %v5357
        %v5494 = vunpack.c.l.b16 %v5358
        %v5495 = vunpack.c.l.b16 %v5359
        %v5496 = vunpack.c.l.b16 %v5360
        %v5497 = vunpack.c.l.b16 %v5361
        %v5498 = vunpack.c.l.b16 %v5362
        %v5499 = vunpack.c.l.b16 %v5363
        %v5500 = vunpack.c.l.b16 %v5364
        %v5501 = vunpack.c.l.b16 %v5365
        %v5502 = vunpack.c.l.b16 %v5366
        %v5503 = vunpack.c.l.b16 %v5367
        %v5504 = vunpack.c.l.b16 %v5368
        %v5505 = vunpack.c.l.b16 %v5369
        %v5506 = vunpack.c.l.b16 %v5370
        %v5507 = vunpack.c.l.b16 %v5371
        %v5508 = vunpack.c.l.b16 %v5372
        %v5509 = vunpack.c.l.b16 %v5373
        %v5510 = vunpack.c.l.b16 %v5374
        %v5511 = vunpack.c.l.b16 %v5375
        %v5512 = vunpack.c.l.b16 %v5376
        %v5513 = vunpack.c.l.b16 %v5377
        %v5514 = vunpack.c.l.b16 %v5378
        %v5515 = vunpack.c.l.b16 %v5379
        %v5516 = vunpack.c.l.b16 %v5380
        %v5517 = vunpack.c.l.b16 %v5381
        %v5518 = vunpack.c.l.b16 %v5382
        %v5519 = vunpack.c.l.b16 %v5383
        %v5520 = vunpack.c.l.b16 %v5384
        %v5521 = vunpack.c.l.b16 %v5385
        %v5522 = vunpack.c.l.b16 %v5386
        %v5523 = vunpack.c.l.b16 %v5387
        %v5524 = vunpack.c.l.b16 %v5388
        %v5525 = vunpack.c.l.b16 %v5389
        %v5526 = vunpack.c.l.b16 %v5390
        %v5527 = vunpack.c.l.b16 %v5391
        %v5528 = vpack.c.b16 %v5465, %v5464
        %v5529 = vpack.c.b16 %v5467, %v5466
        %v5530 = vpack.c.b16 %v5469, %v5468
        %v5531 = vpack.c.b16 %v5471, %v5470
        %v5532 = vpack.c.b16 %v5473, %v5472
        %v5533 = vpack.c.b16 %v5475, %v5474
        %v5534 = vpack.c.b16 %v5477, %v5476
        %v5535 = vpack.c.b16 %v5479, %v5478
        %v5536 = vpack.c.b16 %v5481, %v5480
        %v5537 = vpack.c.b16 %v5483, %v5482
        %v5538 = vpack.c.b16 %v5485, %v5484
        %v5539 = vpack.c.b16 %v5487, %v5486
        %v5540 = vpack.c.b16 %v5489, %v5488
        %v5541 = vpack.c.b16 %v5491, %v5490
        %v5542 = vpack.c.b16 %v5493, %v5492
        %v5543 = vpack.c.b16 %v5495, %v5494
        %v5544 = vpack.c.b16 %v5497, %v5496
        %v5545 = vpack.c.b16 %v5499, %v5498
        %v5546 = vpack.c.b16 %v5501, %v5500
        %v5547 = vpack.c.b16 %v5503, %v5502
        %v5548 = vpack.c.b16 %v5505, %v5504
        %v5549 = vpack.c.b16 %v5507, %v5506
        %v5550 = vpack.c.b16 %v5509, %v5508
        %v5551 = vpack.c.b16 %v5511, %v5510
        %v5552 = vpack.c.b16 %v5513, %v5512
        %v5553 = vpack.c.b16 %v5515, %v5514
        %v5554 = vpack.c.b16 %v5517, %v5516
        %v5555 = vpack.c.b16 %v5519, %v5518
        %v5556 = vpack.c.b16 %v5521, %v5520
        %v5557 = vpack.c.b16 %v5523, %v5522
        %v5558 = vpack.c.b16 %v5525, %v5524
        %v5559 = vpack.c.b16 %v5527, %v5526
        %5592 = vmatprep.subr.bf16.mxu0 0
        %5593 = vmatpush1.bf16.msra.mxu0 %v5528
        %5594 = vmatprep.subr.bf16.mxu0 0
        %5595 = vmatpush1.bf16.msra.mxu0 %v5529
        %5596 = vmatprep.subr.bf16.mxu0 0
        %5597 = vmatpush1.bf16.msra.mxu0 %v5530
        %5598 = vmatprep.subr.bf16.mxu0 0
        %5599 = vmatpush1.bf16.msra.mxu0 %v5531
        %5600 = vmatprep.subr.bf16.mxu0 0
        %5601 = vmatpush1.bf16.msra.mxu0 %v5532
        %5602 = vmatprep.subr.bf16.mxu0 0
        %5603 = vmatpush1.bf16.msra.mxu0 %v5533
        %5604 = vmatprep.subr.bf16.mxu0 0
        %5605 = vmatpush1.bf16.msra.mxu0 %v5534
        %5606 = vmatprep.subr.bf16.mxu0 0
        %5607 = vmatpush1.bf16.msra.mxu0 %v5535
        %5608 = vmatprep.subr.bf16.mxu0 0
        %5609 = vmatpush1.bf16.msra.mxu0 %v5536
        %5610 = vmatprep.subr.bf16.mxu0 0
        %5611 = vmatpush1.bf16.msra.mxu0 %v5537
        %5612 = vmatprep.subr.bf16.mxu0 0
        %5613 = vmatpush1.bf16.msra.mxu0 %v5538
        %5614 = vmatprep.subr.bf16.mxu0 0
        %5615 = vmatpush1.bf16.msra.mxu0 %v5539
        %5616 = vmatprep.subr.bf16.mxu0 0
        %5617 = vmatpush1.bf16.msra.mxu0 %v5540
        %5618 = vmatprep.subr.bf16.mxu0 0
        %5619 = vmatpush1.bf16.msra.mxu0 %v5541
        %5620 = vmatprep.subr.bf16.mxu0 0
        %5621 = vmatpush1.bf16.msra.mxu0 %v5542
        %5622 = vmatprep.subr.bf16.mxu0 0
        %5623 = vmatpush1.bf16.msra.mxu0 %v5543
        %5624 = vmatprep.mubr.bf16.mxu0 %v5296
        %5625 = vmatmul.mubr.bf16.gmra.mrb[0].mxu0 %v5279
        %v5626 = vpop.f32.mrb[0].mxu0
        %v5627 = vadd.f32 %v5398, %v5626
        %v5628 = vpop.f32.mrb[0].mxu0
        %v5629 = vpop.f32.mrb[0].mxu0
        %v5630 = vadd.f32 %v5398, %v5629
        %v5631 = vpop.f32.mrb[0].mxu0
        %5632 = vmatprep.mubr.bf16.mxu0 %v5297
        %5633 = vmatmul.mubr.bf16.gmra.mrb[0].mxu0 %v5280
        %v5634 = vpop.f32.mrb[0].mxu0
        %v5635 = vadd.f32 %v5398, %v5634
        %v5636 = vpop.f32.mrb[0].mxu0
        %v5637 = vpop.f32.mrb[0].mxu0
        %v5638 = vadd.f32 %v5398, %v5637
        %v5639 = vpop.f32.mrb[0].mxu0
        %5640 = vmatprep.mubr.bf16.mxu0 %v5298
        %5641 = vmatmul.mubr.bf16.gmra.mrb[0].mxu0 %v5281
        %v5642 = vpop.f32.mrb[0].mxu0
        %v5643 = vadd.f32 %v5398, %v5642
        %v5644 = vpop.f32.mrb[0].mxu0
        %v5645 = vpop.f32.mrb[0].mxu0
        %v5646 = vadd.f32 %v5398, %v5645
        %v5647 = vpop.f32.mrb[0].mxu0
        %5648 = vmatprep.mubr.bf16.mxu0 %v5299
        %5649 = vmatmul.mubr.bf16.gmra.mrb[0].mxu0 %v5282
        %v5650 = vpop.f32.mrb[0].mxu0
        %v5651 = vadd.f32 %v5398, %v5650
        %v5652 = vpop.f32.mrb[0].mxu0
        %v5653 = vpop.f32.mrb[0].mxu0
        %v5654 = vadd.f32 %v5398, %v5653
        %v5655 = vpop.f32.mrb[0].mxu0
        %5656 = vmatprep.mubr.bf16.mxu0 %v5300
        %5657 = vmatmul.mubr.bf16.gmra.mrb[0].mxu0 %v5283
        %v5658 = vpop.f32.mrb[0].mxu0
        %v5659 = vadd.f32 %v5398, %v5658
        %v5660 = vpop.f32.mrb[0].mxu0
        %v5661 = vpop.f32.mrb[0].mxu0
        %v5662 = vadd.f32 %v5398, %v5661
        %v5663 = vpop.f32.mrb[0].mxu0
        %5664 = vmatprep.mubr.bf16.mxu0 %v5301
        %5665 = vmatmul.mubr.bf16.gmra.mrb[0].mxu0 %v5284
        %v5666 = vpop.f32.mrb[0].mxu0
        %v5667 = vadd.f32 %v5398, %v5666
        %v5668 = vpop.f32.mrb[0].mxu0
        %v5669 = vpop.f32.mrb[0].mxu0
        %v5670 = vpop.f32.mrb[0].mxu0
        %5671 = vdwg.mxu0
        %5672 = vmatprep.subr.bf16.mxu0 0
        %5673 = vmatpush1.bf16.msra.mxu0 %v5544
        %5674 = vmatprep.subr.bf16.mxu0 0
        %5675 = vmatpush1.bf16.msra.mxu0 %v5545
        %5676 = vmatprep.subr.bf16.mxu0 0
        %5677 = vmatpush1.bf16.msra.mxu0 %v5546
        %5678 = vmatprep.subr.bf16.mxu0 0
        %5679 = vmatpush1.bf16.msra.mxu0 %v5547
        %5680 = vmatprep.subr.bf16.mxu0 0
        %5681 = vmatpush1.bf16.msra.mxu0 %v5548
        %5682 = vmatprep.subr.bf16.mxu0 0
        %5683 = vmatpush1.bf16.msra.mxu0 %v5549
        %5684 = vmatprep.subr.bf16.mxu0 0
        %5685 = vmatpush1.bf16.msra.mxu0 %v5550
        %5686 = vmatprep.subr.bf16.mxu0 0
        %5687 = vmatpush1.bf16.msra.mxu0 %v5551
        %5688 = vmatprep.subr.bf16.mxu0 0
        %5689 = vmatpush1.bf16.msra.mxu0 %v5552
        %5690 = vmatprep.subr.bf16.mxu0 0
        %5691 = vmatpush1.bf16.msra.mxu0 %v5553
        %5692 = vmatprep.subr.bf16.mxu0 0
        %5693 = vmatpush1.bf16.msra.mxu0 %v5554
        %5694 = vmatprep.subr.bf16.mxu0 0
        %5695 = vmatpush1.bf16.msra.mxu0 %v5555
        %5696 = vmatprep.subr.bf16.mxu0 0
        %5697 = vmatpush1.bf16.msra.mxu0 %v5556
        %5698 = vmatprep.subr.bf16.mxu0 0
        %5699 = vmatpush1.bf16.msra.mxu0 %v5557
        %5700 = vmatprep.subr.bf16.mxu0 0
        %5701 = vmatpush1.bf16.msra.mxu0 %v5558
        %5702 = vmatprep.subr.bf16.mxu0 0
        %5703 = vmatpush1.bf16.msra.mxu0 %v5559
        %5704 = vmatprep.mubr.bf16.mxu0 %v5321
        %5705 = vmatmul.mubr.bf16.gmra.mrb[0].mxu0 %v5304
        %v5706 = vpop.f32.mrb[0].mxu0
        %v5707 = vadd.f32 %v5627, %v5706
        %v5708 = vpop.f32.mrb[0].mxu0
        %v5709 = vpop.f32.mrb[0].mxu0
        %v5710 = vadd.f32 %v5630, %v5709
        %v5711 = vpop.f32.mrb[0].mxu0
        %5712 = vmatprep.mubr.bf16.mxu0 %v5322
        %5713 = vmatmul.mubr.bf16.gmra.mrb[0].mxu0 %v5305
        %v5714 = vpop.f32.mrb[0].mxu0
        %v5715 = vadd.f32 %v5635, %v5714
        %v5716 = vpop.f32.mrb[0].mxu0
        %v5717 = vpop.f32.mrb[0].mxu0
        %v5718 = vadd.f32 %v5638, %v5717
        %v5719 = vpop.f32.mrb[0].mxu0
        %5720 = vmatprep.mubr.bf16.mxu0 %v5323
        %5721 = vmatmul.mubr.bf16.gmra.mrb[0].mxu0 %v5306
        %v5722 = vpop.f32.mrb[0].mxu0
        %v5723 = vadd.f32 %v5643, %v5722
        %v5724 = vpop.f32.mrb[0].mxu0
        %v5725 = vpop.f32.mrb[0].mxu0
        %v5726 = vadd.f32 %v5646, %v5725
        %v5727 = vpop.f32.mrb[0].mxu0
        %5728 = vmatprep.mubr.bf16.mxu0 %v5324
        %5729 = vmatmul.mubr.bf16.gmra.mrb[0].mxu0 %v5307
        %v5730 = vpop.f32.mrb[0].mxu0
        %v5731 = vadd.f32 %v5651, %v5730
        %v5732 = vpop.f32.mrb[0].mxu0
        %v5733 = vpop.f32.mrb[0].mxu0
        %v5734 = vadd.f32 %v5654, %v5733
        %v5735 = vpop.f32.mrb[0].mxu0
        %5736 = vmatprep.mubr.bf16.mxu0 %v5325
        %5737 = vmatmul.mubr.bf16.gmra.mrb[0].mxu0 %v5308
        %v5738 = vpop.f32.mrb[0].mxu0
        %v5739 = vadd.f32 %v5659, %v5738
        %v5740 = vpop.f32.mrb[0].mxu0
        %v5741 = vpop.f32.mrb[0].mxu0
        %v5742 = vadd.f32 %v5662, %v5741
        %v5743 = vpop.f32.mrb[0].mxu0
        %5744 = vmatprep.mubr.bf16.mxu0 %v5326
        %5745 = vmatmul.mubr.bf16.gmra.mrb[0].mxu0 %v5309
        %v5746 = vpop.f32.mrb[0].mxu0
        %v5747 = vadd.f32 %v5667, %v5746
        %v5748 = vpop.f32.mrb[0].mxu0
        %v5749 = vpop.f32.mrb[0].mxu0
        %v5750 = vpop.f32.mrb[0].mxu0
        %5751 = vdwg.mxu0
        %v5752 = vmax.f32 %v5707, 0.0
        %v5753 = vmax.f32 %v5710, 0.0
        %v5754 = vmax.f32 %v5715, 0.0
        %v5755 = vmax.f32 %v5718, 0.0
        %v5756 = vmax.f32 %v5723, 0.0
        %v5757 = vmax.f32 %v5726, 0.0
        %v5758 = vmax.f32 %v5731, 0.0
        %v5759 = vmax.f32 %v5734, 0.0
        %v5760 = vmax.f32 %v5739, 0.0
        %v5761 = vmax.f32 %v5742, 0.0
        %v5762 = vmax.f32 %v5747, 0.0
        %v5763 = vmul.f32 %v5752, %v4201
        %v5764 = vmul.f32 %v5753, %v4202
        %v5765 = vmul.f32 %v5754, %v4203
        %v5766 = vmul.f32 %v5755, %v4204
        %v5767 = vmul.f32 %v5756, %v4205
        %v5768 = vmul.f32 %v5757, %v4206
        %v5769 = vmul.f32 %v5758, %v4207
        %v5770 = vmul.f32 %v5759, %v4208
        %v5771 = vmul.f32 %v5760, %v4209
        %v5772 = vmul.f32 %v5761, %v4210
        %v5773 = vmul.f32 %v5762, %v4211
        %v5774 = vadd.f32 %v5268, %v5763
        %v5775 = vadd.f32 %v5269, %v5764
        %v5776 = vadd.f32 %v5270, %v5765
        %v5777 = vadd.f32 %v5271, %v5766
        %v5778 = vadd.f32 %v5272, %v5767
        %v5779 = vadd.f32 %v5273, %v5768
        %v5780 = vadd.f32 %v5274, %v5769
        %v5781 = vadd.f32 %v5275, %v5770
        %v5782 = vadd.f32 %v5276, %v5771
        %v5783 = vadd.f32 %v5277, %v5772
        %v5784 = vadd.f32 %v5278, %v5773
        %5785 = vst [vmem:[#allocation3] sm:$0xff] %v5774
        %5786 = vst [vmem:[#allocation3 + $0x8] sm:$0xff] %v5775
        %5787 = vst [vmem:[#allocation3 + $0x10] sm:$0xff] %v5776
        %5788 = vst [vmem:[#allocation3 + $0x18] sm:$0xff] %v5777
        %5789 = vst [vmem:[#allocation3 + $0x20] sm:$0xff] %v5778
        %5790 = vst [vmem:[#allocation3 + $0x28] sm:$0xff] %v5779
        %5791 = vst [vmem:[#allocation3 + $0x30] sm:$0xff] %v5780
        %5792 = vst [vmem:[#allocation3 + $0x38] sm:$0xff] %v5781
        %5793 = vst [vmem:[#allocation3 + $0x40] sm:$0xff] %v5782
        %5794 = vst [vmem:[#allocation3 + $0x48] sm:$0xff] %v5783
        %5795 = vst [vmem:[#allocation3 + $0x50] sm:$0x1] %v5784
        %v5796 = vld [vmem:[#allocation3] sm:$0xff]
        %v5797 = vld [vmem:[#allocation3 + $0x8] sm:$0xff]
        %v5798 = vld [vmem:[#allocation3 + $0x10] sm:$0xff]
        %v5799 = vld [vmem:[#allocation3 + $0x18] sm:$0xff]
        %v5800 = vld [vmem:[#allocation3 + $0x20] sm:$0xff]
        %v5801 = vld [vmem:[#allocation3 + $0x28] sm:$0xff]
        %v5802 = vld [vmem:[#allocation3 + $0x30] sm:$0xff]
        %v5803 = vld [vmem:[#allocation3 + $0x38] sm:$0xff]
        %v5804 = vld [vmem:[#allocation3 + $0x40] sm:$0xff]
        %v5805 = vld [vmem:[#allocation3 + $0x48] sm:$0xff]
        %v5806 = vld [vmem:[#allocation3 + $0x50] sm:$0x1]
        %v5807 = vpack.c.bf16 %v5797, %v5796
        %v5808 = vpack.c.bf16 %v5799, %v5798
        %v5809 = vpack.c.bf16 %v5801, %v5800
        %v5810 = vpack.c.bf16 %v5803, %v5802
        %v5811 = vpack.c.bf16 %v5805, %v5804
        %v5812 = vpack.c.bf16 %v5806, %v5806
        %s5813 = scalar_lea.vmem [#allocation8], 64
        %v5814 = vld [vmem:[%s5813] sm:$0xf]
        %v5815 = vld [vmem:[%s5813 + $0x4] sm:$0xf]
        %v5816 = vld [vmem:[%s5813 + $0x8] sm:$0xf]
        %v5817 = vld [vmem:[%s5813 + $0xc] sm:$0xf]
        %v5818 = vld [vmem:[%s5813 + $0x10] sm:$0xf]
        %v5819 = vld [vmem:[%s5813 + $0x14] sm:$0xf]
        %v5820 = vld [vmem:[%s5813 + $0x18] sm:$0xf]
        %v5821 = vld [vmem:[%s5813 + $0x1c] sm:$0xf]
        %v5822 = vld [vmem:[%s5813 + $0x20] sm:$0xf]
        %v5823 = vld [vmem:[%s5813 + $0x24] sm:$0xf]
        %v5824 = vld [vmem:[%s5813 + $0x28] sm:$0xf]
        %v5825 = vld [vmem:[%s5813 + $0x2c] sm:$0xf]
        %v5826 = vld [vmem:[%s5813 + $0x30] sm:$0xf]
        %v5827 = vld [vmem:[%s5813 + $0x34] sm:$0xf]
        %v5828 = vld [vmem:[%s5813 + $0x38] sm:$0xf]
        %v5829 = vld [vmem:[%s5813 + $0x3c] sm:$0xf]
        %s5830 = scalar_lea.vmem [#allocation9], 1
        %v5831 = vld [vmem:[%s5830] sm:$0x1]
        %v5833 = vlaneseq
        %v5834 = vshrl.u32 %v5833, 7
        %v5835 = vsub.s32 0, %v5834
        %v5836 = vrot.slane %v5831, %v5835
        %v5854 = vunpack.c.l.b16 %v5814
        %v5855 = vunpack.c.l.b16 %v5815
        %v5856 = vunpack.c.l.b16 %v5816
        %v5857 = vunpack.c.l.b16 %v5817
        %v5858 = vunpack.c.l.b16 %v5818
        %v5859 = vunpack.c.l.b16 %v5819
        %v5860 = vunpack.c.l.b16 %v5820
        %v5861 = vunpack.c.l.b16 %v5821
        %v5862 = vunpack.c.l.b16 %v5822
        %v5863 = vunpack.c.l.b16 %v5823
        %v5864 = vunpack.c.l.b16 %v5824
        %v5865 = vunpack.c.l.b16 %v5825
        %v5866 = vunpack.c.l.b16 %v5826
        %v5867 = vunpack.c.l.b16 %v5827
        %v5868 = vunpack.c.l.b16 %v5828
        %v5869 = vunpack.c.l.b16 %v5829
        %v5870 = vpack.c.b16 %v5855, %v5854
        %v5871 = vpack.c.b16 %v5857, %v5856
        %v5872 = vpack.c.b16 %v5859, %v5858
        %v5873 = vpack.c.b16 %v5861, %v5860
        %v5874 = vpack.c.b16 %v5863, %v5862
        %v5875 = vpack.c.b16 %v5865, %v5864
        %v5876 = vpack.c.b16 %v5867, %v5866
        %v5877 = vpack.c.b16 %v5869, %v5868
        %5886 = vmatprep.subr.bf16.mxu0 0
        %5887 = vmatpush1.bf16.msra.mxu0 %v5870
        %5888 = vmatprep.subr.bf16.mxu0 0
        %5889 = vmatpush1.bf16.msra.mxu0 %v5871
        %5890 = vmatprep.subr.bf16.mxu0 0
        %5891 = vmatpush1.bf16.msra.mxu0 %v5872
        %5892 = vmatprep.subr.bf16.mxu0 0
        %5893 = vmatpush1.bf16.msra.mxu0 %v5873
        %5894 = vmatprep.subr.bf16.mxu0 0
        %5895 = vmatpush1.bf16.msra.mxu0 %v5874
        %5896 = vmatprep.subr.bf16.mxu0 0
        %5897 = vmatpush1.bf16.msra.mxu0 %v5875
        %5898 = vmatprep.subr.bf16.mxu0 0
        %5899 = vmatpush1.bf16.msra.mxu0 %v5876
        %5900 = vmatprep.subr.bf16.mxu0 0
        %5901 = vmatpush1.bf16.msra.mxu0 %v5877
        %5902 = vmatprep.subr.bf16.mxu0 0
        %5903 = vmatpush1.bf16.msra.mxu0 0
        %5904 = vmatprep.subr.bf16.mxu0 0
        %5905 = vmatpush1.bf16.msra.mxu0 0
        %5906 = vmatprep.subr.bf16.mxu0 0
        %5907 = vmatpush1.bf16.msra.mxu0 0
        %5908 = vmatprep.subr.bf16.mxu0 0
        %5909 = vmatpush1.bf16.msra.mxu0 0
        %5910 = vmatprep.subr.bf16.mxu0 0
        %5911 = vmatpush1.bf16.msra.mxu0 0
        %5912 = vmatprep.subr.bf16.mxu0 0
        %5913 = vmatpush1.bf16.msra.mxu0 0
        %5914 = vmatprep.subr.bf16.mxu0 0
        %5915 = vmatpush1.bf16.msra.mxu0 0
        %5916 = vmatprep.subr.bf16.mxu0 0
        %5917 = vmatpush1.bf16.msra.mxu0 0
        %5918 = vmatprep.mubr.bf16.mxu0 0
        %5919 = vmatmul.mubr.bf16.gmra.mrb[0].mxu0 %v5807
        %v5920 = vpop.f32.mrb[0].mxu0
        %v5921 = vadd.f32 %v5836, %v5920
        %v5922 = vpop.f32.mrb[0].mxu0
        %v5923 = vpop.f32.mrb[0].mxu0
        %v5924 = vadd.f32 %v5836, %v5923
        %v5925 = vpop.f32.mrb[0].mxu0
        %5926 = vmatprep.mubr.bf16.mxu0 0
        %5927 = vmatmul.mubr.bf16.gmra.mrb[0].mxu0 %v5808
        %v5928 = vpop.f32.mrb[0].mxu0
        %v5929 = vadd.f32 %v5836, %v5928
        %v5930 = vpop.f32.mrb[0].mxu0
        %v5931 = vpop.f32.mrb[0].mxu0
        %v5932 = vadd.f32 %v5836, %v5931
        %v5933 = vpop.f32.mrb[0].mxu0
        %5934 = vmatprep.mubr.bf16.mxu0 0
        %5935 = vmatmul.mubr.bf16.gmra.mrb[0].mxu0 %v5809
        %v5936 = vpop.f32.mrb[0].mxu0
        %v5937 = vadd.f32 %v5836, %v5936
        %v5938 = vpop.f32.mrb[0].mxu0
        %v5939 = vpop.f32.mrb[0].mxu0
        %v5940 = vadd.f32 %v5836, %v5939
        %v5941 = vpop.f32.mrb[0].mxu0
        %5942 = vmatprep.mubr.bf16.mxu0 0
        %5943 = vmatmul.mubr.bf16.gmra.mrb[0].mxu0 %v5810
        %v5944 = vpop.f32.mrb[0].mxu0
        %v5945 = vadd.f32 %v5836, %v5944
        %v5946 = vpop.f32.mrb[0].mxu0
        %v5947 = vpop.f32.mrb[0].mxu0
        %v5948 = vadd.f32 %v5836, %v5947
        %v5949 = vpop.f32.mrb[0].mxu0
        %5950 = vmatprep.mubr.bf16.mxu0 0
        %5951 = vmatmul.mubr.bf16.gmra.mrb[0].mxu0 %v5811
        %v5952 = vpop.f32.mrb[0].mxu0
        %v5953 = vadd.f32 %v5836, %v5952
        %v5954 = vpop.f32.mrb[0].mxu0
        %v5955 = vpop.f32.mrb[0].mxu0
        %v5956 = vadd.f32 %v5836, %v5955
        %v5957 = vpop.f32.mrb[0].mxu0
        %5958 = vmatprep.mubr.bf16.mxu0 0
        %5959 = vmatmul.mubr.bf16.gmra.mrb[0].mxu0 %v5812
        %v5960 = vpop.f32.mrb[0].mxu0
        %v5961 = vadd.f32 %v5836, %v5960
        %v5962 = vpop.f32.mrb[0].mxu0
        %v5963 = vpop.f32.mrb[0].mxu0
        %v5964 = vpop.f32.mrb[0].mxu0
        %5965 = vdwg.mxu0
        %5966 = vst [vmem:[#allocation3] sm:$0xff] %v5921
        %5967 = vst [vmem:[#allocation3 + $0x8] sm:$0xff] %v5924
        %5968 = vst [vmem:[#allocation3 + $0x10] sm:$0xff] %v5929
        %5969 = vst [vmem:[#allocation3 + $0x18] sm:$0xff] %v5932
        %5970 = vst [vmem:[#allocation3 + $0x20] sm:$0xff] %v5937
        %5971 = vst [vmem:[#allocation3 + $0x28] sm:$0xff] %v5940
        %5972 = vst [vmem:[#allocation3 + $0x30] sm:$0xff] %v5945
        %5973 = vst [vmem:[#allocation3 + $0x38] sm:$0xff] %v5948
        %5974 = vst [vmem:[#allocation3 + $0x40] sm:$0xff] %v5953
        %5975 = vst [vmem:[#allocation3 + $0x48] sm:$0xff] %v5956
        %5976 = vst [vmem:[#allocation3 + $0x50] sm:$0x1] %v5961
        %5977 = vst [vmem:[#allocation2] sm:$0xff] 0.0
        %5978 = vst [vmem:[#allocation2 + $0x8] sm:$0xff] 0.0
        %5979 = vst [vmem:[#allocation2 + $0x10] sm:$0xff] 0.0
        %5980 = vst [vmem:[#allocation2 + $0x18] sm:$0xff] 0.0
        %5981 = vst [vmem:[#allocation2 + $0x20] sm:$0xff] 0.0
        %5982 = vst [vmem:[#allocation2 + $0x28] sm:$0xff] 0.0
        %5983 = vst [vmem:[#allocation2 + $0x30] sm:$0xff] 0.0
        %5984 = vst [vmem:[#allocation2 + $0x38] sm:$0xff] 0.0
        %5985 = vst [vmem:[#allocation2 + $0x40] sm:$0xff] 0.0
        %5986 = vst [vmem:[#allocation2 + $0x48] sm:$0xff] 0.0
        %5987 = vst [vmem:[#allocation2 + $0x50] sm:$0xff] 0.0
        %5988 = vst [vmem:[#allocation2 + $0x58] sm:$0xff] 0.0
        %5989 = vst [vmem:[#allocation2 + $0x60] sm:$0xff] 0.0
        %5990 = vst [vmem:[#allocation2 + $0x68] sm:$0xff] 0.0
        %5991 = vst [vmem:[#allocation2 + $0x70] sm:$0xff] 0.0
        %5992 = vst [vmem:[#allocation2 + $0x78] sm:$0xff] 0.0
        %5993 = vst [vmem:[#allocation2 + $0x80] sm:$0xff] 0.0
        %5994 = vst [vmem:[#allocation2 + $0x88] sm:$0xff] 0.0
        %5995 = vst [vmem:[#allocation2 + $0x90] sm:$0xff] 0.0
        %5996 = vst [vmem:[#allocation2 + $0x98] sm:$0xff] 0.0
        %5997 = vst [vmem:[#allocation2 + $0xa0] sm:$0xff] 0.0
        %5998 = vst [vmem:[#allocation2 + $0xa8] sm:$0xff] 0.0
        %5999 = vst [vmem:[#allocation2 + $0xb0] sm:$0xff] 0.0
        %6000 = vst [vmem:[#allocation2 + $0xb8] sm:$0xff] 0.0
        %6001 = vst [vmem:[#allocation2 + $0xc0] sm:$0xff] 0.0
        %6002 = vst [vmem:[#allocation2 + $0xc8] sm:$0xff] 0.0
        %6003 = vst [vmem:[#allocation2 + $0xd0] sm:$0xff] 0.0
        %6004 = vst [vmem:[#allocation2 + $0xd8] sm:$0xff] 0.0
        %6005 = vst [vmem:[#allocation2 + $0xe0] sm:$0xff] 0.0
        %6006 = vst [vmem:[#allocation2 + $0xe8] sm:$0xff] 0.0
        %6007 = vst [vmem:[#allocation2 + $0xf0] sm:$0xff] 0.0
        %6008 = vst [vmem:[#allocation2 + $0xf8] sm:$0xff] 0.0
        %6009 = vst [vmem:[#allocation2 + $0x100] sm:$0xff] 0.0
        %6010 = vst [vmem:[#allocation2 + $0x108] sm:$0xff] 0.0
        %6011 = vst [vmem:[#allocation2 + $0x110] sm:$0xff] 0.0
        %6012 = vst [vmem:[#allocation2 + $0x118] sm:$0xff] 0.0
        %6013 = vst [vmem:[#allocation2 + $0x120] sm:$0xff] 0.0
        %6014 = vst [vmem:[#allocation2 + $0x128] sm:$0xff] 0.0
        %6015 = vst [vmem:[#allocation2 + $0x130] sm:$0xff] 0.0
        %v6016 = vld [vmem:[#allocation3] ss:$2 sm:$0xf]
        %s6017 = scalar_lea.vmem [#allocation3], 1
        %v6018 = vld [vmem:[%s6017] ss:$2 sm:$0xf]
        %v6019 = vmax.f32 %v6016, %v6018
        %s6020 = scalar_lea.vmem [#allocation3], 9
        %v6021 = vld [vmem:[%s6020] ss:$2 sm:$0xf]
        %s6022 = scalar_lea.vmem [#allocation3], 10
        %v6023 = vld [vmem:[%s6022] ss:$2 sm:$0xf]
        %v6024 = vmax.f32 %v6021, %v6023
        %v6025 = vmax.f32 %v6019, %v6024
        %6026 = vst [vmem:[#allocation2] sm:$0xf] %v6025
        %s6027 = scalar_lea.vmem [#allocation3], 18
        %v6028 = vld [vmem:[%s6027] ss:$2 sm:$0xf]
        %s6029 = scalar_lea.vmem [#allocation3], 19
        %v6030 = vld [vmem:[%s6029] ss:$2 sm:$0xf]
        %v6031 = vmax.f32 %v6028, %v6030
        %s6032 = scalar_lea.vmem [#allocation3], 27
        %v6033 = vld [vmem:[%s6032] ss:$2 sm:$0xf]
        %s6034 = scalar_lea.vmem [#allocation3], 28
        %v6035 = vld [vmem:[%s6034] ss:$2 sm:$0xf]
        %v6036 = vmax.f32 %v6033, %v6035
        %v6037 = vmax.f32 %v6031, %v6036
        %6038 = vst [vmem:[#allocation2 + $0x5] sm:$0xf] %v6037
        %s6039 = scalar_lea.vmem [#allocation3], 36
        %v6040 = vld [vmem:[%s6039] ss:$2 sm:$0xf]
        %s6041 = scalar_lea.vmem [#allocation3], 37
        %v6042 = vld [vmem:[%s6041] ss:$2 sm:$0xf]
        %v6043 = vmax.f32 %v6040, %v6042
        %s6044 = scalar_lea.vmem [#allocation3], 45
        %v6045 = vld [vmem:[%s6044] ss:$2 sm:$0xf]
        %s6046 = scalar_lea.vmem [#allocation3], 46
        %v6047 = vld [vmem:[%s6046] ss:$2 sm:$0xf]
        %v6048 = vmax.f32 %v6045, %v6047
        %v6049 = vmax.f32 %v6043, %v6048
        %6050 = vst [vmem:[#allocation2 + $0xa] sm:$0xf] %v6049
        %s6051 = scalar_lea.vmem [#allocation3], 54
        %v6052 = vld [vmem:[%s6051] ss:$2 sm:$0xf]
        %s6053 = scalar_lea.vmem [#allocation3], 55
        %v6054 = vld [vmem:[%s6053] ss:$2 sm:$0xf]
        %v6055 = vmax.f32 %v6052, %v6054
        %s6056 = scalar_lea.vmem [#allocation3], 63
        %v6057 = vld [vmem:[%s6056] ss:$2 sm:$0xf]
        %s6058 = scalar_lea.vmem [#allocation3], 64
        %v6059 = vld [vmem:[%s6058] ss:$2 sm:$0xf]
        %v6060 = vmax.f32 %v6057, %v6059
        %v6061 = vmax.f32 %v6055, %v6060
        %6062 = vst [vmem:[#allocation2 + $0xf] sm:$0xf] %v6061
        %v6063 = vmul.f32 %v476, 0.2
        %v6064 = vmul.f32 %v477, 0.2
        %v6065 = vmul.f32 %v478, 0.2
        %v6066 = vmul.f32 %v479, 0.2
        %v6067 = vfloor.f32 %v6063
        %v6068 = vfloor.f32 %v6064
        %v6069 = vfloor.f32 %v6065
        %v6070 = vfloor.f32 %v6066
        %v6071 = vmul.f32 %v6067, 5.0
        %v6072 = vmul.f32 %v6068, 5.0
        %v6073 = vmul.f32 %v6069, 5.0
        %v6074 = vmul.f32 %v6070, 5.0
        %v6075 = vsub.f32 %v439, %v6071
        %v6076 = vsub.f32 %v440, %v6072
        %v6077 = vsub.f32 %v441, %v6073
        %v6078 = vsub.f32 %v442, %v6074
        %vm6079 = vcmp.lt.f32.partialorder %v6067, 3.5
        %vm6080 = vcmp.lt.f32.partialorder %v6068, 3.5
        %vm6081 = vcmp.lt.f32.partialorder %v6069, 3.5
        %vm6082 = vcmp.lt.f32.partialorder %v6070, 3.5
        %vm6083 = vcmp.lt.f32.partialorder %v6075, 3.5
        %vm6084 = vcmp.lt.f32.partialorder %v6076, 3.5
        %vm6085 = vcmp.lt.f32.partialorder %v6077, 3.5
        %vm6086 = vcmp.lt.f32.partialorder %v6078, 3.5
        %vm6087 = vmand %vm6079, %vm6083
        %vm6088 = vmand %vm6080, %vm6084
        %vm6089 = vmand %vm6081, %vm6085
        %vm6090 = vmand %vm6082, %vm6086
        %v6091 = vsel %vm6087, 1.0, 0.0
        %v6092 = vsel %vm6088, 1.0, 0.0
        %v6093 = vsel %vm6089, 1.0, 0.0
        %v6094 = vsel %vm6090, 1.0, 0.0
        %v6095 = vld [vmem:[#allocation2] sm:$0xff]
        %v6096 = vld [vmem:[#allocation2 + $0x8] sm:$0xff]
        %v6097 = vld [vmem:[#allocation2 + $0x10] sm:$0xff]
        %v6098 = vld [vmem:[#allocation2 + $0x18] sm:$0x1]
        %v6099 = vpack.c.bf16 %v6096, %v6095
        %v6100 = vpack.c.bf16 %v6098, %v6097
        %v6101 = vld [vmem:[#allocation2 + $0x1] sm:$0xff]
        %v6102 = vld [vmem:[#allocation2 + $0x9] sm:$0xff]
        %v6103 = vld [vmem:[#allocation2 + $0x11] sm:$0xff]
        %v6104 = vld [vmem:[#allocation2 + $0x19] sm:$0x1]
        %v6105 = vpack.c.bf16 %v6102, %v6101
        %v6106 = vpack.c.bf16 %v6104, %v6103
        %v6107 = vld [vmem:[#allocation2 + $0x5] sm:$0xff]
        %v6108 = vld [vmem:[#allocation2 + $0xd] sm:$0xff]
        %v6109 = vld [vmem:[#allocation2 + $0x15] sm:$0xff]
        %v6110 = vld [vmem:[#allocation2 + $0x1d] sm:$0x1]
        %v6111 = vpack.c.bf16 %v6108, %v6107
        %v6112 = vpack.c.bf16 %v6110, %v6109
        %v6113 = vld [vmem:[#allocation2 + $0x6] sm:$0xff]
        %v6114 = vld [vmem:[#allocation2 + $0xe] sm:$0xff]
        %v6115 = vld [vmem:[#allocation2 + $0x16] sm:$0xff]
        %v6116 = vld [vmem:[#allocation2 + $0x1e] sm:$0x1]
        %v6117 = vpack.c.bf16 %v6114, %v6113
        %v6118 = vpack.c.bf16 %v6116, %v6115
        %s6119 = scalar_lea.vmem [#allocation4], 1536
        %v6120 = vld [vmem:[%s6119] sm:$0xf]
        %v6121 = vld [vmem:[%s6119 + $0x4] sm:$0xf]
        %v6122 = vld [vmem:[%s6119 + $0x8] sm:$0xf]
        %v6123 = vld [vmem:[%s6119 + $0xc] sm:$0xf]
        %v6124 = vld [vmem:[%s6119 + $0x10] sm:$0xf]
        %v6125 = vld [vmem:[%s6119 + $0x14] sm:$0xf]
        %v6126 = vld [vmem:[%s6119 + $0x18] sm:$0xf]
        %v6127 = vld [vmem:[%s6119 + $0x1c] sm:$0xf]
        %v6128 = vld [vmem:[%s6119 + $0x20] sm:$0xf]
        %v6129 = vld [vmem:[%s6119 + $0x24] sm:$0xf]
        %v6130 = vld [vmem:[%s6119 + $0x28] sm:$0xf]
        %v6131 = vld [vmem:[%s6119 + $0x2c] sm:$0xf]
        %v6132 = vld [vmem:[%s6119 + $0x30] sm:$0xf]
        %v6133 = vld [vmem:[%s6119 + $0x34] sm:$0xf]
        %v6134 = vld [vmem:[%s6119 + $0x38] sm:$0xf]
        %v6135 = vld [vmem:[%s6119 + $0x3c] sm:$0xf]
        %v6136 = vld [vmem:[%s6119 + $0x40] sm:$0xf]
        %v6137 = vld [vmem:[%s6119 + $0x44] sm:$0xf]
        %v6138 = vld [vmem:[%s6119 + $0x48] sm:$0xf]
        %v6139 = vld [vmem:[%s6119 + $0x4c] sm:$0xf]
        %v6140 = vld [vmem:[%s6119 + $0x50] sm:$0xf]
        %v6141 = vld [vmem:[%s6119 + $0x54] sm:$0xf]
        %v6142 = vld [vmem:[%s6119 + $0x58] sm:$0xf]
        %v6143 = vld [vmem:[%s6119 + $0x5c] sm:$0xf]
        %v6144 = vld [vmem:[%s6119 + $0x60] sm:$0xf]
        %v6145 = vld [vmem:[%s6119 + $0x64] sm:$0xf]
        %v6146 = vld [vmem:[%s6119 + $0x68] sm:$0xf]
        %v6147 = vld [vmem:[%s6119 + $0x6c] sm:$0xf]
        %v6148 = vld [vmem:[%s6119 + $0x70] sm:$0xf]
        %v6149 = vld [vmem:[%s6119 + $0x74] sm:$0xf]
        %v6150 = vld [vmem:[%s6119 + $0x78] sm:$0xf]
        %v6151 = vld [vmem:[%s6119 + $0x7c] sm:$0xf]
        %v6152 = vld [vmem:[%s6119 + $0x80] sm:$0xf]
        %v6153 = vld [vmem:[%s6119 + $0x84] sm:$0xf]
        %v6154 = vld [vmem:[%s6119 + $0x88] sm:$0xf]
        %v6155 = vld [vmem:[%s6119 + $0x8c] sm:$0xf]
        %v6156 = vld [vmem:[%s6119 + $0x90] sm:$0xf]
        %v6157 = vld [vmem:[%s6119 + $0x94] sm:$0xf]
        %v6158 = vld [vmem:[%s6119 + $0x98] sm:$0xf]
        %v6159 = vld [vmem:[%s6119 + $0x9c] sm:$0xf]
        %v6160 = vld [vmem:[%s6119 + $0xa0] sm:$0xf]
        %v6161 = vld [vmem:[%s6119 + $0xa4] sm:$0xf]
        %v6162 = vld [vmem:[%s6119 + $0xa8] sm:$0xf]
        %v6163 = vld [vmem:[%s6119 + $0xac] sm:$0xf]
        %v6164 = vld [vmem:[%s6119 + $0xb0] sm:$0xf]
        %v6165 = vld [vmem:[%s6119 + $0xb4] sm:$0xf]
        %v6166 = vld [vmem:[%s6119 + $0xb8] sm:$0xf]
        %v6167 = vld [vmem:[%s6119 + $0xbc] sm:$0xf]
        %v6168 = vld [vmem:[%s6119 + $0xc0] sm:$0xf]
        %v6169 = vld [vmem:[%s6119 + $0xc4] sm:$0xf]
        %v6170 = vld [vmem:[%s6119 + $0xc8] sm:$0xf]
        %v6171 = vld [vmem:[%s6119 + $0xcc] sm:$0xf]
        %v6172 = vld [vmem:[%s6119 + $0xd0] sm:$0xf]
        %v6173 = vld [vmem:[%s6119 + $0xd4] sm:$0xf]
        %v6174 = vld [vmem:[%s6119 + $0xd8] sm:$0xf]
        %v6175 = vld [vmem:[%s6119 + $0xdc] sm:$0xf]
        %v6176 = vld [vmem:[%s6119 + $0xe0] sm:$0xf]
        %v6177 = vld [vmem:[%s6119 + $0xe4] sm:$0xf]
        %v6178 = vld [vmem:[%s6119 + $0xe8] sm:$0xf]
        %v6179 = vld [vmem:[%s6119 + $0xec] sm:$0xf]
        %v6180 = vld [vmem:[%s6119 + $0xf0] sm:$0xf]
        %v6181 = vld [vmem:[%s6119 + $0xf4] sm:$0xf]
        %v6182 = vld [vmem:[%s6119 + $0xf8] sm:$0xf]
        %v6183 = vld [vmem:[%s6119 + $0xfc] sm:$0xf]
        %s6184 = scalar_lea.vmem [#allocation6], 6
        %v6185 = vld [vmem:[%s6184] sm:$0x1]
        %v6187 = vlaneseq
        %v6188 = vshrl.u32 %v6187, 7
        %v6189 = vsub.s32 0, %v6188
        %v6190 = vrot.slane %v6185, %v6189
        %v6256 = vunpack.c.l.b16 %v6120
        %v6257 = vunpack.c.l.b16 %v6121
        %v6258 = vunpack.c.l.b16 %v6122
        %v6259 = vunpack.c.l.b16 %v6123
        %v6260 = vunpack.c.l.b16 %v6124
        %v6261 = vunpack.c.l.b16 %v6125
        %v6262 = vunpack.c.l.b16 %v6126
        %v6263 = vunpack.c.l.b16 %v6127
        %v6264 = vunpack.c.l.b16 %v6128
        %v6265 = vunpack.c.l.b16 %v6129
        %v6266 = vunpack.c.l.b16 %v6130
        %v6267 = vunpack.c.l.b16 %v6131
        %v6268 = vunpack.c.l.b16 %v6132
        %v6269 = vunpack.c.l.b16 %v6133
        %v6270 = vunpack.c.l.b16 %v6134
        %v6271 = vunpack.c.l.b16 %v6135
        %v6272 = vunpack.c.l.b16 %v6136
        %v6273 = vunpack.c.l.b16 %v6137
        %v6274 = vunpack.c.l.b16 %v6138
        %v6275 = vunpack.c.l.b16 %v6139
        %v6276 = vunpack.c.l.b16 %v6140
        %v6277 = vunpack.c.l.b16 %v6141
        %v6278 = vunpack.c.l.b16 %v6142
        %v6279 = vunpack.c.l.b16 %v6143
        %v6280 = vunpack.c.l.b16 %v6144
        %v6281 = vunpack.c.l.b16 %v6145
        %v6282 = vunpack.c.l.b16 %v6146
        %v6283 = vunpack.c.l.b16 %v6147
        %v6284 = vunpack.c.l.b16 %v6148
        %v6285 = vunpack.c.l.b16 %v6149
        %v6286 = vunpack.c.l.b16 %v6150
        %v6287 = vunpack.c.l.b16 %v6151
        %v6288 = vunpack.c.l.b16 %v6152
        %v6289 = vunpack.c.l.b16 %v6153
        %v6290 = vunpack.c.l.b16 %v6154
        %v6291 = vunpack.c.l.b16 %v6155
        %v6292 = vunpack.c.l.b16 %v6156
        %v6293 = vunpack.c.l.b16 %v6157
        %v6294 = vunpack.c.l.b16 %v6158
        %v6295 = vunpack.c.l.b16 %v6159
        %v6296 = vunpack.c.l.b16 %v6160
        %v6297 = vunpack.c.l.b16 %v6161
        %v6298 = vunpack.c.l.b16 %v6162
        %v6299 = vunpack.c.l.b16 %v6163
        %v6300 = vunpack.c.l.b16 %v6164
        %v6301 = vunpack.c.l.b16 %v6165
        %v6302 = vunpack.c.l.b16 %v6166
        %v6303 = vunpack.c.l.b16 %v6167
        %v6304 = vunpack.c.l.b16 %v6168
        %v6305 = vunpack.c.l.b16 %v6169
        %v6306 = vunpack.c.l.b16 %v6170
        %v6307 = vunpack.c.l.b16 %v6171
        %v6308 = vunpack.c.l.b16 %v6172
        %v6309 = vunpack.c.l.b16 %v6173
        %v6310 = vunpack.c.l.b16 %v6174
        %v6311 = vunpack.c.l.b16 %v6175
        %v6312 = vunpack.c.l.b16 %v6176
        %v6313 = vunpack.c.l.b16 %v6177
        %v6314 = vunpack.c.l.b16 %v6178
        %v6315 = vunpack.c.l.b16 %v6179
        %v6316 = vunpack.c.l.b16 %v6180
        %v6317 = vunpack.c.l.b16 %v6181
        %v6318 = vunpack.c.l.b16 %v6182
        %v6319 = vunpack.c.l.b16 %v6183
        %v6320 = vpack.c.b16 %v6257, %v6256
        %v6321 = vpack.c.b16 %v6259, %v6258
        %v6322 = vpack.c.b16 %v6261, %v6260
        %v6323 = vpack.c.b16 %v6263, %v6262
        %v6324 = vpack.c.b16 %v6265, %v6264
        %v6325 = vpack.c.b16 %v6267, %v6266
        %v6326 = vpack.c.b16 %v6269, %v6268
        %v6327 = vpack.c.b16 %v6271, %v6270
        %v6328 = vpack.c.b16 %v6273, %v6272
        %v6329 = vpack.c.b16 %v6275, %v6274
        %v6330 = vpack.c.b16 %v6277, %v6276
        %v6331 = vpack.c.b16 %v6279, %v6278
        %v6332 = vpack.c.b16 %v6281, %v6280
        %v6333 = vpack.c.b16 %v6283, %v6282
        %v6334 = vpack.c.b16 %v6285, %v6284
        %v6335 = vpack.c.b16 %v6287, %v6286
        %v6336 = vpack.c.b16 %v6289, %v6288
        %v6337 = vpack.c.b16 %v6291, %v6290
        %v6338 = vpack.c.b16 %v6293, %v6292
        %v6339 = vpack.c.b16 %v6295, %v6294
        %v6340 = vpack.c.b16 %v6297, %v6296
        %v6341 = vpack.c.b16 %v6299, %v6298
        %v6342 = vpack.c.b16 %v6301, %v6300
        %v6343 = vpack.c.b16 %v6303, %v6302
        %v6344 = vpack.c.b16 %v6305, %v6304
        %v6345 = vpack.c.b16 %v6307, %v6306
        %v6346 = vpack.c.b16 %v6309, %v6308
        %v6347 = vpack.c.b16 %v6311, %v6310
        %v6348 = vpack.c.b16 %v6313, %v6312
        %v6349 = vpack.c.b16 %v6315, %v6314
        %v6350 = vpack.c.b16 %v6317, %v6316
        %v6351 = vpack.c.b16 %v6319, %v6318
        %6384 = vmatprep.subr.bf16.mxu0 0
        %6385 = vmatpush1.bf16.msra.mxu0 %v6320
        %6386 = vmatprep.subr.bf16.mxu0 0
        %6387 = vmatpush1.bf16.msra.mxu0 %v6321
        %6388 = vmatprep.subr.bf16.mxu0 0
        %6389 = vmatpush1.bf16.msra.mxu0 %v6322
        %6390 = vmatprep.subr.bf16.mxu0 0
        %6391 = vmatpush1.bf16.msra.mxu0 %v6323
        %6392 = vmatprep.subr.bf16.mxu0 0
        %6393 = vmatpush1.bf16.msra.mxu0 %v6324
        %6394 = vmatprep.subr.bf16.mxu0 0
        %6395 = vmatpush1.bf16.msra.mxu0 %v6325
        %6396 = vmatprep.subr.bf16.mxu0 0
        %6397 = vmatpush1.bf16.msra.mxu0 %v6326
        %6398 = vmatprep.subr.bf16.mxu0 0
        %6399 = vmatpush1.bf16.msra.mxu0 %v6327
        %6400 = vmatprep.subr.bf16.mxu0 0
        %6401 = vmatpush1.bf16.msra.mxu0 %v6328
        %6402 = vmatprep.subr.bf16.mxu0 0
        %6403 = vmatpush1.bf16.msra.mxu0 %v6329
        %6404 = vmatprep.subr.bf16.mxu0 0
        %6405 = vmatpush1.bf16.msra.mxu0 %v6330
        %6406 = vmatprep.subr.bf16.mxu0 0
        %6407 = vmatpush1.bf16.msra.mxu0 %v6331
        %6408 = vmatprep.subr.bf16.mxu0 0
        %6409 = vmatpush1.bf16.msra.mxu0 %v6332
        %6410 = vmatprep.subr.bf16.mxu0 0
        %6411 = vmatpush1.bf16.msra.mxu0 %v6333
        %6412 = vmatprep.subr.bf16.mxu0 0
        %6413 = vmatpush1.bf16.msra.mxu0 %v6334
        %6414 = vmatprep.subr.bf16.mxu0 0
        %6415 = vmatpush1.bf16.msra.mxu0 %v6335
        %6416 = vmatprep.mubr.bf16.mxu0 %v6105
        %6417 = vmatmul.mubr.bf16.gmra.mrb[0].mxu0 %v6099
        %v6418 = vpop.f32.mrb[0].mxu0
        %v6419 = vadd.f32 %v6190, %v6418
        %v6420 = vpop.f32.mrb[0].mxu0
        %v6421 = vpop.f32.mrb[0].mxu0
        %v6422 = vadd.f32 %v6190, %v6421
        %v6423 = vpop.f32.mrb[0].mxu0
        %6424 = vmatprep.mubr.bf16.mxu0 %v6106
        %6425 = vmatmul.mubr.bf16.gmra.mrb[0].mxu0 %v6100
        %v6426 = vpop.f32.mrb[0].mxu0
        %v6427 = vadd.f32 %v6190, %v6426
        %v6428 = vpop.f32.mrb[0].mxu0
        %v6429 = vpop.f32.mrb[0].mxu0
        %v6430 = vadd.f32 %v6190, %v6429
        %v6431 = vpop.f32.mrb[0].mxu0
        %6432 = vdwg.mxu0
        %6433 = vmatprep.subr.bf16.mxu0 0
        %6434 = vmatpush1.bf16.msra.mxu0 %v6336
        %6435 = vmatprep.subr.bf16.mxu0 0
        %6436 = vmatpush1.bf16.msra.mxu0 %v6337
        %6437 = vmatprep.subr.bf16.mxu0 0
        %6438 = vmatpush1.bf16.msra.mxu0 %v6338
        %6439 = vmatprep.subr.bf16.mxu0 0
        %6440 = vmatpush1.bf16.msra.mxu0 %v6339
        %6441 = vmatprep.subr.bf16.mxu0 0
        %6442 = vmatpush1.bf16.msra.mxu0 %v6340
        %6443 = vmatprep.subr.bf16.mxu0 0
        %6444 = vmatpush1.bf16.msra.mxu0 %v6341
        %6445 = vmatprep.subr.bf16.mxu0 0
        %6446 = vmatpush1.bf16.msra.mxu0 %v6342
        %6447 = vmatprep.subr.bf16.mxu0 0
        %6448 = vmatpush1.bf16.msra.mxu0 %v6343
        %6449 = vmatprep.subr.bf16.mxu0 0
        %6450 = vmatpush1.bf16.msra.mxu0 %v6344
        %6451 = vmatprep.subr.bf16.mxu0 0
        %6452 = vmatpush1.bf16.msra.mxu0 %v6345
        %6453 = vmatprep.subr.bf16.mxu0 0
        %6454 = vmatpush1.bf16.msra.mxu0 %v6346
        %6455 = vmatprep.subr.bf16.mxu0 0
        %6456 = vmatpush1.bf16.msra.mxu0 %v6347
        %6457 = vmatprep.subr.bf16.mxu0 0
        %6458 = vmatpush1.bf16.msra.mxu0 %v6348
        %6459 = vmatprep.subr.bf16.mxu0 0
        %6460 = vmatpush1.bf16.msra.mxu0 %v6349
        %6461 = vmatprep.subr.bf16.mxu0 0
        %6462 = vmatpush1.bf16.msra.mxu0 %v6350
        %6463 = vmatprep.subr.bf16.mxu0 0
        %6464 = vmatpush1.bf16.msra.mxu0 %v6351
        %6465 = vmatprep.mubr.bf16.mxu0 %v6117
        %6466 = vmatmul.mubr.bf16.gmra.mrb[0].mxu0 %v6111
        %v6467 = vpop.f32.mrb[0].mxu0
        %v6468 = vadd.f32 %v6419, %v6467
        %v6469 = vpop.f32.mrb[0].mxu0
        %v6470 = vpop.f32.mrb[0].mxu0
        %v6471 = vadd.f32 %v6422, %v6470
        %v6472 = vpop.f32.mrb[0].mxu0
        %6473 = vmatprep.mubr.bf16.mxu0 %v6118
        %6474 = vmatmul.mubr.bf16.gmra.mrb[0].mxu0 %v6112
        %v6475 = vpop.f32.mrb[0].mxu0
        %v6476 = vadd.f32 %v6427, %v6475
        %v6477 = vpop.f32.mrb[0].mxu0
        %v6478 = vpop.f32.mrb[0].mxu0
        %v6479 = vadd.f32 %v6430, %v6478
        %v6480 = vpop.f32.mrb[0].mxu0
        %6481 = vdwg.mxu0
        %v6482 = vmax.f32 %v6468, 0.0
        %v6483 = vmax.f32 %v6471, 0.0
        %v6484 = vmax.f32 %v6476, 0.0
        %v6485 = vmax.f32 %v6479, 0.0
        %v6486 = vmul.f32 %v6482, %v6091
        %v6487 = vmul.f32 %v6483, %v6092
        %v6488 = vmul.f32 %v6484, %v6093
        %v6489 = vmul.f32 %v6485, %v6094
        %v6490 = vadd.f32 %v6095, %v6486
        %v6491 = vadd.f32 %v6096, %v6487
        %v6492 = vadd.f32 %v6097, %v6488
        %v6493 = vadd.f32 %v6098, %v6489
        %6494 = vst [vmem:[#allocation2] sm:$0xff] %v6490
        %6495 = vst [vmem:[#allocation2 + $0x8] sm:$0xff] %v6491
        %6496 = vst [vmem:[#allocation2 + $0x10] sm:$0xff] %v6492
        %6497 = vst [vmem:[#allocation2 + $0x18] sm:$0x1] %v6493
        %v6498 = vld [vmem:[#allocation2] sm:$0xff]
        %v6499 = vld [vmem:[#allocation2 + $0x8] sm:$0xff]
        %v6500 = vld [vmem:[#allocation2 + $0x10] sm:$0xff]
        %v6501 = vld [vmem:[#allocation2 + $0x18] sm:$0x1]
        %v6502 = vpack.c.bf16 %v6499, %v6498
        %v6503 = vpack.c.bf16 %v6501, %v6500
        %v6504 = vld [vmem:[#allocation2 + $0x1] sm:$0xff]
        %v6505 = vld [vmem:[#allocation2 + $0x9] sm:$0xff]
        %v6506 = vld [vmem:[#allocation2 + $0x11] sm:$0xff]
        %v6507 = vld [vmem:[#allocation2 + $0x19] sm:$0x1]
        %v6508 = vpack.c.bf16 %v6505, %v6504
        %v6509 = vpack.c.bf16 %v6507, %v6506
        %v6510 = vld [vmem:[#allocation2 + $0x5] sm:$0xff]
        %v6511 = vld [vmem:[#allocation2 + $0xd] sm:$0xff]
        %v6512 = vld [vmem:[#allocation2 + $0x15] sm:$0xff]
        %v6513 = vld [vmem:[#allocation2 + $0x1d] sm:$0x1]
        %v6514 = vpack.c.bf16 %v6511, %v6510
        %v6515 = vpack.c.bf16 %v6513, %v6512
        %v6516 = vld [vmem:[#allocation2 + $0x6] sm:$0xff]
        %v6517 = vld [vmem:[#allocation2 + $0xe] sm:$0xff]
        %v6518 = vld [vmem:[#allocation2 + $0x16] sm:$0xff]
        %v6519 = vld [vmem:[#allocation2 + $0x1e] sm:$0x1]
        %v6520 = vpack.c.bf16 %v6517, %v6516
        %v6521 = vpack.c.bf16 %v6519, %v6518
        %s6522 = scalar_lea.vmem [#allocation4], 1792
        %v6523 = vld [vmem:[%s6522] sm:$0xf]
        %v6524 = vld [vmem:[%s6522 + $0x4] sm:$0xf]
        %v6525 = vld [vmem:[%s6522 + $0x8] sm:$0xf]
        %v6526 = vld [vmem:[%s6522 + $0xc] sm:$0xf]
        %v6527 = vld [vmem:[%s6522 + $0x10] sm:$0xf]
        %v6528 = vld [vmem:[%s6522 + $0x14] sm:$0xf]
        %v6529 = vld [vmem:[%s6522 + $0x18] sm:$0xf]
        %v6530 = vld [vmem:[%s6522 + $0x1c] sm:$0xf]
        %v6531 = vld [vmem:[%s6522 + $0x20] sm:$0xf]
        %v6532 = vld [vmem:[%s6522 + $0x24] sm:$0xf]
        %v6533 = vld [vmem:[%s6522 + $0x28] sm:$0xf]
        %v6534 = vld [vmem:[%s6522 + $0x2c] sm:$0xf]
        %v6535 = vld [vmem:[%s6522 + $0x30] sm:$0xf]
        %v6536 = vld [vmem:[%s6522 + $0x34] sm:$0xf]
        %v6537 = vld [vmem:[%s6522 + $0x38] sm:$0xf]
        %v6538 = vld [vmem:[%s6522 + $0x3c] sm:$0xf]
        %v6539 = vld [vmem:[%s6522 + $0x40] sm:$0xf]
        %v6540 = vld [vmem:[%s6522 + $0x44] sm:$0xf]
        %v6541 = vld [vmem:[%s6522 + $0x48] sm:$0xf]
        %v6542 = vld [vmem:[%s6522 + $0x4c] sm:$0xf]
        %v6543 = vld [vmem:[%s6522 + $0x50] sm:$0xf]
        %v6544 = vld [vmem:[%s6522 + $0x54] sm:$0xf]
        %v6545 = vld [vmem:[%s6522 + $0x58] sm:$0xf]
        %v6546 = vld [vmem:[%s6522 + $0x5c] sm:$0xf]
        %v6547 = vld [vmem:[%s6522 + $0x60] sm:$0xf]
        %v6548 = vld [vmem:[%s6522 + $0x64] sm:$0xf]
        %v6549 = vld [vmem:[%s6522 + $0x68] sm:$0xf]
        %v6550 = vld [vmem:[%s6522 + $0x6c] sm:$0xf]
        %v6551 = vld [vmem:[%s6522 + $0x70] sm:$0xf]
        %v6552 = vld [vmem:[%s6522 + $0x74] sm:$0xf]
        %v6553 = vld [vmem:[%s6522 + $0x78] sm:$0xf]
        %v6554 = vld [vmem:[%s6522 + $0x7c] sm:$0xf]
        %v6555 = vld [vmem:[%s6522 + $0x80] sm:$0xf]
        %v6556 = vld [vmem:[%s6522 + $0x84] sm:$0xf]
        %v6557 = vld [vmem:[%s6522 + $0x88] sm:$0xf]
        %v6558 = vld [vmem:[%s6522 + $0x8c] sm:$0xf]
        %v6559 = vld [vmem:[%s6522 + $0x90] sm:$0xf]
        %v6560 = vld [vmem:[%s6522 + $0x94] sm:$0xf]
        %v6561 = vld [vmem:[%s6522 + $0x98] sm:$0xf]
        %v6562 = vld [vmem:[%s6522 + $0x9c] sm:$0xf]
        %v6563 = vld [vmem:[%s6522 + $0xa0] sm:$0xf]
        %v6564 = vld [vmem:[%s6522 + $0xa4] sm:$0xf]
        %v6565 = vld [vmem:[%s6522 + $0xa8] sm:$0xf]
        %v6566 = vld [vmem:[%s6522 + $0xac] sm:$0xf]
        %v6567 = vld [vmem:[%s6522 + $0xb0] sm:$0xf]
        %v6568 = vld [vmem:[%s6522 + $0xb4] sm:$0xf]
        %v6569 = vld [vmem:[%s6522 + $0xb8] sm:$0xf]
        %v6570 = vld [vmem:[%s6522 + $0xbc] sm:$0xf]
        %v6571 = vld [vmem:[%s6522 + $0xc0] sm:$0xf]
        %v6572 = vld [vmem:[%s6522 + $0xc4] sm:$0xf]
        %v6573 = vld [vmem:[%s6522 + $0xc8] sm:$0xf]
        %v6574 = vld [vmem:[%s6522 + $0xcc] sm:$0xf]
        %v6575 = vld [vmem:[%s6522 + $0xd0] sm:$0xf]
        %v6576 = vld [vmem:[%s6522 + $0xd4] sm:$0xf]
        %v6577 = vld [vmem:[%s6522 + $0xd8] sm:$0xf]
        %v6578 = vld [vmem:[%s6522 + $0xdc] sm:$0xf]
        %v6579 = vld [vmem:[%s6522 + $0xe0] sm:$0xf]
        %v6580 = vld [vmem:[%s6522 + $0xe4] sm:$0xf]
        %v6581 = vld [vmem:[%s6522 + $0xe8] sm:$0xf]
        %v6582 = vld [vmem:[%s6522 + $0xec] sm:$0xf]
        %v6583 = vld [vmem:[%s6522 + $0xf0] sm:$0xf]
        %v6584 = vld [vmem:[%s6522 + $0xf4] sm:$0xf]
        %v6585 = vld [vmem:[%s6522 + $0xf8] sm:$0xf]
        %v6586 = vld [vmem:[%s6522 + $0xfc] sm:$0xf]
        %s6587 = scalar_lea.vmem [#allocation6], 7
        %v6588 = vld [vmem:[%s6587] sm:$0x1]
        %v6590 = vlaneseq
        %v6591 = vshrl.u32 %v6590, 7
        %v6592 = vsub.s32 0, %v6591
        %v6593 = vrot.slane %v6588, %v6592
        %v6659 = vunpack.c.l.b16 %v6523
        %v6660 = vunpack.c.l.b16 %v6524
        %v6661 = vunpack.c.l.b16 %v6525
        %v6662 = vunpack.c.l.b16 %v6526
        %v6663 = vunpack.c.l.b16 %v6527
        %v6664 = vunpack.c.l.b16 %v6528
        %v6665 = vunpack.c.l.b16 %v6529
        %v6666 = vunpack.c.l.b16 %v6530
        %v6667 = vunpack.c.l.b16 %v6531
        %v6668 = vunpack.c.l.b16 %v6532
        %v6669 = vunpack.c.l.b16 %v6533
        %v6670 = vunpack.c.l.b16 %v6534
        %v6671 = vunpack.c.l.b16 %v6535
        %v6672 = vunpack.c.l.b16 %v6536
        %v6673 = vunpack.c.l.b16 %v6537
        %v6674 = vunpack.c.l.b16 %v6538
        %v6675 = vunpack.c.l.b16 %v6539
        %v6676 = vunpack.c.l.b16 %v6540
        %v6677 = vunpack.c.l.b16 %v6541
        %v6678 = vunpack.c.l.b16 %v6542
        %v6679 = vunpack.c.l.b16 %v6543
        %v6680 = vunpack.c.l.b16 %v6544
        %v6681 = vunpack.c.l.b16 %v6545
        %v6682 = vunpack.c.l.b16 %v6546
        %v6683 = vunpack.c.l.b16 %v6547
        %v6684 = vunpack.c.l.b16 %v6548
        %v6685 = vunpack.c.l.b16 %v6549
        %v6686 = vunpack.c.l.b16 %v6550
        %v6687 = vunpack.c.l.b16 %v6551
        %v6688 = vunpack.c.l.b16 %v6552
        %v6689 = vunpack.c.l.b16 %v6553
        %v6690 = vunpack.c.l.b16 %v6554
        %v6691 = vunpack.c.l.b16 %v6555
        %v6692 = vunpack.c.l.b16 %v6556
        %v6693 = vunpack.c.l.b16 %v6557
        %v6694 = vunpack.c.l.b16 %v6558
        %v6695 = vunpack.c.l.b16 %v6559
        %v6696 = vunpack.c.l.b16 %v6560
        %v6697 = vunpack.c.l.b16 %v6561
        %v6698 = vunpack.c.l.b16 %v6562
        %v6699 = vunpack.c.l.b16 %v6563
        %v6700 = vunpack.c.l.b16 %v6564
        %v6701 = vunpack.c.l.b16 %v6565
        %v6702 = vunpack.c.l.b16 %v6566
        %v6703 = vunpack.c.l.b16 %v6567
        %v6704 = vunpack.c.l.b16 %v6568
        %v6705 = vunpack.c.l.b16 %v6569
        %v6706 = vunpack.c.l.b16 %v6570
        %v6707 = vunpack.c.l.b16 %v6571
        %v6708 = vunpack.c.l.b16 %v6572
        %v6709 = vunpack.c.l.b16 %v6573
        %v6710 = vunpack.c.l.b16 %v6574
        %v6711 = vunpack.c.l.b16 %v6575
        %v6712 = vunpack.c.l.b16 %v6576
        %v6713 = vunpack.c.l.b16 %v6577
        %v6714 = vunpack.c.l.b16 %v6578
        %v6715 = vunpack.c.l.b16 %v6579
        %v6716 = vunpack.c.l.b16 %v6580
        %v6717 = vunpack.c.l.b16 %v6581
        %v6718 = vunpack.c.l.b16 %v6582
        %v6719 = vunpack.c.l.b16 %v6583
        %v6720 = vunpack.c.l.b16 %v6584
        %v6721 = vunpack.c.l.b16 %v6585
        %v6722 = vunpack.c.l.b16 %v6586
        %v6723 = vpack.c.b16 %v6660, %v6659
        %v6724 = vpack.c.b16 %v6662, %v6661
        %v6725 = vpack.c.b16 %v6664, %v6663
        %v6726 = vpack.c.b16 %v6666, %v6665
        %v6727 = vpack.c.b16 %v6668, %v6667
        %v6728 = vpack.c.b16 %v6670, %v6669
        %v6729 = vpack.c.b16 %v6672, %v6671
        %v6730 = vpack.c.b16 %v6674, %v6673
        %v6731 = vpack.c.b16 %v6676, %v6675
        %v6732 = vpack.c.b16 %v6678, %v6677
        %v6733 = vpack.c.b16 %v6680, %v6679
        %v6734 = vpack.c.b16 %v6682, %v6681
        %v6735 = vpack.c.b16 %v6684, %v6683
        %v6736 = vpack.c.b16 %v6686, %v6685
        %v6737 = vpack.c.b16 %v6688, %v6687
        %v6738 = vpack.c.b16 %v6690, %v6689
        %v6739 = vpack.c.b16 %v6692, %v6691
        %v6740 = vpack.c.b16 %v6694, %v6693
        %v6741 = vpack.c.b16 %v6696, %v6695
        %v6742 = vpack.c.b16 %v6698, %v6697
        %v6743 = vpack.c.b16 %v6700, %v6699
        %v6744 = vpack.c.b16 %v6702, %v6701
        %v6745 = vpack.c.b16 %v6704, %v6703
        %v6746 = vpack.c.b16 %v6706, %v6705
        %v6747 = vpack.c.b16 %v6708, %v6707
        %v6748 = vpack.c.b16 %v6710, %v6709
        %v6749 = vpack.c.b16 %v6712, %v6711
        %v6750 = vpack.c.b16 %v6714, %v6713
        %v6751 = vpack.c.b16 %v6716, %v6715
        %v6752 = vpack.c.b16 %v6718, %v6717
        %v6753 = vpack.c.b16 %v6720, %v6719
        %v6754 = vpack.c.b16 %v6722, %v6721
        %6787 = vmatprep.subr.bf16.mxu0 0
        %6788 = vmatpush1.bf16.msra.mxu0 %v6723
        %6789 = vmatprep.subr.bf16.mxu0 0
        %6790 = vmatpush1.bf16.msra.mxu0 %v6724
        %6791 = vmatprep.subr.bf16.mxu0 0
        %6792 = vmatpush1.bf16.msra.mxu0 %v6725
        %6793 = vmatprep.subr.bf16.mxu0 0
        %6794 = vmatpush1.bf16.msra.mxu0 %v6726
        %6795 = vmatprep.subr.bf16.mxu0 0
        %6796 = vmatpush1.bf16.msra.mxu0 %v6727
        %6797 = vmatprep.subr.bf16.mxu0 0
        %6798 = vmatpush1.bf16.msra.mxu0 %v6728
        %6799 = vmatprep.subr.bf16.mxu0 0
        %6800 = vmatpush1.bf16.msra.mxu0 %v6729
        %6801 = vmatprep.subr.bf16.mxu0 0
        %6802 = vmatpush1.bf16.msra.mxu0 %v6730
        %6803 = vmatprep.subr.bf16.mxu0 0
        %6804 = vmatpush1.bf16.msra.mxu0 %v6731
        %6805 = vmatprep.subr.bf16.mxu0 0
        %6806 = vmatpush1.bf16.msra.mxu0 %v6732
        %6807 = vmatprep.subr.bf16.mxu0 0
        %6808 = vmatpush1.bf16.msra.mxu0 %v6733
        %6809 = vmatprep.subr.bf16.mxu0 0
        %6810 = vmatpush1.bf16.msra.mxu0 %v6734
        %6811 = vmatprep.subr.bf16.mxu0 0
        %6812 = vmatpush1.bf16.msra.mxu0 %v6735
        %6813 = vmatprep.subr.bf16.mxu0 0
        %6814 = vmatpush1.bf16.msra.mxu0 %v6736
        %6815 = vmatprep.subr.bf16.mxu0 0
        %6816 = vmatpush1.bf16.msra.mxu0 %v6737
        %6817 = vmatprep.subr.bf16.mxu0 0
        %6818 = vmatpush1.bf16.msra.mxu0 %v6738
        %6819 = vmatprep.mubr.bf16.mxu0 %v6508
        %6820 = vmatmul.mubr.bf16.gmra.mrb[0].mxu0 %v6502
        %v6821 = vpop.f32.mrb[0].mxu0
        %v6822 = vadd.f32 %v6593, %v6821
        %v6823 = vpop.f32.mrb[0].mxu0
        %v6824 = vpop.f32.mrb[0].mxu0
        %v6825 = vadd.f32 %v6593, %v6824
        %v6826 = vpop.f32.mrb[0].mxu0
        %6827 = vmatprep.mubr.bf16.mxu0 %v6509
        %6828 = vmatmul.mubr.bf16.gmra.mrb[0].mxu0 %v6503
        %v6829 = vpop.f32.mrb[0].mxu0
        %v6830 = vadd.f32 %v6593, %v6829
        %v6831 = vpop.f32.mrb[0].mxu0
        %v6832 = vpop.f32.mrb[0].mxu0
        %v6833 = vadd.f32 %v6593, %v6832
        %v6834 = vpop.f32.mrb[0].mxu0
        %6835 = vdwg.mxu0
        %6836 = vmatprep.subr.bf16.mxu0 0
        %6837 = vmatpush1.bf16.msra.mxu0 %v6739
        %6838 = vmatprep.subr.bf16.mxu0 0
        %6839 = vmatpush1.bf16.msra.mxu0 %v6740
        %6840 = vmatprep.subr.bf16.mxu0 0
        %6841 = vmatpush1.bf16.msra.mxu0 %v6741
        %6842 = vmatprep.subr.bf16.mxu0 0
        %6843 = vmatpush1.bf16.msra.mxu0 %v6742
        %6844 = vmatprep.subr.bf16.mxu0 0
        %6845 = vmatpush1.bf16.msra.mxu0 %v6743
        %6846 = vmatprep.subr.bf16.mxu0 0
        %6847 = vmatpush1.bf16.msra.mxu0 %v6744
        %6848 = vmatprep.subr.bf16.mxu0 0
        %6849 = vmatpush1.bf16.msra.mxu0 %v6745
        %6850 = vmatprep.subr.bf16.mxu0 0
        %6851 = vmatpush1.bf16.msra.mxu0 %v6746
        %6852 = vmatprep.subr.bf16.mxu0 0
        %6853 = vmatpush1.bf16.msra.mxu0 %v6747
        %6854 = vmatprep.subr.bf16.mxu0 0
        %6855 = vmatpush1.bf16.msra.mxu0 %v6748
        %6856 = vmatprep.subr.bf16.mxu0 0
        %6857 = vmatpush1.bf16.msra.mxu0 %v6749
        %6858 = vmatprep.subr.bf16.mxu0 0
        %6859 = vmatpush1.bf16.msra.mxu0 %v6750
        %6860 = vmatprep.subr.bf16.mxu0 0
        %6861 = vmatpush1.bf16.msra.mxu0 %v6751
        %6862 = vmatprep.subr.bf16.mxu0 0
        %6863 = vmatpush1.bf16.msra.mxu0 %v6752
        %6864 = vmatprep.subr.bf16.mxu0 0
        %6865 = vmatpush1.bf16.msra.mxu0 %v6753
        %6866 = vmatprep.subr.bf16.mxu0 0
        %6867 = vmatpush1.bf16.msra.mxu0 %v6754
        %6868 = vmatprep.mubr.bf16.mxu0 %v6520
        %6869 = vmatmul.mubr.bf16.gmra.mrb[0].mxu0 %v6514
        %v6870 = vpop.f32.mrb[0].mxu0
        %v6871 = vadd.f32 %v6822, %v6870
        %v6872 = vpop.f32.mrb[0].mxu0
        %v6873 = vpop.f32.mrb[0].mxu0
        %v6874 = vadd.f32 %v6825, %v6873
        %v6875 = vpop.f32.mrb[0].mxu0
        %6876 = vmatprep.mubr.bf16.mxu0 %v6521
        %6877 = vmatmul.mubr.bf16.gmra.mrb[0].mxu0 %v6515
        %v6878 = vpop.f32.mrb[0].mxu0
        %v6879 = vadd.f32 %v6830, %v6878
        %v6880 = vpop.f32.mrb[0].mxu0
        %v6881 = vpop.f32.mrb[0].mxu0
        %v6882 = vadd.f32 %v6833, %v6881
        %v6883 = vpop.f32.mrb[0].mxu0
        %6884 = vdwg.mxu0
        %v6885 = vmax.f32 %v6871, 0.0
        %v6886 = vmax.f32 %v6874, 0.0
        %v6887 = vmax.f32 %v6879, 0.0
        %v6888 = vmax.f32 %v6882, 0.0
        %v6889 = vmul.f32 %v6885, %v6091
        %v6890 = vmul.f32 %v6886, %v6092
        %v6891 = vmul.f32 %v6887, %v6093
        %v6892 = vmul.f32 %v6888, %v6094
        %v6893 = vadd.f32 %v6498, %v6889
        %v6894 = vadd.f32 %v6499, %v6890
        %v6895 = vadd.f32 %v6500, %v6891
        %v6896 = vadd.f32 %v6501, %v6892
        %6897 = vst [vmem:[#allocation2] sm:$0xff] %v6893
        %6898 = vst [vmem:[#allocation2 + $0x8] sm:$0xff] %v6894
        %6899 = vst [vmem:[#allocation2 + $0x10] sm:$0xff] %v6895
        %6900 = vst [vmem:[#allocation2 + $0x18] sm:$0x1] %v6896
        %v6901 = vld [vmem:[#allocation2] sm:$0xff]
        %v6902 = vld [vmem:[#allocation2 + $0x8] sm:$0xff]
        %v6903 = vld [vmem:[#allocation2 + $0x10] sm:$0xff]
        %v6904 = vld [vmem:[#allocation2 + $0x18] sm:$0x1]
        %v6905 = vpack.c.bf16 %v6902, %v6901
        %v6906 = vpack.c.bf16 %v6904, %v6903
        %v6907 = vld [vmem:[#allocation2 + $0x1] sm:$0xff]
        %v6908 = vld [vmem:[#allocation2 + $0x9] sm:$0xff]
        %v6909 = vld [vmem:[#allocation2 + $0x11] sm:$0xff]
        %v6910 = vld [vmem:[#allocation2 + $0x19] sm:$0x1]
        %v6911 = vpack.c.bf16 %v6908, %v6907
        %v6912 = vpack.c.bf16 %v6910, %v6909
        %v6913 = vld [vmem:[#allocation2 + $0x5] sm:$0xff]
        %v6914 = vld [vmem:[#allocation2 + $0xd] sm:$0xff]
        %v6915 = vld [vmem:[#allocation2 + $0x15] sm:$0xff]
        %v6916 = vld [vmem:[#allocation2 + $0x1d] sm:$0x1]
        %v6917 = vpack.c.bf16 %v6914, %v6913
        %v6918 = vpack.c.bf16 %v6916, %v6915
        %v6919 = vld [vmem:[#allocation2 + $0x6] sm:$0xff]
        %v6920 = vld [vmem:[#allocation2 + $0xe] sm:$0xff]
        %v6921 = vld [vmem:[#allocation2 + $0x16] sm:$0xff]
        %v6922 = vld [vmem:[#allocation2 + $0x1e] sm:$0x1]
        %v6923 = vpack.c.bf16 %v6920, %v6919
        %v6924 = vpack.c.bf16 %v6922, %v6921
        %s6925 = scalar_lea.vmem [#allocation4], 2048
        %v6926 = vld [vmem:[%s6925] sm:$0xf]
        %v6927 = vld [vmem:[%s6925 + $0x4] sm:$0xf]
        %v6928 = vld [vmem:[%s6925 + $0x8] sm:$0xf]
        %v6929 = vld [vmem:[%s6925 + $0xc] sm:$0xf]
        %v6930 = vld [vmem:[%s6925 + $0x10] sm:$0xf]
        %v6931 = vld [vmem:[%s6925 + $0x14] sm:$0xf]
        %v6932 = vld [vmem:[%s6925 + $0x18] sm:$0xf]
        %v6933 = vld [vmem:[%s6925 + $0x1c] sm:$0xf]
        %v6934 = vld [vmem:[%s6925 + $0x20] sm:$0xf]
        %v6935 = vld [vmem:[%s6925 + $0x24] sm:$0xf]
        %v6936 = vld [vmem:[%s6925 + $0x28] sm:$0xf]
        %v6937 = vld [vmem:[%s6925 + $0x2c] sm:$0xf]
        %v6938 = vld [vmem:[%s6925 + $0x30] sm:$0xf]
        %v6939 = vld [vmem:[%s6925 + $0x34] sm:$0xf]
        %v6940 = vld [vmem:[%s6925 + $0x38] sm:$0xf]
        %v6941 = vld [vmem:[%s6925 + $0x3c] sm:$0xf]
        %v6942 = vld [vmem:[%s6925 + $0x40] sm:$0xf]
        %v6943 = vld [vmem:[%s6925 + $0x44] sm:$0xf]
        %v6944 = vld [vmem:[%s6925 + $0x48] sm:$0xf]
        %v6945 = vld [vmem:[%s6925 + $0x4c] sm:$0xf]
        %v6946 = vld [vmem:[%s6925 + $0x50] sm:$0xf]
        %v6947 = vld [vmem:[%s6925 + $0x54] sm:$0xf]
        %v6948 = vld [vmem:[%s6925 + $0x58] sm:$0xf]
        %v6949 = vld [vmem:[%s6925 + $0x5c] sm:$0xf]
        %v6950 = vld [vmem:[%s6925 + $0x60] sm:$0xf]
        %v6951 = vld [vmem:[%s6925 + $0x64] sm:$0xf]
        %v6952 = vld [vmem:[%s6925 + $0x68] sm:$0xf]
        %v6953 = vld [vmem:[%s6925 + $0x6c] sm:$0xf]
        %v6954 = vld [vmem:[%s6925 + $0x70] sm:$0xf]
        %v6955 = vld [vmem:[%s6925 + $0x74] sm:$0xf]
        %v6956 = vld [vmem:[%s6925 + $0x78] sm:$0xf]
        %v6957 = vld [vmem:[%s6925 + $0x7c] sm:$0xf]
        %v6958 = vld [vmem:[%s6925 + $0x80] sm:$0xf]
        %v6959 = vld [vmem:[%s6925 + $0x84] sm:$0xf]
        %v6960 = vld [vmem:[%s6925 + $0x88] sm:$0xf]
        %v6961 = vld [vmem:[%s6925 + $0x8c] sm:$0xf]
        %v6962 = vld [vmem:[%s6925 + $0x90] sm:$0xf]
        %v6963 = vld [vmem:[%s6925 + $0x94] sm:$0xf]
        %v6964 = vld [vmem:[%s6925 + $0x98] sm:$0xf]
        %v6965 = vld [vmem:[%s6925 + $0x9c] sm:$0xf]
        %v6966 = vld [vmem:[%s6925 + $0xa0] sm:$0xf]
        %v6967 = vld [vmem:[%s6925 + $0xa4] sm:$0xf]
        %v6968 = vld [vmem:[%s6925 + $0xa8] sm:$0xf]
        %v6969 = vld [vmem:[%s6925 + $0xac] sm:$0xf]
        %v6970 = vld [vmem:[%s6925 + $0xb0] sm:$0xf]
        %v6971 = vld [vmem:[%s6925 + $0xb4] sm:$0xf]
        %v6972 = vld [vmem:[%s6925 + $0xb8] sm:$0xf]
        %v6973 = vld [vmem:[%s6925 + $0xbc] sm:$0xf]
        %v6974 = vld [vmem:[%s6925 + $0xc0] sm:$0xf]
        %v6975 = vld [vmem:[%s6925 + $0xc4] sm:$0xf]
        %v6976 = vld [vmem:[%s6925 + $0xc8] sm:$0xf]
        %v6977 = vld [vmem:[%s6925 + $0xcc] sm:$0xf]
        %v6978 = vld [vmem:[%s6925 + $0xd0] sm:$0xf]
        %v6979 = vld [vmem:[%s6925 + $0xd4] sm:$0xf]
        %v6980 = vld [vmem:[%s6925 + $0xd8] sm:$0xf]
        %v6981 = vld [vmem:[%s6925 + $0xdc] sm:$0xf]
        %v6982 = vld [vmem:[%s6925 + $0xe0] sm:$0xf]
        %v6983 = vld [vmem:[%s6925 + $0xe4] sm:$0xf]
        %v6984 = vld [vmem:[%s6925 + $0xe8] sm:$0xf]
        %v6985 = vld [vmem:[%s6925 + $0xec] sm:$0xf]
        %v6986 = vld [vmem:[%s6925 + $0xf0] sm:$0xf]
        %v6987 = vld [vmem:[%s6925 + $0xf4] sm:$0xf]
        %v6988 = vld [vmem:[%s6925 + $0xf8] sm:$0xf]
        %v6989 = vld [vmem:[%s6925 + $0xfc] sm:$0xf]
        %s6990 = scalar_lea.vmem [#allocation6], 8
        %v6991 = vld [vmem:[%s6990] sm:$0x1]
        %v6993 = vlaneseq
        %v6994 = vshrl.u32 %v6993, 7
        %v6995 = vsub.s32 0, %v6994
        %v6996 = vrot.slane %v6991, %v6995
        %v7062 = vunpack.c.l.b16 %v6926
        %v7063 = vunpack.c.l.b16 %v6927
        %v7064 = vunpack.c.l.b16 %v6928
        %v7065 = vunpack.c.l.b16 %v6929
        %v7066 = vunpack.c.l.b16 %v6930
        %v7067 = vunpack.c.l.b16 %v6931
        %v7068 = vunpack.c.l.b16 %v6932
        %v7069 = vunpack.c.l.b16 %v6933
        %v7070 = vunpack.c.l.b16 %v6934
        %v7071 = vunpack.c.l.b16 %v6935
        %v7072 = vunpack.c.l.b16 %v6936
        %v7073 = vunpack.c.l.b16 %v6937
        %v7074 = vunpack.c.l.b16 %v6938
        %v7075 = vunpack.c.l.b16 %v6939
        %v7076 = vunpack.c.l.b16 %v6940
        %v7077 = vunpack.c.l.b16 %v6941
        %v7078 = vunpack.c.l.b16 %v6942
        %v7079 = vunpack.c.l.b16 %v6943
        %v7080 = vunpack.c.l.b16 %v6944
        %v7081 = vunpack.c.l.b16 %v6945
        %v7082 = vunpack.c.l.b16 %v6946
        %v7083 = vunpack.c.l.b16 %v6947
        %v7084 = vunpack.c.l.b16 %v6948
        %v7085 = vunpack.c.l.b16 %v6949
        %v7086 = vunpack.c.l.b16 %v6950
        %v7087 = vunpack.c.l.b16 %v6951
        %v7088 = vunpack.c.l.b16 %v6952
        %v7089 = vunpack.c.l.b16 %v6953
        %v7090 = vunpack.c.l.b16 %v6954
        %v7091 = vunpack.c.l.b16 %v6955
        %v7092 = vunpack.c.l.b16 %v6956
        %v7093 = vunpack.c.l.b16 %v6957
        %v7094 = vunpack.c.l.b16 %v6958
        %v7095 = vunpack.c.l.b16 %v6959
        %v7096 = vunpack.c.l.b16 %v6960
        %v7097 = vunpack.c.l.b16 %v6961
        %v7098 = vunpack.c.l.b16 %v6962
        %v7099 = vunpack.c.l.b16 %v6963
        %v7100 = vunpack.c.l.b16 %v6964
        %v7101 = vunpack.c.l.b16 %v6965
        %v7102 = vunpack.c.l.b16 %v6966
        %v7103 = vunpack.c.l.b16 %v6967
        %v7104 = vunpack.c.l.b16 %v6968
        %v7105 = vunpack.c.l.b16 %v6969
        %v7106 = vunpack.c.l.b16 %v6970
        %v7107 = vunpack.c.l.b16 %v6971
        %v7108 = vunpack.c.l.b16 %v6972
        %v7109 = vunpack.c.l.b16 %v6973
        %v7110 = vunpack.c.l.b16 %v6974
        %v7111 = vunpack.c.l.b16 %v6975
        %v7112 = vunpack.c.l.b16 %v6976
        %v7113 = vunpack.c.l.b16 %v6977
        %v7114 = vunpack.c.l.b16 %v6978
        %v7115 = vunpack.c.l.b16 %v6979
        %v7116 = vunpack.c.l.b16 %v6980
        %v7117 = vunpack.c.l.b16 %v6981
        %v7118 = vunpack.c.l.b16 %v6982
        %v7119 = vunpack.c.l.b16 %v6983
        %v7120 = vunpack.c.l.b16 %v6984
        %v7121 = vunpack.c.l.b16 %v6985
        %v7122 = vunpack.c.l.b16 %v6986
        %v7123 = vunpack.c.l.b16 %v6987
        %v7124 = vunpack.c.l.b16 %v6988
        %v7125 = vunpack.c.l.b16 %v6989
        %v7126 = vpack.c.b16 %v7063, %v7062
        %v7127 = vpack.c.b16 %v7065, %v7064
        %v7128 = vpack.c.b16 %v7067, %v7066
        %v7129 = vpack.c.b16 %v7069, %v7068
        %v7130 = vpack.c.b16 %v7071, %v7070
        %v7131 = vpack.c.b16 %v7073, %v7072
        %v7132 = vpack.c.b16 %v7075, %v7074
        %v7133 = vpack.c.b16 %v7077, %v7076
        %v7134 = vpack.c.b16 %v7079, %v7078
        %v7135 = vpack.c.b16 %v7081, %v7080
        %v7136 = vpack.c.b16 %v7083, %v7082
        %v7137 = vpack.c.b16 %v7085, %v7084
        %v7138 = vpack.c.b16 %v7087, %v7086
        %v7139 = vpack.c.b16 %v7089, %v7088
        %v7140 = vpack.c.b16 %v7091, %v7090
        %v7141 = vpack.c.b16 %v7093, %v7092
        %v7142 = vpack.c.b16 %v7095, %v7094
        %v7143 = vpack.c.b16 %v7097, %v7096
        %v7144 = vpack.c.b16 %v7099, %v7098
        %v7145 = vpack.c.b16 %v7101, %v7100
        %v7146 = vpack.c.b16 %v7103, %v7102
        %v7147 = vpack.c.b16 %v7105, %v7104
        %v7148 = vpack.c.b16 %v7107, %v7106
        %v7149 = vpack.c.b16 %v7109, %v7108
        %v7150 = vpack.c.b16 %v7111, %v7110
        %v7151 = vpack.c.b16 %v7113, %v7112
        %v7152 = vpack.c.b16 %v7115, %v7114
        %v7153 = vpack.c.b16 %v7117, %v7116
        %v7154 = vpack.c.b16 %v7119, %v7118
        %v7155 = vpack.c.b16 %v7121, %v7120
        %v7156 = vpack.c.b16 %v7123, %v7122
        %v7157 = vpack.c.b16 %v7125, %v7124
        %7190 = vmatprep.subr.bf16.mxu0 0
        %7191 = vmatpush1.bf16.msra.mxu0 %v7126
        %7192 = vmatprep.subr.bf16.mxu0 0
        %7193 = vmatpush1.bf16.msra.mxu0 %v7127
        %7194 = vmatprep.subr.bf16.mxu0 0
        %7195 = vmatpush1.bf16.msra.mxu0 %v7128
        %7196 = vmatprep.subr.bf16.mxu0 0
        %7197 = vmatpush1.bf16.msra.mxu0 %v7129
        %7198 = vmatprep.subr.bf16.mxu0 0
        %7199 = vmatpush1.bf16.msra.mxu0 %v7130
        %7200 = vmatprep.subr.bf16.mxu0 0
        %7201 = vmatpush1.bf16.msra.mxu0 %v7131
        %7202 = vmatprep.subr.bf16.mxu0 0
        %7203 = vmatpush1.bf16.msra.mxu0 %v7132
        %7204 = vmatprep.subr.bf16.mxu0 0
        %7205 = vmatpush1.bf16.msra.mxu0 %v7133
        %7206 = vmatprep.subr.bf16.mxu0 0
        %7207 = vmatpush1.bf16.msra.mxu0 %v7134
        %7208 = vmatprep.subr.bf16.mxu0 0
        %7209 = vmatpush1.bf16.msra.mxu0 %v7135
        %7210 = vmatprep.subr.bf16.mxu0 0
        %7211 = vmatpush1.bf16.msra.mxu0 %v7136
        %7212 = vmatprep.subr.bf16.mxu0 0
        %7213 = vmatpush1.bf16.msra.mxu0 %v7137
        %7214 = vmatprep.subr.bf16.mxu0 0
        %7215 = vmatpush1.bf16.msra.mxu0 %v7138
        %7216 = vmatprep.subr.bf16.mxu0 0
        %7217 = vmatpush1.bf16.msra.mxu0 %v7139
        %7218 = vmatprep.subr.bf16.mxu0 0
        %7219 = vmatpush1.bf16.msra.mxu0 %v7140
        %7220 = vmatprep.subr.bf16.mxu0 0
        %7221 = vmatpush1.bf16.msra.mxu0 %v7141
        %7222 = vmatprep.mubr.bf16.mxu0 %v6911
        %7223 = vmatmul.mubr.bf16.gmra.mrb[0].mxu0 %v6905
        %v7224 = vpop.f32.mrb[0].mxu0
        %v7225 = vadd.f32 %v6996, %v7224
        %v7226 = vpop.f32.mrb[0].mxu0
        %v7227 = vpop.f32.mrb[0].mxu0
        %v7228 = vadd.f32 %v6996, %v7227
        %v7229 = vpop.f32.mrb[0].mxu0
        %7230 = vmatprep.mubr.bf16.mxu0 %v6912
        %7231 = vmatmul.mubr.bf16.gmra.mrb[0].mxu0 %v6906
        %v7232 = vpop.f32.mrb[0].mxu0
        %v7233 = vadd.f32 %v6996, %v7232
        %v7234 = vpop.f32.mrb[0].mxu0
        %v7235 = vpop.f32.mrb[0].mxu0
        %v7236 = vadd.f32 %v6996, %v7235
        %v7237 = vpop.f32.mrb[0].mxu0
        %7238 = vdwg.mxu0
        %7239 = vmatprep.subr.bf16.mxu0 0
        %7240 = vmatpush1.bf16.msra.mxu0 %v7142
        %7241 = vmatprep.subr.bf16.mxu0 0
        %7242 = vmatpush1.bf16.msra.mxu0 %v7143
        %7243 = vmatprep.subr.bf16.mxu0 0
        %7244 = vmatpush1.bf16.msra.mxu0 %v7144
        %7245 = vmatprep.subr.bf16.mxu0 0
        %7246 = vmatpush1.bf16.msra.mxu0 %v7145
        %7247 = vmatprep.subr.bf16.mxu0 0
        %7248 = vmatpush1.bf16.msra.mxu0 %v7146
        %7249 = vmatprep.subr.bf16.mxu0 0
        %7250 = vmatpush1.bf16.msra.mxu0 %v7147
        %7251 = vmatprep.subr.bf16.mxu0 0
        %7252 = vmatpush1.bf16.msra.mxu0 %v7148
        %7253 = vmatprep.subr.bf16.mxu0 0
        %7254 = vmatpush1.bf16.msra.mxu0 %v7149
        %7255 = vmatprep.subr.bf16.mxu0 0
        %7256 = vmatpush1.bf16.msra.mxu0 %v7150
        %7257 = vmatprep.subr.bf16.mxu0 0
        %7258 = vmatpush1.bf16.msra.mxu0 %v7151
        %7259 = vmatprep.subr.bf16.mxu0 0
        %7260 = vmatpush1.bf16.msra.mxu0 %v7152
        %7261 = vmatprep.subr.bf16.mxu0 0
        %7262 = vmatpush1.bf16.msra.mxu0 %v7153
        %7263 = vmatprep.subr.bf16.mxu0 0
        %7264 = vmatpush1.bf16.msra.mxu0 %v7154
        %7265 = vmatprep.subr.bf16.mxu0 0
        %7266 = vmatpush1.bf16.msra.mxu0 %v7155
        %7267 = vmatprep.subr.bf16.mxu0 0
        %7268 = vmatpush1.bf16.msra.mxu0 %v7156
        %7269 = vmatprep.subr.bf16.mxu0 0
        %7270 = vmatpush1.bf16.msra.mxu0 %v7157
        %7271 = vmatprep.mubr.bf16.mxu0 %v6923
        %7272 = vmatmul.mubr.bf16.gmra.mrb[0].mxu0 %v6917
        %v7273 = vpop.f32.mrb[0].mxu0
        %v7274 = vadd.f32 %v7225, %v7273
        %v7275 = vpop.f32.mrb[0].mxu0
        %v7276 = vpop.f32.mrb[0].mxu0
        %v7277 = vadd.f32 %v7228, %v7276
        %v7278 = vpop.f32.mrb[0].mxu0
        %7279 = vmatprep.mubr.bf16.mxu0 %v6924
        %7280 = vmatmul.mubr.bf16.gmra.mrb[0].mxu0 %v6918
        %v7281 = vpop.f32.mrb[0].mxu0
        %v7282 = vadd.f32 %v7233, %v7281
        %v7283 = vpop.f32.mrb[0].mxu0
        %v7284 = vpop.f32.mrb[0].mxu0
        %v7285 = vadd.f32 %v7236, %v7284
        %v7286 = vpop.f32.mrb[0].mxu0
        %7287 = vdwg.mxu0
        %v7288 = vmax.f32 %v7274, 0.0
        %v7289 = vmax.f32 %v7277, 0.0
        %v7290 = vmax.f32 %v7282, 0.0
        %v7291 = vmax.f32 %v7285, 0.0
        %v7292 = vmul.f32 %v7288, %v6091
        %v7293 = vmul.f32 %v7289, %v6092
        %v7294 = vmul.f32 %v7290, %v6093
        %v7295 = vmul.f32 %v7291, %v6094
        %v7296 = vadd.f32 %v6901, %v7292
        %v7297 = vadd.f32 %v6902, %v7293
        %v7298 = vadd.f32 %v6903, %v7294
        %v7299 = vadd.f32 %v6904, %v7295
        %7300 = vst [vmem:[#allocation2] sm:$0xff] %v7296
        %7301 = vst [vmem:[#allocation2 + $0x8] sm:$0xff] %v7297
        %7302 = vst [vmem:[#allocation2 + $0x10] sm:$0xff] %v7298
        %7303 = vst [vmem:[#allocation2 + $0x18] sm:$0x1] %v7299
        %v7304 = vld [vmem:[#allocation2] sm:$0xff]
        %v7305 = vld [vmem:[#allocation2 + $0x8] sm:$0xff]
        %v7306 = vld [vmem:[#allocation2 + $0x10] sm:$0xff]
        %v7307 = vld [vmem:[#allocation2 + $0x18] sm:$0x1]
        %v7308 = vpack.c.bf16 %v7305, %v7304
        %v7309 = vpack.c.bf16 %v7307, %v7306
        %s7310 = scalar_lea.vmem [#allocation8], 128
        %v7311 = vld [vmem:[%s7310] sm:$0xf]
        %v7312 = vld [vmem:[%s7310 + $0x4] sm:$0xf]
        %v7313 = vld [vmem:[%s7310 + $0x8] sm:$0xf]
        %v7314 = vld [vmem:[%s7310 + $0xc] sm:$0xf]
        %v7315 = vld [vmem:[%s7310 + $0x10] sm:$0xf]
        %v7316 = vld [vmem:[%s7310 + $0x14] sm:$0xf]
        %v7317 = vld [vmem:[%s7310 + $0x18] sm:$0xf]
        %v7318 = vld [vmem:[%s7310 + $0x1c] sm:$0xf]
        %v7319 = vld [vmem:[%s7310 + $0x20] sm:$0xf]
        %v7320 = vld [vmem:[%s7310 + $0x24] sm:$0xf]
        %v7321 = vld [vmem:[%s7310 + $0x28] sm:$0xf]
        %v7322 = vld [vmem:[%s7310 + $0x2c] sm:$0xf]
        %v7323 = vld [vmem:[%s7310 + $0x30] sm:$0xf]
        %v7324 = vld [vmem:[%s7310 + $0x34] sm:$0xf]
        %v7325 = vld [vmem:[%s7310 + $0x38] sm:$0xf]
        %v7326 = vld [vmem:[%s7310 + $0x3c] sm:$0xf]
        %s7327 = scalar_lea.vmem [#allocation9], 2
        %v7328 = vld [vmem:[%s7327] sm:$0x1]
        %v7330 = vlaneseq
        %v7331 = vshrl.u32 %v7330, 7
        %v7332 = vsub.s32 0, %v7331
        %v7333 = vrot.slane %v7328, %v7332
        %v7351 = vunpack.c.l.b16 %v7311
        %v7352 = vunpack.c.l.b16 %v7312
        %v7353 = vunpack.c.l.b16 %v7313
        %v7354 = vunpack.c.l.b16 %v7314
        %v7355 = vunpack.c.l.b16 %v7315
        %v7356 = vunpack.c.l.b16 %v7316
        %v7357 = vunpack.c.l.b16 %v7317
        %v7358 = vunpack.c.l.b16 %v7318
        %v7359 = vunpack.c.l.b16 %v7319
        %v7360 = vunpack.c.l.b16 %v7320
        %v7361 = vunpack.c.l.b16 %v7321
        %v7362 = vunpack.c.l.b16 %v7322
        %v7363 = vunpack.c.l.b16 %v7323
        %v7364 = vunpack.c.l.b16 %v7324
        %v7365 = vunpack.c.l.b16 %v7325
        %v7366 = vunpack.c.l.b16 %v7326
        %v7367 = vpack.c.b16 %v7352, %v7351
        %v7368 = vpack.c.b16 %v7354, %v7353
        %v7369 = vpack.c.b16 %v7356, %v7355
        %v7370 = vpack.c.b16 %v7358, %v7357
        %v7371 = vpack.c.b16 %v7360, %v7359
        %v7372 = vpack.c.b16 %v7362, %v7361
        %v7373 = vpack.c.b16 %v7364, %v7363
        %v7374 = vpack.c.b16 %v7366, %v7365
        %7383 = vmatprep.subr.bf16.mxu0 0
        %7384 = vmatpush1.bf16.msra.mxu0 %v7367
        %7385 = vmatprep.subr.bf16.mxu0 0
        %7386 = vmatpush1.bf16.msra.mxu0 %v7368
        %7387 = vmatprep.subr.bf16.mxu0 0
        %7388 = vmatpush1.bf16.msra.mxu0 %v7369
        %7389 = vmatprep.subr.bf16.mxu0 0
        %7390 = vmatpush1.bf16.msra.mxu0 %v7370
        %7391 = vmatprep.subr.bf16.mxu0 0
        %7392 = vmatpush1.bf16.msra.mxu0 %v7371
        %7393 = vmatprep.subr.bf16.mxu0 0
        %7394 = vmatpush1.bf16.msra.mxu0 %v7372
        %7395 = vmatprep.subr.bf16.mxu0 0
        %7396 = vmatpush1.bf16.msra.mxu0 %v7373
        %7397 = vmatprep.subr.bf16.mxu0 0
        %7398 = vmatpush1.bf16.msra.mxu0 %v7374
        %7399 = vmatprep.subr.bf16.mxu0 0
        %7400 = vmatpush1.bf16.msra.mxu0 0
        %7401 = vmatprep.subr.bf16.mxu0 0
        %7402 = vmatpush1.bf16.msra.mxu0 0
        %7403 = vmatprep.subr.bf16.mxu0 0
        %7404 = vmatpush1.bf16.msra.mxu0 0
        %7405 = vmatprep.subr.bf16.mxu0 0
        %7406 = vmatpush1.bf16.msra.mxu0 0
        %7407 = vmatprep.subr.bf16.mxu0 0
        %7408 = vmatpush1.bf16.msra.mxu0 0
        %7409 = vmatprep.subr.bf16.mxu0 0
        %7410 = vmatpush1.bf16.msra.mxu0 0
        %7411 = vmatprep.subr.bf16.mxu0 0
        %7412 = vmatpush1.bf16.msra.mxu0 0
        %7413 = vmatprep.subr.bf16.mxu0 0
        %7414 = vmatpush1.bf16.msra.mxu0 0
        %7415 = vmatprep.mubr.bf16.mxu0 0
        %7416 = vmatmul.mubr.bf16.gmra.mrb[0].mxu0 %v7308
        %v7417 = vpop.f32.mrb[0].mxu0
        %v7418 = vadd.f32 %v7333, %v7417
        %v7419 = vpop.f32.mrb[0].mxu0
        %v7420 = vpop.f32.mrb[0].mxu0
        %v7421 = vadd.f32 %v7333, %v7420
        %v7422 = vpop.f32.mrb[0].mxu0
        %7423 = vmatprep.mubr.bf16.mxu0 0
        %7424 = vmatmul.mubr.bf16.gmra.mrb[0].mxu0 %v7309
        %v7425 = vpop.f32.mrb[0].mxu0
        %v7426 = vadd.f32 %v7333, %v7425
        %v7427 = vpop.f32.mrb[0].mxu0
        %v7428 = vpop.f32.mrb[0].mxu0
        %v7429 = vadd.f32 %v7333, %v7428
        %v7430 = vpop.f32.mrb[0].mxu0
        %7431 = vdwg.mxu0
        %7432 = vst [vmem:[#allocation2] sm:$0xff] %v7418
        %7433 = vst [vmem:[#allocation2 + $0x8] sm:$0xff] %v7421
        %7434 = vst [vmem:[#allocation2 + $0x10] sm:$0xff] %v7426
        %7435 = vst [vmem:[#allocation2 + $0x18] sm:$0x1] %v7429
        %7436 = vst [vmem:[%s281] sm:$0xff] 0.0
        %v7437 = vld [vmem:[#allocation2] ss:$2 sm:$0x3]
        %v7438 = vld [vmem:[%s4030] ss:$2 sm:$0x3]
        %v7439 = vmax.f32 %v7437, %v7438
        %s7440 = scalar_lea.vmem [#allocation2], 5
        %v7441 = vld [vmem:[%s7440] ss:$2 sm:$0x3]
        %s7442 = scalar_lea.vmem [#allocation2], 6
        %v7443 = vld [vmem:[%s7442] ss:$2 sm:$0x3]
        %v7444 = vmax.f32 %v7441, %v7443
        %v7445 = vmax.f32 %v7439, %v7444
        %7446 = vst [vmem:[%s281] sm:$0x3] %v7445
        %s7447 = scalar_lea.vmem [#allocation2], 10
        %v7448 = vld [vmem:[%s7447] ss:$2 sm:$0x3]
        %s7449 = scalar_lea.vmem [#allocation2], 11
        %v7450 = vld [vmem:[%s7449] ss:$2 sm:$0x3]
        %v7451 = vmax.f32 %v7448, %v7450
        %s7452 = scalar_lea.vmem [#allocation2], 15
        %v7453 = vld [vmem:[%s7452] ss:$2 sm:$0x3]
        %s7454 = scalar_lea.vmem [#allocation2], 16
        %v7455 = vld [vmem:[%s7454] ss:$2 sm:$0x3]
        %v7456 = vmax.f32 %v7453, %v7455
        %v7457 = vmax.f32 %v7451, %v7456
        %7458 = vst [vmem:[%s281 + $0x2] sm:$0x3] %v7457
        %p7459 = scmp.lt.s32.totalorder %s19, 1
        %s7460 = scalar_select %p7459, %s19, 1
        %s7461 = smul.addr %s7460, 8
        %s7462 = scalar_lea.vmem %s5, %s7461
        // Predicated region
        $region57: #{_lambda_.1} parent=39 // pred_check
          %p7463 = pneg %p147
        $region58: #{_lambda_.1} parent=39 // pred_check_branch
          %7465 = sbr.rel (%p7463) target = $region60
        $region59: #{_lambda_.1} parent=39 // pred_region
          _
        $region60: #{_lambda_.1} parent=39 // pred_fallthru
          _
      $region40: #{_lambda_.1} parent=5 // pred_fallthru
        _
      %p7466 = scmp.le.s32.totalorder 2, %s14
      // Predicated region
      $region61: #{_lambda_.1} parent=5 // pred_check
        %p7467 = pneg %p7466
      $region62: #{_lambda_.1} parent=5 // pred_check_branch
        %7469 = sbr.rel (%p7467) target = $region64
      $region63: #{_lambda_.1} parent=5 // pred_region
        %s7470 = ssub.s32 %s14, 2
        // Predicated region
        $region65: #{_lambda_.1} parent=63 // pred_check
          %p7471 = pneg %p153
        $region66: #{_lambda_.1} parent=63 // pred_check_branch
          %7473 = sbr.rel (%p7471) target = $region68
        $region67: #{_lambda_.1} parent=63 // pred_region
          %p7474 = scmp.lt.s32.totalorder %s20, 1
          %s7475 = scalar_select %p7474, %s20, 1
          %s7476 = smul.addr %s7475, 8
          %s7477 = scalar_lea.vmem %s5, %s7476
        $region68: #{_lambda_.1} parent=63 // pred_fallthru
          _
      $region64: #{_lambda_.1} parent=5 // pred_fallthru
        _
    $region6: #{_lambda_.1} parent=1 // loop_footer
      %s18 = sadd.s32 1, %s14
    $region7: #{_lambda_.1} parent=1 // loop_footer_branch
      %13 = sbr.rel target = $region3
    $region8: #{_lambda_.1} parent=1 // loop_exit
      _
    %7478 = vsyncpa [#allocation5], 1
    %s7479 = scalar_lea.sflag [#allocation5], 1
    %7480 = vsyncpa %s7479, 1
    %7481 = vsyncpa [#allocation7], 1
    %7482 = vsyncpa [#allocation10], 1

</llo_original>
